<compile_context>
chip_gen: v7x
topology: tpu7x:2x2x1
jax: 0.10.0
libtpu: 0.0.40
codegen_flags: <defaults>
</compile_context>

<pallas_src>
import functools
import math

import jax
import jax.numpy as jnp
from jax.experimental import pallas as pl
from jax.experimental.pallas import tpu as pltpu


# ---------------------------------------------------------------------------
# Static architecture plan (mirrors ResNet3MFCC.__init__ / _make_layer)
# ---------------------------------------------------------------------------

def _build_block_cfg(n_mfcc, k=1):
    """Returns [(cin, cout, stride, has_shortcut), ...] and the final width."""
    widths = [int(24 * k), int(32 * k), int(48 * k), int(60 * k)]
    num_blocks = [3, 3, 2, 2]
    first_stride = [1, 2, 2, 2]
    cfg = []
    cin = n_mfcc
    for w, nb, s0 in zip(widths, num_blocks, first_stride):
        for s in [s0] + [1] * (nb - 1):
            cfg.append((cin, w, s, (s != 1) or (cin != w)))
            cin = w
    return cfg, widths[-1]


# ---------------------------------------------------------------------------
# Single fused Pallas kernel:  power-spectrum -> class probabilities
# ---------------------------------------------------------------------------

def _make_fused_kernel(T, block_cfg, n_param_refs):
    f32, bf16 = jnp.float32, jnp.bfloat16

    def kernel(*refs):
        power_ref = refs[0]
        params = refs[1:1 + n_param_refs]
        o_ref = refs[1 + n_param_refs]

        it = iter(params)
        take = lambda: next(it)

        # Caches so iota-built constants are emitted once per size and reused
        # across the (trace-time-unrolled) block loop.
        sel_cache = {}     # t_in -> (t_out, t_in) bf16 0/1 even-row selector
        mask_cache = {}    # (t, c) -> (first_row_mask, last_row_mask)

        def mm(a_bf16, w_bf16):
            # bf16 x bf16 MXU matmul, f32 accumulation.
            return jnp.dot(a_bf16, w_bf16, preferred_element_type=f32)

        def sel_for(t_in):
            if t_in not in sel_cache:
                t_out = (t_in - 1) // 2 + 1
                r = jax.lax.broadcasted_iota(jnp.int32, (t_out, t_in), 0)
                c = jax.lax.broadcasted_iota(jnp.int32, (t_out, t_in), 1)
                sel_cache[t_in] = (c == 2 * r).astype(bf16)
            return sel_cache[t_in]

        def downsample(v_bf16):
            # Exact even-row selection (rows 0,2,4,...) on the MXU; f32 result.
            return jnp.dot(sel_for(v_bf16.shape[0]), v_bf16,
                           preferred_element_type=f32)

        def shift_taps(x):
            # left[t] = x[t-1] (0 at t=0), right[t] = x[t+1] (0 at t=tmax).
            # pltpu.roll runs on the XLU; the boundary row is zeroed with an
            # iota row mask (no VMEM round trip, no store->load dependency).
            t, c = x.shape
            if (t, c) not in mask_cache:
                row = jax.lax.broadcasted_iota(jnp.int32, (t, c), 0)
                mask_cache[(t, c)] = (row == 0, row == t - 1)
            first, last = mask_cache[(t, c)]
            left = jnp.where(first, 0.0, pltpu.roll(x, 1, 0))
            right = jnp.where(last, 0.0, pltpu.roll(x, t - 1, 0))
            return left, right

        def conv3_same(x, w_ref, b_ref, stride):
            # Conv1d(k=3, pad=1) with folded BN, all 3 taps fused into ONE
            # (t, 3c) x (3c, cout) matmul.  Stride-2 downsamples the operand
            # BEFORE the matmul so the conv runs on the halved M dim.
            left, right = shift_taps(x)
            cat = jnp.concatenate([left, x, right], axis=-1).astype(bf16)
            if stride == 2:
                cat = downsample(cat).astype(bf16)       # exact 0/1 selection
            return mm(cat, w_ref[...]) + b_ref[...]

        # ---- MFCC back half: mel -> dB (top_db=80) -> DCT ------------------
        fb_ref, dct_ref = take(), take()
        power = power_ref[0]                              # (T, n_freqs_pad) f32
        mel = mm(power.astype(bf16), fb_ref[...])         # (T, n_mels) f32
        db = 10.0 * jnp.log10(jnp.maximum(mel, 1e-10))
        dmax = jnp.max(jnp.max(db, axis=1, keepdims=True), axis=0, keepdims=True)
        db = jnp.maximum(db, dmax - 80.0)
        x = mm(db.astype(bf16), dct_ref[...])              # (T, n_mfcc) f32

        # ---- conv1 (k=3, stride=1, padding=0) + folded BN + ReLU -----------
        w_ref, b_ref = take(), take()
        cat = jnp.concatenate([x[0:T - 2], x[1:T - 1], x[2:T]],
                              axis=-1).astype(bf16)        # (T-2, 3*n_mfcc)
        h = jnp.maximum(mm(cat, w_ref[...]) + b_ref[...], 0.0)  # (T-2, n_mfcc)

        # ---- MaxPool1d(k=3, s=2, p=1); h >= 0 so zero pad == -inf pad ------
        left, right = shift_taps(h)
        pooled = jnp.maximum(jnp.maximum(left, h), right).astype(bf16)
        h = downsample(pooled)                              # f32, even rows

        # ---- residual trunk: layer1..layer4 ---------------------------------
        for (cin, cout, stride, has_short) in block_cfg:
            w1, b1, w2, b2 = take(), take(), take(), take()
            ws, bs = (take(), take()) if has_short else (None, None)
            y = jnp.maximum(conv3_same(h, w1, b1, stride), 0.0)
            y = conv3_same(y, w2, b2, 1)
            if has_short:
                sc_in = h.astype(bf16)
                if stride == 2:
                    sc_in = downsample(sc_in).astype(bf16)
                sc = mm(sc_in, ws[...]) + bs[...]
            else:
                sc = h
            h = jnp.maximum(y + sc, 0.0)

        # ---- AdaptiveAvgPool1d(1) + classification head + Softmax ----------
        fw1, fb1, fw2, fb2 = take(), take(), take(), take()
        feat = jnp.mean(h, axis=0, keepdims=True)           # (1, 60*k) f32
        z = jnp.maximum(mm(feat.astype(bf16), fw1[...]) + fb1[...], 0.0)
        logits = mm(z.astype(bf16), fw2[...]) + fb2[...]     # (1, 2)
        logits = logits - jnp.max(logits, axis=-1, keepdims=True)
        e = jnp.exp(logits)
        o_ref[0] = (e / jnp.sum(e, axis=-1, keepdims=True)).astype(o_ref.dtype)

    return kernel


# ---------------------------------------------------------------------------
# MFCC front half (XLA): framing + window + rFFT + power spectrum
# ---------------------------------------------------------------------------

def _stft_power(x, n_fft=2048, hop=256, win_length=512):
    """torchaudio-style Spectrogram(power=2): center=True, reflect pad,
    periodic Hann(win_length) zero-padded to n_fft."""
    # TODO(synk): rFFT has no Pallas primitive; this stays in XLA.
    B, L = x.shape
    half = n_fft // 2
    xp = jnp.pad(x, ((0, 0), (half, half)), mode="reflect")
    T = 1 + L // hop
    idx = jnp.arange(T)[:, None] * hop + jnp.arange(n_fft)[None, :]
    frames = xp[:, idx]                                     # (B, T, n_fft)
    n = jnp.arange(win_length, dtype=jnp.float32)
    win = 0.5 - 0.5 * jnp.cos(2.0 * jnp.pi * n / win_length)
    lpad = (n_fft - win_length) // 2
    window = jnp.zeros((n_fft,), jnp.float32).at[lpad:lpad + win_length].set(win)
    spec = jnp.fft.rfft(frames * window, axis=-1)
    return (spec.real ** 2 + spec.imag ** 2).astype(jnp.float32)


def _melscale_fbanks(n_freqs, n_mels, sr):
    f_max = sr / 2.0
    all_freqs = jnp.linspace(0.0, f_max, n_freqs)
    m_max = 2595.0 * math.log10(1.0 + f_max / 700.0)
    m_pts = jnp.linspace(0.0, m_max, n_mels + 2)
    f_pts = 700.0 * (jnp.power(10.0, m_pts / 2595.0) - 1.0)
    f_diff = f_pts[1:] - f_pts[:-1]
    slopes = f_pts[None, :] - all_freqs[:, None]
    down = -slopes[:, :-2] / f_diff[:-1]
    up = slopes[:, 2:] / f_diff[1:]
    return jnp.maximum(0.0, jnp.minimum(down, up)).astype(jnp.float32)


def _create_dct(n_mfcc, n_mels):
    n = jnp.arange(n_mels, dtype=jnp.float32)
    kk = jnp.arange(n_mfcc, dtype=jnp.float32)[:, None]
    dct = jnp.cos(math.pi / n_mels * (n + 0.5) * kk)         # (n_mfcc, n_mels)
    dct = dct.at[0].multiply(1.0 / math.sqrt(2.0))
    dct = dct * math.sqrt(2.0 / n_mels)                      # norm='ortho'
    return dct.T.astype(jnp.float32)                         # (n_mels, n_mfcc)


# ---------------------------------------------------------------------------
# Deterministic parameter init (inference BN folded into conv weights;
# k=3 conv weights stored fused as (3*cin, cout) to match the in-kernel im2col)
# ---------------------------------------------------------------------------

def _make_bn_affine(key, c):
    k1, k2, k3, k4 = jax.random.split(key, 4)
    gamma = 1.0 + 0.1 * jax.random.normal(k1, (c,), jnp.float32)
    beta = 0.1 * jax.random.normal(k2, (c,), jnp.float32)
    mean = 0.1 * jax.random.normal(k3, (c,), jnp.float32)
    var = 0.5 + jax.random.uniform(k4, (c,), jnp.float32)
    scale = gamma / jnp.sqrt(var + 1e-5)
    return scale, beta - mean * scale


def _conv_bn_folded(key, cin, cout, ksize):
    """Conv1d(bias=False)+BN folded -> (w[(k*cin), cout] bf16, b[1, cout] f32)."""
    kw, kb = jax.random.split(key)
    w = jax.random.normal(kw, (ksize, cin, cout), jnp.float32) / math.sqrt(cin * ksize)
    s, b = _make_bn_affine(kb, cout)
    w = (w * s[None, None, :]).reshape(ksize * cin, cout)
    return w.astype(jnp.bfloat16), b.reshape(1, cout)


def init_params(key, *, sr, n_mfcc, n_mels, k=1, n_fft=2048):
    block_cfg, c_last = _build_block_cfg(n_mfcc, k)
    n_freqs = n_fft // 2 + 1
    n_freqs_pad = ((n_freqs + 127) // 128) * 128            # 1025 -> 1152 (exact)
    fb = _melscale_fbanks(n_freqs, n_mels, sr)
    fb = jnp.pad(fb, ((0, n_freqs_pad - n_freqs), (0, 0)))   # zero rows: exact
    flat = [fb.astype(jnp.bfloat16),
            _create_dct(n_mfcc, n_mels).astype(jnp.bfloat16)]
    keys = iter(jax.random.split(key, 4 + 3 * len(block_cfg)))
    w, b = _conv_bn_folded(next(keys), n_mfcc, n_mfcc, 3)
    flat += [w, b]
    for (cin, cout, stride, has_short) in block_cfg:
        w1, b1 = _conv_bn_folded(next(keys), cin, cout, 3)
        w2, b2 = _conv_bn_folded(next(keys), cout, cout, 3)
        flat += [w1, b1, w2, b2]
        if has_short:
            ws, bs = _conv_bn_folded(next(keys), cin, cout, 1)
            flat += [ws, bs]                                  # (cin, cout) 1x1
    kf1, kf2, kb1, kb2 = jax.random.split(next(keys), 4)
    flat += [
        (jax.random.normal(kf1, (c_last, c_last), jnp.float32)
         / math.sqrt(c_last)).astype(jnp.bfloat16),
        0.01 * jax.random.normal(kb1, (1, c_last), jnp.float32),
        (jax.random.normal(kf2, (c_last, 2), jnp.float32)
         / math.sqrt(c_last)).astype(jnp.bfloat16),
        0.01 * jax.random.normal(kb2, (1, 2), jnp.float32),
    ]
    return flat


# ---------------------------------------------------------------------------
# Forward pass: XLA STFT front-end + one fused Pallas call
# ---------------------------------------------------------------------------

def _const_spec(arr):
    nd = arr.ndim
    return pl.BlockSpec(arr.shape, lambda b, _nd=nd: (0,) * _nd)


@functools.partial(jax.jit, static_argnames=("n_mfcc", "k"))
def resnet3_mfcc_forward(audio, params, *, n_mfcc, k=1):
    """audio: (B, L) raw waveform -> (B, 2) class probabilities."""
    power = _stft_power(audio)                          # (B, T, n_fft//2+1)
    B, T, n_freqs = power.shape
    n_freqs_pad = ((n_freqs + 127) // 128) * 128        # lane-align the big operand
    power = jnp.pad(power, ((0, 0), (0, 0), (0, n_freqs_pad - n_freqs)))

    block_cfg, _ = _build_block_cfg(n_mfcc, k)
    kernel = _make_fused_kernel(T, block_cfg, len(params))

    in_specs = [pl.BlockSpec((1, T, n_freqs_pad), lambda b: (b, 0, 0))]
    in_specs += [_const_spec(p) for p in params]

    out = pl.pallas_call(
        kernel,
        out_shape=jax.ShapeDtypeStruct((B, 1, 2), jnp.float32),
        grid=(B,),
        in_specs=in_specs,
        out_specs=pl.BlockSpec((1, 1, 2), lambda b: (b, 0, 0)),
        compiler_params=pltpu.CompilerParams(
            dimension_semantics=("parallel",),          # batch -> 2 TCs on v7x
            vmem_limit_bytes=32 * 1024 * 1024),
    )(power, *params)
    return out.reshape(B, 2)


# ---------------------------------------------------------------------------

if __name__ == "__main__":
    B, L = 2, 16384            # ~2 s of audio at 8 kHz -> T = 1 + L//256 = 65 frames
    SR, N_MFCC, N_MELS, K = 8000, 13, 40, 1

    key = jax.random.PRNGKey(0)
    kx, kp = jax.random.split(key)
    audio = 0.1 * jax.random.normal(kx, (B, L), jnp.float32)
    params = init_params(kp, sr=SR, n_mfcc=N_MFCC, n_mels=N_MELS, k=K)

    out = resnet3_mfcc_forward(audio, params, n_mfcc=N_MFCC, k=K)
    out = jax.block_until_ready(out)

    assert out.shape == (B, 2)
    assert bool(jnp.all(jnp.isfinite(out)))
    assert bool(jnp.allclose(jnp.sum(out, axis=1), 1.0, atol=1e-4))
    print("KERNEL_OK")
</pallas_src>

<mosaic_0001>
module attributes {stable_mosaic.version = 11 : i64} {
  func.func @kernel(%arg0: i32, %arg1: memref<1x65x1152xf32, #tpu.memory_space<vmem>>, %arg2: memref<1152x40xbf16, #tpu.memory_space<vmem>>, %arg3: memref<40x13xbf16, #tpu.memory_space<vmem>>, %arg4: memref<39x13xbf16, #tpu.memory_space<vmem>>, %arg5: memref<1x13xf32, #tpu.memory_space<vmem>>, %arg6: memref<39x24xbf16, #tpu.memory_space<vmem>>, %arg7: memref<1x24xf32, #tpu.memory_space<vmem>>, %arg8: memref<72x24xbf16, #tpu.memory_space<vmem>>, %arg9: memref<1x24xf32, #tpu.memory_space<vmem>>, %arg10: memref<13x24xbf16, #tpu.memory_space<vmem>>, %arg11: memref<1x24xf32, #tpu.memory_space<vmem>>, %arg12: memref<72x24xbf16, #tpu.memory_space<vmem>>, %arg13: memref<1x24xf32, #tpu.memory_space<vmem>>, %arg14: memref<72x24xbf16, #tpu.memory_space<vmem>>, %arg15: memref<1x24xf32, #tpu.memory_space<vmem>>, %arg16: memref<72x24xbf16, #tpu.memory_space<vmem>>, %arg17: memref<1x24xf32, #tpu.memory_space<vmem>>, %arg18: memref<72x24xbf16, #tpu.memory_space<vmem>>, %arg19: memref<1x24xf32, #tpu.memory_space<vmem>>, %arg20: memref<72x32xbf16, #tpu.memory_space<vmem>>, %arg21: memref<1x32xf32, #tpu.memory_space<vmem>>, %arg22: memref<96x32xbf16, #tpu.memory_space<vmem>>, %arg23: memref<1x32xf32, #tpu.memory_space<vmem>>, %arg24: memref<24x32xbf16, #tpu.memory_space<vmem>>, %arg25: memref<1x32xf32, #tpu.memory_space<vmem>>, %arg26: memref<96x32xbf16, #tpu.memory_space<vmem>>, %arg27: memref<1x32xf32, #tpu.memory_space<vmem>>, %arg28: memref<96x32xbf16, #tpu.memory_space<vmem>>, %arg29: memref<1x32xf32, #tpu.memory_space<vmem>>, %arg30: memref<96x32xbf16, #tpu.memory_space<vmem>>, %arg31: memref<1x32xf32, #tpu.memory_space<vmem>>, %arg32: memref<96x32xbf16, #tpu.memory_space<vmem>>, %arg33: memref<1x32xf32, #tpu.memory_space<vmem>>, %arg34: memref<96x48xbf16, #tpu.memory_space<vmem>>, %arg35: memref<1x48xf32, #tpu.memory_space<vmem>>, %arg36: memref<144x48xbf16, #tpu.memory_space<vmem>>, %arg37: memref<1x48xf32, #tpu.memory_space<vmem>>, %arg38: memref<32x48xbf16, #tpu.memory_space<vmem>>, %arg39: memref<1x48xf32, #tpu.memory_space<vmem>>, %arg40: memref<144x48xbf16, #tpu.memory_space<vmem>>, %arg41: memref<1x48xf32, #tpu.memory_space<vmem>>, %arg42: memref<144x48xbf16, #tpu.memory_space<vmem>>, %arg43: memref<1x48xf32, #tpu.memory_space<vmem>>, %arg44: memref<144x60xbf16, #tpu.memory_space<vmem>>, %arg45: memref<1x60xf32, #tpu.memory_space<vmem>>, %arg46: memref<180x60xbf16, #tpu.memory_space<vmem>>, %arg47: memref<1x60xf32, #tpu.memory_space<vmem>>, %arg48: memref<48x60xbf16, #tpu.memory_space<vmem>>, %arg49: memref<1x60xf32, #tpu.memory_space<vmem>>, %arg50: memref<180x60xbf16, #tpu.memory_space<vmem>>, %arg51: memref<1x60xf32, #tpu.memory_space<vmem>>, %arg52: memref<180x60xbf16, #tpu.memory_space<vmem>>, %arg53: memref<1x60xf32, #tpu.memory_space<vmem>>, %arg54: memref<60x60xbf16, #tpu.memory_space<vmem>>, %arg55: memref<1x60xf32, #tpu.memory_space<vmem>>, %arg56: memref<60x2xbf16, #tpu.memory_space<vmem>>, %arg57: memref<1x2xf32, #tpu.memory_space<vmem>>, %arg58: memref<1x1x2xf32, #tpu.memory_space<vmem>>) attributes {dimension_semantics = [#tpu.dimension_semantics<parallel>], iteration_bounds = array<i64: 2>, scalar_prefetch = 0 : i64, scratch_operands = 0 : i64, tpu.core_type = #tpu.core_type<tc>, window_params = [{transform_indices = @transform_0, window_bounds = array<i64: 1, 65, 1152>}, {pipeline_mode = #tpu.pipeline_mode<synchronous>, transform_indices = @transform_1, window_bounds = array<i64: 1152, 40>}, {pipeline_mode = #tpu.pipeline_mode<synchronous>, transform_indices = @transform_2, window_bounds = array<i64: 40, 13>}, {pipeline_mode = #tpu.pipeline_mode<synchronous>, transform_indices = @transform_3, window_bounds = array<i64: 39, 13>}, {pipeline_mode = #tpu.pipeline_mode<synchronous>, transform_indices = @transform_4, window_bounds = array<i64: 1, 13>}, {pipeline_mode = #tpu.pipeline_mode<synchronous>, transform_indices = @transform_5, window_bounds = array<i64: 39, 24>}, {pipeline_mode = #tpu.pipeline_mode<synchronous>, transform_indices = @transform_6, window_bounds = array<i64: 1, 24>}, {pipeline_mode = #tpu.pipeline_mode<synchronous>, transform_indices = @transform_7, window_bounds = array<i64: 72, 24>}, {pipeline_mode = #tpu.pipeline_mode<synchronous>, transform_indices = @transform_8, window_bounds = array<i64: 1, 24>}, {pipeline_mode = #tpu.pipeline_mode<synchronous>, transform_indices = @transform_9, window_bounds = array<i64: 13, 24>}, {pipeline_mode = #tpu.pipeline_mode<synchronous>, transform_indices = @transform_10, window_bounds = array<i64: 1, 24>}, {pipeline_mode = #tpu.pipeline_mode<synchronous>, transform_indices = @transform_11, window_bounds = array<i64: 72, 24>}, {pipeline_mode = #tpu.pipeline_mode<synchronous>, transform_indices = @transform_12, window_bounds = array<i64: 1, 24>}, {pipeline_mode = #tpu.pipeline_mode<synchronous>, transform_indices = @transform_13, window_bounds = array<i64: 72, 24>}, {pipeline_mode = #tpu.pipeline_mode<synchronous>, transform_indices = @transform_14, window_bounds = array<i64: 1, 24>}, {pipeline_mode = #tpu.pipeline_mode<synchronous>, transform_indices = @transform_15, window_bounds = array<i64: 72, 24>}, {pipeline_mode = #tpu.pipeline_mode<synchronous>, transform_indices = @transform_16, window_bounds = array<i64: 1, 24>}, {pipeline_mode = #tpu.pipeline_mode<synchronous>, transform_indices = @transform_17, window_bounds = array<i64: 72, 24>}, {pipeline_mode = #tpu.pipeline_mode<synchronous>, transform_indices = @transform_18, window_bounds = array<i64: 1, 24>}, {pipeline_mode = #tpu.pipeline_mode<synchronous>, transform_indices = @transform_19, window_bounds = array<i64: 72, 32>}, {pipeline_mode = #tpu.pipeline_mode<synchronous>, transform_indices = @transform_20, window_bounds = array<i64: 1, 32>}, {pipeline_mode = #tpu.pipeline_mode<synchronous>, transform_indices = @transform_21, window_bounds = array<i64: 96, 32>}, {pipeline_mode = #tpu.pipeline_mode<synchronous>, transform_indices = @transform_22, window_bounds = array<i64: 1, 32>}, {pipeline_mode = #tpu.pipeline_mode<synchronous>, transform_indices = @transform_23, window_bounds = array<i64: 24, 32>}, {pipeline_mode = #tpu.pipeline_mode<synchronous>, transform_indices = @transform_24, window_bounds = array<i64: 1, 32>}, {pipeline_mode = #tpu.pipeline_mode<synchronous>, transform_indices = @transform_25, window_bounds = array<i64: 96, 32>}, {pipeline_mode = #tpu.pipeline_mode<synchronous>, transform_indices = @transform_26, window_bounds = array<i64: 1, 32>}, {pipeline_mode = #tpu.pipeline_mode<synchronous>, transform_indices = @transform_27, window_bounds = array<i64: 96, 32>}, {pipeline_mode = #tpu.pipeline_mode<synchronous>, transform_indices = @transform_28, window_bounds = array<i64: 1, 32>}, {pipeline_mode = #tpu.pipeline_mode<synchronous>, transform_indices = @transform_29, window_bounds = array<i64: 96, 32>}, {pipeline_mode = #tpu.pipeline_mode<synchronous>, transform_indices = @transform_30, window_bounds = array<i64: 1, 32>}, {pipeline_mode = #tpu.pipeline_mode<synchronous>, transform_indices = @transform_31, window_bounds = array<i64: 96, 32>}, {pipeline_mode = #tpu.pipeline_mode<synchronous>, transform_indices = @transform_32, window_bounds = array<i64: 1, 32>}, {pipeline_mode = #tpu.pipeline_mode<synchronous>, transform_indices = @transform_33, window_bounds = array<i64: 96, 48>}, {pipeline_mode = #tpu.pipeline_mode<synchronous>, transform_indices = @transform_34, window_bounds = array<i64: 1, 48>}, {pipeline_mode = #tpu.pipeline_mode<synchronous>, transform_indices = @transform_35, window_bounds = array<i64: 144, 48>}, {pipeline_mode = #tpu.pipeline_mode<synchronous>, transform_indices = @transform_36, window_bounds = array<i64: 1, 48>}, {pipeline_mode = #tpu.pipeline_mode<synchronous>, transform_indices = @transform_37, window_bounds = array<i64: 32, 48>}, {pipeline_mode = #tpu.pipeline_mode<synchronous>, transform_indices = @transform_38, window_bounds = array<i64: 1, 48>}, {pipeline_mode = #tpu.pipeline_mode<synchronous>, transform_indices = @transform_39, window_bounds = array<i64: 144, 48>}, {pipeline_mode = #tpu.pipeline_mode<synchronous>, transform_indices = @transform_40, window_bounds = array<i64: 1, 48>}, {pipeline_mode = #tpu.pipeline_mode<synchronous>, transform_indices = @transform_41, window_bounds = array<i64: 144, 48>}, {pipeline_mode = #tpu.pipeline_mode<synchronous>, transform_indices = @transform_42, window_bounds = array<i64: 1, 48>}, {pipeline_mode = #tpu.pipeline_mode<synchronous>, transform_indices = @transform_43, window_bounds = array<i64: 144, 60>}, {pipeline_mode = #tpu.pipeline_mode<synchronous>, transform_indices = @transform_44, window_bounds = array<i64: 1, 60>}, {pipeline_mode = #tpu.pipeline_mode<synchronous>, transform_indices = @transform_45, window_bounds = array<i64: 180, 60>}, {pipeline_mode = #tpu.pipeline_mode<synchronous>, transform_indices = @transform_46, window_bounds = array<i64: 1, 60>}, {pipeline_mode = #tpu.pipeline_mode<synchronous>, transform_indices = @transform_47, window_bounds = array<i64: 48, 60>}, {pipeline_mode = #tpu.pipeline_mode<synchronous>, transform_indices = @transform_48, window_bounds = array<i64: 1, 60>}, {pipeline_mode = #tpu.pipeline_mode<synchronous>, transform_indices = @transform_49, window_bounds = array<i64: 180, 60>}, {pipeline_mode = #tpu.pipeline_mode<synchronous>, transform_indices = @transform_50, window_bounds = array<i64: 1, 60>}, {pipeline_mode = #tpu.pipeline_mode<synchronous>, transform_indices = @transform_51, window_bounds = array<i64: 180, 60>}, {pipeline_mode = #tpu.pipeline_mode<synchronous>, transform_indices = @transform_52, window_bounds = array<i64: 1, 60>}, {pipeline_mode = #tpu.pipeline_mode<synchronous>, transform_indices = @transform_53, window_bounds = array<i64: 60, 60>}, {pipeline_mode = #tpu.pipeline_mode<synchronous>, transform_indices = @transform_54, window_bounds = array<i64: 1, 60>}, {pipeline_mode = #tpu.pipeline_mode<synchronous>, transform_indices = @transform_55, window_bounds = array<i64: 60, 2>}, {pipeline_mode = #tpu.pipeline_mode<synchronous>, transform_indices = @transform_56, window_bounds = array<i64: 1, 2>}, {transform_indices = @transform_57, window_bounds = array<i64: 1, 1, 2>}]} {
    %c0 = arith.constant 0 : index
    %c0_0 = arith.constant 0 : index
    %c0_1 = arith.constant 0 : index
    %0 = vector.load %arg1[%c0, %c0_0, %c0_1] : memref<1x65x1152xf32, #tpu.memory_space<vmem>>, vector<1x65x1152xf32>
    %1 = vector.shape_cast %0 : vector<1x65x1152xf32> to vector<65x1152xf32>
    %2 = arith.truncf %1 : vector<65x1152xf32> to vector<65x1152xbf16>
    %c0_2 = arith.constant 0 : index
    %c0_3 = arith.constant 0 : index
    %3 = vector.load %arg2[%c0_2, %c0_3] : memref<1152x40xbf16, #tpu.memory_space<vmem>>, vector<1152x40xbf16>
    %cst = arith.constant dense<0.000000e+00> : vector<65x40xf32>
    %4 = tpu.matmul %2, %3, %cst {dimension_numbers = #tpu.dot_dimension_numbers<[1], [0], [0], [1], [0, 0, 1, 1], [], []>} : vector<65x1152xbf16>, vector<1152x40xbf16>, vector<65x40xf32> -> vector<65x40xf32>
    %cst_4 = arith.constant 1.000000e-10 : f32
    %5 = vector.broadcast %cst_4 : f32 to vector<65x40xf32>
    %6 = arith.maximumf %4, %5 : vector<65x40xf32>
    %7 = math.log %6 : vector<65x40xf32>
    %cst_5 = arith.constant 0.434294492 : f32
    %8 = vector.broadcast %cst_5 : f32 to vector<65x40xf32>
    %9 = arith.mulf %7, %8 : vector<65x40xf32>
    %cst_6 = arith.constant 1.000000e+01 : f32
    %10 = vector.broadcast %cst_6 : f32 to vector<65x40xf32>
    %11 = arith.mulf %10, %9 : vector<65x40xf32>
    %cst_7 = arith.constant dense<0xFF800000> : vector<65xf32>
    %12 = vector.multi_reduction <maximumf>, %11, %cst_7 [1] : vector<65x40xf32> to vector<65xf32>
    %13 = vector.shape_cast %12 : vector<65xf32> to vector<65x1xf32>
    %cst_8 = arith.constant dense<0xFF800000> : vector<1xf32>
    %14 = vector.multi_reduction <maximumf>, %13, %cst_8 [0] : vector<65x1xf32> to vector<1xf32>
    %15 = vector.shape_cast %14 : vector<1xf32> to vector<1x1xf32>
    %cst_9 = arith.constant 8.000000e+01 : f32
    %16 = vector.broadcast %cst_9 : f32 to vector<1x1xf32>
    %17 = arith.subf %15, %16 : vector<1x1xf32>
    %18 = vector.broadcast %17 : vector<1x1xf32> to vector<65x40xf32>
    %19 = arith.maximumf %11, %18 : vector<65x40xf32>
    %20 = arith.truncf %19 : vector<65x40xf32> to vector<65x40xbf16>
    %c0_10 = arith.constant 0 : index
    %c0_11 = arith.constant 0 : index
    %21 = vector.load %arg3[%c0_10, %c0_11] : memref<40x13xbf16, #tpu.memory_space<vmem>>, vector<40x13xbf16>
    %cst_12 = arith.constant dense<0.000000e+00> : vector<65x13xf32>
    %22 = tpu.matmul %20, %21, %cst_12 {dimension_numbers = #tpu.dot_dimension_numbers<[1], [0], [0], [1], [0, 0, 1, 1], [], []>} : vector<65x40xbf16>, vector<40x13xbf16>, vector<65x13xf32> -> vector<65x13xf32>
    %23 = vector.extract_strided_slice %22 {offsets = [0, 0], sizes = [63, 13], strides = [1, 1]} : vector<65x13xf32> to vector<63x13xf32>
    %24 = vector.extract_strided_slice %22 {offsets = [1, 0], sizes = [63, 13], strides = [1, 1]} : vector<65x13xf32> to vector<63x13xf32>
    %25 = vector.extract_strided_slice %22 {offsets = [2, 0], sizes = [63, 13], strides = [1, 1]} : vector<65x13xf32> to vector<63x13xf32>
    %26 = tpu.concatenate %23, %24, %25 in 1 : vector<63x13xf32>, vector<63x13xf32>, vector<63x13xf32> -> vector<63x39xf32>
    %27 = arith.truncf %26 : vector<63x39xf32> to vector<63x39xbf16>
    %c0_13 = arith.constant 0 : index
    %c0_14 = arith.constant 0 : index
    %28 = vector.load %arg4[%c0_13, %c0_14] : memref<39x13xbf16, #tpu.memory_space<vmem>>, vector<39x13xbf16>
    %cst_15 = arith.constant dense<0.000000e+00> : vector<63x13xf32>
    %29 = tpu.matmul %27, %28, %cst_15 {dimension_numbers = #tpu.dot_dimension_numbers<[1], [0], [0], [1], [0, 0, 1, 1], [], []>} : vector<63x39xbf16>, vector<39x13xbf16>, vector<63x13xf32> -> vector<63x13xf32>
    %c0_16 = arith.constant 0 : index
    %c0_17 = arith.constant 0 : index
    %30 = vector.load %arg5[%c0_16, %c0_17] : memref<1x13xf32, #tpu.memory_space<vmem>>, vector<1x13xf32>
    %31 = vector.broadcast %30 : vector<1x13xf32> to vector<63x13xf32>
    %32 = arith.addf %29, %31 : vector<63x13xf32>
    %cst_18 = arith.constant 0.000000e+00 : f32
    %33 = vector.broadcast %cst_18 : f32 to vector<63x13xf32>
    %34 = arith.maximumf %32, %33 : vector<63x13xf32>
    %35 = tpu.iota {dimensions = array<i32: 0>} : vector<63x13xi32>
    %c0_i32 = arith.constant 0 : i32
    %36 = vector.broadcast %c0_i32 : i32 to vector<63x13xi32>
    %37 = arith.cmpi eq, %35, %36 : vector<63x13xi32>
    %c62_i32 = arith.constant 62 : i32
    %38 = vector.broadcast %c62_i32 : i32 to vector<63x13xi32>
    %39 = arith.cmpi eq, %35, %38 : vector<63x13xi32>
    %c1_i32 = arith.constant 1 : i32
    %40 = tpu.dynamic_rotate %34 by %c1_i32 dim 0 : vector<63x13xf32>, i32 -> vector<63x13xf32>
    %cst_19 = arith.constant 0.000000e+00 : f32
    %41 = vector.broadcast %cst_19 : f32 to vector<63x13xf32>
    %42 = arith.select %37, %41, %40 : vector<63x13xi1>, vector<63x13xf32>
    %c62_i32_20 = arith.constant 62 : i32
    %43 = tpu.dynamic_rotate %34 by %c62_i32_20 dim 0 : vector<63x13xf32>, i32 -> vector<63x13xf32>
    %cst_21 = arith.constant 0.000000e+00 : f32
    %44 = vector.broadcast %cst_21 : f32 to vector<63x13xf32>
    %45 = arith.select %39, %44, %43 : vector<63x13xi1>, vector<63x13xf32>
    %46 = arith.maximumf %42, %34 : vector<63x13xf32>
    %47 = arith.maximumf %46, %45 : vector<63x13xf32>
    %48 = arith.truncf %47 : vector<63x13xf32> to vector<63x13xbf16>
    %49 = tpu.iota {dimensions = array<i32: 0>} : vector<32x63xi32>
    %50 = tpu.iota {dimensions = array<i32: 1>} : vector<32x63xi32>
    %c2_i32 = arith.constant 2 : i32
    %51 = vector.broadcast %c2_i32 : i32 to vector<32x63xi32>
    %52 = arith.muli %51, %49 : vector<32x63xi32>
    %53 = arith.cmpi eq, %50, %52 : vector<32x63xi32>
    %54 = arith.extui %53 : vector<32x63xi1> to vector<32x63xi32>
    %55 = arith.sitofp %54 : vector<32x63xi32> to vector<32x63xf32>
    %56 = arith.truncf %55 : vector<32x63xf32> to vector<32x63xbf16>
    %cst_22 = arith.constant dense<0.000000e+00> : vector<32x13xf32>
    %57 = tpu.matmul %56, %48, %cst_22 {dimension_numbers = #tpu.dot_dimension_numbers<[1], [0], [0], [1], [0, 0, 1, 1], [], []>} : vector<32x63xbf16>, vector<63x13xbf16>, vector<32x13xf32> -> vector<32x13xf32>
    %58 = tpu.iota {dimensions = array<i32: 0>} : vector<32x13xi32>
    %c0_i32_23 = arith.constant 0 : i32
    %59 = vector.broadcast %c0_i32_23 : i32 to vector<32x13xi32>
    %60 = arith.cmpi eq, %58, %59 : vector<32x13xi32>
    %c31_i32 = arith.constant 31 : i32
    %61 = vector.broadcast %c31_i32 : i32 to vector<32x13xi32>
    %62 = arith.cmpi eq, %58, %61 : vector<32x13xi32>
    %c1_i32_24 = arith.constant 1 : i32
    %63 = tpu.dynamic_rotate %57 by %c1_i32_24 dim 0 : vector<32x13xf32>, i32 -> vector<32x13xf32>
    %cst_25 = arith.constant 0.000000e+00 : f32
    %64 = vector.broadcast %cst_25 : f32 to vector<32x13xf32>
    %65 = arith.select %60, %64, %63 : vector<32x13xi1>, vector<32x13xf32>
    %c31_i32_26 = arith.constant 31 : i32
    %66 = tpu.dynamic_rotate %57 by %c31_i32_26 dim 0 : vector<32x13xf32>, i32 -> vector<32x13xf32>
    %cst_27 = arith.constant 0.000000e+00 : f32
    %67 = vector.broadcast %cst_27 : f32 to vector<32x13xf32>
    %68 = arith.select %62, %67, %66 : vector<32x13xi1>, vector<32x13xf32>
    %69 = tpu.concatenate %65, %57, %68 in 1 : vector<32x13xf32>, vector<32x13xf32>, vector<32x13xf32> -> vector<32x39xf32>
    %70 = arith.truncf %69 : vector<32x39xf32> to vector<32x39xbf16>
    %c0_28 = arith.constant 0 : index
    %c0_29 = arith.constant 0 : index
    %71 = vector.load %arg6[%c0_28, %c0_29] : memref<39x24xbf16, #tpu.memory_space<vmem>>, vector<39x24xbf16>
    %cst_30 = arith.constant dense<0.000000e+00> : vector<32x24xf32>
    %72 = tpu.matmul %70, %71, %cst_30 {dimension_numbers = #tpu.dot_dimension_numbers<[1], [0], [0], [1], [0, 0, 1, 1], [], []>} : vector<32x39xbf16>, vector<39x24xbf16>, vector<32x24xf32> -> vector<32x24xf32>
    %c0_31 = arith.constant 0 : index
    %c0_32 = arith.constant 0 : index
    %73 = vector.load %arg7[%c0_31, %c0_32] : memref<1x24xf32, #tpu.memory_space<vmem>>, vector<1x24xf32>
    %74 = vector.broadcast %73 : vector<1x24xf32> to vector<32x24xf32>
    %75 = arith.addf %72, %74 : vector<32x24xf32>
    %cst_33 = arith.constant 0.000000e+00 : f32
    %76 = vector.broadcast %cst_33 : f32 to vector<32x24xf32>
    %77 = arith.maximumf %75, %76 : vector<32x24xf32>
    %78 = tpu.iota {dimensions = array<i32: 0>} : vector<32x24xi32>
    %c0_i32_34 = arith.constant 0 : i32
    %79 = vector.broadcast %c0_i32_34 : i32 to vector<32x24xi32>
    %80 = arith.cmpi eq, %78, %79 : vector<32x24xi32>
    %c31_i32_35 = arith.constant 31 : i32
    %81 = vector.broadcast %c31_i32_35 : i32 to vector<32x24xi32>
    %82 = arith.cmpi eq, %78, %81 : vector<32x24xi32>
    %c1_i32_36 = arith.constant 1 : i32
    %83 = tpu.dynamic_rotate %77 by %c1_i32_36 dim 0 : vector<32x24xf32>, i32 -> vector<32x24xf32>
    %cst_37 = arith.constant 0.000000e+00 : f32
    %84 = vector.broadcast %cst_37 : f32 to vector<32x24xf32>
    %85 = arith.select %80, %84, %83 : vector<32x24xi1>, vector<32x24xf32>
    %c31_i32_38 = arith.constant 31 : i32
    %86 = tpu.dynamic_rotate %77 by %c31_i32_38 dim 0 : vector<32x24xf32>, i32 -> vector<32x24xf32>
    %cst_39 = arith.constant 0.000000e+00 : f32
    %87 = vector.broadcast %cst_39 : f32 to vector<32x24xf32>
    %88 = arith.select %82, %87, %86 : vector<32x24xi1>, vector<32x24xf32>
    %89 = tpu.concatenate %85, %77, %88 in 1 : vector<32x24xf32>, vector<32x24xf32>, vector<32x24xf32> -> vector<32x72xf32>
    %90 = arith.truncf %89 : vector<32x72xf32> to vector<32x72xbf16>
    %c0_40 = arith.constant 0 : index
    %c0_41 = arith.constant 0 : index
    %91 = vector.load %arg8[%c0_40, %c0_41] : memref<72x24xbf16, #tpu.memory_space<vmem>>, vector<72x24xbf16>
    %cst_42 = arith.constant dense<0.000000e+00> : vector<32x24xf32>
    %92 = tpu.matmul %90, %91, %cst_42 {dimension_numbers = #tpu.dot_dimension_numbers<[1], [0], [0], [1], [0, 0, 1, 1], [], []>} : vector<32x72xbf16>, vector<72x24xbf16>, vector<32x24xf32> -> vector<32x24xf32>
    %c0_43 = arith.constant 0 : index
    %c0_44 = arith.constant 0 : index
    %93 = vector.load %arg9[%c0_43, %c0_44] : memref<1x24xf32, #tpu.memory_space<vmem>>, vector<1x24xf32>
    %94 = vector.broadcast %93 : vector<1x24xf32> to vector<32x24xf32>
    %95 = arith.addf %92, %94 : vector<32x24xf32>
    %96 = arith.truncf %57 : vector<32x13xf32> to vector<32x13xbf16>
    %c0_45 = arith.constant 0 : index
    %c0_46 = arith.constant 0 : index
    %97 = vector.load %arg10[%c0_45, %c0_46] : memref<13x24xbf16, #tpu.memory_space<vmem>>, vector<13x24xbf16>
    %cst_47 = arith.constant dense<0.000000e+00> : vector<32x24xf32>
    %98 = tpu.matmul %96, %97, %cst_47 {dimension_numbers = #tpu.dot_dimension_numbers<[1], [0], [0], [1], [0, 0, 1, 1], [], []>} : vector<32x13xbf16>, vector<13x24xbf16>, vector<32x24xf32> -> vector<32x24xf32>
    %c0_48 = arith.constant 0 : index
    %c0_49 = arith.constant 0 : index
    %99 = vector.load %arg11[%c0_48, %c0_49] : memref<1x24xf32, #tpu.memory_space<vmem>>, vector<1x24xf32>
    %100 = vector.broadcast %99 : vector<1x24xf32> to vector<32x24xf32>
    %101 = arith.addf %98, %100 : vector<32x24xf32>
    %102 = arith.addf %95, %101 : vector<32x24xf32>
    %cst_50 = arith.constant 0.000000e+00 : f32
    %103 = vector.broadcast %cst_50 : f32 to vector<32x24xf32>
    %104 = arith.maximumf %102, %103 : vector<32x24xf32>
    %c1_i32_51 = arith.constant 1 : i32
    %105 = tpu.dynamic_rotate %104 by %c1_i32_51 dim 0 : vector<32x24xf32>, i32 -> vector<32x24xf32>
    %cst_52 = arith.constant 0.000000e+00 : f32
    %106 = vector.broadcast %cst_52 : f32 to vector<32x24xf32>
    %107 = arith.select %80, %106, %105 : vector<32x24xi1>, vector<32x24xf32>
    %c31_i32_53 = arith.constant 31 : i32
    %108 = tpu.dynamic_rotate %104 by %c31_i32_53 dim 0 : vector<32x24xf32>, i32 -> vector<32x24xf32>
    %cst_54 = arith.constant 0.000000e+00 : f32
    %109 = vector.broadcast %cst_54 : f32 to vector<32x24xf32>
    %110 = arith.select %82, %109, %108 : vector<32x24xi1>, vector<32x24xf32>
    %111 = tpu.concatenate %107, %104, %110 in 1 : vector<32x24xf32>, vector<32x24xf32>, vector<32x24xf32> -> vector<32x72xf32>
    %112 = arith.truncf %111 : vector<32x72xf32> to vector<32x72xbf16>
    %c0_55 = arith.constant 0 : index
    %c0_56 = arith.constant 0 : index
    %113 = vector.load %arg12[%c0_55, %c0_56] : memref<72x24xbf16, #tpu.memory_space<vmem>>, vector<72x24xbf16>
    %cst_57 = arith.constant dense<0.000000e+00> : vector<32x24xf32>
    %114 = tpu.matmul %112, %113, %cst_57 {dimension_numbers = #tpu.dot_dimension_numbers<[1], [0], [0], [1], [0, 0, 1, 1], [], []>} : vector<32x72xbf16>, vector<72x24xbf16>, vector<32x24xf32> -> vector<32x24xf32>
    %c0_58 = arith.constant 0 : index
    %c0_59 = arith.constant 0 : index
    %115 = vector.load %arg13[%c0_58, %c0_59] : memref<1x24xf32, #tpu.memory_space<vmem>>, vector<1x24xf32>
    %116 = vector.broadcast %115 : vector<1x24xf32> to vector<32x24xf32>
    %117 = arith.addf %114, %116 : vector<32x24xf32>
    %cst_60 = arith.constant 0.000000e+00 : f32
    %118 = vector.broadcast %cst_60 : f32 to vector<32x24xf32>
    %119 = arith.maximumf %117, %118 : vector<32x24xf32>
    %c1_i32_61 = arith.constant 1 : i32
    %120 = tpu.dynamic_rotate %119 by %c1_i32_61 dim 0 : vector<32x24xf32>, i32 -> vector<32x24xf32>
    %cst_62 = arith.constant 0.000000e+00 : f32
    %121 = vector.broadcast %cst_62 : f32 to vector<32x24xf32>
    %122 = arith.select %80, %121, %120 : vector<32x24xi1>, vector<32x24xf32>
    %c31_i32_63 = arith.constant 31 : i32
    %123 = tpu.dynamic_rotate %119 by %c31_i32_63 dim 0 : vector<32x24xf32>, i32 -> vector<32x24xf32>
    %cst_64 = arith.constant 0.000000e+00 : f32
    %124 = vector.broadcast %cst_64 : f32 to vector<32x24xf32>
    %125 = arith.select %82, %124, %123 : vector<32x24xi1>, vector<32x24xf32>
    %126 = tpu.concatenate %122, %119, %125 in 1 : vector<32x24xf32>, vector<32x24xf32>, vector<32x24xf32> -> vector<32x72xf32>
    %127 = arith.truncf %126 : vector<32x72xf32> to vector<32x72xbf16>
    %c0_65 = arith.constant 0 : index
    %c0_66 = arith.constant 0 : index
    %128 = vector.load %arg14[%c0_65, %c0_66] : memref<72x24xbf16, #tpu.memory_space<vmem>>, vector<72x24xbf16>
    %cst_67 = arith.constant dense<0.000000e+00> : vector<32x24xf32>
    %129 = tpu.matmul %127, %128, %cst_67 {dimension_numbers = #tpu.dot_dimension_numbers<[1], [0], [0], [1], [0, 0, 1, 1], [], []>} : vector<32x72xbf16>, vector<72x24xbf16>, vector<32x24xf32> -> vector<32x24xf32>
    %c0_68 = arith.constant 0 : index
    %c0_69 = arith.constant 0 : index
    %130 = vector.load %arg15[%c0_68, %c0_69] : memref<1x24xf32, #tpu.memory_space<vmem>>, vector<1x24xf32>
    %131 = vector.broadcast %130 : vector<1x24xf32> to vector<32x24xf32>
    %132 = arith.addf %129, %131 : vector<32x24xf32>
    %133 = arith.addf %132, %104 : vector<32x24xf32>
    %cst_70 = arith.constant 0.000000e+00 : f32
    %134 = vector.broadcast %cst_70 : f32 to vector<32x24xf32>
    %135 = arith.maximumf %133, %134 : vector<32x24xf32>
    %c1_i32_71 = arith.constant 1 : i32
    %136 = tpu.dynamic_rotate %135 by %c1_i32_71 dim 0 : vector<32x24xf32>, i32 -> vector<32x24xf32>
    %cst_72 = arith.constant 0.000000e+00 : f32
    %137 = vector.broadcast %cst_72 : f32 to vector<32x24xf32>
    %138 = arith.select %80, %137, %136 : vector<32x24xi1>, vector<32x24xf32>
    %c31_i32_73 = arith.constant 31 : i32
    %139 = tpu.dynamic_rotate %135 by %c31_i32_73 dim 0 : vector<32x24xf32>, i32 -> vector<32x24xf32>
    %cst_74 = arith.constant 0.000000e+00 : f32
    %140 = vector.broadcast %cst_74 : f32 to vector<32x24xf32>
    %141 = arith.select %82, %140, %139 : vector<32x24xi1>, vector<32x24xf32>
    %142 = tpu.concatenate %138, %135, %141 in 1 : vector<32x24xf32>, vector<32x24xf32>, vector<32x24xf32> -> vector<32x72xf32>
    %143 = arith.truncf %142 : vector<32x72xf32> to vector<32x72xbf16>
    %c0_75 = arith.constant 0 : index
    %c0_76 = arith.constant 0 : index
    %144 = vector.load %arg16[%c0_75, %c0_76] : memref<72x24xbf16, #tpu.memory_space<vmem>>, vector<72x24xbf16>
    %cst_77 = arith.constant dense<0.000000e+00> : vector<32x24xf32>
    %145 = tpu.matmul %143, %144, %cst_77 {dimension_numbers = #tpu.dot_dimension_numbers<[1], [0], [0], [1], [0, 0, 1, 1], [], []>} : vector<32x72xbf16>, vector<72x24xbf16>, vector<32x24xf32> -> vector<32x24xf32>
    %c0_78 = arith.constant 0 : index
    %c0_79 = arith.constant 0 : index
    %146 = vector.load %arg17[%c0_78, %c0_79] : memref<1x24xf32, #tpu.memory_space<vmem>>, vector<1x24xf32>
    %147 = vector.broadcast %146 : vector<1x24xf32> to vector<32x24xf32>
    %148 = arith.addf %145, %147 : vector<32x24xf32>
    %cst_80 = arith.constant 0.000000e+00 : f32
    %149 = vector.broadcast %cst_80 : f32 to vector<32x24xf32>
    %150 = arith.maximumf %148, %149 : vector<32x24xf32>
    %c1_i32_81 = arith.constant 1 : i32
    %151 = tpu.dynamic_rotate %150 by %c1_i32_81 dim 0 : vector<32x24xf32>, i32 -> vector<32x24xf32>
    %cst_82 = arith.constant 0.000000e+00 : f32
    %152 = vector.broadcast %cst_82 : f32 to vector<32x24xf32>
    %153 = arith.select %80, %152, %151 : vector<32x24xi1>, vector<32x24xf32>
    %c31_i32_83 = arith.constant 31 : i32
    %154 = tpu.dynamic_rotate %150 by %c31_i32_83 dim 0 : vector<32x24xf32>, i32 -> vector<32x24xf32>
    %cst_84 = arith.constant 0.000000e+00 : f32
    %155 = vector.broadcast %cst_84 : f32 to vector<32x24xf32>
    %156 = arith.select %82, %155, %154 : vector<32x24xi1>, vector<32x24xf32>
    %157 = tpu.concatenate %153, %150, %156 in 1 : vector<32x24xf32>, vector<32x24xf32>, vector<32x24xf32> -> vector<32x72xf32>
    %158 = arith.truncf %157 : vector<32x72xf32> to vector<32x72xbf16>
    %c0_85 = arith.constant 0 : index
    %c0_86 = arith.constant 0 : index
    %159 = vector.load %arg18[%c0_85, %c0_86] : memref<72x24xbf16, #tpu.memory_space<vmem>>, vector<72x24xbf16>
    %cst_87 = arith.constant dense<0.000000e+00> : vector<32x24xf32>
    %160 = tpu.matmul %158, %159, %cst_87 {dimension_numbers = #tpu.dot_dimension_numbers<[1], [0], [0], [1], [0, 0, 1, 1], [], []>} : vector<32x72xbf16>, vector<72x24xbf16>, vector<32x24xf32> -> vector<32x24xf32>
    %c0_88 = arith.constant 0 : index
    %c0_89 = arith.constant 0 : index
    %161 = vector.load %arg19[%c0_88, %c0_89] : memref<1x24xf32, #tpu.memory_space<vmem>>, vector<1x24xf32>
    %162 = vector.broadcast %161 : vector<1x24xf32> to vector<32x24xf32>
    %163 = arith.addf %160, %162 : vector<32x24xf32>
    %164 = arith.addf %163, %135 : vector<32x24xf32>
    %cst_90 = arith.constant 0.000000e+00 : f32
    %165 = vector.broadcast %cst_90 : f32 to vector<32x24xf32>
    %166 = arith.maximumf %164, %165 : vector<32x24xf32>
    %c1_i32_91 = arith.constant 1 : i32
    %167 = tpu.dynamic_rotate %166 by %c1_i32_91 dim 0 : vector<32x24xf32>, i32 -> vector<32x24xf32>
    %cst_92 = arith.constant 0.000000e+00 : f32
    %168 = vector.broadcast %cst_92 : f32 to vector<32x24xf32>
    %169 = arith.select %80, %168, %167 : vector<32x24xi1>, vector<32x24xf32>
    %c31_i32_93 = arith.constant 31 : i32
    %170 = tpu.dynamic_rotate %166 by %c31_i32_93 dim 0 : vector<32x24xf32>, i32 -> vector<32x24xf32>
    %cst_94 = arith.constant 0.000000e+00 : f32
    %171 = vector.broadcast %cst_94 : f32 to vector<32x24xf32>
    %172 = arith.select %82, %171, %170 : vector<32x24xi1>, vector<32x24xf32>
    %173 = tpu.concatenate %169, %166, %172 in 1 : vector<32x24xf32>, vector<32x24xf32>, vector<32x24xf32> -> vector<32x72xf32>
    %174 = arith.truncf %173 : vector<32x72xf32> to vector<32x72xbf16>
    %175 = tpu.iota {dimensions = array<i32: 0>} : vector<16x32xi32>
    %176 = tpu.iota {dimensions = array<i32: 1>} : vector<16x32xi32>
    %c2_i32_95 = arith.constant 2 : i32
    %177 = vector.broadcast %c2_i32_95 : i32 to vector<16x32xi32>
    %178 = arith.muli %177, %175 : vector<16x32xi32>
    %179 = arith.cmpi eq, %176, %178 : vector<16x32xi32>
    %180 = arith.extui %179 : vector<16x32xi1> to vector<16x32xi32>
    %181 = arith.sitofp %180 : vector<16x32xi32> to vector<16x32xf32>
    %182 = arith.truncf %181 : vector<16x32xf32> to vector<16x32xbf16>
    %cst_96 = arith.constant dense<0.000000e+00> : vector<16x72xf32>
    %183 = tpu.matmul %182, %174, %cst_96 {dimension_numbers = #tpu.dot_dimension_numbers<[1], [0], [0], [1], [0, 0, 1, 1], [], []>} : vector<16x32xbf16>, vector<32x72xbf16>, vector<16x72xf32> -> vector<16x72xf32>
    %184 = arith.truncf %183 : vector<16x72xf32> to vector<16x72xbf16>
    %c0_97 = arith.constant 0 : index
    %c0_98 = arith.constant 0 : index
    %185 = vector.load %arg20[%c0_97, %c0_98] : memref<72x32xbf16, #tpu.memory_space<vmem>>, vector<72x32xbf16>
    %cst_99 = arith.constant dense<0.000000e+00> : vector<16x32xf32>
    %186 = tpu.matmul %184, %185, %cst_99 {dimension_numbers = #tpu.dot_dimension_numbers<[1], [0], [0], [1], [0, 0, 1, 1], [], []>} : vector<16x72xbf16>, vector<72x32xbf16>, vector<16x32xf32> -> vector<16x32xf32>
    %c0_100 = arith.constant 0 : index
    %c0_101 = arith.constant 0 : index
    %187 = vector.load %arg21[%c0_100, %c0_101] : memref<1x32xf32, #tpu.memory_space<vmem>>, vector<1x32xf32>
    %188 = vector.broadcast %187 : vector<1x32xf32> to vector<16x32xf32>
    %189 = arith.addf %186, %188 : vector<16x32xf32>
    %cst_102 = arith.constant 0.000000e+00 : f32
    %190 = vector.broadcast %cst_102 : f32 to vector<16x32xf32>
    %191 = arith.maximumf %189, %190 : vector<16x32xf32>
    %192 = tpu.iota {dimensions = array<i32: 0>} : vector<16x32xi32>
    %c0_i32_103 = arith.constant 0 : i32
    %193 = vector.broadcast %c0_i32_103 : i32 to vector<16x32xi32>
    %194 = arith.cmpi eq, %192, %193 : vector<16x32xi32>
    %c15_i32 = arith.constant 15 : i32
    %195 = vector.broadcast %c15_i32 : i32 to vector<16x32xi32>
    %196 = arith.cmpi eq, %192, %195 : vector<16x32xi32>
    %c1_i32_104 = arith.constant 1 : i32
    %197 = tpu.dynamic_rotate %191 by %c1_i32_104 dim 0 : vector<16x32xf32>, i32 -> vector<16x32xf32>
    %cst_105 = arith.constant 0.000000e+00 : f32
    %198 = vector.broadcast %cst_105 : f32 to vector<16x32xf32>
    %199 = arith.select %194, %198, %197 : vector<16x32xi1>, vector<16x32xf32>
    %c15_i32_106 = arith.constant 15 : i32
    %200 = tpu.dynamic_rotate %191 by %c15_i32_106 dim 0 : vector<16x32xf32>, i32 -> vector<16x32xf32>
    %cst_107 = arith.constant 0.000000e+00 : f32
    %201 = vector.broadcast %cst_107 : f32 to vector<16x32xf32>
    %202 = arith.select %196, %201, %200 : vector<16x32xi1>, vector<16x32xf32>
    %203 = tpu.concatenate %199, %191, %202 in 1 : vector<16x32xf32>, vector<16x32xf32>, vector<16x32xf32> -> vector<16x96xf32>
    %204 = arith.truncf %203 : vector<16x96xf32> to vector<16x96xbf16>
    %c0_108 = arith.constant 0 : index
    %c0_109 = arith.constant 0 : index
    %205 = vector.load %arg22[%c0_108, %c0_109] : memref<96x32xbf16, #tpu.memory_space<vmem>>, vector<96x32xbf16>
    %cst_110 = arith.constant dense<0.000000e+00> : vector<16x32xf32>
    %206 = tpu.matmul %204, %205, %cst_110 {dimension_numbers = #tpu.dot_dimension_numbers<[1], [0], [0], [1], [0, 0, 1, 1], [], []>} : vector<16x96xbf16>, vector<96x32xbf16>, vector<16x32xf32> -> vector<16x32xf32>
    %c0_111 = arith.constant 0 : index
    %c0_112 = arith.constant 0 : index
    %207 = vector.load %arg23[%c0_111, %c0_112] : memref<1x32xf32, #tpu.memory_space<vmem>>, vector<1x32xf32>
    %208 = vector.broadcast %207 : vector<1x32xf32> to vector<16x32xf32>
    %209 = arith.addf %206, %208 : vector<16x32xf32>
    %210 = arith.truncf %166 : vector<32x24xf32> to vector<32x24xbf16>
    %cst_113 = arith.constant dense<0.000000e+00> : vector<16x24xf32>
    %211 = tpu.matmul %182, %210, %cst_113 {dimension_numbers = #tpu.dot_dimension_numbers<[1], [0], [0], [1], [0, 0, 1, 1], [], []>} : vector<16x32xbf16>, vector<32x24xbf16>, vector<16x24xf32> -> vector<16x24xf32>
    %212 = arith.truncf %211 : vector<16x24xf32> to vector<16x24xbf16>
    %c0_114 = arith.constant 0 : index
    %c0_115 = arith.constant 0 : index
    %213 = vector.load %arg24[%c0_114, %c0_115] : memref<24x32xbf16, #tpu.memory_space<vmem>>, vector<24x32xbf16>
    %cst_116 = arith.constant dense<0.000000e+00> : vector<16x32xf32>
    %214 = tpu.matmul %212, %213, %cst_116 {dimension_numbers = #tpu.dot_dimension_numbers<[1], [0], [0], [1], [0, 0, 1, 1], [], []>} : vector<16x24xbf16>, vector<24x32xbf16>, vector<16x32xf32> -> vector<16x32xf32>
    %c0_117 = arith.constant 0 : index
    %c0_118 = arith.constant 0 : index
    %215 = vector.load %arg25[%c0_117, %c0_118] : memref<1x32xf32, #tpu.memory_space<vmem>>, vector<1x32xf32>
    %216 = vector.broadcast %215 : vector<1x32xf32> to vector<16x32xf32>
    %217 = arith.addf %214, %216 : vector<16x32xf32>
    %218 = arith.addf %209, %217 : vector<16x32xf32>
    %cst_119 = arith.constant 0.000000e+00 : f32
    %219 = vector.broadcast %cst_119 : f32 to vector<16x32xf32>
    %220 = arith.maximumf %218, %219 : vector<16x32xf32>
    %c1_i32_120 = arith.constant 1 : i32
    %221 = tpu.dynamic_rotate %220 by %c1_i32_120 dim 0 : vector<16x32xf32>, i32 -> vector<16x32xf32>
    %cst_121 = arith.constant 0.000000e+00 : f32
    %222 = vector.broadcast %cst_121 : f32 to vector<16x32xf32>
    %223 = arith.select %194, %222, %221 : vector<16x32xi1>, vector<16x32xf32>
    %c15_i32_122 = arith.constant 15 : i32
    %224 = tpu.dynamic_rotate %220 by %c15_i32_122 dim 0 : vector<16x32xf32>, i32 -> vector<16x32xf32>
    %cst_123 = arith.constant 0.000000e+00 : f32
    %225 = vector.broadcast %cst_123 : f32 to vector<16x32xf32>
    %226 = arith.select %196, %225, %224 : vector<16x32xi1>, vector<16x32xf32>
    %227 = tpu.concatenate %223, %220, %226 in 1 : vector<16x32xf32>, vector<16x32xf32>, vector<16x32xf32> -> vector<16x96xf32>
    %228 = arith.truncf %227 : vector<16x96xf32> to vector<16x96xbf16>
    %c0_124 = arith.constant 0 : index
    %c0_125 = arith.constant 0 : index
    %229 = vector.load %arg26[%c0_124, %c0_125] : memref<96x32xbf16, #tpu.memory_space<vmem>>, vector<96x32xbf16>
    %cst_126 = arith.constant dense<0.000000e+00> : vector<16x32xf32>
    %230 = tpu.matmul %228, %229, %cst_126 {dimension_numbers = #tpu.dot_dimension_numbers<[1], [0], [0], [1], [0, 0, 1, 1], [], []>} : vector<16x96xbf16>, vector<96x32xbf16>, vector<16x32xf32> -> vector<16x32xf32>
    %c0_127 = arith.constant 0 : index
    %c0_128 = arith.constant 0 : index
    %231 = vector.load %arg27[%c0_127, %c0_128] : memref<1x32xf32, #tpu.memory_space<vmem>>, vector<1x32xf32>
    %232 = vector.broadcast %231 : vector<1x32xf32> to vector<16x32xf32>
    %233 = arith.addf %230, %232 : vector<16x32xf32>
    %cst_129 = arith.constant 0.000000e+00 : f32
    %234 = vector.broadcast %cst_129 : f32 to vector<16x32xf32>
    %235 = arith.maximumf %233, %234 : vector<16x32xf32>
    %c1_i32_130 = arith.constant 1 : i32
    %236 = tpu.dynamic_rotate %235 by %c1_i32_130 dim 0 : vector<16x32xf32>, i32 -> vector<16x32xf32>
    %cst_131 = arith.constant 0.000000e+00 : f32
    %237 = vector.broadcast %cst_131 : f32 to vector<16x32xf32>
    %238 = arith.select %194, %237, %236 : vector<16x32xi1>, vector<16x32xf32>
    %c15_i32_132 = arith.constant 15 : i32
    %239 = tpu.dynamic_rotate %235 by %c15_i32_132 dim 0 : vector<16x32xf32>, i32 -> vector<16x32xf32>
    %cst_133 = arith.constant 0.000000e+00 : f32
    %240 = vector.broadcast %cst_133 : f32 to vector<16x32xf32>
    %241 = arith.select %196, %240, %239 : vector<16x32xi1>, vector<16x32xf32>
    %242 = tpu.concatenate %238, %235, %241 in 1 : vector<16x32xf32>, vector<16x32xf32>, vector<16x32xf32> -> vector<16x96xf32>
    %243 = arith.truncf %242 : vector<16x96xf32> to vector<16x96xbf16>
    %c0_134 = arith.constant 0 : index
    %c0_135 = arith.constant 0 : index
    %244 = vector.load %arg28[%c0_134, %c0_135] : memref<96x32xbf16, #tpu.memory_space<vmem>>, vector<96x32xbf16>
    %cst_136 = arith.constant dense<0.000000e+00> : vector<16x32xf32>
    %245 = tpu.matmul %243, %244, %cst_136 {dimension_numbers = #tpu.dot_dimension_numbers<[1], [0], [0], [1], [0, 0, 1, 1], [], []>} : vector<16x96xbf16>, vector<96x32xbf16>, vector<16x32xf32> -> vector<16x32xf32>
    %c0_137 = arith.constant 0 : index
    %c0_138 = arith.constant 0 : index
    %246 = vector.load %arg29[%c0_137, %c0_138] : memref<1x32xf32, #tpu.memory_space<vmem>>, vector<1x32xf32>
    %247 = vector.broadcast %246 : vector<1x32xf32> to vector<16x32xf32>
    %248 = arith.addf %245, %247 : vector<16x32xf32>
    %249 = arith.addf %248, %220 : vector<16x32xf32>
    %cst_139 = arith.constant 0.000000e+00 : f32
    %250 = vector.broadcast %cst_139 : f32 to vector<16x32xf32>
    %251 = arith.maximumf %249, %250 : vector<16x32xf32>
    %c1_i32_140 = arith.constant 1 : i32
    %252 = tpu.dynamic_rotate %251 by %c1_i32_140 dim 0 : vector<16x32xf32>, i32 -> vector<16x32xf32>
    %cst_141 = arith.constant 0.000000e+00 : f32
    %253 = vector.broadcast %cst_141 : f32 to vector<16x32xf32>
    %254 = arith.select %194, %253, %252 : vector<16x32xi1>, vector<16x32xf32>
    %c15_i32_142 = arith.constant 15 : i32
    %255 = tpu.dynamic_rotate %251 by %c15_i32_142 dim 0 : vector<16x32xf32>, i32 -> vector<16x32xf32>
    %cst_143 = arith.constant 0.000000e+00 : f32
    %256 = vector.broadcast %cst_143 : f32 to vector<16x32xf32>
    %257 = arith.select %196, %256, %255 : vector<16x32xi1>, vector<16x32xf32>
    %258 = tpu.concatenate %254, %251, %257 in 1 : vector<16x32xf32>, vector<16x32xf32>, vector<16x32xf32> -> vector<16x96xf32>
    %259 = arith.truncf %258 : vector<16x96xf32> to vector<16x96xbf16>
    %c0_144 = arith.constant 0 : index
    %c0_145 = arith.constant 0 : index
    %260 = vector.load %arg30[%c0_144, %c0_145] : memref<96x32xbf16, #tpu.memory_space<vmem>>, vector<96x32xbf16>
    %cst_146 = arith.constant dense<0.000000e+00> : vector<16x32xf32>
    %261 = tpu.matmul %259, %260, %cst_146 {dimension_numbers = #tpu.dot_dimension_numbers<[1], [0], [0], [1], [0, 0, 1, 1], [], []>} : vector<16x96xbf16>, vector<96x32xbf16>, vector<16x32xf32> -> vector<16x32xf32>
    %c0_147 = arith.constant 0 : index
    %c0_148 = arith.constant 0 : index
    %262 = vector.load %arg31[%c0_147, %c0_148] : memref<1x32xf32, #tpu.memory_space<vmem>>, vector<1x32xf32>
    %263 = vector.broadcast %262 : vector<1x32xf32> to vector<16x32xf32>
    %264 = arith.addf %261, %263 : vector<16x32xf32>
    %cst_149 = arith.constant 0.000000e+00 : f32
    %265 = vector.broadcast %cst_149 : f32 to vector<16x32xf32>
    %266 = arith.maximumf %264, %265 : vector<16x32xf32>
    %c1_i32_150 = arith.constant 1 : i32
    %267 = tpu.dynamic_rotate %266 by %c1_i32_150 dim 0 : vector<16x32xf32>, i32 -> vector<16x32xf32>
    %cst_151 = arith.constant 0.000000e+00 : f32
    %268 = vector.broadcast %cst_151 : f32 to vector<16x32xf32>
    %269 = arith.select %194, %268, %267 : vector<16x32xi1>, vector<16x32xf32>
    %c15_i32_152 = arith.constant 15 : i32
    %270 = tpu.dynamic_rotate %266 by %c15_i32_152 dim 0 : vector<16x32xf32>, i32 -> vector<16x32xf32>
    %cst_153 = arith.constant 0.000000e+00 : f32
    %271 = vector.broadcast %cst_153 : f32 to vector<16x32xf32>
    %272 = arith.select %196, %271, %270 : vector<16x32xi1>, vector<16x32xf32>
    %273 = tpu.concatenate %269, %266, %272 in 1 : vector<16x32xf32>, vector<16x32xf32>, vector<16x32xf32> -> vector<16x96xf32>
    %274 = arith.truncf %273 : vector<16x96xf32> to vector<16x96xbf16>
    %c0_154 = arith.constant 0 : index
    %c0_155 = arith.constant 0 : index
    %275 = vector.load %arg32[%c0_154, %c0_155] : memref<96x32xbf16, #tpu.memory_space<vmem>>, vector<96x32xbf16>
    %cst_156 = arith.constant dense<0.000000e+00> : vector<16x32xf32>
    %276 = tpu.matmul %274, %275, %cst_156 {dimension_numbers = #tpu.dot_dimension_numbers<[1], [0], [0], [1], [0, 0, 1, 1], [], []>} : vector<16x96xbf16>, vector<96x32xbf16>, vector<16x32xf32> -> vector<16x32xf32>
    %c0_157 = arith.constant 0 : index
    %c0_158 = arith.constant 0 : index
    %277 = vector.load %arg33[%c0_157, %c0_158] : memref<1x32xf32, #tpu.memory_space<vmem>>, vector<1x32xf32>
    %278 = vector.broadcast %277 : vector<1x32xf32> to vector<16x32xf32>
    %279 = arith.addf %276, %278 : vector<16x32xf32>
    %280 = arith.addf %279, %251 : vector<16x32xf32>
    %cst_159 = arith.constant 0.000000e+00 : f32
    %281 = vector.broadcast %cst_159 : f32 to vector<16x32xf32>
    %282 = arith.maximumf %280, %281 : vector<16x32xf32>
    %c1_i32_160 = arith.constant 1 : i32
    %283 = tpu.dynamic_rotate %282 by %c1_i32_160 dim 0 : vector<16x32xf32>, i32 -> vector<16x32xf32>
    %cst_161 = arith.constant 0.000000e+00 : f32
    %284 = vector.broadcast %cst_161 : f32 to vector<16x32xf32>
    %285 = arith.select %194, %284, %283 : vector<16x32xi1>, vector<16x32xf32>
    %c15_i32_162 = arith.constant 15 : i32
    %286 = tpu.dynamic_rotate %282 by %c15_i32_162 dim 0 : vector<16x32xf32>, i32 -> vector<16x32xf32>
    %cst_163 = arith.constant 0.000000e+00 : f32
    %287 = vector.broadcast %cst_163 : f32 to vector<16x32xf32>
    %288 = arith.select %196, %287, %286 : vector<16x32xi1>, vector<16x32xf32>
    %289 = tpu.concatenate %285, %282, %288 in 1 : vector<16x32xf32>, vector<16x32xf32>, vector<16x32xf32> -> vector<16x96xf32>
    %290 = arith.truncf %289 : vector<16x96xf32> to vector<16x96xbf16>
    %291 = tpu.iota {dimensions = array<i32: 0>} : vector<8x16xi32>
    %292 = tpu.iota {dimensions = array<i32: 1>} : vector<8x16xi32>
    %c2_i32_164 = arith.constant 2 : i32
    %293 = vector.broadcast %c2_i32_164 : i32 to vector<8x16xi32>
    %294 = arith.muli %293, %291 : vector<8x16xi32>
    %295 = arith.cmpi eq, %292, %294 : vector<8x16xi32>
    %296 = arith.extui %295 : vector<8x16xi1> to vector<8x16xi32>
    %297 = arith.sitofp %296 : vector<8x16xi32> to vector<8x16xf32>
    %298 = arith.truncf %297 : vector<8x16xf32> to vector<8x16xbf16>
    %cst_165 = arith.constant dense<0.000000e+00> : vector<8x96xf32>
    %299 = tpu.matmul %298, %290, %cst_165 {dimension_numbers = #tpu.dot_dimension_numbers<[1], [0], [0], [1], [0, 0, 1, 1], [], []>} : vector<8x16xbf16>, vector<16x96xbf16>, vector<8x96xf32> -> vector<8x96xf32>
    %300 = arith.truncf %299 : vector<8x96xf32> to vector<8x96xbf16>
    %c0_166 = arith.constant 0 : index
    %c0_167 = arith.constant 0 : index
    %301 = vector.load %arg34[%c0_166, %c0_167] : memref<96x48xbf16, #tpu.memory_space<vmem>>, vector<96x48xbf16>
    %cst_168 = arith.constant dense<0.000000e+00> : vector<8x48xf32>
    %302 = tpu.matmul %300, %301, %cst_168 {dimension_numbers = #tpu.dot_dimension_numbers<[1], [0], [0], [1], [0, 0, 1, 1], [], []>} : vector<8x96xbf16>, vector<96x48xbf16>, vector<8x48xf32> -> vector<8x48xf32>
    %c0_169 = arith.constant 0 : index
    %c0_170 = arith.constant 0 : index
    %303 = vector.load %arg35[%c0_169, %c0_170] : memref<1x48xf32, #tpu.memory_space<vmem>>, vector<1x48xf32>
    %304 = vector.broadcast %303 : vector<1x48xf32> to vector<8x48xf32>
    %305 = arith.addf %302, %304 : vector<8x48xf32>
    %cst_171 = arith.constant 0.000000e+00 : f32
    %306 = vector.broadcast %cst_171 : f32 to vector<8x48xf32>
    %307 = arith.maximumf %305, %306 : vector<8x48xf32>
    %308 = tpu.iota {dimensions = array<i32: 0>} : vector<8x48xi32>
    %c0_i32_172 = arith.constant 0 : i32
    %309 = vector.broadcast %c0_i32_172 : i32 to vector<8x48xi32>
    %310 = arith.cmpi eq, %308, %309 : vector<8x48xi32>
    %c7_i32 = arith.constant 7 : i32
    %311 = vector.broadcast %c7_i32 : i32 to vector<8x48xi32>
    %312 = arith.cmpi eq, %308, %311 : vector<8x48xi32>
    %c1_i32_173 = arith.constant 1 : i32
    %313 = tpu.dynamic_rotate %307 by %c1_i32_173 dim 0 : vector<8x48xf32>, i32 -> vector<8x48xf32>
    %cst_174 = arith.constant 0.000000e+00 : f32
    %314 = vector.broadcast %cst_174 : f32 to vector<8x48xf32>
    %315 = arith.select %310, %314, %313 : vector<8x48xi1>, vector<8x48xf32>
    %c7_i32_175 = arith.constant 7 : i32
    %316 = tpu.dynamic_rotate %307 by %c7_i32_175 dim 0 : vector<8x48xf32>, i32 -> vector<8x48xf32>
    %cst_176 = arith.constant 0.000000e+00 : f32
    %317 = vector.broadcast %cst_176 : f32 to vector<8x48xf32>
    %318 = arith.select %312, %317, %316 : vector<8x48xi1>, vector<8x48xf32>
    %319 = tpu.concatenate %315, %307, %318 in 1 : vector<8x48xf32>, vector<8x48xf32>, vector<8x48xf32> -> vector<8x144xf32>
    %320 = arith.truncf %319 : vector<8x144xf32> to vector<8x144xbf16>
    %c0_177 = arith.constant 0 : index
    %c0_178 = arith.constant 0 : index
    %321 = vector.load %arg36[%c0_177, %c0_178] : memref<144x48xbf16, #tpu.memory_space<vmem>>, vector<144x48xbf16>
    %cst_179 = arith.constant dense<0.000000e+00> : vector<8x48xf32>
    %322 = tpu.matmul %320, %321, %cst_179 {dimension_numbers = #tpu.dot_dimension_numbers<[1], [0], [0], [1], [0, 0, 1, 1], [], []>} : vector<8x144xbf16>, vector<144x48xbf16>, vector<8x48xf32> -> vector<8x48xf32>
    %c0_180 = arith.constant 0 : index
    %c0_181 = arith.constant 0 : index
    %323 = vector.load %arg37[%c0_180, %c0_181] : memref<1x48xf32, #tpu.memory_space<vmem>>, vector<1x48xf32>
    %324 = vector.broadcast %323 : vector<1x48xf32> to vector<8x48xf32>
    %325 = arith.addf %322, %324 : vector<8x48xf32>
    %326 = arith.truncf %282 : vector<16x32xf32> to vector<16x32xbf16>
    %cst_182 = arith.constant dense<0.000000e+00> : vector<8x32xf32>
    %327 = tpu.matmul %298, %326, %cst_182 {dimension_numbers = #tpu.dot_dimension_numbers<[1], [0], [0], [1], [0, 0, 1, 1], [], []>} : vector<8x16xbf16>, vector<16x32xbf16>, vector<8x32xf32> -> vector<8x32xf32>
    %328 = arith.truncf %327 : vector<8x32xf32> to vector<8x32xbf16>
    %c0_183 = arith.constant 0 : index
    %c0_184 = arith.constant 0 : index
    %329 = vector.load %arg38[%c0_183, %c0_184] : memref<32x48xbf16, #tpu.memory_space<vmem>>, vector<32x48xbf16>
    %cst_185 = arith.constant dense<0.000000e+00> : vector<8x48xf32>
    %330 = tpu.matmul %328, %329, %cst_185 {dimension_numbers = #tpu.dot_dimension_numbers<[1], [0], [0], [1], [0, 0, 1, 1], [], []>} : vector<8x32xbf16>, vector<32x48xbf16>, vector<8x48xf32> -> vector<8x48xf32>
    %c0_186 = arith.constant 0 : index
    %c0_187 = arith.constant 0 : index
    %331 = vector.load %arg39[%c0_186, %c0_187] : memref<1x48xf32, #tpu.memory_space<vmem>>, vector<1x48xf32>
    %332 = vector.broadcast %331 : vector<1x48xf32> to vector<8x48xf32>
    %333 = arith.addf %330, %332 : vector<8x48xf32>
    %334 = arith.addf %325, %333 : vector<8x48xf32>
    %cst_188 = arith.constant 0.000000e+00 : f32
    %335 = vector.broadcast %cst_188 : f32 to vector<8x48xf32>
    %336 = arith.maximumf %334, %335 : vector<8x48xf32>
    %c1_i32_189 = arith.constant 1 : i32
    %337 = tpu.dynamic_rotate %336 by %c1_i32_189 dim 0 : vector<8x48xf32>, i32 -> vector<8x48xf32>
    %cst_190 = arith.constant 0.000000e+00 : f32
    %338 = vector.broadcast %cst_190 : f32 to vector<8x48xf32>
    %339 = arith.select %310, %338, %337 : vector<8x48xi1>, vector<8x48xf32>
    %c7_i32_191 = arith.constant 7 : i32
    %340 = tpu.dynamic_rotate %336 by %c7_i32_191 dim 0 : vector<8x48xf32>, i32 -> vector<8x48xf32>
    %cst_192 = arith.constant 0.000000e+00 : f32
    %341 = vector.broadcast %cst_192 : f32 to vector<8x48xf32>
    %342 = arith.select %312, %341, %340 : vector<8x48xi1>, vector<8x48xf32>
    %343 = tpu.concatenate %339, %336, %342 in 1 : vector<8x48xf32>, vector<8x48xf32>, vector<8x48xf32> -> vector<8x144xf32>
    %344 = arith.truncf %343 : vector<8x144xf32> to vector<8x144xbf16>
    %c0_193 = arith.constant 0 : index
    %c0_194 = arith.constant 0 : index
    %345 = vector.load %arg40[%c0_193, %c0_194] : memref<144x48xbf16, #tpu.memory_space<vmem>>, vector<144x48xbf16>
    %cst_195 = arith.constant dense<0.000000e+00> : vector<8x48xf32>
    %346 = tpu.matmul %344, %345, %cst_195 {dimension_numbers = #tpu.dot_dimension_numbers<[1], [0], [0], [1], [0, 0, 1, 1], [], []>} : vector<8x144xbf16>, vector<144x48xbf16>, vector<8x48xf32> -> vector<8x48xf32>
    %c0_196 = arith.constant 0 : index
    %c0_197 = arith.constant 0 : index
    %347 = vector.load %arg41[%c0_196, %c0_197] : memref<1x48xf32, #tpu.memory_space<vmem>>, vector<1x48xf32>
    %348 = vector.broadcast %347 : vector<1x48xf32> to vector<8x48xf32>
    %349 = arith.addf %346, %348 : vector<8x48xf32>
    %cst_198 = arith.constant 0.000000e+00 : f32
    %350 = vector.broadcast %cst_198 : f32 to vector<8x48xf32>
    %351 = arith.maximumf %349, %350 : vector<8x48xf32>
    %c1_i32_199 = arith.constant 1 : i32
    %352 = tpu.dynamic_rotate %351 by %c1_i32_199 dim 0 : vector<8x48xf32>, i32 -> vector<8x48xf32>
    %cst_200 = arith.constant 0.000000e+00 : f32
    %353 = vector.broadcast %cst_200 : f32 to vector<8x48xf32>
    %354 = arith.select %310, %353, %352 : vector<8x48xi1>, vector<8x48xf32>
    %c7_i32_201 = arith.constant 7 : i32
    %355 = tpu.dynamic_rotate %351 by %c7_i32_201 dim 0 : vector<8x48xf32>, i32 -> vector<8x48xf32>
    %cst_202 = arith.constant 0.000000e+00 : f32
    %356 = vector.broadcast %cst_202 : f32 to vector<8x48xf32>
    %357 = arith.select %312, %356, %355 : vector<8x48xi1>, vector<8x48xf32>
    %358 = tpu.concatenate %354, %351, %357 in 1 : vector<8x48xf32>, vector<8x48xf32>, vector<8x48xf32> -> vector<8x144xf32>
    %359 = arith.truncf %358 : vector<8x144xf32> to vector<8x144xbf16>
    %c0_203 = arith.constant 0 : index
    %c0_204 = arith.constant 0 : index
    %360 = vector.load %arg42[%c0_203, %c0_204] : memref<144x48xbf16, #tpu.memory_space<vmem>>, vector<144x48xbf16>
    %cst_205 = arith.constant dense<0.000000e+00> : vector<8x48xf32>
    %361 = tpu.matmul %359, %360, %cst_205 {dimension_numbers = #tpu.dot_dimension_numbers<[1], [0], [0], [1], [0, 0, 1, 1], [], []>} : vector<8x144xbf16>, vector<144x48xbf16>, vector<8x48xf32> -> vector<8x48xf32>
    %c0_206 = arith.constant 0 : index
    %c0_207 = arith.constant 0 : index
    %362 = vector.load %arg43[%c0_206, %c0_207] : memref<1x48xf32, #tpu.memory_space<vmem>>, vector<1x48xf32>
    %363 = vector.broadcast %362 : vector<1x48xf32> to vector<8x48xf32>
    %364 = arith.addf %361, %363 : vector<8x48xf32>
    %365 = arith.addf %364, %336 : vector<8x48xf32>
    %cst_208 = arith.constant 0.000000e+00 : f32
    %366 = vector.broadcast %cst_208 : f32 to vector<8x48xf32>
    %367 = arith.maximumf %365, %366 : vector<8x48xf32>
    %c1_i32_209 = arith.constant 1 : i32
    %368 = tpu.dynamic_rotate %367 by %c1_i32_209 dim 0 : vector<8x48xf32>, i32 -> vector<8x48xf32>
    %cst_210 = arith.constant 0.000000e+00 : f32
    %369 = vector.broadcast %cst_210 : f32 to vector<8x48xf32>
    %370 = arith.select %310, %369, %368 : vector<8x48xi1>, vector<8x48xf32>
    %c7_i32_211 = arith.constant 7 : i32
    %371 = tpu.dynamic_rotate %367 by %c7_i32_211 dim 0 : vector<8x48xf32>, i32 -> vector<8x48xf32>
    %cst_212 = arith.constant 0.000000e+00 : f32
    %372 = vector.broadcast %cst_212 : f32 to vector<8x48xf32>
    %373 = arith.select %312, %372, %371 : vector<8x48xi1>, vector<8x48xf32>
    %374 = tpu.concatenate %370, %367, %373 in 1 : vector<8x48xf32>, vector<8x48xf32>, vector<8x48xf32> -> vector<8x144xf32>
    %375 = arith.truncf %374 : vector<8x144xf32> to vector<8x144xbf16>
    %376 = tpu.iota {dimensions = array<i32: 0>} : vector<4x8xi32>
    %377 = tpu.iota {dimensions = array<i32: 1>} : vector<4x8xi32>
    %c2_i32_213 = arith.constant 2 : i32
    %378 = vector.broadcast %c2_i32_213 : i32 to vector<4x8xi32>
    %379 = arith.muli %378, %376 : vector<4x8xi32>
    %380 = arith.cmpi eq, %377, %379 : vector<4x8xi32>
    %381 = arith.extui %380 : vector<4x8xi1> to vector<4x8xi32>
    %382 = arith.sitofp %381 : vector<4x8xi32> to vector<4x8xf32>
    %383 = arith.truncf %382 : vector<4x8xf32> to vector<4x8xbf16>
    %cst_214 = arith.constant dense<0.000000e+00> : vector<4x144xf32>
    %384 = tpu.matmul %383, %375, %cst_214 {dimension_numbers = #tpu.dot_dimension_numbers<[1], [0], [0], [1], [0, 0, 1, 1], [], []>} : vector<4x8xbf16>, vector<8x144xbf16>, vector<4x144xf32> -> vector<4x144xf32>
    %385 = arith.truncf %384 : vector<4x144xf32> to vector<4x144xbf16>
    %c0_215 = arith.constant 0 : index
    %c0_216 = arith.constant 0 : index
    %386 = vector.load %arg44[%c0_215, %c0_216] : memref<144x60xbf16, #tpu.memory_space<vmem>>, vector<144x60xbf16>
    %cst_217 = arith.constant dense<0.000000e+00> : vector<4x60xf32>
    %387 = tpu.matmul %385, %386, %cst_217 {dimension_numbers = #tpu.dot_dimension_numbers<[1], [0], [0], [1], [0, 0, 1, 1], [], []>} : vector<4x144xbf16>, vector<144x60xbf16>, vector<4x60xf32> -> vector<4x60xf32>
    %c0_218 = arith.constant 0 : index
    %c0_219 = arith.constant 0 : index
    %388 = vector.load %arg45[%c0_218, %c0_219] : memref<1x60xf32, #tpu.memory_space<vmem>>, vector<1x60xf32>
    %389 = vector.broadcast %388 : vector<1x60xf32> to vector<4x60xf32>
    %390 = arith.addf %387, %389 : vector<4x60xf32>
    %cst_220 = arith.constant 0.000000e+00 : f32
    %391 = vector.broadcast %cst_220 : f32 to vector<4x60xf32>
    %392 = arith.maximumf %390, %391 : vector<4x60xf32>
    %393 = tpu.iota {dimensions = array<i32: 0>} : vector<4x60xi32>
    %c0_i32_221 = arith.constant 0 : i32
    %394 = vector.broadcast %c0_i32_221 : i32 to vector<4x60xi32>
    %395 = arith.cmpi eq, %393, %394 : vector<4x60xi32>
    %c3_i32 = arith.constant 3 : i32
    %396 = vector.broadcast %c3_i32 : i32 to vector<4x60xi32>
    %397 = arith.cmpi eq, %393, %396 : vector<4x60xi32>
    %c1_i32_222 = arith.constant 1 : i32
    %398 = tpu.dynamic_rotate %392 by %c1_i32_222 dim 0 : vector<4x60xf32>, i32 -> vector<4x60xf32>
    %cst_223 = arith.constant 0.000000e+00 : f32
    %399 = vector.broadcast %cst_223 : f32 to vector<4x60xf32>
    %400 = arith.select %395, %399, %398 : vector<4x60xi1>, vector<4x60xf32>
    %c3_i32_224 = arith.constant 3 : i32
    %401 = tpu.dynamic_rotate %392 by %c3_i32_224 dim 0 : vector<4x60xf32>, i32 -> vector<4x60xf32>
    %cst_225 = arith.constant 0.000000e+00 : f32
    %402 = vector.broadcast %cst_225 : f32 to vector<4x60xf32>
    %403 = arith.select %397, %402, %401 : vector<4x60xi1>, vector<4x60xf32>
    %404 = tpu.concatenate %400, %392, %403 in 1 : vector<4x60xf32>, vector<4x60xf32>, vector<4x60xf32> -> vector<4x180xf32>
    %405 = arith.truncf %404 : vector<4x180xf32> to vector<4x180xbf16>
    %c0_226 = arith.constant 0 : index
    %c0_227 = arith.constant 0 : index
    %406 = vector.load %arg46[%c0_226, %c0_227] : memref<180x60xbf16, #tpu.memory_space<vmem>>, vector<180x60xbf16>
    %cst_228 = arith.constant dense<0.000000e+00> : vector<4x60xf32>
    %407 = tpu.matmul %405, %406, %cst_228 {dimension_numbers = #tpu.dot_dimension_numbers<[1], [0], [0], [1], [0, 0, 1, 1], [], []>} : vector<4x180xbf16>, vector<180x60xbf16>, vector<4x60xf32> -> vector<4x60xf32>
    %c0_229 = arith.constant 0 : index
    %c0_230 = arith.constant 0 : index
    %408 = vector.load %arg47[%c0_229, %c0_230] : memref<1x60xf32, #tpu.memory_space<vmem>>, vector<1x60xf32>
    %409 = vector.broadcast %408 : vector<1x60xf32> to vector<4x60xf32>
    %410 = arith.addf %407, %409 : vector<4x60xf32>
    %411 = arith.truncf %367 : vector<8x48xf32> to vector<8x48xbf16>
    %cst_231 = arith.constant dense<0.000000e+00> : vector<4x48xf32>
    %412 = tpu.matmul %383, %411, %cst_231 {dimension_numbers = #tpu.dot_dimension_numbers<[1], [0], [0], [1], [0, 0, 1, 1], [], []>} : vector<4x8xbf16>, vector<8x48xbf16>, vector<4x48xf32> -> vector<4x48xf32>
    %413 = arith.truncf %412 : vector<4x48xf32> to vector<4x48xbf16>
    %c0_232 = arith.constant 0 : index
    %c0_233 = arith.constant 0 : index
    %414 = vector.load %arg48[%c0_232, %c0_233] : memref<48x60xbf16, #tpu.memory_space<vmem>>, vector<48x60xbf16>
    %cst_234 = arith.constant dense<0.000000e+00> : vector<4x60xf32>
    %415 = tpu.matmul %413, %414, %cst_234 {dimension_numbers = #tpu.dot_dimension_numbers<[1], [0], [0], [1], [0, 0, 1, 1], [], []>} : vector<4x48xbf16>, vector<48x60xbf16>, vector<4x60xf32> -> vector<4x60xf32>
    %c0_235 = arith.constant 0 : index
    %c0_236 = arith.constant 0 : index
    %416 = vector.load %arg49[%c0_235, %c0_236] : memref<1x60xf32, #tpu.memory_space<vmem>>, vector<1x60xf32>
    %417 = vector.broadcast %416 : vector<1x60xf32> to vector<4x60xf32>
    %418 = arith.addf %415, %417 : vector<4x60xf32>
    %419 = arith.addf %410, %418 : vector<4x60xf32>
    %cst_237 = arith.constant 0.000000e+00 : f32
    %420 = vector.broadcast %cst_237 : f32 to vector<4x60xf32>
    %421 = arith.maximumf %419, %420 : vector<4x60xf32>
    %c1_i32_238 = arith.constant 1 : i32
    %422 = tpu.dynamic_rotate %421 by %c1_i32_238 dim 0 : vector<4x60xf32>, i32 -> vector<4x60xf32>
    %cst_239 = arith.constant 0.000000e+00 : f32
    %423 = vector.broadcast %cst_239 : f32 to vector<4x60xf32>
    %424 = arith.select %395, %423, %422 : vector<4x60xi1>, vector<4x60xf32>
    %c3_i32_240 = arith.constant 3 : i32
    %425 = tpu.dynamic_rotate %421 by %c3_i32_240 dim 0 : vector<4x60xf32>, i32 -> vector<4x60xf32>
    %cst_241 = arith.constant 0.000000e+00 : f32
    %426 = vector.broadcast %cst_241 : f32 to vector<4x60xf32>
    %427 = arith.select %397, %426, %425 : vector<4x60xi1>, vector<4x60xf32>
    %428 = tpu.concatenate %424, %421, %427 in 1 : vector<4x60xf32>, vector<4x60xf32>, vector<4x60xf32> -> vector<4x180xf32>
    %429 = arith.truncf %428 : vector<4x180xf32> to vector<4x180xbf16>
    %c0_242 = arith.constant 0 : index
    %c0_243 = arith.constant 0 : index
    %430 = vector.load %arg50[%c0_242, %c0_243] : memref<180x60xbf16, #tpu.memory_space<vmem>>, vector<180x60xbf16>
    %cst_244 = arith.constant dense<0.000000e+00> : vector<4x60xf32>
    %431 = tpu.matmul %429, %430, %cst_244 {dimension_numbers = #tpu.dot_dimension_numbers<[1], [0], [0], [1], [0, 0, 1, 1], [], []>} : vector<4x180xbf16>, vector<180x60xbf16>, vector<4x60xf32> -> vector<4x60xf32>
    %c0_245 = arith.constant 0 : index
    %c0_246 = arith.constant 0 : index
    %432 = vector.load %arg51[%c0_245, %c0_246] : memref<1x60xf32, #tpu.memory_space<vmem>>, vector<1x60xf32>
    %433 = vector.broadcast %432 : vector<1x60xf32> to vector<4x60xf32>
    %434 = arith.addf %431, %433 : vector<4x60xf32>
    %cst_247 = arith.constant 0.000000e+00 : f32
    %435 = vector.broadcast %cst_247 : f32 to vector<4x60xf32>
    %436 = arith.maximumf %434, %435 : vector<4x60xf32>
    %c1_i32_248 = arith.constant 1 : i32
    %437 = tpu.dynamic_rotate %436 by %c1_i32_248 dim 0 : vector<4x60xf32>, i32 -> vector<4x60xf32>
    %cst_249 = arith.constant 0.000000e+00 : f32
    %438 = vector.broadcast %cst_249 : f32 to vector<4x60xf32>
    %439 = arith.select %395, %438, %437 : vector<4x60xi1>, vector<4x60xf32>
    %c3_i32_250 = arith.constant 3 : i32
    %440 = tpu.dynamic_rotate %436 by %c3_i32_250 dim 0 : vector<4x60xf32>, i32 -> vector<4x60xf32>
    %cst_251 = arith.constant 0.000000e+00 : f32
    %441 = vector.broadcast %cst_251 : f32 to vector<4x60xf32>
    %442 = arith.select %397, %441, %440 : vector<4x60xi1>, vector<4x60xf32>
    %443 = tpu.concatenate %439, %436, %442 in 1 : vector<4x60xf32>, vector<4x60xf32>, vector<4x60xf32> -> vector<4x180xf32>
    %444 = arith.truncf %443 : vector<4x180xf32> to vector<4x180xbf16>
    %c0_252 = arith.constant 0 : index
    %c0_253 = arith.constant 0 : index
    %445 = vector.load %arg52[%c0_252, %c0_253] : memref<180x60xbf16, #tpu.memory_space<vmem>>, vector<180x60xbf16>
    %cst_254 = arith.constant dense<0.000000e+00> : vector<4x60xf32>
    %446 = tpu.matmul %444, %445, %cst_254 {dimension_numbers = #tpu.dot_dimension_numbers<[1], [0], [0], [1], [0, 0, 1, 1], [], []>} : vector<4x180xbf16>, vector<180x60xbf16>, vector<4x60xf32> -> vector<4x60xf32>
    %c0_255 = arith.constant 0 : index
    %c0_256 = arith.constant 0 : index
    %447 = vector.load %arg53[%c0_255, %c0_256] : memref<1x60xf32, #tpu.memory_space<vmem>>, vector<1x60xf32>
    %448 = vector.broadcast %447 : vector<1x60xf32> to vector<4x60xf32>
    %449 = arith.addf %446, %448 : vector<4x60xf32>
    %450 = arith.addf %449, %421 : vector<4x60xf32>
    %cst_257 = arith.constant 0.000000e+00 : f32
    %451 = vector.broadcast %cst_257 : f32 to vector<4x60xf32>
    %452 = arith.maximumf %450, %451 : vector<4x60xf32>
    %cst_258 = arith.constant dense<0.000000e+00> : vector<60xf32>
    %453 = vector.multi_reduction <add>, %452, %cst_258 [0] : vector<4x60xf32> to vector<60xf32>
    %454 = vector.shape_cast %453 : vector<60xf32> to vector<1x60xf32>
    %cst_259 = arith.constant 4.000000e+00 : f32
    %455 = vector.broadcast %cst_259 : f32 to vector<1x60xf32>
    %456 = arith.divf %454, %455 : vector<1x60xf32>
    %457 = arith.truncf %456 : vector<1x60xf32> to vector<1x60xbf16>
    %c0_260 = arith.constant 0 : index
    %c0_261 = arith.constant 0 : index
    %458 = vector.load %arg54[%c0_260, %c0_261] : memref<60x60xbf16, #tpu.memory_space<vmem>>, vector<60x60xbf16>
    %cst_262 = arith.constant dense<0.000000e+00> : vector<1x60xf32>
    %459 = tpu.matmul %457, %458, %cst_262 {dimension_numbers = #tpu.dot_dimension_numbers<[1], [0], [0], [1], [0, 0, 1, 1], [], []>} : vector<1x60xbf16>, vector<60x60xbf16>, vector<1x60xf32> -> vector<1x60xf32>
    %c0_263 = arith.constant 0 : index
    %c0_264 = arith.constant 0 : index
    %460 = vector.load %arg55[%c0_263, %c0_264] : memref<1x60xf32, #tpu.memory_space<vmem>>, vector<1x60xf32>
    %461 = arith.addf %459, %460 : vector<1x60xf32>
    %cst_265 = arith.constant 0.000000e+00 : f32
    %462 = vector.broadcast %cst_265 : f32 to vector<1x60xf32>
    %463 = arith.maximumf %461, %462 : vector<1x60xf32>
    %464 = arith.truncf %463 : vector<1x60xf32> to vector<1x60xbf16>
    %c0_266 = arith.constant 0 : index
    %c0_267 = arith.constant 0 : index
    %465 = vector.load %arg56[%c0_266, %c0_267] : memref<60x2xbf16, #tpu.memory_space<vmem>>, vector<60x2xbf16>
    %cst_268 = arith.constant dense<0.000000e+00> : vector<1x2xf32>
    %466 = tpu.matmul %464, %465, %cst_268 {dimension_numbers = #tpu.dot_dimension_numbers<[1], [0], [0], [1], [0, 0, 1, 1], [], []>} : vector<1x60xbf16>, vector<60x2xbf16>, vector<1x2xf32> -> vector<1x2xf32>
    %c0_269 = arith.constant 0 : index
    %c0_270 = arith.constant 0 : index
    %467 = vector.load %arg57[%c0_269, %c0_270] : memref<1x2xf32, #tpu.memory_space<vmem>>, vector<1x2xf32>
    %468 = arith.addf %466, %467 : vector<1x2xf32>
    %cst_271 = arith.constant dense<0xFF800000> : vector<1xf32>
    %469 = vector.multi_reduction <maximumf>, %468, %cst_271 [1] : vector<1x2xf32> to vector<1xf32>
    %470 = vector.shape_cast %469 : vector<1xf32> to vector<1x1xf32>
    %471 = vector.broadcast %470 : vector<1x1xf32> to vector<1x2xf32>
    %472 = arith.subf %468, %471 : vector<1x2xf32>
    %473 = math.exp %472 : vector<1x2xf32>
    %cst_272 = arith.constant dense<0.000000e+00> : vector<1xf32>
    %474 = vector.multi_reduction <add>, %473, %cst_272 [1] : vector<1x2xf32> to vector<1xf32>
    %475 = vector.shape_cast %474 : vector<1xf32> to vector<1x1xf32>
    %476 = vector.broadcast %475 : vector<1x1xf32> to vector<1x2xf32>
    %477 = arith.divf %473, %476 : vector<1x2xf32>
    %c0_273 = arith.constant 0 : index
    %c0_274 = arith.constant 0 : index
    %c0_275 = arith.constant 0 : index
    %478 = vector.load %arg58[%c0_273, %c0_274, %c0_275] : memref<1x1x2xf32, #tpu.memory_space<vmem>>, vector<1x1x2xf32>
    %479 = vector.shape_cast %478 : vector<1x1x2xf32> to vector<1x2xf32>
    %480 = vector.shape_cast %477 : vector<1x2xf32> to vector<1x1x2xf32>
    tpu.vector_store %arg58[%c0_273, %c0_274, %c0_275], %480 {strides = array<i32>} : memref<1x1x2xf32, #tpu.memory_space<vmem>>, vector<1x1x2xf32>,
    return
  }
  func.func @transform_0(%arg0: i32) -> (i32, i32, i32) {
    %c0_i32 = arith.constant 0 : i32
    %c0_i32_0 = arith.constant 0 : i32
    %c0_i32_1 = arith.constant 0 : i32
    return %arg0, %c0_i32, %c0_i32_0 : i32, i32, i32
  }
  func.func @transform_1(%arg0: i32) -> (i32, i32) {
    %c0_i32 = arith.constant 0 : i32
    %c0_i32_0 = arith.constant 0 : i32
    %c0_i32_1 = arith.constant 0 : i32
    return %c0_i32, %c0_i32_0 : i32, i32
  }
  func.func @transform_2(%arg0: i32) -> (i32, i32) {
    %c0_i32 = arith.constant 0 : i32
    %c0_i32_0 = arith.constant 0 : i32
    %c0_i32_1 = arith.constant 0 : i32
    return %c0_i32, %c0_i32_0 : i32, i32
  }
  func.func @transform_3(%arg0: i32) -> (i32, i32) {
    %c0_i32 = arith.constant 0 : i32
    %c0_i32_0 = arith.constant 0 : i32
    %c0_i32_1 = arith.constant 0 : i32
    return %c0_i32, %c0_i32_0 : i32, i32
  }
  func.func @transform_4(%arg0: i32) -> (i32, i32) {
    %c0_i32 = arith.constant 0 : i32
    %c0_i32_0 = arith.constant 0 : i32
    %c0_i32_1 = arith.constant 0 : i32
    return %c0_i32, %c0_i32_0 : i32, i32
  }
  func.func @transform_5(%arg0: i32) -> (i32, i32) {
    %c0_i32 = arith.constant 0 : i32
    %c0_i32_0 = arith.constant 0 : i32
    %c0_i32_1 = arith.constant 0 : i32
    return %c0_i32, %c0_i32_0 : i32, i32
  }
  func.func @transform_6(%arg0: i32) -> (i32, i32) {
    %c0_i32 = arith.constant 0 : i32
    %c0_i32_0 = arith.constant 0 : i32
    %c0_i32_1 = arith.constant 0 : i32
    return %c0_i32, %c0_i32_0 : i32, i32
  }
  func.func @transform_7(%arg0: i32) -> (i32, i32) {
    %c0_i32 = arith.constant 0 : i32
    %c0_i32_0 = arith.constant 0 : i32
    %c0_i32_1 = arith.constant 0 : i32
    return %c0_i32, %c0_i32_0 : i32, i32
  }
  func.func @transform_8(%arg0: i32) -> (i32, i32) {
    %c0_i32 = arith.constant 0 : i32
    %c0_i32_0 = arith.constant 0 : i32
    %c0_i32_1 = arith.constant 0 : i32
    return %c0_i32, %c0_i32_0 : i32, i32
  }
  func.func @transform_9(%arg0: i32) -> (i32, i32) {
    %c0_i32 = arith.constant 0 : i32
    %c0_i32_0 = arith.constant 0 : i32
    %c0_i32_1 = arith.constant 0 : i32
    return %c0_i32, %c0_i32_0 : i32, i32
  }
  func.func @transform_10(%arg0: i32) -> (i32, i32) {
    %c0_i32 = arith.constant 0 : i32
    %c0_i32_0 = arith.constant 0 : i32
    %c0_i32_1 = arith.constant 0 : i32
    return %c0_i32, %c0_i32_0 : i32, i32
  }
  func.func @transform_11(%arg0: i32) -> (i32, i32) {
    %c0_i32 = arith.constant 0 : i32
    %c0_i32_0 = arith.constant 0 : i32
    %c0_i32_1 = arith.constant 0 : i32
    return %c0_i32, %c0_i32_0 : i32, i32
  }
  func.func @transform_12(%arg0: i32) -> (i32, i32) {
    %c0_i32 = arith.constant 0 : i32
    %c0_i32_0 = arith.constant 0 : i32
    %c0_i32_1 = arith.constant 0 : i32
    return %c0_i32, %c0_i32_0 : i32, i32
  }
  func.func @transform_13(%arg0: i32) -> (i32, i32) {
    %c0_i32 = arith.constant 0 : i32
    %c0_i32_0 = arith.constant 0 : i32
    %c0_i32_1 = arith.constant 0 : i32
    return %c0_i32, %c0_i32_0 : i32, i32
  }
  func.func @transform_14(%arg0: i32) -> (i32, i32) {
    %c0_i32 = arith.constant 0 : i32
    %c0_i32_0 = arith.constant 0 : i32
    %c0_i32_1 = arith.constant 0 : i32
    return %c0_i32, %c0_i32_0 : i32, i32
  }
  func.func @transform_15(%arg0: i32) -> (i32, i32) {
    %c0_i32 = arith.constant 0 : i32
    %c0_i32_0 = arith.constant 0 : i32
    %c0_i32_1 = arith.constant 0 : i32
    return %c0_i32, %c0_i32_0 : i32, i32
  }
  func.func @transform_16(%arg0: i32) -> (i32, i32) {
    %c0_i32 = arith.constant 0 : i32
    %c0_i32_0 = arith.constant 0 : i32
    %c0_i32_1 = arith.constant 0 : i32
    return %c0_i32, %c0_i32_0 : i32, i32
  }
  func.func @transform_17(%arg0: i32) -> (i32, i32) {
    %c0_i32 = arith.constant 0 : i32
    %c0_i32_0 = arith.constant 0 : i32
    %c0_i32_1 = arith.constant 0 : i32
    return %c0_i32, %c0_i32_0 : i32, i32
  }
  func.func @transform_18(%arg0: i32) -> (i32, i32) {
    %c0_i32 = arith.constant 0 : i32
    %c0_i32_0 = arith.constant 0 : i32
    %c0_i32_1 = arith.constant 0 : i32
    return %c0_i32, %c0_i32_0 : i32, i32
  }
  func.func @transform_19(%arg0: i32) -> (i32, i32) {
    %c0_i32 = arith.constant 0 : i32
    %c0_i32_0 = arith.constant 0 : i32
    %c0_i32_1 = arith.constant 0 : i32
    return %c0_i32, %c0_i32_0 : i32, i32
  }
  func.func @transform_20(%arg0: i32) -> (i32, i32) {
    %c0_i32 = arith.constant 0 : i32
    %c0_i32_0 = arith.constant 0 : i32
    %c0_i32_1 = arith.constant 0 : i32
    return %c0_i32, %c0_i32_0 : i32, i32
  }
  func.func @transform_21(%arg0: i32) -> (i32, i32) {
    %c0_i32 = arith.constant 0 : i32
    %c0_i32_0 = arith.constant 0 : i32
    %c0_i32_1 = arith.constant 0 : i32
    return %c0_i32, %c0_i32_0 : i32, i32
  }
  func.func @transform_22(%arg0: i32) -> (i32, i32) {
    %c0_i32 = arith.constant 0 : i32
    %c0_i32_0 = arith.constant 0 : i32
    %c0_i32_1 = arith.constant 0 : i32
    return %c0_i32, %c0_i32_0 : i32, i32
  }
  func.func @transform_23(%arg0: i32) -> (i32, i32) {
    %c0_i32 = arith.constant 0 : i32
    %c0_i32_0 = arith.constant 0 : i32
    %c0_i32_1 = arith.constant 0 : i32
    return %c0_i32, %c0_i32_0 : i32, i32
  }
  func.func @transform_24(%arg0: i32) -> (i32, i32) {
    %c0_i32 = arith.constant 0 : i32
    %c0_i32_0 = arith.constant 0 : i32
    %c0_i32_1 = arith.constant 0 : i32
    return %c0_i32, %c0_i32_0 : i32, i32
  }
  func.func @transform_25(%arg0: i32) -> (i32, i32) {
    %c0_i32 = arith.constant 0 : i32
    %c0_i32_0 = arith.constant 0 : i32
    %c0_i32_1 = arith.constant 0 : i32
    return %c0_i32, %c0_i32_0 : i32, i32
  }
  func.func @transform_26(%arg0: i32) -> (i32, i32) {
    %c0_i32 = arith.constant 0 : i32
    %c0_i32_0 = arith.constant 0 : i32
    %c0_i32_1 = arith.constant 0 : i32
    return %c0_i32, %c0_i32_0 : i32, i32
  }
  func.func @transform_27(%arg0: i32) -> (i32, i32) {
    %c0_i32 = arith.constant 0 : i32
    %c0_i32_0 = arith.constant 0 : i32
    %c0_i32_1 = arith.constant 0 : i32
    return %c0_i32, %c0_i32_0 : i32, i32
  }
  func.func @transform_28(%arg0: i32) -> (i32, i32) {
    %c0_i32 = arith.constant 0 : i32
    %c0_i32_0 = arith.constant 0 : i32
    %c0_i32_1 = arith.constant 0 : i32
    return %c0_i32, %c0_i32_0 : i32, i32
  }
  func.func @transform_29(%arg0: i32) -> (i32, i32) {
    %c0_i32 = arith.constant 0 : i32
    %c0_i32_0 = arith.constant 0 : i32
    %c0_i32_1 = arith.constant 0 : i32
    return %c0_i32, %c0_i32_0 : i32, i32
  }
  func.func @transform_30(%arg0: i32) -> (i32, i32) {
    %c0_i32 = arith.constant 0 : i32
    %c0_i32_0 = arith.constant 0 : i32
    %c0_i32_1 = arith.constant 0 : i32
    return %c0_i32, %c0_i32_0 : i32, i32
  }
  func.func @transform_31(%arg0: i32) -> (i32, i32) {
    %c0_i32 = arith.constant 0 : i32
    %c0_i32_0 = arith.constant 0 : i32
    %c0_i32_1 = arith.constant 0 : i32
    return %c0_i32, %c0_i32_0 : i32, i32
  }
  func.func @transform_32(%arg0: i32) -> (i32, i32) {
    %c0_i32 = arith.constant 0 : i32
    %c0_i32_0 = arith.constant 0 : i32
    %c0_i32_1 = arith.constant 0 : i32
    return %c0_i32, %c0_i32_0 : i32, i32
  }
  func.func @transform_33(%arg0: i32) -> (i32, i32) {
    %c0_i32 = arith.constant 0 : i32
    %c0_i32_0 = arith.constant 0 : i32
    %c0_i32_1 = arith.constant 0 : i32
    return %c0_i32, %c0_i32_0 : i32, i32
  }
  func.func @transform_34(%arg0: i32) -> (i32, i32) {
    %c0_i32 = arith.constant 0 : i32
    %c0_i32_0 = arith.constant 0 : i32
    %c0_i32_1 = arith.constant 0 : i32
    return %c0_i32, %c0_i32_0 : i32, i32
  }
  func.func @transform_35(%arg0: i32) -> (i32, i32) {
    %c0_i32 = arith.constant 0 : i32
    %c0_i32_0 = arith.constant 0 : i32
    %c0_i32_1 = arith.constant 0 : i32
    return %c0_i32, %c0_i32_0 : i32, i32
  }
  func.func @transform_36(%arg0: i32) -> (i32, i32) {
    %c0_i32 = arith.constant 0 : i32
    %c0_i32_0 = arith.constant 0 : i32
    %c0_i32_1 = arith.constant 0 : i32
    return %c0_i32, %c0_i32_0 : i32, i32
  }
  func.func @transform_37(%arg0: i32) -> (i32, i32) {
    %c0_i32 = arith.constant 0 : i32
    %c0_i32_0 = arith.constant 0 : i32
    %c0_i32_1 = arith.constant 0 : i32
    return %c0_i32, %c0_i32_0 : i32, i32
  }
  func.func @transform_38(%arg0: i32) -> (i32, i32) {
    %c0_i32 = arith.constant 0 : i32
    %c0_i32_0 = arith.constant 0 : i32
    %c0_i32_1 = arith.constant 0 : i32
    return %c0_i32, %c0_i32_0 : i32, i32
  }
  func.func @transform_39(%arg0: i32) -> (i32, i32) {
    %c0_i32 = arith.constant 0 : i32
    %c0_i32_0 = arith.constant 0 : i32
    %c0_i32_1 = arith.constant 0 : i32
    return %c0_i32, %c0_i32_0 : i32, i32
  }
  func.func @transform_40(%arg0: i32) -> (i32, i32) {
    %c0_i32 = arith.constant 0 : i32
    %c0_i32_0 = arith.constant 0 : i32
    %c0_i32_1 = arith.constant 0 : i32
    return %c0_i32, %c0_i32_0 : i32, i32
  }
  func.func @transform_41(%arg0: i32) -> (i32, i32) {
    %c0_i32 = arith.constant 0 : i32
    %c0_i32_0 = arith.constant 0 : i32
    %c0_i32_1 = arith.constant 0 : i32
    return %c0_i32, %c0_i32_0 : i32, i32
  }
  func.func @transform_42(%arg0: i32) -> (i32, i32) {
    %c0_i32 = arith.constant 0 : i32
    %c0_i32_0 = arith.constant 0 : i32
    %c0_i32_1 = arith.constant 0 : i32
    return %c0_i32, %c0_i32_0 : i32, i32
  }
  func.func @transform_43(%arg0: i32) -> (i32, i32) {
    %c0_i32 = arith.constant 0 : i32
    %c0_i32_0 = arith.constant 0 : i32
    %c0_i32_1 = arith.constant 0 : i32
    return %c0_i32, %c0_i32_0 : i32, i32
  }
  func.func @transform_44(%arg0: i32) -> (i32, i32) {
    %c0_i32 = arith.constant 0 : i32
    %c0_i32_0 = arith.constant 0 : i32
    %c0_i32_1 = arith.constant 0 : i32
    return %c0_i32, %c0_i32_0 : i32, i32
  }
  func.func @transform_45(%arg0: i32) -> (i32, i32) {
    %c0_i32 = arith.constant 0 : i32
    %c0_i32_0 = arith.constant 0 : i32
    %c0_i32_1 = arith.constant 0 : i32
    return %c0_i32, %c0_i32_0 : i32, i32
  }
  func.func @transform_46(%arg0: i32) -> (i32, i32) {
    %c0_i32 = arith.constant 0 : i32
    %c0_i32_0 = arith.constant 0 : i32
    %c0_i32_1 = arith.constant 0 : i32
    return %c0_i32, %c0_i32_0 : i32, i32
  }
  func.func @transform_47(%arg0: i32) -> (i32, i32) {
    %c0_i32 = arith.constant 0 : i32
    %c0_i32_0 = arith.constant 0 : i32
    %c0_i32_1 = arith.constant 0 : i32
    return %c0_i32, %c0_i32_0 : i32, i32
  }
  func.func @transform_48(%arg0: i32) -> (i32, i32) {
    %c0_i32 = arith.constant 0 : i32
    %c0_i32_0 = arith.constant 0 : i32
    %c0_i32_1 = arith.constant 0 : i32
    return %c0_i32, %c0_i32_0 : i32, i32
  }
  func.func @transform_49(%arg0: i32) -> (i32, i32) {
    %c0_i32 = arith.constant 0 : i32
    %c0_i32_0 = arith.constant 0 : i32
    %c0_i32_1 = arith.constant 0 : i32
    return %c0_i32, %c0_i32_0 : i32, i32
  }
  func.func @transform_50(%arg0: i32) -> (i32, i32) {
    %c0_i32 = arith.constant 0 : i32
    %c0_i32_0 = arith.constant 0 : i32
    %c0_i32_1 = arith.constant 0 : i32
    return %c0_i32, %c0_i32_0 : i32, i32
  }
  func.func @transform_51(%arg0: i32) -> (i32, i32) {
    %c0_i32 = arith.constant 0 : i32
    %c0_i32_0 = arith.constant 0 : i32
    %c0_i32_1 = arith.constant 0 : i32
    return %c0_i32, %c0_i32_0 : i32, i32
  }
  func.func @transform_52(%arg0: i32) -> (i32, i32) {
    %c0_i32 = arith.constant 0 : i32
    %c0_i32_0 = arith.constant 0 : i32
    %c0_i32_1 = arith.constant 0 : i32
    return %c0_i32, %c0_i32_0 : i32, i32
  }
  func.func @transform_53(%arg0: i32) -> (i32, i32) {
    %c0_i32 = arith.constant 0 : i32
    %c0_i32_0 = arith.constant 0 : i32
    %c0_i32_1 = arith.constant 0 : i32
    return %c0_i32, %c0_i32_0 : i32, i32
  }
  func.func @transform_54(%arg0: i32) -> (i32, i32) {
    %c0_i32 = arith.constant 0 : i32
    %c0_i32_0 = arith.constant 0 : i32
    %c0_i32_1 = arith.constant 0 : i32
    return %c0_i32, %c0_i32_0 : i32, i32
  }
  func.func @transform_55(%arg0: i32) -> (i32, i32) {
    %c0_i32 = arith.constant 0 : i32
    %c0_i32_0 = arith.constant 0 : i32
    %c0_i32_1 = arith.constant 0 : i32
    return %c0_i32, %c0_i32_0 : i32, i32
  }
  func.func @transform_56(%arg0: i32) -> (i32, i32) {
    %c0_i32 = arith.constant 0 : i32
    %c0_i32_0 = arith.constant 0 : i32
    %c0_i32_1 = arith.constant 0 : i32
    return %c0_i32, %c0_i32_0 : i32, i32
  }
  func.func @transform_57(%arg0: i32) -> (i32, i32, i32) {
    %c0_i32 = arith.constant 0 : i32
    %c0_i32_0 = arith.constant 0 : i32
    %c0_i32_1 = arith.constant 0 : i32
    return %arg0, %c0_i32, %c0_i32_0 : i32, i32, i32
  }
}

</mosaic_0001>

<llo_original>
// kernel: resnet3_mfcc_forward.1
$region0: #{resnet3_mfcc_forward.1}
  #allocation0 [shape = 'u32[]', space=smem, size = 0x4, offset = 0x4, fixed_abs, tag = 'smem constant byte address 0x4 - core index']
  #allocation1 [shape = 'u32[144,128]{1,0:T(1,128)}', space=vmem, size = 0x12000, scoped, tag = 'internal scratch']
  %s0 = inlined_call_operand.smem [shape: u32[58], index: -1, kind: input, shape index: {}]
  %s1 = sld [smem:[%s0]]
  %s2 = scalar_lea.smem %s0, 1
  %s3 = sld [smem:[%s2]]
  %s4 = scalar_lea.smem %s0, 2
  %s5 = sld [smem:[%s4]]
  %s6 = scalar_lea.smem %s0, 3
  %s7 = sld [smem:[%s6]]
  %s8 = scalar_lea.smem %s0, 4
  %s9 = sld [smem:[%s8]]
  %s10 = scalar_lea.smem %s0, 5
  %s11 = sld [smem:[%s10]]
  %s12 = scalar_lea.smem %s0, 6
  %s13 = sld [smem:[%s12]]
  %s14 = scalar_lea.smem %s0, 7
  %s15 = sld [smem:[%s14]]
  %s16 = scalar_lea.smem %s0, 8
  %s17 = sld [smem:[%s16]]
  %s18 = scalar_lea.smem %s0, 9
  %s19 = sld [smem:[%s18]]
  %s20 = scalar_lea.smem %s0, 10
  %s21 = sld [smem:[%s20]]
  %s22 = scalar_lea.smem %s0, 11
  %s23 = sld [smem:[%s22]]
  %s24 = scalar_lea.smem %s0, 12
  %s25 = sld [smem:[%s24]]
  %s26 = scalar_lea.smem %s0, 13
  %s27 = sld [smem:[%s26]]
  %s28 = scalar_lea.smem %s0, 14
  %s29 = sld [smem:[%s28]]
  %s30 = scalar_lea.smem %s0, 15
  %s31 = sld [smem:[%s30]]
  %s32 = scalar_lea.smem %s0, 16
  %s33 = sld [smem:[%s32]]
  %s34 = scalar_lea.smem %s0, 17
  %s35 = sld [smem:[%s34]]
  %s36 = scalar_lea.smem %s0, 18
  %s37 = sld [smem:[%s36]]
  %s38 = scalar_lea.smem %s0, 19
  %s39 = sld [smem:[%s38]]
  %s40 = scalar_lea.smem %s0, 20
  %s41 = sld [smem:[%s40]]
  %s42 = scalar_lea.smem %s0, 21
  %s43 = sld [smem:[%s42]]
  %s44 = scalar_lea.smem %s0, 22
  %s45 = sld [smem:[%s44]]
  %s46 = scalar_lea.smem %s0, 23
  %s47 = sld [smem:[%s46]]
  %s48 = scalar_lea.smem %s0, 24
  %s49 = sld [smem:[%s48]]
  %s50 = scalar_lea.smem %s0, 25
  %s51 = sld [smem:[%s50]]
  %s52 = scalar_lea.smem %s0, 26
  %s53 = sld [smem:[%s52]]
  %s54 = scalar_lea.smem %s0, 27
  %s55 = sld [smem:[%s54]]
  %s56 = scalar_lea.smem %s0, 28
  %s57 = sld [smem:[%s56]]
  %s58 = scalar_lea.smem %s0, 29
  %s59 = sld [smem:[%s58]]
  %s60 = scalar_lea.smem %s0, 30
  %s61 = sld [smem:[%s60]]
  %s62 = scalar_lea.smem %s0, 31
  %s63 = sld [smem:[%s62]]
  %s64 = scalar_lea.smem %s0, 32
  %s65 = sld [smem:[%s64]]
  %s66 = scalar_lea.smem %s0, 33
  %s67 = sld [smem:[%s66]]
  %s68 = scalar_lea.smem %s0, 34
  %s69 = sld [smem:[%s68]]
  %s70 = scalar_lea.smem %s0, 35
  %s71 = sld [smem:[%s70]]
  %s72 = scalar_lea.smem %s0, 36
  %s73 = sld [smem:[%s72]]
  %s74 = scalar_lea.smem %s0, 37
  %s75 = sld [smem:[%s74]]
  %s76 = scalar_lea.smem %s0, 38
  %s77 = sld [smem:[%s76]]
  %s78 = scalar_lea.smem %s0, 39
  %s79 = sld [smem:[%s78]]
  %s80 = scalar_lea.smem %s0, 40
  %s81 = sld [smem:[%s80]]
  %s82 = scalar_lea.smem %s0, 41
  %s83 = sld [smem:[%s82]]
  %s84 = scalar_lea.smem %s0, 42
  %s85 = sld [smem:[%s84]]
  %s86 = scalar_lea.smem %s0, 43
  %s87 = sld [smem:[%s86]]
  %s88 = scalar_lea.smem %s0, 44
  %s89 = sld [smem:[%s88]]
  %s90 = scalar_lea.smem %s0, 45
  %s91 = sld [smem:[%s90]]
  %s92 = scalar_lea.smem %s0, 46
  %s93 = sld [smem:[%s92]]
  %s94 = scalar_lea.smem %s0, 47
  %s95 = sld [smem:[%s94]]
  %s96 = scalar_lea.smem %s0, 48
  %s97 = sld [smem:[%s96]]
  %s98 = scalar_lea.smem %s0, 49
  %s99 = sld [smem:[%s98]]
  %s100 = scalar_lea.smem %s0, 50
  %s101 = sld [smem:[%s100]]
  %s102 = scalar_lea.smem %s0, 51
  %s103 = sld [smem:[%s102]]
  %s104 = scalar_lea.smem %s0, 52
  %s105 = sld [smem:[%s104]]
  %s106 = scalar_lea.smem %s0, 53
  %s107 = sld [smem:[%s106]]
  %s108 = scalar_lea.smem %s0, 54
  %s109 = sld [smem:[%s108]]
  %s110 = scalar_lea.smem %s0, 55
  %s111 = sld [smem:[%s110]]
  %s112 = scalar_lea.smem %s0, 56
  %s113 = sld [smem:[%s112]]
  %s114 = scalar_lea.smem %s0, 57
  %s115 = sld [smem:[%s114]]
  %s116 = sld [smem:[#allocation0]]
  $region321: #{resnet3_mfcc_forward.1} parent=0
    _
  %s118 = ssub.s32 1, %s116
  %s119 = scalar_select 0, %s118, %s116
  $region1: #{resnet3_mfcc_forward.1} parent=0
    #allocation2 [shape = 'u8[512]{0}', space=vmem, size = 0x400, scoped, tag = 'input window, operand 28, single buffered']
    #allocation3 [shape = 's32[2]{0}', space=sflag, size = 0x8, scoped, tag = 'scoped memory for resnet3_mfcc_forward.1']
    #allocation4 [shape = 's32[2]{0}', space=sflag, size = 0x8, scoped, tag = 'scoped memory for resnet3_mfcc_forward.1']
    #allocation5 [shape = 'u8[512]{0}', space=vmem, size = 0x400, scoped, tag = 'input window, operand 30, single buffered']
    #allocation6 [shape = 's32[1]{0}', space=sflag, size = 0x4, scoped, tag = 'scoped memory for resnet3_mfcc_forward.1']
    #allocation7 [shape = 'u8[512]{0}', space=vmem, size = 0x400, scoped, tag = 'input window, operand 32, single buffered']
    #allocation8 [shape = 'u8[512]{0}', space=vmem, size = 0x400, scoped, tag = 'input window, operand 34, single buffered']
    #allocation9 [shape = 's32[1]{0}', space=sflag, size = 0x4, scoped, tag = 'scoped memory for resnet3_mfcc_forward.1']
    #allocation10 [shape = 'u8[512]{0}', space=vmem, size = 0x400, scoped, tag = 'input window, operand 36, single buffered']
    #allocation11 [shape = 'u8[512]{0}', space=vmem, size = 0x400, scoped, tag = 'input window, operand 38, single buffered']
    #allocation12 [shape = 's32[1]{0}', space=sflag, size = 0x4, scoped, tag = 'scoped memory for resnet3_mfcc_forward.1']
    #allocation13 [shape = 'u8[512]{0}', space=vmem, size = 0x400, scoped, tag = 'input window, operand 40, single buffered']
    #allocation14 [shape = 'u8[512]{0}', space=vmem, size = 0x400, scoped, tag = 'input window, operand 42, single buffered']
    #allocation15 [shape = 's32[1]{0}', space=sflag, size = 0x4, scoped, tag = 'scoped memory for resnet3_mfcc_forward.1']
    #allocation16 [shape = 'u8[512]{0}', space=vmem, size = 0x400, scoped, tag = 'input window, operand 44, single buffered']
    #allocation17 [shape = 'u8[512]{0}', space=vmem, size = 0x400, scoped, tag = 'input window, operand 46, single buffered']
    #allocation18 [shape = 's32[1]{0}', space=sflag, size = 0x4, scoped, tag = 'scoped memory for resnet3_mfcc_forward.1']
    #allocation19 [shape = 'u8[512]{0}', space=vmem, size = 0x400, scoped, tag = 'input window, operand 48, single buffered']
    #allocation20 [shape = 'u8[512]{0}', space=vmem, size = 0x400, scoped, tag = 'input window, operand 50, single buffered']
    #allocation21 [shape = 's32[1]{0}', space=sflag, size = 0x4, scoped, tag = 'scoped memory for resnet3_mfcc_forward.1']
    #allocation22 [shape = 'u8[512]{0}', space=vmem, size = 0x400, scoped, tag = 'input window, operand 52, single buffered']
    #allocation23 [shape = 'u8[512]{0}', space=vmem, size = 0x400, scoped, tag = 'input window, operand 54, single buffered']
    #allocation24 [shape = 's32[1]{0}', space=sflag, size = 0x4, scoped, tag = 'scoped memory for resnet3_mfcc_forward.1']
    #allocation25 [shape = 'u8[512]{0}', space=vmem, size = 0x400, scoped, tag = 'input window, operand 56, single buffered']
    #allocation26 [shape = 'u8[1024]{0}', space=vmem, size = 0x400, scoped, tag = 'output window, operand 0']
    %120 = vsyncpa [#allocation3], 0
    %121 = vsyncpa [#allocation6], 0
    %122 = vsyncpa [#allocation9], 0
    %123 = vsyncpa [#allocation12], 0
    %124 = vsyncpa [#allocation15], 0
    %125 = vsyncpa [#allocation18], 0
    %126 = vsyncpa [#allocation21], 0
    %127 = vsyncpa [#allocation24], 0
    %128 = vsyncpa [#allocation4], 0
    %s129 = scalar_lea.sflag [#allocation4], 1
    %130 = vsyncpa %s129, 0
    loop: start=0, step=1, limit=4
    $region2: #{resnet3_mfcc_forward.1} parent=1 // loop_pre_header
      _
    $region3: #{resnet3_mfcc_forward.1} parent=1 // loop_header
      %s132 = sphi 0, %s136
      %p133 = scmp.ge.s32.totalorder %s132, 4
      %s142 = sphi 0, %s144
      %s145 = sphi 0, %s142
      %s146 = sphi 0, %s145
      %s162 = sphi 0, %s146
      %s166 = sphi 0, %s166
      %s168 = sphi 0, %s166
      %s169 = sphi 0, %s168
      %s183 = sphi 0, %s169
      %s187 = sphi 0, %s187
      %s189 = sphi 0, %s187
      %s190 = sphi 0, %s189
      %s204 = sphi 0, %s190
      %s208 = sphi 0, %s208
      %s210 = sphi 0, %s208
      %s211 = sphi 0, %s210
      %s225 = sphi 0, %s211
      %s229 = sphi 0, %s229
      %s231 = sphi 0, %s229
      %s232 = sphi 0, %s231
      %s246 = sphi 0, %s232
      %s250 = sphi 0, %s250
      %s252 = sphi 0, %s250
      %s253 = sphi 0, %s252
      %s267 = sphi 0, %s253
      %s271 = sphi 0, %s271
      %s273 = sphi 0, %s271
      %s274 = sphi 0, %s273
      %s288 = sphi 0, %s274
      %s292 = sphi 0, %s292
      %s294 = sphi 0, %s292
      %s295 = sphi 0, %s294
      %s309 = sphi 0, %s295
      %s313 = sphi 0, %s313
      %s315 = sphi 0, %s313
      %s316 = sphi 0, %s315
      %s330 = sphi 0, %s316
      %s334 = sphi 0, %s334
      %s336 = sphi 0, %s334
      %s337 = sphi 0, %s336
      %s351 = sphi 0, %s337
      %s355 = sphi 0, %s355
      %s357 = sphi 0, %s355
      %s358 = sphi 0, %s357
      %s372 = sphi 0, %s358
      %s376 = sphi 0, %s376
      %s378 = sphi 0, %s376
      %s379 = sphi 0, %s378
      %s393 = sphi 0, %s379
      %s397 = sphi 0, %s397
      %s399 = sphi 0, %s397
      %s400 = sphi 0, %s399
      %s414 = sphi 0, %s400
      %s418 = sphi 0, %s418
      %s420 = sphi 0, %s418
      %s421 = sphi 0, %s420
      %s435 = sphi 0, %s421
      %s439 = sphi 0, %s439
      %s441 = sphi 0, %s439
      %s442 = sphi 0, %s441
      %s456 = sphi 0, %s442
      %s460 = sphi 0, %s460
      %s462 = sphi 0, %s460
      %s463 = sphi 0, %s462
      %s477 = sphi 0, %s463
      %s481 = sphi 0, %s481
      %s483 = sphi 0, %s481
      %s484 = sphi 0, %s483
      %s498 = sphi 0, %s484
      %s502 = sphi 0, %s502
      %s504 = sphi 0, %s502
      %s505 = sphi 0, %s504
      %s519 = sphi 0, %s505
      %s523 = sphi 0, %s523
      %s525 = sphi 0, %s523
      %s526 = sphi 0, %s525
      %s540 = sphi 0, %s526
      %s544 = sphi 0, %s544
      %s546 = sphi 0, %s544
      %s547 = sphi 0, %s546
      %s561 = sphi 0, %s547
      %s565 = sphi 0, %s565
      %s567 = sphi 0, %s565
      %s568 = sphi 0, %s567
      %s582 = sphi 0, %s568
      %s586 = sphi 0, %s586
      %s588 = sphi 0, %s586
      %s589 = sphi 0, %s588
      %s603 = sphi 0, %s589
      %s607 = sphi 0, %s607
      %s609 = sphi 0, %s607
      %s610 = sphi 0, %s609
      %s624 = sphi 0, %s610
      %s628 = sphi 0, %s628
      %s630 = sphi 0, %s628
      %s631 = sphi 0, %s630
      %s645 = sphi 0, %s631
      %s649 = sphi 0, %s649
      %s651 = sphi 0, %s649
      %s652 = sphi 0, %s651
      %s666 = sphi 0, %s652
      %s670 = sphi 0, %s670
      %s672 = sphi 0, %s670
      %s673 = sphi 0, %s672
      %s687 = sphi 0, %s673
      %s691 = sphi 0, %s691
      %s693 = sphi 0, %s691
      %s694 = sphi 0, %s693
      %s708 = sphi 0, %s694
      %s712 = sphi 0, %s712
      %s714 = sphi 0, %s712
      %s715 = sphi 0, %s714
      %s729 = sphi 0, %s715
      %s733 = sphi 0, %s733
      %s735 = sphi 0, %s733
      %s736 = sphi 0, %s735
      %s750 = sphi 0, %s736
      %s754 = sphi 0, %s754
      %s756 = sphi 0, %s754
      %s757 = sphi 0, %s756
      %s771 = sphi 0, %s757
      %s775 = sphi 0, %s775
      %s777 = sphi 0, %s775
      %s778 = sphi 0, %s777
      %s792 = sphi 0, %s778
      %s796 = sphi 0, %s796
      %s798 = sphi 0, %s796
      %s799 = sphi 0, %s798
      %s813 = sphi 0, %s799
      %s817 = sphi 0, %s817
      %s819 = sphi 0, %s817
      %s820 = sphi 0, %s819
      %s834 = sphi 0, %s820
      %s838 = sphi 0, %s838
      %s840 = sphi 0, %s838
      %s841 = sphi 0, %s840
      %s855 = sphi 0, %s841
      %s859 = sphi 0, %s859
      %s861 = sphi 0, %s859
      %s862 = sphi 0, %s861
      %s876 = sphi 0, %s862
      %s880 = sphi 0, %s880
      %s882 = sphi 0, %s880
      %s883 = sphi 0, %s882
      %s897 = sphi 0, %s883
      %s901 = sphi 0, %s901
      %s903 = sphi 0, %s901
      %s904 = sphi 0, %s903
      %s918 = sphi 0, %s904
      %s922 = sphi 0, %s922
      %s924 = sphi 0, %s922
      %s925 = sphi 0, %s924
      %s939 = sphi 0, %s925
      %s943 = sphi 0, %s943
      %s945 = sphi 0, %s943
      %s946 = sphi 0, %s945
      %s960 = sphi 0, %s946
      %s964 = sphi 0, %s964
      %s966 = sphi 0, %s964
      %s967 = sphi 0, %s966
      %s981 = sphi 0, %s967
      %s985 = sphi 0, %s985
      %s987 = sphi 0, %s985
      %s988 = sphi 0, %s987
      %s1002 = sphi 0, %s988
      %s1006 = sphi 0, %s1006
      %s1008 = sphi 0, %s1006
      %s1009 = sphi 0, %s1008
      %s1023 = sphi 0, %s1009
      %s1027 = sphi 0, %s1027
      %s1029 = sphi 0, %s1027
      %s1030 = sphi 0, %s1029
      %s1044 = sphi 0, %s1030
      %s1048 = sphi 0, %s1048
      %s1050 = sphi 0, %s1048
      %s1051 = sphi 0, %s1050
      %s1065 = sphi 0, %s1051
      %s1069 = sphi 0, %s1069
      %s1071 = sphi 0, %s1069
      %s1072 = sphi 0, %s1071
      %s1086 = sphi 0, %s1072
      %s1090 = sphi 0, %s1090
      %s1092 = sphi 0, %s1090
      %s1093 = sphi 0, %s1092
      %s1107 = sphi 0, %s1093
      %s1111 = sphi 0, %s1111
      %s1113 = sphi 0, %s1111
      %s1114 = sphi 0, %s1113
      %s1128 = sphi 0, %s1114
      %s1132 = sphi 0, %s1132
      %s1134 = sphi 0, %s1132
      %s1135 = sphi 0, %s1134
      %s1149 = sphi 0, %s1135
      %s1153 = sphi 0, %s1153
      %s1155 = sphi 0, %s1153
      %s1156 = sphi 0, %s1155
      %s1170 = sphi 0, %s1156
      %s1174 = sphi 0, %s1174
      %s1176 = sphi 0, %s1174
      %s1177 = sphi 0, %s1176
      %s1191 = sphi 0, %s1177
      %s1195 = sphi 0, %s1195
      %s1197 = sphi 0, %s1195
      %s1198 = sphi 0, %s1197
      %s1212 = sphi 0, %s1198
      %s1216 = sphi 0, %s1216
      %s1218 = sphi 0, %s1216
      %s1219 = sphi 0, %s1218
      %s1233 = sphi 0, %s1219
      %s1237 = sphi 0, %s1237
      %s1239 = sphi 0, %s1237
      %s1240 = sphi 0, %s1239
      %s1254 = sphi 0, %s1240
      %s1258 = sphi 0, %s1258
      %s1260 = sphi 0, %s1258
      %s1261 = sphi 0, %s1260
      %s1275 = sphi 0, %s1261
      %s1279 = sphi 0, %s1279
      %s1281 = sphi 0, %s1279
      %s1282 = sphi 0, %s1281
      %s1296 = sphi 0, %s1282
      %s1300 = sphi 0, %s1300
      %s1302 = sphi 0, %s1300
      %s1303 = sphi 0, %s1302
      %s1317 = sphi 0, %s1303
      %s1321 = sphi 0, %s1321
      %s1323 = sphi 0, %s1321
      %s1324 = sphi 0, %s1323
      %s1338 = sphi 0, %s1324
      %s1344 = sphi 0, %s1346
      %s1347 = sphi 0, %s1344
      %s1348 = sphi 0, %s1347
      %s1364 = sphi 0, %s1348
    $region4: #{resnet3_mfcc_forward.1} parent=1 // loop_header_branch
      %135 = sbr.rel (%p133) target = $region8
    $region5: #{resnet3_mfcc_forward.1} parent=1 // loop_body
      %s137 = ssub.s32 %s132, 1
      %s138 = ssub.s32 %s132, 2
      %s139 = sadd.s32 %s132, 1
      %s140 = ssub.s32 %s132, %s139
      %p141 = scmp.eq.s32.totalorder %s140, 0
      %s143 = sadd.s32 %s142, 1
      %s144 = scalar_select %p141, %s142, %s143
      %p147 = pneg %p141
      %p148 = scmp.eq.s32.totalorder %s132, 1
      %p149 = por %p147, %p148
      %p150 = scmp.ne.s32.totalorder %s142, %s145
      %p151 = scmp.eq.s32.totalorder %s132, 0
      %p152 = por %p150, %p151
      %p153 = scmp.ne.s32.totalorder %s142, %s145
      %p154 = scmp.eq.s32.totalorder %s137, 1
      %p155 = por %p153, %p154
      %p156 = scmp.ne.s32.totalorder %s145, %s146
      %p157 = scmp.eq.s32.totalorder %s137, 0
      %p158 = por %p156, %p157
      %p159 = scmp.ne.s32.totalorder %s145, %s146
      %p160 = scmp.eq.s32.totalorder %s138, 1
      %p161 = por %p159, %p160
      %p163 = scmp.ne.s32.totalorder %s146, %s162
      %p164 = scmp.eq.s32.totalorder %s138, 0
      %p165 = por %p163, %p164
      %s167 = sadd.s32 %s166, 1
      %p170 = scmp.eq.s32.totalorder %s132, 1
      %p171 = scmp.ne.s32.totalorder %s166, %s168
      %p172 = scmp.eq.s32.totalorder %s132, 0
      %p173 = por %p171, %p172
      %p174 = scmp.ne.s32.totalorder %s166, %s168
      %p175 = scmp.eq.s32.totalorder %s137, 1
      %p176 = por %p174, %p175
      %p177 = scmp.ne.s32.totalorder %s168, %s169
      %p178 = scmp.eq.s32.totalorder %s137, 0
      %p179 = por %p177, %p178
      %p180 = scmp.ne.s32.totalorder %s168, %s169
      %p181 = scmp.eq.s32.totalorder %s138, 1
      %p182 = por %p180, %p181
      %p184 = scmp.ne.s32.totalorder %s169, %s183
      %p185 = scmp.eq.s32.totalorder %s138, 0
      %p186 = por %p184, %p185
      %s188 = sadd.s32 %s187, 1
      %p191 = scmp.eq.s32.totalorder %s132, 1
      %p192 = scmp.ne.s32.totalorder %s187, %s189
      %p193 = scmp.eq.s32.totalorder %s132, 0
      %p194 = por %p192, %p193
      %p195 = scmp.ne.s32.totalorder %s187, %s189
      %p196 = scmp.eq.s32.totalorder %s137, 1
      %p197 = por %p195, %p196
      %p198 = scmp.ne.s32.totalorder %s189, %s190
      %p199 = scmp.eq.s32.totalorder %s137, 0
      %p200 = por %p198, %p199
      %p201 = scmp.ne.s32.totalorder %s189, %s190
      %p202 = scmp.eq.s32.totalorder %s138, 1
      %p203 = por %p201, %p202
      %p205 = scmp.ne.s32.totalorder %s190, %s204
      %p206 = scmp.eq.s32.totalorder %s138, 0
      %p207 = por %p205, %p206
      %s209 = sadd.s32 %s208, 1
      %p212 = scmp.eq.s32.totalorder %s132, 1
      %p213 = scmp.ne.s32.totalorder %s208, %s210
      %p214 = scmp.eq.s32.totalorder %s132, 0
      %p215 = por %p213, %p214
      %p216 = scmp.ne.s32.totalorder %s208, %s210
      %p217 = scmp.eq.s32.totalorder %s137, 1
      %p218 = por %p216, %p217
      %p219 = scmp.ne.s32.totalorder %s210, %s211
      %p220 = scmp.eq.s32.totalorder %s137, 0
      %p221 = por %p219, %p220
      %p222 = scmp.ne.s32.totalorder %s210, %s211
      %p223 = scmp.eq.s32.totalorder %s138, 1
      %p224 = por %p222, %p223
      %p226 = scmp.ne.s32.totalorder %s211, %s225
      %p227 = scmp.eq.s32.totalorder %s138, 0
      %p228 = por %p226, %p227
      %s230 = sadd.s32 %s229, 1
      %p233 = scmp.eq.s32.totalorder %s132, 1
      %p234 = scmp.ne.s32.totalorder %s229, %s231
      %p235 = scmp.eq.s32.totalorder %s132, 0
      %p236 = por %p234, %p235
      %p237 = scmp.ne.s32.totalorder %s229, %s231
      %p238 = scmp.eq.s32.totalorder %s137, 1
      %p239 = por %p237, %p238
      %p240 = scmp.ne.s32.totalorder %s231, %s232
      %p241 = scmp.eq.s32.totalorder %s137, 0
      %p242 = por %p240, %p241
      %p243 = scmp.ne.s32.totalorder %s231, %s232
      %p244 = scmp.eq.s32.totalorder %s138, 1
      %p245 = por %p243, %p244
      %p247 = scmp.ne.s32.totalorder %s232, %s246
      %p248 = scmp.eq.s32.totalorder %s138, 0
      %p249 = por %p247, %p248
      %s251 = sadd.s32 %s250, 1
      %p254 = scmp.eq.s32.totalorder %s132, 1
      %p255 = scmp.ne.s32.totalorder %s250, %s252
      %p256 = scmp.eq.s32.totalorder %s132, 0
      %p257 = por %p255, %p256
      %p258 = scmp.ne.s32.totalorder %s250, %s252
      %p259 = scmp.eq.s32.totalorder %s137, 1
      %p260 = por %p258, %p259
      %p261 = scmp.ne.s32.totalorder %s252, %s253
      %p262 = scmp.eq.s32.totalorder %s137, 0
      %p263 = por %p261, %p262
      %p264 = scmp.ne.s32.totalorder %s252, %s253
      %p265 = scmp.eq.s32.totalorder %s138, 1
      %p266 = por %p264, %p265
      %p268 = scmp.ne.s32.totalorder %s253, %s267
      %p269 = scmp.eq.s32.totalorder %s138, 0
      %p270 = por %p268, %p269
      %s272 = sadd.s32 %s271, 1
      %p275 = scmp.eq.s32.totalorder %s132, 1
      %p276 = scmp.ne.s32.totalorder %s271, %s273
      %p277 = scmp.eq.s32.totalorder %s132, 0
      %p278 = por %p276, %p277
      %p279 = scmp.ne.s32.totalorder %s271, %s273
      %p280 = scmp.eq.s32.totalorder %s137, 1
      %p281 = por %p279, %p280
      %p282 = scmp.ne.s32.totalorder %s273, %s274
      %p283 = scmp.eq.s32.totalorder %s137, 0
      %p284 = por %p282, %p283
      %p285 = scmp.ne.s32.totalorder %s273, %s274
      %p286 = scmp.eq.s32.totalorder %s138, 1
      %p287 = por %p285, %p286
      %p289 = scmp.ne.s32.totalorder %s274, %s288
      %p290 = scmp.eq.s32.totalorder %s138, 0
      %p291 = por %p289, %p290
      %s293 = sadd.s32 %s292, 1
      %p296 = scmp.eq.s32.totalorder %s132, 1
      %p297 = scmp.ne.s32.totalorder %s292, %s294
      %p298 = scmp.eq.s32.totalorder %s132, 0
      %p299 = por %p297, %p298
      %p300 = scmp.ne.s32.totalorder %s292, %s294
      %p301 = scmp.eq.s32.totalorder %s137, 1
      %p302 = por %p300, %p301
      %p303 = scmp.ne.s32.totalorder %s294, %s295
      %p304 = scmp.eq.s32.totalorder %s137, 0
      %p305 = por %p303, %p304
      %p306 = scmp.ne.s32.totalorder %s294, %s295
      %p307 = scmp.eq.s32.totalorder %s138, 1
      %p308 = por %p306, %p307
      %p310 = scmp.ne.s32.totalorder %s295, %s309
      %p311 = scmp.eq.s32.totalorder %s138, 0
      %p312 = por %p310, %p311
      %s314 = sadd.s32 %s313, 1
      %p317 = scmp.eq.s32.totalorder %s132, 1
      %p318 = scmp.ne.s32.totalorder %s313, %s315
      %p319 = scmp.eq.s32.totalorder %s132, 0
      %p320 = por %p318, %p319
      %p321 = scmp.ne.s32.totalorder %s313, %s315
      %p322 = scmp.eq.s32.totalorder %s137, 1
      %p323 = por %p321, %p322
      %p324 = scmp.ne.s32.totalorder %s315, %s316
      %p325 = scmp.eq.s32.totalorder %s137, 0
      %p326 = por %p324, %p325
      %p327 = scmp.ne.s32.totalorder %s315, %s316
      %p328 = scmp.eq.s32.totalorder %s138, 1
      %p329 = por %p327, %p328
      %p331 = scmp.ne.s32.totalorder %s316, %s330
      %p332 = scmp.eq.s32.totalorder %s138, 0
      %p333 = por %p331, %p332
      %s335 = sadd.s32 %s334, 1
      %p338 = scmp.eq.s32.totalorder %s132, 1
      %p339 = scmp.ne.s32.totalorder %s334, %s336
      %p340 = scmp.eq.s32.totalorder %s132, 0
      %p341 = por %p339, %p340
      %p342 = scmp.ne.s32.totalorder %s334, %s336
      %p343 = scmp.eq.s32.totalorder %s137, 1
      %p344 = por %p342, %p343
      %p345 = scmp.ne.s32.totalorder %s336, %s337
      %p346 = scmp.eq.s32.totalorder %s137, 0
      %p347 = por %p345, %p346
      %p348 = scmp.ne.s32.totalorder %s336, %s337
      %p349 = scmp.eq.s32.totalorder %s138, 1
      %p350 = por %p348, %p349
      %p352 = scmp.ne.s32.totalorder %s337, %s351
      %p353 = scmp.eq.s32.totalorder %s138, 0
      %p354 = por %p352, %p353
      %s356 = sadd.s32 %s355, 1
      %p359 = scmp.eq.s32.totalorder %s132, 1
      %p360 = scmp.ne.s32.totalorder %s355, %s357
      %p361 = scmp.eq.s32.totalorder %s132, 0
      %p362 = por %p360, %p361
      %p363 = scmp.ne.s32.totalorder %s355, %s357
      %p364 = scmp.eq.s32.totalorder %s137, 1
      %p365 = por %p363, %p364
      %p366 = scmp.ne.s32.totalorder %s357, %s358
      %p367 = scmp.eq.s32.totalorder %s137, 0
      %p368 = por %p366, %p367
      %p369 = scmp.ne.s32.totalorder %s357, %s358
      %p370 = scmp.eq.s32.totalorder %s138, 1
      %p371 = por %p369, %p370
      %p373 = scmp.ne.s32.totalorder %s358, %s372
      %p374 = scmp.eq.s32.totalorder %s138, 0
      %p375 = por %p373, %p374
      %s377 = sadd.s32 %s376, 1
      %p380 = scmp.eq.s32.totalorder %s132, 1
      %p381 = scmp.ne.s32.totalorder %s376, %s378
      %p382 = scmp.eq.s32.totalorder %s132, 0
      %p383 = por %p381, %p382
      %p384 = scmp.ne.s32.totalorder %s376, %s378
      %p385 = scmp.eq.s32.totalorder %s137, 1
      %p386 = por %p384, %p385
      %p387 = scmp.ne.s32.totalorder %s378, %s379
      %p388 = scmp.eq.s32.totalorder %s137, 0
      %p389 = por %p387, %p388
      %p390 = scmp.ne.s32.totalorder %s378, %s379
      %p391 = scmp.eq.s32.totalorder %s138, 1
      %p392 = por %p390, %p391
      %p394 = scmp.ne.s32.totalorder %s379, %s393
      %p395 = scmp.eq.s32.totalorder %s138, 0
      %p396 = por %p394, %p395
      %s398 = sadd.s32 %s397, 1
      %p401 = scmp.eq.s32.totalorder %s132, 1
      %p402 = scmp.ne.s32.totalorder %s397, %s399
      %p403 = scmp.eq.s32.totalorder %s132, 0
      %p404 = por %p402, %p403
      %p405 = scmp.ne.s32.totalorder %s397, %s399
      %p406 = scmp.eq.s32.totalorder %s137, 1
      %p407 = por %p405, %p406
      %p408 = scmp.ne.s32.totalorder %s399, %s400
      %p409 = scmp.eq.s32.totalorder %s137, 0
      %p410 = por %p408, %p409
      %p411 = scmp.ne.s32.totalorder %s399, %s400
      %p412 = scmp.eq.s32.totalorder %s138, 1
      %p413 = por %p411, %p412
      %p415 = scmp.ne.s32.totalorder %s400, %s414
      %p416 = scmp.eq.s32.totalorder %s138, 0
      %p417 = por %p415, %p416
      %s419 = sadd.s32 %s418, 1
      %p422 = scmp.eq.s32.totalorder %s132, 1
      %p423 = scmp.ne.s32.totalorder %s418, %s420
      %p424 = scmp.eq.s32.totalorder %s132, 0
      %p425 = por %p423, %p424
      %p426 = scmp.ne.s32.totalorder %s418, %s420
      %p427 = scmp.eq.s32.totalorder %s137, 1
      %p428 = por %p426, %p427
      %p429 = scmp.ne.s32.totalorder %s420, %s421
      %p430 = scmp.eq.s32.totalorder %s137, 0
      %p431 = por %p429, %p430
      %p432 = scmp.ne.s32.totalorder %s420, %s421
      %p433 = scmp.eq.s32.totalorder %s138, 1
      %p434 = por %p432, %p433
      %p436 = scmp.ne.s32.totalorder %s421, %s435
      %p437 = scmp.eq.s32.totalorder %s138, 0
      %p438 = por %p436, %p437
      %s440 = sadd.s32 %s439, 1
      %p443 = scmp.eq.s32.totalorder %s132, 1
      %p444 = scmp.ne.s32.totalorder %s439, %s441
      %p445 = scmp.eq.s32.totalorder %s132, 0
      %p446 = por %p444, %p445
      %p447 = scmp.ne.s32.totalorder %s439, %s441
      %p448 = scmp.eq.s32.totalorder %s137, 1
      %p449 = por %p447, %p448
      %p450 = scmp.ne.s32.totalorder %s441, %s442
      %p451 = scmp.eq.s32.totalorder %s137, 0
      %p452 = por %p450, %p451
      %p453 = scmp.ne.s32.totalorder %s441, %s442
      %p454 = scmp.eq.s32.totalorder %s138, 1
      %p455 = por %p453, %p454
      %p457 = scmp.ne.s32.totalorder %s442, %s456
      %p458 = scmp.eq.s32.totalorder %s138, 0
      %p459 = por %p457, %p458
      %s461 = sadd.s32 %s460, 1
      %p464 = scmp.eq.s32.totalorder %s132, 1
      %p465 = scmp.ne.s32.totalorder %s460, %s462
      %p466 = scmp.eq.s32.totalorder %s132, 0
      %p467 = por %p465, %p466
      %p468 = scmp.ne.s32.totalorder %s460, %s462
      %p469 = scmp.eq.s32.totalorder %s137, 1
      %p470 = por %p468, %p469
      %p471 = scmp.ne.s32.totalorder %s462, %s463
      %p472 = scmp.eq.s32.totalorder %s137, 0
      %p473 = por %p471, %p472
      %p474 = scmp.ne.s32.totalorder %s462, %s463
      %p475 = scmp.eq.s32.totalorder %s138, 1
      %p476 = por %p474, %p475
      %p478 = scmp.ne.s32.totalorder %s463, %s477
      %p479 = scmp.eq.s32.totalorder %s138, 0
      %p480 = por %p478, %p479
      %s482 = sadd.s32 %s481, 1
      %p485 = scmp.eq.s32.totalorder %s132, 1
      %p486 = scmp.ne.s32.totalorder %s481, %s483
      %p487 = scmp.eq.s32.totalorder %s132, 0
      %p488 = por %p486, %p487
      %p489 = scmp.ne.s32.totalorder %s481, %s483
      %p490 = scmp.eq.s32.totalorder %s137, 1
      %p491 = por %p489, %p490
      %p492 = scmp.ne.s32.totalorder %s483, %s484
      %p493 = scmp.eq.s32.totalorder %s137, 0
      %p494 = por %p492, %p493
      %p495 = scmp.ne.s32.totalorder %s483, %s484
      %p496 = scmp.eq.s32.totalorder %s138, 1
      %p497 = por %p495, %p496
      %p499 = scmp.ne.s32.totalorder %s484, %s498
      %p500 = scmp.eq.s32.totalorder %s138, 0
      %p501 = por %p499, %p500
      %s503 = sadd.s32 %s502, 1
      %p506 = scmp.eq.s32.totalorder %s132, 1
      %p507 = scmp.ne.s32.totalorder %s502, %s504
      %p508 = scmp.eq.s32.totalorder %s132, 0
      %p509 = por %p507, %p508
      %p510 = scmp.ne.s32.totalorder %s502, %s504
      %p511 = scmp.eq.s32.totalorder %s137, 1
      %p512 = por %p510, %p511
      %p513 = scmp.ne.s32.totalorder %s504, %s505
      %p514 = scmp.eq.s32.totalorder %s137, 0
      %p515 = por %p513, %p514
      %p516 = scmp.ne.s32.totalorder %s504, %s505
      %p517 = scmp.eq.s32.totalorder %s138, 1
      %p518 = por %p516, %p517
      %p520 = scmp.ne.s32.totalorder %s505, %s519
      %p521 = scmp.eq.s32.totalorder %s138, 0
      %p522 = por %p520, %p521
      %s524 = sadd.s32 %s523, 1
      %p527 = scmp.eq.s32.totalorder %s132, 1
      %p528 = scmp.ne.s32.totalorder %s523, %s525
      %p529 = scmp.eq.s32.totalorder %s132, 0
      %p530 = por %p528, %p529
      %p531 = scmp.ne.s32.totalorder %s523, %s525
      %p532 = scmp.eq.s32.totalorder %s137, 1
      %p533 = por %p531, %p532
      %p534 = scmp.ne.s32.totalorder %s525, %s526
      %p535 = scmp.eq.s32.totalorder %s137, 0
      %p536 = por %p534, %p535
      %p537 = scmp.ne.s32.totalorder %s525, %s526
      %p538 = scmp.eq.s32.totalorder %s138, 1
      %p539 = por %p537, %p538
      %p541 = scmp.ne.s32.totalorder %s526, %s540
      %p542 = scmp.eq.s32.totalorder %s138, 0
      %p543 = por %p541, %p542
      %s545 = sadd.s32 %s544, 1
      %p548 = scmp.eq.s32.totalorder %s132, 1
      %p549 = scmp.ne.s32.totalorder %s544, %s546
      %p550 = scmp.eq.s32.totalorder %s132, 0
      %p551 = por %p549, %p550
      %p552 = scmp.ne.s32.totalorder %s544, %s546
      %p553 = scmp.eq.s32.totalorder %s137, 1
      %p554 = por %p552, %p553
      %p555 = scmp.ne.s32.totalorder %s546, %s547
      %p556 = scmp.eq.s32.totalorder %s137, 0
      %p557 = por %p555, %p556
      %p558 = scmp.ne.s32.totalorder %s546, %s547
      %p559 = scmp.eq.s32.totalorder %s138, 1
      %p560 = por %p558, %p559
      %p562 = scmp.ne.s32.totalorder %s547, %s561
      %p563 = scmp.eq.s32.totalorder %s138, 0
      %p564 = por %p562, %p563
      %s566 = sadd.s32 %s565, 1
      %p569 = scmp.eq.s32.totalorder %s132, 1
      %p570 = scmp.ne.s32.totalorder %s565, %s567
      %p571 = scmp.eq.s32.totalorder %s132, 0
      %p572 = por %p570, %p571
      %p573 = scmp.ne.s32.totalorder %s565, %s567
      %p574 = scmp.eq.s32.totalorder %s137, 1
      %p575 = por %p573, %p574
      %p576 = scmp.ne.s32.totalorder %s567, %s568
      %p577 = scmp.eq.s32.totalorder %s137, 0
      %p578 = por %p576, %p577
      %p579 = scmp.ne.s32.totalorder %s567, %s568
      %p580 = scmp.eq.s32.totalorder %s138, 1
      %p581 = por %p579, %p580
      %p583 = scmp.ne.s32.totalorder %s568, %s582
      %p584 = scmp.eq.s32.totalorder %s138, 0
      %p585 = por %p583, %p584
      %s587 = sadd.s32 %s586, 1
      %p590 = scmp.eq.s32.totalorder %s132, 1
      %p591 = scmp.ne.s32.totalorder %s586, %s588
      %p592 = scmp.eq.s32.totalorder %s132, 0
      %p593 = por %p591, %p592
      %p594 = scmp.ne.s32.totalorder %s586, %s588
      %p595 = scmp.eq.s32.totalorder %s137, 1
      %p596 = por %p594, %p595
      %p597 = scmp.ne.s32.totalorder %s588, %s589
      %p598 = scmp.eq.s32.totalorder %s137, 0
      %p599 = por %p597, %p598
      %p600 = scmp.ne.s32.totalorder %s588, %s589
      %p601 = scmp.eq.s32.totalorder %s138, 1
      %p602 = por %p600, %p601
      %p604 = scmp.ne.s32.totalorder %s589, %s603
      %p605 = scmp.eq.s32.totalorder %s138, 0
      %p606 = por %p604, %p605
      %s608 = sadd.s32 %s607, 1
      %p611 = scmp.eq.s32.totalorder %s132, 1
      %p612 = scmp.ne.s32.totalorder %s607, %s609
      %p613 = scmp.eq.s32.totalorder %s132, 0
      %p614 = por %p612, %p613
      %p615 = scmp.ne.s32.totalorder %s607, %s609
      %p616 = scmp.eq.s32.totalorder %s137, 1
      %p617 = por %p615, %p616
      %p618 = scmp.ne.s32.totalorder %s609, %s610
      %p619 = scmp.eq.s32.totalorder %s137, 0
      %p620 = por %p618, %p619
      %p621 = scmp.ne.s32.totalorder %s609, %s610
      %p622 = scmp.eq.s32.totalorder %s138, 1
      %p623 = por %p621, %p622
      %p625 = scmp.ne.s32.totalorder %s610, %s624
      %p626 = scmp.eq.s32.totalorder %s138, 0
      %p627 = por %p625, %p626
      %s629 = sadd.s32 %s628, 1
      %p632 = scmp.eq.s32.totalorder %s132, 1
      %p633 = scmp.ne.s32.totalorder %s628, %s630
      %p634 = scmp.eq.s32.totalorder %s132, 0
      %p635 = por %p633, %p634
      %p636 = scmp.ne.s32.totalorder %s628, %s630
      %p637 = scmp.eq.s32.totalorder %s137, 1
      %p638 = por %p636, %p637
      %p639 = scmp.ne.s32.totalorder %s630, %s631
      %p640 = scmp.eq.s32.totalorder %s137, 0
      %p641 = por %p639, %p640
      %p642 = scmp.ne.s32.totalorder %s630, %s631
      %p643 = scmp.eq.s32.totalorder %s138, 1
      %p644 = por %p642, %p643
      %p646 = scmp.ne.s32.totalorder %s631, %s645
      %p647 = scmp.eq.s32.totalorder %s138, 0
      %p648 = por %p646, %p647
      %s650 = sadd.s32 %s649, 1
      %p653 = scmp.eq.s32.totalorder %s132, 1
      %p654 = scmp.ne.s32.totalorder %s649, %s651
      %p655 = scmp.eq.s32.totalorder %s132, 0
      %p656 = por %p654, %p655
      %p657 = scmp.ne.s32.totalorder %s649, %s651
      %p658 = scmp.eq.s32.totalorder %s137, 1
      %p659 = por %p657, %p658
      %p660 = scmp.ne.s32.totalorder %s651, %s652
      %p661 = scmp.eq.s32.totalorder %s137, 0
      %p662 = por %p660, %p661
      %p663 = scmp.ne.s32.totalorder %s651, %s652
      %p664 = scmp.eq.s32.totalorder %s138, 1
      %p665 = por %p663, %p664
      %p667 = scmp.ne.s32.totalorder %s652, %s666
      %p668 = scmp.eq.s32.totalorder %s138, 0
      %p669 = por %p667, %p668
      %s671 = sadd.s32 %s670, 1
      %p674 = scmp.eq.s32.totalorder %s132, 1
      %p675 = scmp.ne.s32.totalorder %s670, %s672
      %p676 = scmp.eq.s32.totalorder %s132, 0
      %p677 = por %p675, %p676
      %p678 = scmp.ne.s32.totalorder %s670, %s672
      %p679 = scmp.eq.s32.totalorder %s137, 1
      %p680 = por %p678, %p679
      %p681 = scmp.ne.s32.totalorder %s672, %s673
      %p682 = scmp.eq.s32.totalorder %s137, 0
      %p683 = por %p681, %p682
      %p684 = scmp.ne.s32.totalorder %s672, %s673
      %p685 = scmp.eq.s32.totalorder %s138, 1
      %p686 = por %p684, %p685
      %p688 = scmp.ne.s32.totalorder %s673, %s687
      %p689 = scmp.eq.s32.totalorder %s138, 0
      %p690 = por %p688, %p689
      %s692 = sadd.s32 %s691, 1
      %p695 = scmp.eq.s32.totalorder %s132, 1
      %p696 = scmp.ne.s32.totalorder %s691, %s693
      %p697 = scmp.eq.s32.totalorder %s132, 0
      %p698 = por %p696, %p697
      %p699 = scmp.ne.s32.totalorder %s691, %s693
      %p700 = scmp.eq.s32.totalorder %s137, 1
      %p701 = por %p699, %p700
      %p702 = scmp.ne.s32.totalorder %s693, %s694
      %p703 = scmp.eq.s32.totalorder %s137, 0
      %p704 = por %p702, %p703
      %p705 = scmp.ne.s32.totalorder %s693, %s694
      %p706 = scmp.eq.s32.totalorder %s138, 1
      %p707 = por %p705, %p706
      %p709 = scmp.ne.s32.totalorder %s694, %s708
      %p710 = scmp.eq.s32.totalorder %s138, 0
      %p711 = por %p709, %p710
      %s713 = sadd.s32 %s712, 1
      %p716 = scmp.eq.s32.totalorder %s132, 1
      %p717 = scmp.ne.s32.totalorder %s712, %s714
      %p718 = scmp.eq.s32.totalorder %s132, 0
      %p719 = por %p717, %p718
      %p720 = scmp.ne.s32.totalorder %s712, %s714
      %p721 = scmp.eq.s32.totalorder %s137, 1
      %p722 = por %p720, %p721
      %p723 = scmp.ne.s32.totalorder %s714, %s715
      %p724 = scmp.eq.s32.totalorder %s137, 0
      %p725 = por %p723, %p724
      %p726 = scmp.ne.s32.totalorder %s714, %s715
      %p727 = scmp.eq.s32.totalorder %s138, 1
      %p728 = por %p726, %p727
      %p730 = scmp.ne.s32.totalorder %s715, %s729
      %p731 = scmp.eq.s32.totalorder %s138, 0
      %p732 = por %p730, %p731
      %s734 = sadd.s32 %s733, 1
      %p737 = scmp.eq.s32.totalorder %s132, 1
      %p738 = scmp.ne.s32.totalorder %s733, %s735
      %p739 = scmp.eq.s32.totalorder %s132, 0
      %p740 = por %p738, %p739
      %p741 = scmp.ne.s32.totalorder %s733, %s735
      %p742 = scmp.eq.s32.totalorder %s137, 1
      %p743 = por %p741, %p742
      %p744 = scmp.ne.s32.totalorder %s735, %s736
      %p745 = scmp.eq.s32.totalorder %s137, 0
      %p746 = por %p744, %p745
      %p747 = scmp.ne.s32.totalorder %s735, %s736
      %p748 = scmp.eq.s32.totalorder %s138, 1
      %p749 = por %p747, %p748
      %p751 = scmp.ne.s32.totalorder %s736, %s750
      %p752 = scmp.eq.s32.totalorder %s138, 0
      %p753 = por %p751, %p752
      %s755 = sadd.s32 %s754, 1
      %p758 = scmp.eq.s32.totalorder %s132, 1
      %p759 = scmp.ne.s32.totalorder %s754, %s756
      %p760 = scmp.eq.s32.totalorder %s132, 0
      %p761 = por %p759, %p760
      %p762 = scmp.ne.s32.totalorder %s754, %s756
      %p763 = scmp.eq.s32.totalorder %s137, 1
      %p764 = por %p762, %p763
      %p765 = scmp.ne.s32.totalorder %s756, %s757
      %p766 = scmp.eq.s32.totalorder %s137, 0
      %p767 = por %p765, %p766
      %p768 = scmp.ne.s32.totalorder %s756, %s757
      %p769 = scmp.eq.s32.totalorder %s138, 1
      %p770 = por %p768, %p769
      %p772 = scmp.ne.s32.totalorder %s757, %s771
      %p773 = scmp.eq.s32.totalorder %s138, 0
      %p774 = por %p772, %p773
      %s776 = sadd.s32 %s775, 1
      %p779 = scmp.eq.s32.totalorder %s132, 1
      %p780 = scmp.ne.s32.totalorder %s775, %s777
      %p781 = scmp.eq.s32.totalorder %s132, 0
      %p782 = por %p780, %p781
      %p783 = scmp.ne.s32.totalorder %s775, %s777
      %p784 = scmp.eq.s32.totalorder %s137, 1
      %p785 = por %p783, %p784
      %p786 = scmp.ne.s32.totalorder %s777, %s778
      %p787 = scmp.eq.s32.totalorder %s137, 0
      %p788 = por %p786, %p787
      %p789 = scmp.ne.s32.totalorder %s777, %s778
      %p790 = scmp.eq.s32.totalorder %s138, 1
      %p791 = por %p789, %p790
      %p793 = scmp.ne.s32.totalorder %s778, %s792
      %p794 = scmp.eq.s32.totalorder %s138, 0
      %p795 = por %p793, %p794
      %s797 = sadd.s32 %s796, 1
      %p800 = scmp.eq.s32.totalorder %s132, 1
      %p801 = scmp.ne.s32.totalorder %s796, %s798
      %p802 = scmp.eq.s32.totalorder %s132, 0
      %p803 = por %p801, %p802
      %p804 = scmp.ne.s32.totalorder %s796, %s798
      %p805 = scmp.eq.s32.totalorder %s137, 1
      %p806 = por %p804, %p805
      %p807 = scmp.ne.s32.totalorder %s798, %s799
      %p808 = scmp.eq.s32.totalorder %s137, 0
      %p809 = por %p807, %p808
      %p810 = scmp.ne.s32.totalorder %s798, %s799
      %p811 = scmp.eq.s32.totalorder %s138, 1
      %p812 = por %p810, %p811
      %p814 = scmp.ne.s32.totalorder %s799, %s813
      %p815 = scmp.eq.s32.totalorder %s138, 0
      %p816 = por %p814, %p815
      %s818 = sadd.s32 %s817, 1
      %p821 = scmp.eq.s32.totalorder %s132, 1
      %p822 = scmp.ne.s32.totalorder %s817, %s819
      %p823 = scmp.eq.s32.totalorder %s132, 0
      %p824 = por %p822, %p823
      %p825 = scmp.ne.s32.totalorder %s817, %s819
      %p826 = scmp.eq.s32.totalorder %s137, 1
      %p827 = por %p825, %p826
      %p828 = scmp.ne.s32.totalorder %s819, %s820
      %p829 = scmp.eq.s32.totalorder %s137, 0
      %p830 = por %p828, %p829
      %p831 = scmp.ne.s32.totalorder %s819, %s820
      %p832 = scmp.eq.s32.totalorder %s138, 1
      %p833 = por %p831, %p832
      %p835 = scmp.ne.s32.totalorder %s820, %s834
      %p836 = scmp.eq.s32.totalorder %s138, 0
      %p837 = por %p835, %p836
      %s839 = sadd.s32 %s838, 1
      %p842 = scmp.eq.s32.totalorder %s132, 1
      %p843 = scmp.ne.s32.totalorder %s838, %s840
      %p844 = scmp.eq.s32.totalorder %s132, 0
      %p845 = por %p843, %p844
      %p846 = scmp.ne.s32.totalorder %s838, %s840
      %p847 = scmp.eq.s32.totalorder %s137, 1
      %p848 = por %p846, %p847
      %p849 = scmp.ne.s32.totalorder %s840, %s841
      %p850 = scmp.eq.s32.totalorder %s137, 0
      %p851 = por %p849, %p850
      %p852 = scmp.ne.s32.totalorder %s840, %s841
      %p853 = scmp.eq.s32.totalorder %s138, 1
      %p854 = por %p852, %p853
      %p856 = scmp.ne.s32.totalorder %s841, %s855
      %p857 = scmp.eq.s32.totalorder %s138, 0
      %p858 = por %p856, %p857
      %s860 = sadd.s32 %s859, 1
      %p863 = scmp.eq.s32.totalorder %s132, 1
      %p864 = scmp.ne.s32.totalorder %s859, %s861
      %p865 = scmp.eq.s32.totalorder %s132, 0
      %p866 = por %p864, %p865
      %p867 = scmp.ne.s32.totalorder %s859, %s861
      %p868 = scmp.eq.s32.totalorder %s137, 1
      %p869 = por %p867, %p868
      %p870 = scmp.ne.s32.totalorder %s861, %s862
      %p871 = scmp.eq.s32.totalorder %s137, 0
      %p872 = por %p870, %p871
      %p873 = scmp.ne.s32.totalorder %s861, %s862
      %p874 = scmp.eq.s32.totalorder %s138, 1
      %p875 = por %p873, %p874
      %p877 = scmp.ne.s32.totalorder %s862, %s876
      %p878 = scmp.eq.s32.totalorder %s138, 0
      %p879 = por %p877, %p878
      %s881 = sadd.s32 %s880, 1
      %p884 = scmp.eq.s32.totalorder %s132, 1
      %p885 = scmp.ne.s32.totalorder %s880, %s882
      %p886 = scmp.eq.s32.totalorder %s132, 0
      %p887 = por %p885, %p886
      %p888 = scmp.ne.s32.totalorder %s880, %s882
      %p889 = scmp.eq.s32.totalorder %s137, 1
      %p890 = por %p888, %p889
      %p891 = scmp.ne.s32.totalorder %s882, %s883
      %p892 = scmp.eq.s32.totalorder %s137, 0
      %p893 = por %p891, %p892
      %p894 = scmp.ne.s32.totalorder %s882, %s883
      %p895 = scmp.eq.s32.totalorder %s138, 1
      %p896 = por %p894, %p895
      %p898 = scmp.ne.s32.totalorder %s883, %s897
      %p899 = scmp.eq.s32.totalorder %s138, 0
      %p900 = por %p898, %p899
      %s902 = sadd.s32 %s901, 1
      %p905 = scmp.eq.s32.totalorder %s132, 1
      %p906 = scmp.ne.s32.totalorder %s901, %s903
      %p907 = scmp.eq.s32.totalorder %s132, 0
      %p908 = por %p906, %p907
      %p909 = scmp.ne.s32.totalorder %s901, %s903
      %p910 = scmp.eq.s32.totalorder %s137, 1
      %p911 = por %p909, %p910
      %p912 = scmp.ne.s32.totalorder %s903, %s904
      %p913 = scmp.eq.s32.totalorder %s137, 0
      %p914 = por %p912, %p913
      %p915 = scmp.ne.s32.totalorder %s903, %s904
      %p916 = scmp.eq.s32.totalorder %s138, 1
      %p917 = por %p915, %p916
      %p919 = scmp.ne.s32.totalorder %s904, %s918
      %p920 = scmp.eq.s32.totalorder %s138, 0
      %p921 = por %p919, %p920
      %s923 = sadd.s32 %s922, 1
      %p926 = scmp.eq.s32.totalorder %s132, 1
      %p927 = scmp.ne.s32.totalorder %s922, %s924
      %p928 = scmp.eq.s32.totalorder %s132, 0
      %p929 = por %p927, %p928
      %p930 = scmp.ne.s32.totalorder %s922, %s924
      %p931 = scmp.eq.s32.totalorder %s137, 1
      %p932 = por %p930, %p931
      %p933 = scmp.ne.s32.totalorder %s924, %s925
      %p934 = scmp.eq.s32.totalorder %s137, 0
      %p935 = por %p933, %p934
      %p936 = scmp.ne.s32.totalorder %s924, %s925
      %p937 = scmp.eq.s32.totalorder %s138, 1
      %p938 = por %p936, %p937
      %p940 = scmp.ne.s32.totalorder %s925, %s939
      %p941 = scmp.eq.s32.totalorder %s138, 0
      %p942 = por %p940, %p941
      %s944 = sadd.s32 %s943, 1
      %p947 = scmp.eq.s32.totalorder %s132, 1
      %p948 = scmp.ne.s32.totalorder %s943, %s945
      %p949 = scmp.eq.s32.totalorder %s132, 0
      %p950 = por %p948, %p949
      %p951 = scmp.ne.s32.totalorder %s943, %s945
      %p952 = scmp.eq.s32.totalorder %s137, 1
      %p953 = por %p951, %p952
      %p954 = scmp.ne.s32.totalorder %s945, %s946
      %p955 = scmp.eq.s32.totalorder %s137, 0
      %p956 = por %p954, %p955
      %p957 = scmp.ne.s32.totalorder %s945, %s946
      %p958 = scmp.eq.s32.totalorder %s138, 1
      %p959 = por %p957, %p958
      %p961 = scmp.ne.s32.totalorder %s946, %s960
      %p962 = scmp.eq.s32.totalorder %s138, 0
      %p963 = por %p961, %p962
      %s965 = sadd.s32 %s964, 1
      %p968 = scmp.eq.s32.totalorder %s132, 1
      %p969 = scmp.ne.s32.totalorder %s964, %s966
      %p970 = scmp.eq.s32.totalorder %s132, 0
      %p971 = por %p969, %p970
      %p972 = scmp.ne.s32.totalorder %s964, %s966
      %p973 = scmp.eq.s32.totalorder %s137, 1
      %p974 = por %p972, %p973
      %p975 = scmp.ne.s32.totalorder %s966, %s967
      %p976 = scmp.eq.s32.totalorder %s137, 0
      %p977 = por %p975, %p976
      %p978 = scmp.ne.s32.totalorder %s966, %s967
      %p979 = scmp.eq.s32.totalorder %s138, 1
      %p980 = por %p978, %p979
      %p982 = scmp.ne.s32.totalorder %s967, %s981
      %p983 = scmp.eq.s32.totalorder %s138, 0
      %p984 = por %p982, %p983
      %s986 = sadd.s32 %s985, 1
      %p989 = scmp.eq.s32.totalorder %s132, 1
      %p990 = scmp.ne.s32.totalorder %s985, %s987
      %p991 = scmp.eq.s32.totalorder %s132, 0
      %p992 = por %p990, %p991
      %p993 = scmp.ne.s32.totalorder %s985, %s987
      %p994 = scmp.eq.s32.totalorder %s137, 1
      %p995 = por %p993, %p994
      %p996 = scmp.ne.s32.totalorder %s987, %s988
      %p997 = scmp.eq.s32.totalorder %s137, 0
      %p998 = por %p996, %p997
      %p999 = scmp.ne.s32.totalorder %s987, %s988
      %p1000 = scmp.eq.s32.totalorder %s138, 1
      %p1001 = por %p999, %p1000
      %p1003 = scmp.ne.s32.totalorder %s988, %s1002
      %p1004 = scmp.eq.s32.totalorder %s138, 0
      %p1005 = por %p1003, %p1004
      %s1007 = sadd.s32 %s1006, 1
      %p1010 = scmp.eq.s32.totalorder %s132, 1
      %p1011 = scmp.ne.s32.totalorder %s1006, %s1008
      %p1012 = scmp.eq.s32.totalorder %s132, 0
      %p1013 = por %p1011, %p1012
      %p1014 = scmp.ne.s32.totalorder %s1006, %s1008
      %p1015 = scmp.eq.s32.totalorder %s137, 1
      %p1016 = por %p1014, %p1015
      %p1017 = scmp.ne.s32.totalorder %s1008, %s1009
      %p1018 = scmp.eq.s32.totalorder %s137, 0
      %p1019 = por %p1017, %p1018
      %p1020 = scmp.ne.s32.totalorder %s1008, %s1009
      %p1021 = scmp.eq.s32.totalorder %s138, 1
      %p1022 = por %p1020, %p1021
      %p1024 = scmp.ne.s32.totalorder %s1009, %s1023
      %p1025 = scmp.eq.s32.totalorder %s138, 0
      %p1026 = por %p1024, %p1025
      %s1028 = sadd.s32 %s1027, 1
      %p1031 = scmp.eq.s32.totalorder %s132, 1
      %p1032 = scmp.ne.s32.totalorder %s1027, %s1029
      %p1033 = scmp.eq.s32.totalorder %s132, 0
      %p1034 = por %p1032, %p1033
      %p1035 = scmp.ne.s32.totalorder %s1027, %s1029
      %p1036 = scmp.eq.s32.totalorder %s137, 1
      %p1037 = por %p1035, %p1036
      %p1038 = scmp.ne.s32.totalorder %s1029, %s1030
      %p1039 = scmp.eq.s32.totalorder %s137, 0
      %p1040 = por %p1038, %p1039
      %p1041 = scmp.ne.s32.totalorder %s1029, %s1030
      %p1042 = scmp.eq.s32.totalorder %s138, 1
      %p1043 = por %p1041, %p1042
      %p1045 = scmp.ne.s32.totalorder %s1030, %s1044
      %p1046 = scmp.eq.s32.totalorder %s138, 0
      %p1047 = por %p1045, %p1046
      %s1049 = sadd.s32 %s1048, 1
      %p1052 = scmp.eq.s32.totalorder %s132, 1
      %p1053 = scmp.ne.s32.totalorder %s1048, %s1050
      %p1054 = scmp.eq.s32.totalorder %s132, 0
      %p1055 = por %p1053, %p1054
      %p1056 = scmp.ne.s32.totalorder %s1048, %s1050
      %p1057 = scmp.eq.s32.totalorder %s137, 1
      %p1058 = por %p1056, %p1057
      %p1059 = scmp.ne.s32.totalorder %s1050, %s1051
      %p1060 = scmp.eq.s32.totalorder %s137, 0
      %p1061 = por %p1059, %p1060
      %p1062 = scmp.ne.s32.totalorder %s1050, %s1051
      %p1063 = scmp.eq.s32.totalorder %s138, 1
      %p1064 = por %p1062, %p1063
      %p1066 = scmp.ne.s32.totalorder %s1051, %s1065
      %p1067 = scmp.eq.s32.totalorder %s138, 0
      %p1068 = por %p1066, %p1067
      %s1070 = sadd.s32 %s1069, 1
      %p1073 = scmp.eq.s32.totalorder %s132, 1
      %p1074 = scmp.ne.s32.totalorder %s1069, %s1071
      %p1075 = scmp.eq.s32.totalorder %s132, 0
      %p1076 = por %p1074, %p1075
      %p1077 = scmp.ne.s32.totalorder %s1069, %s1071
      %p1078 = scmp.eq.s32.totalorder %s137, 1
      %p1079 = por %p1077, %p1078
      %p1080 = scmp.ne.s32.totalorder %s1071, %s1072
      %p1081 = scmp.eq.s32.totalorder %s137, 0
      %p1082 = por %p1080, %p1081
      %p1083 = scmp.ne.s32.totalorder %s1071, %s1072
      %p1084 = scmp.eq.s32.totalorder %s138, 1
      %p1085 = por %p1083, %p1084
      %p1087 = scmp.ne.s32.totalorder %s1072, %s1086
      %p1088 = scmp.eq.s32.totalorder %s138, 0
      %p1089 = por %p1087, %p1088
      %s1091 = sadd.s32 %s1090, 1
      %p1094 = scmp.eq.s32.totalorder %s132, 1
      %p1095 = scmp.ne.s32.totalorder %s1090, %s1092
      %p1096 = scmp.eq.s32.totalorder %s132, 0
      %p1097 = por %p1095, %p1096
      %p1098 = scmp.ne.s32.totalorder %s1090, %s1092
      %p1099 = scmp.eq.s32.totalorder %s137, 1
      %p1100 = por %p1098, %p1099
      %p1101 = scmp.ne.s32.totalorder %s1092, %s1093
      %p1102 = scmp.eq.s32.totalorder %s137, 0
      %p1103 = por %p1101, %p1102
      %p1104 = scmp.ne.s32.totalorder %s1092, %s1093
      %p1105 = scmp.eq.s32.totalorder %s138, 1
      %p1106 = por %p1104, %p1105
      %p1108 = scmp.ne.s32.totalorder %s1093, %s1107
      %p1109 = scmp.eq.s32.totalorder %s138, 0
      %p1110 = por %p1108, %p1109
      %s1112 = sadd.s32 %s1111, 1
      %p1115 = scmp.eq.s32.totalorder %s132, 1
      %p1116 = scmp.ne.s32.totalorder %s1111, %s1113
      %p1117 = scmp.eq.s32.totalorder %s132, 0
      %p1118 = por %p1116, %p1117
      %p1119 = scmp.ne.s32.totalorder %s1111, %s1113
      %p1120 = scmp.eq.s32.totalorder %s137, 1
      %p1121 = por %p1119, %p1120
      %p1122 = scmp.ne.s32.totalorder %s1113, %s1114
      %p1123 = scmp.eq.s32.totalorder %s137, 0
      %p1124 = por %p1122, %p1123
      %p1125 = scmp.ne.s32.totalorder %s1113, %s1114
      %p1126 = scmp.eq.s32.totalorder %s138, 1
      %p1127 = por %p1125, %p1126
      %p1129 = scmp.ne.s32.totalorder %s1114, %s1128
      %p1130 = scmp.eq.s32.totalorder %s138, 0
      %p1131 = por %p1129, %p1130
      %s1133 = sadd.s32 %s1132, 1
      %p1136 = scmp.eq.s32.totalorder %s132, 1
      %p1137 = scmp.ne.s32.totalorder %s1132, %s1134
      %p1138 = scmp.eq.s32.totalorder %s132, 0
      %p1139 = por %p1137, %p1138
      %p1140 = scmp.ne.s32.totalorder %s1132, %s1134
      %p1141 = scmp.eq.s32.totalorder %s137, 1
      %p1142 = por %p1140, %p1141
      %p1143 = scmp.ne.s32.totalorder %s1134, %s1135
      %p1144 = scmp.eq.s32.totalorder %s137, 0
      %p1145 = por %p1143, %p1144
      %p1146 = scmp.ne.s32.totalorder %s1134, %s1135
      %p1147 = scmp.eq.s32.totalorder %s138, 1
      %p1148 = por %p1146, %p1147
      %p1150 = scmp.ne.s32.totalorder %s1135, %s1149
      %p1151 = scmp.eq.s32.totalorder %s138, 0
      %p1152 = por %p1150, %p1151
      %s1154 = sadd.s32 %s1153, 1
      %p1157 = scmp.eq.s32.totalorder %s132, 1
      %p1158 = scmp.ne.s32.totalorder %s1153, %s1155
      %p1159 = scmp.eq.s32.totalorder %s132, 0
      %p1160 = por %p1158, %p1159
      %p1161 = scmp.ne.s32.totalorder %s1153, %s1155
      %p1162 = scmp.eq.s32.totalorder %s137, 1
      %p1163 = por %p1161, %p1162
      %p1164 = scmp.ne.s32.totalorder %s1155, %s1156
      %p1165 = scmp.eq.s32.totalorder %s137, 0
      %p1166 = por %p1164, %p1165
      %p1167 = scmp.ne.s32.totalorder %s1155, %s1156
      %p1168 = scmp.eq.s32.totalorder %s138, 1
      %p1169 = por %p1167, %p1168
      %p1171 = scmp.ne.s32.totalorder %s1156, %s1170
      %p1172 = scmp.eq.s32.totalorder %s138, 0
      %p1173 = por %p1171, %p1172
      %s1175 = sadd.s32 %s1174, 1
      %p1178 = scmp.eq.s32.totalorder %s132, 1
      %p1179 = scmp.ne.s32.totalorder %s1174, %s1176
      %p1180 = scmp.eq.s32.totalorder %s132, 0
      %p1181 = por %p1179, %p1180
      %p1182 = scmp.ne.s32.totalorder %s1174, %s1176
      %p1183 = scmp.eq.s32.totalorder %s137, 1
      %p1184 = por %p1182, %p1183
      %p1185 = scmp.ne.s32.totalorder %s1176, %s1177
      %p1186 = scmp.eq.s32.totalorder %s137, 0
      %p1187 = por %p1185, %p1186
      %p1188 = scmp.ne.s32.totalorder %s1176, %s1177
      %p1189 = scmp.eq.s32.totalorder %s138, 1
      %p1190 = por %p1188, %p1189
      %p1192 = scmp.ne.s32.totalorder %s1177, %s1191
      %p1193 = scmp.eq.s32.totalorder %s138, 0
      %p1194 = por %p1192, %p1193
      %s1196 = sadd.s32 %s1195, 1
      %p1199 = scmp.eq.s32.totalorder %s132, 1
      %p1200 = scmp.ne.s32.totalorder %s1195, %s1197
      %p1201 = scmp.eq.s32.totalorder %s132, 0
      %p1202 = por %p1200, %p1201
      %p1203 = scmp.ne.s32.totalorder %s1195, %s1197
      %p1204 = scmp.eq.s32.totalorder %s137, 1
      %p1205 = por %p1203, %p1204
      %p1206 = scmp.ne.s32.totalorder %s1197, %s1198
      %p1207 = scmp.eq.s32.totalorder %s137, 0
      %p1208 = por %p1206, %p1207
      %p1209 = scmp.ne.s32.totalorder %s1197, %s1198
      %p1210 = scmp.eq.s32.totalorder %s138, 1
      %p1211 = por %p1209, %p1210
      %p1213 = scmp.ne.s32.totalorder %s1198, %s1212
      %p1214 = scmp.eq.s32.totalorder %s138, 0
      %p1215 = por %p1213, %p1214
      %s1217 = sadd.s32 %s1216, 1
      %p1220 = scmp.eq.s32.totalorder %s132, 1
      %p1221 = scmp.ne.s32.totalorder %s1216, %s1218
      %p1222 = scmp.eq.s32.totalorder %s132, 0
      %p1223 = por %p1221, %p1222
      %p1224 = scmp.ne.s32.totalorder %s1216, %s1218
      %p1225 = scmp.eq.s32.totalorder %s137, 1
      %p1226 = por %p1224, %p1225
      %p1227 = scmp.ne.s32.totalorder %s1218, %s1219
      %p1228 = scmp.eq.s32.totalorder %s137, 0
      %p1229 = por %p1227, %p1228
      %p1230 = scmp.ne.s32.totalorder %s1218, %s1219
      %p1231 = scmp.eq.s32.totalorder %s138, 1
      %p1232 = por %p1230, %p1231
      %p1234 = scmp.ne.s32.totalorder %s1219, %s1233
      %p1235 = scmp.eq.s32.totalorder %s138, 0
      %p1236 = por %p1234, %p1235
      %s1238 = sadd.s32 %s1237, 1
      %p1241 = scmp.eq.s32.totalorder %s132, 1
      %p1242 = scmp.ne.s32.totalorder %s1237, %s1239
      %p1243 = scmp.eq.s32.totalorder %s132, 0
      %p1244 = por %p1242, %p1243
      %p1245 = scmp.ne.s32.totalorder %s1237, %s1239
      %p1246 = scmp.eq.s32.totalorder %s137, 1
      %p1247 = por %p1245, %p1246
      %p1248 = scmp.ne.s32.totalorder %s1239, %s1240
      %p1249 = scmp.eq.s32.totalorder %s137, 0
      %p1250 = por %p1248, %p1249
      %p1251 = scmp.ne.s32.totalorder %s1239, %s1240
      %p1252 = scmp.eq.s32.totalorder %s138, 1
      %p1253 = por %p1251, %p1252
      %p1255 = scmp.ne.s32.totalorder %s1240, %s1254
      %p1256 = scmp.eq.s32.totalorder %s138, 0
      %p1257 = por %p1255, %p1256
      %s1259 = sadd.s32 %s1258, 1
      %p1262 = scmp.eq.s32.totalorder %s132, 1
      %p1263 = scmp.ne.s32.totalorder %s1258, %s1260
      %p1264 = scmp.eq.s32.totalorder %s132, 0
      %p1265 = por %p1263, %p1264
      %p1266 = scmp.ne.s32.totalorder %s1258, %s1260
      %p1267 = scmp.eq.s32.totalorder %s137, 1
      %p1268 = por %p1266, %p1267
      %p1269 = scmp.ne.s32.totalorder %s1260, %s1261
      %p1270 = scmp.eq.s32.totalorder %s137, 0
      %p1271 = por %p1269, %p1270
      %p1272 = scmp.ne.s32.totalorder %s1260, %s1261
      %p1273 = scmp.eq.s32.totalorder %s138, 1
      %p1274 = por %p1272, %p1273
      %p1276 = scmp.ne.s32.totalorder %s1261, %s1275
      %p1277 = scmp.eq.s32.totalorder %s138, 0
      %p1278 = por %p1276, %p1277
      %s1280 = sadd.s32 %s1279, 1
      %p1283 = scmp.eq.s32.totalorder %s132, 1
      %p1284 = scmp.ne.s32.totalorder %s1279, %s1281
      %p1285 = scmp.eq.s32.totalorder %s132, 0
      %p1286 = por %p1284, %p1285
      %p1287 = scmp.ne.s32.totalorder %s1279, %s1281
      %p1288 = scmp.eq.s32.totalorder %s137, 1
      %p1289 = por %p1287, %p1288
      %p1290 = scmp.ne.s32.totalorder %s1281, %s1282
      %p1291 = scmp.eq.s32.totalorder %s137, 0
      %p1292 = por %p1290, %p1291
      %p1293 = scmp.ne.s32.totalorder %s1281, %s1282
      %p1294 = scmp.eq.s32.totalorder %s138, 1
      %p1295 = por %p1293, %p1294
      %p1297 = scmp.ne.s32.totalorder %s1282, %s1296
      %p1298 = scmp.eq.s32.totalorder %s138, 0
      %p1299 = por %p1297, %p1298
      %s1301 = sadd.s32 %s1300, 1
      %p1304 = scmp.eq.s32.totalorder %s132, 1
      %p1305 = scmp.ne.s32.totalorder %s1300, %s1302
      %p1306 = scmp.eq.s32.totalorder %s132, 0
      %p1307 = por %p1305, %p1306
      %p1308 = scmp.ne.s32.totalorder %s1300, %s1302
      %p1309 = scmp.eq.s32.totalorder %s137, 1
      %p1310 = por %p1308, %p1309
      %p1311 = scmp.ne.s32.totalorder %s1302, %s1303
      %p1312 = scmp.eq.s32.totalorder %s137, 0
      %p1313 = por %p1311, %p1312
      %p1314 = scmp.ne.s32.totalorder %s1302, %s1303
      %p1315 = scmp.eq.s32.totalorder %s138, 1
      %p1316 = por %p1314, %p1315
      %p1318 = scmp.ne.s32.totalorder %s1303, %s1317
      %p1319 = scmp.eq.s32.totalorder %s138, 0
      %p1320 = por %p1318, %p1319
      %s1322 = sadd.s32 %s1321, 1
      %p1325 = scmp.eq.s32.totalorder %s132, 1
      %p1326 = scmp.ne.s32.totalorder %s1321, %s1323
      %p1327 = scmp.eq.s32.totalorder %s132, 0
      %p1328 = por %p1326, %p1327
      %p1329 = scmp.ne.s32.totalorder %s1321, %s1323
      %p1330 = scmp.eq.s32.totalorder %s137, 1
      %p1331 = por %p1329, %p1330
      %p1332 = scmp.ne.s32.totalorder %s1323, %s1324
      %p1333 = scmp.eq.s32.totalorder %s137, 0
      %p1334 = por %p1332, %p1333
      %p1335 = scmp.ne.s32.totalorder %s1323, %s1324
      %p1336 = scmp.eq.s32.totalorder %s138, 1
      %p1337 = por %p1335, %p1336
      %p1339 = scmp.ne.s32.totalorder %s1324, %s1338
      %p1340 = scmp.eq.s32.totalorder %s138, 0
      %p1341 = por %p1339, %p1340
      %s1342 = ssub.s32 %s132, %s139
      %p1343 = scmp.eq.s32.totalorder %s1342, 0
      %s1345 = sadd.s32 %s1344, 1
      %s1346 = scalar_select %p1343, %s1344, %s1345
      %p1349 = pneg %p1343
      %p1350 = scmp.eq.s32.totalorder %s132, 1
      %p1351 = por %p1349, %p1350
      %p1352 = scmp.ne.s32.totalorder %s1344, %s1347
      %p1353 = scmp.eq.s32.totalorder %s132, 0
      %p1354 = por %p1352, %p1353
      %p1355 = scmp.ne.s32.totalorder %s1344, %s1347
      %p1356 = scmp.eq.s32.totalorder %s137, 1
      %p1357 = por %p1355, %p1356
      %p1358 = scmp.ne.s32.totalorder %s1347, %s1348
      %p1359 = scmp.eq.s32.totalorder %s137, 0
      %p1360 = por %p1358, %p1359
      %p1361 = scmp.ne.s32.totalorder %s1347, %s1348
      %p1362 = scmp.eq.s32.totalorder %s138, 1
      %p1363 = por %p1361, %p1362
      %p1365 = scmp.ne.s32.totalorder %s1348, %s1364
      %p1366 = scmp.eq.s32.totalorder %s138, 0
      %p1367 = por %p1365, %p1366
      %p1368 = scmp.le.s32.totalorder 1, %s132
      %p1369 = scmp.lt.s32.totalorder %s132, 3
      %p1370 = pnand %p1368, %p1369
      %p1371 = pneg %p1370
      // Predicated region
      $region9: #{resnet3_mfcc_forward.1} parent=5 // pred_check
        _
      $region10: #{resnet3_mfcc_forward.1} parent=5 // pred_check_branch
        %1373 = sbr.rel (%p1370) target = $region12
      $region11: #{resnet3_mfcc_forward.1} parent=5 // pred_region
        %s1374 = ssub.s32 %s132, 1
        // Predicated region
        $region13: #{resnet3_mfcc_forward.1} parent=11 // pred_check
          %p1375 = pneg %p179
        $region14: #{resnet3_mfcc_forward.1} parent=11 // pred_check_branch
          %1377 = sbr.rel (%p1375) target = $region16
        $region15: #{resnet3_mfcc_forward.1} parent=11 // pred_region
          _
        $region16: #{resnet3_mfcc_forward.1} parent=11 // pred_fallthru
          _
        // Predicated region
        $region17: #{resnet3_mfcc_forward.1} parent=11 // pred_check
          %p1378 = pneg %p200
        $region18: #{resnet3_mfcc_forward.1} parent=11 // pred_check_branch
          %1380 = sbr.rel (%p1378) target = $region20
        $region19: #{resnet3_mfcc_forward.1} parent=11 // pred_region
          _
        $region20: #{resnet3_mfcc_forward.1} parent=11 // pred_fallthru
          _
        // Predicated region
        $region21: #{resnet3_mfcc_forward.1} parent=11 // pred_check
          %p1381 = pneg %p221
        $region22: #{resnet3_mfcc_forward.1} parent=11 // pred_check_branch
          %1383 = sbr.rel (%p1381) target = $region24
        $region23: #{resnet3_mfcc_forward.1} parent=11 // pred_region
          _
        $region24: #{resnet3_mfcc_forward.1} parent=11 // pred_fallthru
          _
        // Predicated region
        $region25: #{resnet3_mfcc_forward.1} parent=11 // pred_check
          %p1384 = pneg %p242
        $region26: #{resnet3_mfcc_forward.1} parent=11 // pred_check_branch
          %1386 = sbr.rel (%p1384) target = $region28
        $region27: #{resnet3_mfcc_forward.1} parent=11 // pred_region
          _
        $region28: #{resnet3_mfcc_forward.1} parent=11 // pred_fallthru
          _
        // Predicated region
        $region29: #{resnet3_mfcc_forward.1} parent=11 // pred_check
          %p1387 = pneg %p263
        $region30: #{resnet3_mfcc_forward.1} parent=11 // pred_check_branch
          %1389 = sbr.rel (%p1387) target = $region32
        $region31: #{resnet3_mfcc_forward.1} parent=11 // pred_region
          _
        $region32: #{resnet3_mfcc_forward.1} parent=11 // pred_fallthru
          _
        // Predicated region
        $region33: #{resnet3_mfcc_forward.1} parent=11 // pred_check
          %p1390 = pneg %p284
        $region34: #{resnet3_mfcc_forward.1} parent=11 // pred_check_branch
          %1392 = sbr.rel (%p1390) target = $region36
        $region35: #{resnet3_mfcc_forward.1} parent=11 // pred_region
          _
        $region36: #{resnet3_mfcc_forward.1} parent=11 // pred_fallthru
          _
        // Predicated region
        $region37: #{resnet3_mfcc_forward.1} parent=11 // pred_check
          %p1393 = pneg %p305
        $region38: #{resnet3_mfcc_forward.1} parent=11 // pred_check_branch
          %1395 = sbr.rel (%p1393) target = $region40
        $region39: #{resnet3_mfcc_forward.1} parent=11 // pred_region
          _
        $region40: #{resnet3_mfcc_forward.1} parent=11 // pred_fallthru
          _
        // Predicated region
        $region41: #{resnet3_mfcc_forward.1} parent=11 // pred_check
          %p1396 = pneg %p326
        $region42: #{resnet3_mfcc_forward.1} parent=11 // pred_check_branch
          %1398 = sbr.rel (%p1396) target = $region44
        $region43: #{resnet3_mfcc_forward.1} parent=11 // pred_region
          _
        $region44: #{resnet3_mfcc_forward.1} parent=11 // pred_fallthru
          _
        // Predicated region
        $region45: #{resnet3_mfcc_forward.1} parent=11 // pred_check
          %p1399 = pneg %p347
        $region46: #{resnet3_mfcc_forward.1} parent=11 // pred_check_branch
          %1401 = sbr.rel (%p1399) target = $region48
        $region47: #{resnet3_mfcc_forward.1} parent=11 // pred_region
          _
        $region48: #{resnet3_mfcc_forward.1} parent=11 // pred_fallthru
          _
        // Predicated region
        $region49: #{resnet3_mfcc_forward.1} parent=11 // pred_check
          %p1402 = pneg %p368
        $region50: #{resnet3_mfcc_forward.1} parent=11 // pred_check_branch
          %1404 = sbr.rel (%p1402) target = $region52
        $region51: #{resnet3_mfcc_forward.1} parent=11 // pred_region
          _
        $region52: #{resnet3_mfcc_forward.1} parent=11 // pred_fallthru
          _
        // Predicated region
        $region53: #{resnet3_mfcc_forward.1} parent=11 // pred_check
          %p1405 = pneg %p389
        $region54: #{resnet3_mfcc_forward.1} parent=11 // pred_check_branch
          %1407 = sbr.rel (%p1405) target = $region56
        $region55: #{resnet3_mfcc_forward.1} parent=11 // pred_region
          _
        $region56: #{resnet3_mfcc_forward.1} parent=11 // pred_fallthru
          _
        // Predicated region
        $region57: #{resnet3_mfcc_forward.1} parent=11 // pred_check
          %p1408 = pneg %p410
        $region58: #{resnet3_mfcc_forward.1} parent=11 // pred_check_branch
          %1410 = sbr.rel (%p1408) target = $region60
        $region59: #{resnet3_mfcc_forward.1} parent=11 // pred_region
          _
        $region60: #{resnet3_mfcc_forward.1} parent=11 // pred_fallthru
          _
        // Predicated region
        $region61: #{resnet3_mfcc_forward.1} parent=11 // pred_check
          %p1411 = pneg %p431
        $region62: #{resnet3_mfcc_forward.1} parent=11 // pred_check_branch
          %1413 = sbr.rel (%p1411) target = $region64
        $region63: #{resnet3_mfcc_forward.1} parent=11 // pred_region
          _
        $region64: #{resnet3_mfcc_forward.1} parent=11 // pred_fallthru
          _
        // Predicated region
        $region65: #{resnet3_mfcc_forward.1} parent=11 // pred_check
          %p1414 = pneg %p452
        $region66: #{resnet3_mfcc_forward.1} parent=11 // pred_check_branch
          %1416 = sbr.rel (%p1414) target = $region68
        $region67: #{resnet3_mfcc_forward.1} parent=11 // pred_region
          _
        $region68: #{resnet3_mfcc_forward.1} parent=11 // pred_fallthru
          _
        // Predicated region
        $region69: #{resnet3_mfcc_forward.1} parent=11 // pred_check
          %p1417 = pneg %p473
        $region70: #{resnet3_mfcc_forward.1} parent=11 // pred_check_branch
          %1419 = sbr.rel (%p1417) target = $region72
        $region71: #{resnet3_mfcc_forward.1} parent=11 // pred_region
          _
        $region72: #{resnet3_mfcc_forward.1} parent=11 // pred_fallthru
          _
        // Predicated region
        $region73: #{resnet3_mfcc_forward.1} parent=11 // pred_check
          %p1420 = pneg %p494
        $region74: #{resnet3_mfcc_forward.1} parent=11 // pred_check_branch
          %1422 = sbr.rel (%p1420) target = $region76
        $region75: #{resnet3_mfcc_forward.1} parent=11 // pred_region
          _
        $region76: #{resnet3_mfcc_forward.1} parent=11 // pred_fallthru
          _
        // Predicated region
        $region77: #{resnet3_mfcc_forward.1} parent=11 // pred_check
          %p1423 = pneg %p515
        $region78: #{resnet3_mfcc_forward.1} parent=11 // pred_check_branch
          %1425 = sbr.rel (%p1423) target = $region80
        $region79: #{resnet3_mfcc_forward.1} parent=11 // pred_region
          _
        $region80: #{resnet3_mfcc_forward.1} parent=11 // pred_fallthru
          _
        // Predicated region
        $region81: #{resnet3_mfcc_forward.1} parent=11 // pred_check
          %p1426 = pneg %p536
        $region82: #{resnet3_mfcc_forward.1} parent=11 // pred_check_branch
          %1428 = sbr.rel (%p1426) target = $region84
        $region83: #{resnet3_mfcc_forward.1} parent=11 // pred_region
          _
        $region84: #{resnet3_mfcc_forward.1} parent=11 // pred_fallthru
          _
        // Predicated region
        $region85: #{resnet3_mfcc_forward.1} parent=11 // pred_check
          %p1429 = pneg %p557
        $region86: #{resnet3_mfcc_forward.1} parent=11 // pred_check_branch
          %1431 = sbr.rel (%p1429) target = $region88
        $region87: #{resnet3_mfcc_forward.1} parent=11 // pred_region
          _
        $region88: #{resnet3_mfcc_forward.1} parent=11 // pred_fallthru
          _
        // Predicated region
        $region89: #{resnet3_mfcc_forward.1} parent=11 // pred_check
          %p1432 = pneg %p578
        $region90: #{resnet3_mfcc_forward.1} parent=11 // pred_check_branch
          %1434 = sbr.rel (%p1432) target = $region92
        $region91: #{resnet3_mfcc_forward.1} parent=11 // pred_region
          _
        $region92: #{resnet3_mfcc_forward.1} parent=11 // pred_fallthru
          _
        // Predicated region
        $region93: #{resnet3_mfcc_forward.1} parent=11 // pred_check
          %p1435 = pneg %p599
        $region94: #{resnet3_mfcc_forward.1} parent=11 // pred_check_branch
          %1437 = sbr.rel (%p1435) target = $region96
        $region95: #{resnet3_mfcc_forward.1} parent=11 // pred_region
          _
        $region96: #{resnet3_mfcc_forward.1} parent=11 // pred_fallthru
          _
        // Predicated region
        $region97: #{resnet3_mfcc_forward.1} parent=11 // pred_check
          %p1438 = pneg %p620
        $region98: #{resnet3_mfcc_forward.1} parent=11 // pred_check_branch
          %1440 = sbr.rel (%p1438) target = $region100
        $region99: #{resnet3_mfcc_forward.1} parent=11 // pred_region
          _
        $region100: #{resnet3_mfcc_forward.1} parent=11 // pred_fallthru
          _
        // Predicated region
        $region101: #{resnet3_mfcc_forward.1} parent=11 // pred_check
          %p1441 = pneg %p641
        $region102: #{resnet3_mfcc_forward.1} parent=11 // pred_check_branch
          %1443 = sbr.rel (%p1441) target = $region104
        $region103: #{resnet3_mfcc_forward.1} parent=11 // pred_region
          _
        $region104: #{resnet3_mfcc_forward.1} parent=11 // pred_fallthru
          _
        // Predicated region
        $region105: #{resnet3_mfcc_forward.1} parent=11 // pred_check
          %p1444 = pneg %p662
        $region106: #{resnet3_mfcc_forward.1} parent=11 // pred_check_branch
          %1446 = sbr.rel (%p1444) target = $region108
        $region107: #{resnet3_mfcc_forward.1} parent=11 // pred_region
          _
        $region108: #{resnet3_mfcc_forward.1} parent=11 // pred_fallthru
          _
        // Predicated region
        $region109: #{resnet3_mfcc_forward.1} parent=11 // pred_check
          %p1447 = pneg %p683
        $region110: #{resnet3_mfcc_forward.1} parent=11 // pred_check_branch
          %1449 = sbr.rel (%p1447) target = $region112
        $region111: #{resnet3_mfcc_forward.1} parent=11 // pred_region
          _
        $region112: #{resnet3_mfcc_forward.1} parent=11 // pred_fallthru
          _
        // Predicated region
        $region113: #{resnet3_mfcc_forward.1} parent=11 // pred_check
          %p1450 = pneg %p704
        $region114: #{resnet3_mfcc_forward.1} parent=11 // pred_check_branch
          %1452 = sbr.rel (%p1450) target = $region116
        $region115: #{resnet3_mfcc_forward.1} parent=11 // pred_region
          _
        $region116: #{resnet3_mfcc_forward.1} parent=11 // pred_fallthru
          _
        // Predicated region
        $region117: #{resnet3_mfcc_forward.1} parent=11 // pred_check
          %p1453 = pneg %p725
        $region118: #{resnet3_mfcc_forward.1} parent=11 // pred_check_branch
          %1455 = sbr.rel (%p1453) target = $region120
        $region119: #{resnet3_mfcc_forward.1} parent=11 // pred_region
          _
        $region120: #{resnet3_mfcc_forward.1} parent=11 // pred_fallthru
          _
        // Predicated region
        $region121: #{resnet3_mfcc_forward.1} parent=11 // pred_check
          %p1456 = pneg %p746
        $region122: #{resnet3_mfcc_forward.1} parent=11 // pred_check_branch
          %1458 = sbr.rel (%p1456) target = $region124
        $region123: #{resnet3_mfcc_forward.1} parent=11 // pred_region
          %s1460 = ssub.s32 16, 16
          %1461 = vsyncadd [#allocation3], %s1460
          %s1463 = sshll.u32 [#allocation2], 4
          %s1464 = int_to_ptr.vmem [resolvable:$true] %s1463
          %1466 = dma.hbm_to_vmem [thread:$0]  %s57, 16, %s1464, [#allocation3]
        $region124: #{resnet3_mfcc_forward.1} parent=11 // pred_fallthru
          _
        // Predicated region
        $region125: #{resnet3_mfcc_forward.1} parent=11 // pred_check
          %p1467 = pneg %p767
        $region126: #{resnet3_mfcc_forward.1} parent=11 // pred_check_branch
          %1469 = sbr.rel (%p1467) target = $region128
        $region127: #{resnet3_mfcc_forward.1} parent=11 // pred_region
          _
        $region128: #{resnet3_mfcc_forward.1} parent=11 // pred_fallthru
          _
        // Predicated region
        $region129: #{resnet3_mfcc_forward.1} parent=11 // pred_check
          %p1470 = pneg %p788
        $region130: #{resnet3_mfcc_forward.1} parent=11 // pred_check_branch
          %1472 = sbr.rel (%p1470) target = $region132
        $region131: #{resnet3_mfcc_forward.1} parent=11 // pred_region
          %s1474 = ssub.s32 16, 16
          %1475 = vsyncadd [#allocation6], %s1474
          %s1477 = sshll.u32 [#allocation5], 4
          %s1478 = int_to_ptr.vmem [resolvable:$true] %s1477
          %1480 = dma.hbm_to_vmem [thread:$0]  %s61, 16, %s1478, [#allocation6]
        $region132: #{resnet3_mfcc_forward.1} parent=11 // pred_fallthru
          _
        // Predicated region
        $region133: #{resnet3_mfcc_forward.1} parent=11 // pred_check
          %p1481 = pneg %p809
        $region134: #{resnet3_mfcc_forward.1} parent=11 // pred_check_branch
          %1483 = sbr.rel (%p1481) target = $region136
        $region135: #{resnet3_mfcc_forward.1} parent=11 // pred_region
          _
        $region136: #{resnet3_mfcc_forward.1} parent=11 // pred_fallthru
          _
        // Predicated region
        $region137: #{resnet3_mfcc_forward.1} parent=11 // pred_check
          %p1484 = pneg %p830
        $region138: #{resnet3_mfcc_forward.1} parent=11 // pred_check_branch
          %1486 = sbr.rel (%p1484) target = $region140
        $region139: #{resnet3_mfcc_forward.1} parent=11 // pred_region
          %s1488 = ssub.s32 16, 16
          %1489 = vsyncadd [#allocation6], %s1488
          %s1491 = sshll.u32 [#allocation7], 4
          %s1492 = int_to_ptr.vmem [resolvable:$true] %s1491
          %1494 = dma.hbm_to_vmem [thread:$0]  %s65, 16, %s1492, [#allocation6]
        $region140: #{resnet3_mfcc_forward.1} parent=11 // pred_fallthru
          _
        // Predicated region
        $region141: #{resnet3_mfcc_forward.1} parent=11 // pred_check
          %p1495 = pneg %p851
        $region142: #{resnet3_mfcc_forward.1} parent=11 // pred_check_branch
          %1497 = sbr.rel (%p1495) target = $region144
        $region143: #{resnet3_mfcc_forward.1} parent=11 // pred_region
          _
        $region144: #{resnet3_mfcc_forward.1} parent=11 // pred_fallthru
          _
        // Predicated region
        $region145: #{resnet3_mfcc_forward.1} parent=11 // pred_check
          %p1498 = pneg %p872
        $region146: #{resnet3_mfcc_forward.1} parent=11 // pred_check_branch
          %1500 = sbr.rel (%p1498) target = $region148
        $region147: #{resnet3_mfcc_forward.1} parent=11 // pred_region
          %s1502 = ssub.s32 16, 16
          %1503 = vsyncadd [#allocation9], %s1502
          %s1505 = sshll.u32 [#allocation8], 4
          %s1506 = int_to_ptr.vmem [resolvable:$true] %s1505
          %1508 = dma.hbm_to_vmem [thread:$0]  %s69, 16, %s1506, [#allocation9]
        $region148: #{resnet3_mfcc_forward.1} parent=11 // pred_fallthru
          _
        // Predicated region
        $region149: #{resnet3_mfcc_forward.1} parent=11 // pred_check
          %p1509 = pneg %p893
        $region150: #{resnet3_mfcc_forward.1} parent=11 // pred_check_branch
          %1511 = sbr.rel (%p1509) target = $region152
        $region151: #{resnet3_mfcc_forward.1} parent=11 // pred_region
          _
        $region152: #{resnet3_mfcc_forward.1} parent=11 // pred_fallthru
          _
        // Predicated region
        $region153: #{resnet3_mfcc_forward.1} parent=11 // pred_check
          %p1512 = pneg %p914
        $region154: #{resnet3_mfcc_forward.1} parent=11 // pred_check_branch
          %1514 = sbr.rel (%p1512) target = $region156
        $region155: #{resnet3_mfcc_forward.1} parent=11 // pred_region
          %s1516 = ssub.s32 16, 16
          %1517 = vsyncadd [#allocation9], %s1516
          %s1519 = sshll.u32 [#allocation10], 4
          %s1520 = int_to_ptr.vmem [resolvable:$true] %s1519
          %1522 = dma.hbm_to_vmem [thread:$0]  %s73, 16, %s1520, [#allocation9]
        $region156: #{resnet3_mfcc_forward.1} parent=11 // pred_fallthru
          _
        // Predicated region
        $region157: #{resnet3_mfcc_forward.1} parent=11 // pred_check
          %p1523 = pneg %p935
        $region158: #{resnet3_mfcc_forward.1} parent=11 // pred_check_branch
          %1525 = sbr.rel (%p1523) target = $region160
        $region159: #{resnet3_mfcc_forward.1} parent=11 // pred_region
          _
        $region160: #{resnet3_mfcc_forward.1} parent=11 // pred_fallthru
          _
        // Predicated region
        $region161: #{resnet3_mfcc_forward.1} parent=11 // pred_check
          %p1526 = pneg %p956
        $region162: #{resnet3_mfcc_forward.1} parent=11 // pred_check_branch
          %1528 = sbr.rel (%p1526) target = $region164
        $region163: #{resnet3_mfcc_forward.1} parent=11 // pred_region
          %s1530 = ssub.s32 16, 16
          %1531 = vsyncadd [#allocation12], %s1530
          %s1533 = sshll.u32 [#allocation11], 4
          %s1534 = int_to_ptr.vmem [resolvable:$true] %s1533
          %1536 = dma.hbm_to_vmem [thread:$0]  %s77, 16, %s1534, [#allocation12]
        $region164: #{resnet3_mfcc_forward.1} parent=11 // pred_fallthru
          _
        // Predicated region
        $region165: #{resnet3_mfcc_forward.1} parent=11 // pred_check
          %p1537 = pneg %p977
        $region166: #{resnet3_mfcc_forward.1} parent=11 // pred_check_branch
          %1539 = sbr.rel (%p1537) target = $region168
        $region167: #{resnet3_mfcc_forward.1} parent=11 // pred_region
          _
        $region168: #{resnet3_mfcc_forward.1} parent=11 // pred_fallthru
          _
        // Predicated region
        $region169: #{resnet3_mfcc_forward.1} parent=11 // pred_check
          %p1540 = pneg %p998
        $region170: #{resnet3_mfcc_forward.1} parent=11 // pred_check_branch
          %1542 = sbr.rel (%p1540) target = $region172
        $region171: #{resnet3_mfcc_forward.1} parent=11 // pred_region
          %s1544 = ssub.s32 16, 16
          %1545 = vsyncadd [#allocation12], %s1544
          %s1547 = sshll.u32 [#allocation13], 4
          %s1548 = int_to_ptr.vmem [resolvable:$true] %s1547
          %1550 = dma.hbm_to_vmem [thread:$0]  %s81, 16, %s1548, [#allocation12]
        $region172: #{resnet3_mfcc_forward.1} parent=11 // pred_fallthru
          _
        // Predicated region
        $region173: #{resnet3_mfcc_forward.1} parent=11 // pred_check
          %p1551 = pneg %p1019
        $region174: #{resnet3_mfcc_forward.1} parent=11 // pred_check_branch
          %1553 = sbr.rel (%p1551) target = $region176
        $region175: #{resnet3_mfcc_forward.1} parent=11 // pred_region
          _
        $region176: #{resnet3_mfcc_forward.1} parent=11 // pred_fallthru
          _
        // Predicated region
        $region177: #{resnet3_mfcc_forward.1} parent=11 // pred_check
          %p1554 = pneg %p1040
        $region178: #{resnet3_mfcc_forward.1} parent=11 // pred_check_branch
          %1556 = sbr.rel (%p1554) target = $region180
        $region179: #{resnet3_mfcc_forward.1} parent=11 // pred_region
          %s1558 = ssub.s32 16, 16
          %1559 = vsyncadd [#allocation15], %s1558
          %s1561 = sshll.u32 [#allocation14], 4
          %s1562 = int_to_ptr.vmem [resolvable:$true] %s1561
          %1564 = dma.hbm_to_vmem [thread:$0]  %s85, 16, %s1562, [#allocation15]
        $region180: #{resnet3_mfcc_forward.1} parent=11 // pred_fallthru
          _
        // Predicated region
        $region181: #{resnet3_mfcc_forward.1} parent=11 // pred_check
          %p1565 = pneg %p1061
        $region182: #{resnet3_mfcc_forward.1} parent=11 // pred_check_branch
          %1567 = sbr.rel (%p1565) target = $region184
        $region183: #{resnet3_mfcc_forward.1} parent=11 // pred_region
          _
        $region184: #{resnet3_mfcc_forward.1} parent=11 // pred_fallthru
          _
        // Predicated region
        $region185: #{resnet3_mfcc_forward.1} parent=11 // pred_check
          %p1568 = pneg %p1082
        $region186: #{resnet3_mfcc_forward.1} parent=11 // pred_check_branch
          %1570 = sbr.rel (%p1568) target = $region188
        $region187: #{resnet3_mfcc_forward.1} parent=11 // pred_region
          %s1572 = ssub.s32 16, 16
          %1573 = vsyncadd [#allocation15], %s1572
          %s1575 = sshll.u32 [#allocation16], 4
          %s1576 = int_to_ptr.vmem [resolvable:$true] %s1575
          %1578 = dma.hbm_to_vmem [thread:$0]  %s89, 16, %s1576, [#allocation15]
        $region188: #{resnet3_mfcc_forward.1} parent=11 // pred_fallthru
          _
        // Predicated region
        $region189: #{resnet3_mfcc_forward.1} parent=11 // pred_check
          %p1579 = pneg %p1103
        $region190: #{resnet3_mfcc_forward.1} parent=11 // pred_check_branch
          %1581 = sbr.rel (%p1579) target = $region192
        $region191: #{resnet3_mfcc_forward.1} parent=11 // pred_region
          _
        $region192: #{resnet3_mfcc_forward.1} parent=11 // pred_fallthru
          _
        // Predicated region
        $region193: #{resnet3_mfcc_forward.1} parent=11 // pred_check
          %p1582 = pneg %p1124
        $region194: #{resnet3_mfcc_forward.1} parent=11 // pred_check_branch
          %1584 = sbr.rel (%p1582) target = $region196
        $region195: #{resnet3_mfcc_forward.1} parent=11 // pred_region
          %s1586 = ssub.s32 16, 16
          %1587 = vsyncadd [#allocation18], %s1586
          %s1589 = sshll.u32 [#allocation17], 4
          %s1590 = int_to_ptr.vmem [resolvable:$true] %s1589
          %1592 = dma.hbm_to_vmem [thread:$0]  %s93, 16, %s1590, [#allocation18]
        $region196: #{resnet3_mfcc_forward.1} parent=11 // pred_fallthru
          _
        // Predicated region
        $region197: #{resnet3_mfcc_forward.1} parent=11 // pred_check
          %p1593 = pneg %p1145
        $region198: #{resnet3_mfcc_forward.1} parent=11 // pred_check_branch
          %1595 = sbr.rel (%p1593) target = $region200
        $region199: #{resnet3_mfcc_forward.1} parent=11 // pred_region
          _
        $region200: #{resnet3_mfcc_forward.1} parent=11 // pred_fallthru
          _
        // Predicated region
        $region201: #{resnet3_mfcc_forward.1} parent=11 // pred_check
          %p1596 = pneg %p1166
        $region202: #{resnet3_mfcc_forward.1} parent=11 // pred_check_branch
          %1598 = sbr.rel (%p1596) target = $region204
        $region203: #{resnet3_mfcc_forward.1} parent=11 // pred_region
          %s1600 = ssub.s32 16, 16
          %1601 = vsyncadd [#allocation18], %s1600
          %s1603 = sshll.u32 [#allocation19], 4
          %s1604 = int_to_ptr.vmem [resolvable:$true] %s1603
          %1606 = dma.hbm_to_vmem [thread:$0]  %s97, 16, %s1604, [#allocation18]
        $region204: #{resnet3_mfcc_forward.1} parent=11 // pred_fallthru
          _
        // Predicated region
        $region205: #{resnet3_mfcc_forward.1} parent=11 // pred_check
          %p1607 = pneg %p1187
        $region206: #{resnet3_mfcc_forward.1} parent=11 // pred_check_branch
          %1609 = sbr.rel (%p1607) target = $region208
        $region207: #{resnet3_mfcc_forward.1} parent=11 // pred_region
          _
        $region208: #{resnet3_mfcc_forward.1} parent=11 // pred_fallthru
          _
        // Predicated region
        $region209: #{resnet3_mfcc_forward.1} parent=11 // pred_check
          %p1610 = pneg %p1208
        $region210: #{resnet3_mfcc_forward.1} parent=11 // pred_check_branch
          %1612 = sbr.rel (%p1610) target = $region212
        $region211: #{resnet3_mfcc_forward.1} parent=11 // pred_region
          %s1614 = ssub.s32 16, 16
          %1615 = vsyncadd [#allocation21], %s1614
          %s1617 = sshll.u32 [#allocation20], 4
          %s1618 = int_to_ptr.vmem [resolvable:$true] %s1617
          %1620 = dma.hbm_to_vmem [thread:$0]  %s101, 16, %s1618, [#allocation21]
        $region212: #{resnet3_mfcc_forward.1} parent=11 // pred_fallthru
          _
        // Predicated region
        $region213: #{resnet3_mfcc_forward.1} parent=11 // pred_check
          %p1621 = pneg %p1229
        $region214: #{resnet3_mfcc_forward.1} parent=11 // pred_check_branch
          %1623 = sbr.rel (%p1621) target = $region216
        $region215: #{resnet3_mfcc_forward.1} parent=11 // pred_region
          _
        $region216: #{resnet3_mfcc_forward.1} parent=11 // pred_fallthru
          _
        // Predicated region
        $region217: #{resnet3_mfcc_forward.1} parent=11 // pred_check
          %p1624 = pneg %p1250
        $region218: #{resnet3_mfcc_forward.1} parent=11 // pred_check_branch
          %1626 = sbr.rel (%p1624) target = $region220
        $region219: #{resnet3_mfcc_forward.1} parent=11 // pred_region
          %s1628 = ssub.s32 16, 16
          %1629 = vsyncadd [#allocation21], %s1628
          %s1631 = sshll.u32 [#allocation22], 4
          %s1632 = int_to_ptr.vmem [resolvable:$true] %s1631
          %1634 = dma.hbm_to_vmem [thread:$0]  %s105, 16, %s1632, [#allocation21]
        $region220: #{resnet3_mfcc_forward.1} parent=11 // pred_fallthru
          _
        // Predicated region
        $region221: #{resnet3_mfcc_forward.1} parent=11 // pred_check
          %p1635 = pneg %p1271
        $region222: #{resnet3_mfcc_forward.1} parent=11 // pred_check_branch
          %1637 = sbr.rel (%p1635) target = $region224
        $region223: #{resnet3_mfcc_forward.1} parent=11 // pred_region
          _
        $region224: #{resnet3_mfcc_forward.1} parent=11 // pred_fallthru
          _
        // Predicated region
        $region225: #{resnet3_mfcc_forward.1} parent=11 // pred_check
          %p1638 = pneg %p1292
        $region226: #{resnet3_mfcc_forward.1} parent=11 // pred_check_branch
          %1640 = sbr.rel (%p1638) target = $region228
        $region227: #{resnet3_mfcc_forward.1} parent=11 // pred_region
          %s1642 = ssub.s32 16, 16
          %1643 = vsyncadd [#allocation24], %s1642
          %s1645 = sshll.u32 [#allocation23], 4
          %s1646 = int_to_ptr.vmem [resolvable:$true] %s1645
          %1648 = dma.hbm_to_vmem [thread:$0]  %s109, 16, %s1646, [#allocation24]
        $region228: #{resnet3_mfcc_forward.1} parent=11 // pred_fallthru
          _
        // Predicated region
        $region229: #{resnet3_mfcc_forward.1} parent=11 // pred_check
          %p1649 = pneg %p1313
        $region230: #{resnet3_mfcc_forward.1} parent=11 // pred_check_branch
          %1651 = sbr.rel (%p1649) target = $region232
        $region231: #{resnet3_mfcc_forward.1} parent=11 // pred_region
          _
        $region232: #{resnet3_mfcc_forward.1} parent=11 // pred_fallthru
          _
        // Predicated region
        $region233: #{resnet3_mfcc_forward.1} parent=11 // pred_check
          %p1652 = pneg %p1334
        $region234: #{resnet3_mfcc_forward.1} parent=11 // pred_check_branch
          %1654 = sbr.rel (%p1652) target = $region236
        $region235: #{resnet3_mfcc_forward.1} parent=11 // pred_region
          %s1656 = ssub.s32 16, 16
          %1657 = vsyncadd [#allocation24], %s1656
          %s1659 = sshll.u32 [#allocation25], 4
          %s1660 = int_to_ptr.vmem [resolvable:$true] %s1659
          %1662 = dma.hbm_to_vmem [thread:$0]  %s113, 16, %s1660, [#allocation24]
        $region236: #{resnet3_mfcc_forward.1} parent=11 // pred_fallthru
          _
      $region12: #{resnet3_mfcc_forward.1} parent=5 // pred_fallthru
        _
      %p1663 = scmp.lt.s32.totalorder %s132, 2
      // Predicated region
      $region237: #{resnet3_mfcc_forward.1} parent=5 // pred_check
        %p1664 = pneg %p1663
      $region238: #{resnet3_mfcc_forward.1} parent=5 // pred_check_branch
        %1666 = sbr.rel (%p1664) target = $region240
      $region239: #{resnet3_mfcc_forward.1} parent=5 // pred_region
        // Predicated region
        $region241: #{resnet3_mfcc_forward.1} parent=239 // pred_check
          %p1667 = pneg %p152
        $region242: #{resnet3_mfcc_forward.1} parent=239 // pred_check_branch
          %1669 = sbr.rel (%p1667) target = $region244
        $region243: #{resnet3_mfcc_forward.1} parent=239 // pred_region
          %p1670 = scmp.lt.s32.totalorder %s132, 1
          %s1671 = scalar_select %p1670, %s132, 1
          %s1672 = smul.addr %s1671, 81
          %s1673 = smul.addr %s1672, 8
          %s1674 = scalar_lea.vmem %s1, %s1673
        $region244: #{resnet3_mfcc_forward.1} parent=239 // pred_fallthru
          _
      $region240: #{resnet3_mfcc_forward.1} parent=5 // pred_fallthru
        _
      %p1675 = scmp.le.s32.totalorder 1, %s132
      %p1676 = scmp.lt.s32.totalorder %s132, 3
      %p1677 = pnand %p1675, %p1676
      %p1678 = pneg %p1677
      // Predicated region
      $region245: #{resnet3_mfcc_forward.1} parent=5 // pred_check
        _
      $region246: #{resnet3_mfcc_forward.1} parent=5 // pred_check_branch
        %1680 = sbr.rel (%p1677) target = $region248
      $region247: #{resnet3_mfcc_forward.1} parent=5 // pred_region
        %s1681 = ssub.s32 %s132, 1
        // Predicated region
        $region249: #{resnet3_mfcc_forward.1} parent=247 // pred_check
          %p1682 = pneg %p746
        $region250: #{resnet3_mfcc_forward.1} parent=247 // pred_check_branch
          %1684 = sbr.rel (%p1682) target = $region252
        $region251: #{resnet3_mfcc_forward.1} parent=247 // pred_region
          %1685 = dma.done [#allocation3], 16
        $region252: #{resnet3_mfcc_forward.1} parent=247 // pred_fallthru
          _
        // Predicated region
        $region253: #{resnet3_mfcc_forward.1} parent=247 // pred_check
          %p1686 = pneg %p788
        $region254: #{resnet3_mfcc_forward.1} parent=247 // pred_check_branch
          %1688 = sbr.rel (%p1686) target = $region256
        $region255: #{resnet3_mfcc_forward.1} parent=247 // pred_region
          %1689 = dma.done [#allocation6], 16
        $region256: #{resnet3_mfcc_forward.1} parent=247 // pred_fallthru
          _
        // Predicated region
        $region257: #{resnet3_mfcc_forward.1} parent=247 // pred_check
          %p1690 = pneg %p830
        $region258: #{resnet3_mfcc_forward.1} parent=247 // pred_check_branch
          %1692 = sbr.rel (%p1690) target = $region260
        $region259: #{resnet3_mfcc_forward.1} parent=247 // pred_region
          %1693 = dma.done [#allocation6], 16
        $region260: #{resnet3_mfcc_forward.1} parent=247 // pred_fallthru
          _
        // Predicated region
        $region261: #{resnet3_mfcc_forward.1} parent=247 // pred_check
          %p1694 = pneg %p872
        $region262: #{resnet3_mfcc_forward.1} parent=247 // pred_check_branch
          %1696 = sbr.rel (%p1694) target = $region264
        $region263: #{resnet3_mfcc_forward.1} parent=247 // pred_region
          %1697 = dma.done [#allocation9], 16
        $region264: #{resnet3_mfcc_forward.1} parent=247 // pred_fallthru
          _
        // Predicated region
        $region265: #{resnet3_mfcc_forward.1} parent=247 // pred_check
          %p1698 = pneg %p914
        $region266: #{resnet3_mfcc_forward.1} parent=247 // pred_check_branch
          %1700 = sbr.rel (%p1698) target = $region268
        $region267: #{resnet3_mfcc_forward.1} parent=247 // pred_region
          %1701 = dma.done [#allocation9], 16
        $region268: #{resnet3_mfcc_forward.1} parent=247 // pred_fallthru
          _
        // Predicated region
        $region269: #{resnet3_mfcc_forward.1} parent=247 // pred_check
          %p1702 = pneg %p956
        $region270: #{resnet3_mfcc_forward.1} parent=247 // pred_check_branch
          %1704 = sbr.rel (%p1702) target = $region272
        $region271: #{resnet3_mfcc_forward.1} parent=247 // pred_region
          %1705 = dma.done [#allocation12], 16
        $region272: #{resnet3_mfcc_forward.1} parent=247 // pred_fallthru
          _
        // Predicated region
        $region273: #{resnet3_mfcc_forward.1} parent=247 // pred_check
          %p1706 = pneg %p998
        $region274: #{resnet3_mfcc_forward.1} parent=247 // pred_check_branch
          %1708 = sbr.rel (%p1706) target = $region276
        $region275: #{resnet3_mfcc_forward.1} parent=247 // pred_region
          %1709 = dma.done [#allocation12], 16
        $region276: #{resnet3_mfcc_forward.1} parent=247 // pred_fallthru
          _
        // Predicated region
        $region277: #{resnet3_mfcc_forward.1} parent=247 // pred_check
          %p1710 = pneg %p1040
        $region278: #{resnet3_mfcc_forward.1} parent=247 // pred_check_branch
          %1712 = sbr.rel (%p1710) target = $region280
        $region279: #{resnet3_mfcc_forward.1} parent=247 // pred_region
          %1713 = dma.done [#allocation15], 16
        $region280: #{resnet3_mfcc_forward.1} parent=247 // pred_fallthru
          _
        // Predicated region
        $region281: #{resnet3_mfcc_forward.1} parent=247 // pred_check
          %p1714 = pneg %p1082
        $region282: #{resnet3_mfcc_forward.1} parent=247 // pred_check_branch
          %1716 = sbr.rel (%p1714) target = $region284
        $region283: #{resnet3_mfcc_forward.1} parent=247 // pred_region
          %1717 = dma.done [#allocation15], 16
        $region284: #{resnet3_mfcc_forward.1} parent=247 // pred_fallthru
          _
        // Predicated region
        $region285: #{resnet3_mfcc_forward.1} parent=247 // pred_check
          %p1718 = pneg %p1124
        $region286: #{resnet3_mfcc_forward.1} parent=247 // pred_check_branch
          %1720 = sbr.rel (%p1718) target = $region288
        $region287: #{resnet3_mfcc_forward.1} parent=247 // pred_region
          %1721 = dma.done [#allocation18], 16
        $region288: #{resnet3_mfcc_forward.1} parent=247 // pred_fallthru
          _
        // Predicated region
        $region289: #{resnet3_mfcc_forward.1} parent=247 // pred_check
          %p1722 = pneg %p1166
        $region290: #{resnet3_mfcc_forward.1} parent=247 // pred_check_branch
          %1724 = sbr.rel (%p1722) target = $region292
        $region291: #{resnet3_mfcc_forward.1} parent=247 // pred_region
          %1725 = dma.done [#allocation18], 16
        $region292: #{resnet3_mfcc_forward.1} parent=247 // pred_fallthru
          _
        // Predicated region
        $region293: #{resnet3_mfcc_forward.1} parent=247 // pred_check
          %p1726 = pneg %p1208
        $region294: #{resnet3_mfcc_forward.1} parent=247 // pred_check_branch
          %1728 = sbr.rel (%p1726) target = $region296
        $region295: #{resnet3_mfcc_forward.1} parent=247 // pred_region
          %1729 = dma.done [#allocation21], 16
        $region296: #{resnet3_mfcc_forward.1} parent=247 // pred_fallthru
          _
        // Predicated region
        $region297: #{resnet3_mfcc_forward.1} parent=247 // pred_check
          %p1730 = pneg %p1250
        $region298: #{resnet3_mfcc_forward.1} parent=247 // pred_check_branch
          %1732 = sbr.rel (%p1730) target = $region300
        $region299: #{resnet3_mfcc_forward.1} parent=247 // pred_region
          %1733 = dma.done [#allocation21], 16
        $region300: #{resnet3_mfcc_forward.1} parent=247 // pred_fallthru
          _
        // Predicated region
        $region301: #{resnet3_mfcc_forward.1} parent=247 // pred_check
          %p1734 = pneg %p1292
        $region302: #{resnet3_mfcc_forward.1} parent=247 // pred_check_branch
          %1736 = sbr.rel (%p1734) target = $region304
        $region303: #{resnet3_mfcc_forward.1} parent=247 // pred_region
          %1737 = dma.done [#allocation24], 16
        $region304: #{resnet3_mfcc_forward.1} parent=247 // pred_fallthru
          _
        // Predicated region
        $region305: #{resnet3_mfcc_forward.1} parent=247 // pred_check
          %p1738 = pneg %p1334
        $region306: #{resnet3_mfcc_forward.1} parent=247 // pred_check_branch
          %1740 = sbr.rel (%p1738) target = $region308
        $region307: #{resnet3_mfcc_forward.1} parent=247 // pred_region
          %1741 = dma.done [#allocation24], 16
        $region308: #{resnet3_mfcc_forward.1} parent=247 // pred_fallthru
          _
        %p1742 = scmp.lt.s32.totalorder %s137, 1
        %s1743 = scalar_select %p1742, %s137, 1
        %s1744 = smul.addr %s1743, 81
        %s1745 = smul.addr %s1744, 8
        %s1746 = scalar_lea.vmem %s1, %s1745
        %p1747 = pneg %p158
        %p1748 = pneg %p155
        %p1749 = pneg %p179
        %p1750 = pneg %p176
        %p1751 = pneg %p200
        %p1752 = pneg %p197
        %p1753 = pneg %p221
        %p1754 = pneg %p218
        %p1755 = pneg %p242
        %p1756 = pneg %p239
        %p1757 = pneg %p263
        %p1758 = pneg %p260
        %p1759 = pneg %p284
        %p1760 = pneg %p281
        %p1761 = pneg %p305
        %p1762 = pneg %p302
        %p1763 = pneg %p326
        %p1764 = pneg %p323
        %p1765 = pneg %p347
        %p1766 = pneg %p344
        %p1767 = pneg %p368
        %p1768 = pneg %p365
        %p1769 = pneg %p389
        %p1770 = pneg %p386
        %p1771 = pneg %p410
        %p1772 = pneg %p407
        %p1773 = pneg %p431
        %p1774 = pneg %p428
        %p1775 = pneg %p452
        %p1776 = pneg %p449
        %p1777 = pneg %p473
        %p1778 = pneg %p470
        %p1779 = pneg %p494
        %p1780 = pneg %p491
        %p1781 = pneg %p515
        %p1782 = pneg %p512
        %p1783 = pneg %p536
        %p1784 = pneg %p533
        %p1785 = pneg %p557
        %p1786 = pneg %p554
        %p1787 = pneg %p578
        %p1788 = pneg %p575
        %p1789 = pneg %p599
        %p1790 = pneg %p596
        %p1791 = pneg %p620
        %p1792 = pneg %p617
        %p1793 = pneg %p641
        %p1794 = pneg %p638
        %p1795 = pneg %p662
        %p1796 = pneg %p659
        %p1797 = pneg %p683
        %p1798 = pneg %p680
        %p1799 = pneg %p704
        %p1800 = pneg %p701
        %p1801 = pneg %p725
        %p1802 = pneg %p722
        %p1803 = pneg %p746
        %p1804 = pneg %p743
        %p1805 = pneg %p767
        %p1806 = pneg %p764
        %p1807 = pneg %p788
        %p1808 = pneg %p785
        %p1809 = pneg %p809
        %p1810 = pneg %p806
        %p1811 = pneg %p830
        %p1812 = pneg %p827
        %p1813 = pneg %p851
        %p1814 = pneg %p848
        %p1815 = pneg %p872
        %p1816 = pneg %p869
        %p1817 = pneg %p893
        %p1818 = pneg %p890
        %p1819 = pneg %p914
        %p1820 = pneg %p911
        %p1821 = pneg %p935
        %p1822 = pneg %p932
        %p1823 = pneg %p956
        %p1824 = pneg %p953
        %p1825 = pneg %p977
        %p1826 = pneg %p974
        %p1827 = pneg %p998
        %p1828 = pneg %p995
        %p1829 = pneg %p1019
        %p1830 = pneg %p1016
        %p1831 = pneg %p1040
        %p1832 = pneg %p1037
        %p1833 = pneg %p1061
        %p1834 = pneg %p1058
        %p1835 = pneg %p1082
        %p1836 = pneg %p1079
        %p1837 = pneg %p1103
        %p1838 = pneg %p1100
        %p1839 = pneg %p1124
        %p1840 = pneg %p1121
        %p1841 = pneg %p1145
        %p1842 = pneg %p1142
        %p1843 = pneg %p1166
        %p1844 = pneg %p1163
        %p1845 = pneg %p1187
        %p1846 = pneg %p1184
        %p1847 = pneg %p1208
        %p1848 = pneg %p1205
        %p1849 = pneg %p1229
        %p1850 = pneg %p1226
        %p1851 = pneg %p1250
        %p1852 = pneg %p1247
        %p1853 = pneg %p1271
        %p1854 = pneg %p1268
        %p1855 = pneg %p1292
        %p1856 = pneg %p1289
        %p1857 = pneg %p1313
        %p1858 = pneg %p1310
        %p1859 = pneg %p1334
        %p1860 = pneg %p1331
        %p1861 = pneg %p1360
        %p1862 = pneg %p1357
        %s1863 = sand.u32 %s1347, 1
        %s1864 = scalar_lea.sflag [#allocation4], %s1863
        %s1865 = sand.u32 %s1347, 1
        %s1866 = scalar_lea.vmem [#allocation26], %s1865
        %p1867 = scmp.lt.s32.totalorder %s137, 1
        %s1868 = scalar_select %p1867, %s137, 1
        %s1869 = smul.addr %s1868, 81
        %s1870 = smul.addr %s1869, 8
        %s1871 = scalar_lea.vmem %s1, %s1870
        %v1873 = vld [vmem:[%s1871] sm:$0xff]
        %v1874 = vld [vmem:[%s1871 + $0x8] sm:$0xff]
        %v1875 = vld [vmem:[%s1871 + $0x10] sm:$0xff]
        %v1876 = vld [vmem:[%s1871 + $0x18] sm:$0xff]
        %v1877 = vld [vmem:[%s1871 + $0x20] sm:$0xff]
        %v1878 = vld [vmem:[%s1871 + $0x28] sm:$0xff]
        %v1879 = vld [vmem:[%s1871 + $0x30] sm:$0xff]
        %v1880 = vld [vmem:[%s1871 + $0x38] sm:$0xff]
        %v1881 = vld [vmem:[%s1871 + $0x40] sm:$0xff]
        %v1882 = vld [vmem:[%s1871 + $0x48] sm:$0xff]
        %v1883 = vld [vmem:[%s1871 + $0x50] sm:$0xff]
        %v1884 = vld [vmem:[%s1871 + $0x58] sm:$0xff]
        %v1885 = vld [vmem:[%s1871 + $0x60] sm:$0xff]
        %v1886 = vld [vmem:[%s1871 + $0x68] sm:$0xff]
        %v1887 = vld [vmem:[%s1871 + $0x70] sm:$0xff]
        %v1888 = vld [vmem:[%s1871 + $0x78] sm:$0xff]
        %v1889 = vld [vmem:[%s1871 + $0x80] sm:$0xff]
        %v1890 = vld [vmem:[%s1871 + $0x88] sm:$0xff]
        %v1891 = vld [vmem:[%s1871 + $0x90] sm:$0xff]
        %v1892 = vld [vmem:[%s1871 + $0x98] sm:$0xff]
        %v1893 = vld [vmem:[%s1871 + $0xa0] sm:$0xff]
        %v1894 = vld [vmem:[%s1871 + $0xa8] sm:$0xff]
        %v1895 = vld [vmem:[%s1871 + $0xb0] sm:$0xff]
        %v1896 = vld [vmem:[%s1871 + $0xb8] sm:$0xff]
        %v1897 = vld [vmem:[%s1871 + $0xc0] sm:$0xff]
        %v1898 = vld [vmem:[%s1871 + $0xc8] sm:$0xff]
        %v1899 = vld [vmem:[%s1871 + $0xd0] sm:$0xff]
        %v1900 = vld [vmem:[%s1871 + $0xd8] sm:$0xff]
        %v1901 = vld [vmem:[%s1871 + $0xe0] sm:$0xff]
        %v1902 = vld [vmem:[%s1871 + $0xe8] sm:$0xff]
        %v1903 = vld [vmem:[%s1871 + $0xf0] sm:$0xff]
        %v1904 = vld [vmem:[%s1871 + $0xf8] sm:$0xff]
        %v1905 = vld [vmem:[%s1871 + $0x100] sm:$0xff]
        %v1906 = vld [vmem:[%s1871 + $0x108] sm:$0xff]
        %v1907 = vld [vmem:[%s1871 + $0x110] sm:$0xff]
        %v1908 = vld [vmem:[%s1871 + $0x118] sm:$0xff]
        %v1909 = vld [vmem:[%s1871 + $0x120] sm:$0xff]
        %v1910 = vld [vmem:[%s1871 + $0x128] sm:$0xff]
        %v1911 = vld [vmem:[%s1871 + $0x130] sm:$0xff]
        %v1912 = vld [vmem:[%s1871 + $0x138] sm:$0xff]
        %v1913 = vld [vmem:[%s1871 + $0x140] sm:$0xff]
        %v1914 = vld [vmem:[%s1871 + $0x148] sm:$0xff]
        %v1915 = vld [vmem:[%s1871 + $0x150] sm:$0xff]
        %v1916 = vld [vmem:[%s1871 + $0x158] sm:$0xff]
        %v1917 = vld [vmem:[%s1871 + $0x160] sm:$0xff]
        %v1918 = vld [vmem:[%s1871 + $0x168] sm:$0xff]
        %v1919 = vld [vmem:[%s1871 + $0x170] sm:$0xff]
        %v1920 = vld [vmem:[%s1871 + $0x178] sm:$0xff]
        %v1921 = vld [vmem:[%s1871 + $0x180] sm:$0xff]
        %v1922 = vld [vmem:[%s1871 + $0x188] sm:$0xff]
        %v1923 = vld [vmem:[%s1871 + $0x190] sm:$0xff]
        %v1924 = vld [vmem:[%s1871 + $0x198] sm:$0xff]
        %v1925 = vld [vmem:[%s1871 + $0x1a0] sm:$0xff]
        %v1926 = vld [vmem:[%s1871 + $0x1a8] sm:$0xff]
        %v1927 = vld [vmem:[%s1871 + $0x1b0] sm:$0xff]
        %v1928 = vld [vmem:[%s1871 + $0x1b8] sm:$0xff]
        %v1929 = vld [vmem:[%s1871 + $0x1c0] sm:$0xff]
        %v1930 = vld [vmem:[%s1871 + $0x1c8] sm:$0xff]
        %v1931 = vld [vmem:[%s1871 + $0x1d0] sm:$0xff]
        %v1932 = vld [vmem:[%s1871 + $0x1d8] sm:$0xff]
        %v1933 = vld [vmem:[%s1871 + $0x1e0] sm:$0xff]
        %v1934 = vld [vmem:[%s1871 + $0x1e8] sm:$0xff]
        %v1935 = vld [vmem:[%s1871 + $0x1f0] sm:$0xff]
        %v1936 = vld [vmem:[%s1871 + $0x1f8] sm:$0xff]
        %v1937 = vld [vmem:[%s1871 + $0x200] sm:$0xff]
        %v1938 = vld [vmem:[%s1871 + $0x208] sm:$0xff]
        %v1939 = vld [vmem:[%s1871 + $0x210] sm:$0xff]
        %v1940 = vld [vmem:[%s1871 + $0x218] sm:$0xff]
        %v1941 = vld [vmem:[%s1871 + $0x220] sm:$0xff]
        %v1942 = vld [vmem:[%s1871 + $0x228] sm:$0xff]
        %v1943 = vld [vmem:[%s1871 + $0x230] sm:$0xff]
        %v1944 = vld [vmem:[%s1871 + $0x238] sm:$0xff]
        %v1945 = vld [vmem:[%s1871 + $0x240] sm:$0x1]
        %v1946 = vld [vmem:[%s1871 + $0x248] sm:$0x1]
        %v1947 = vld [vmem:[%s1871 + $0x250] sm:$0x1]
        %v1948 = vld [vmem:[%s1871 + $0x258] sm:$0x1]
        %v1949 = vld [vmem:[%s1871 + $0x260] sm:$0x1]
        %v1950 = vld [vmem:[%s1871 + $0x268] sm:$0x1]
        %v1951 = vld [vmem:[%s1871 + $0x270] sm:$0x1]
        %v1952 = vld [vmem:[%s1871 + $0x278] sm:$0x1]
        %v1953 = vld [vmem:[%s1871 + $0x280] sm:$0x1]
        %v1954 = vpack.c.bf16 %v1882, %v1873
        %v1955 = vpack.c.bf16 %v1883, %v1874
        %v1956 = vpack.c.bf16 %v1884, %v1875
        %v1957 = vpack.c.bf16 %v1885, %v1876
        %v1958 = vpack.c.bf16 %v1886, %v1877
        %v1959 = vpack.c.bf16 %v1887, %v1878
        %v1960 = vpack.c.bf16 %v1888, %v1879
        %v1961 = vpack.c.bf16 %v1889, %v1880
        %v1962 = vpack.c.bf16 %v1890, %v1881
        %v1963 = vpack.c.bf16 %v1900, %v1891
        %v1964 = vpack.c.bf16 %v1901, %v1892
        %v1965 = vpack.c.bf16 %v1902, %v1893
        %v1966 = vpack.c.bf16 %v1903, %v1894
        %v1967 = vpack.c.bf16 %v1904, %v1895
        %v1968 = vpack.c.bf16 %v1905, %v1896
        %v1969 = vpack.c.bf16 %v1906, %v1897
        %v1970 = vpack.c.bf16 %v1907, %v1898
        %v1971 = vpack.c.bf16 %v1908, %v1899
        %v1972 = vpack.c.bf16 %v1918, %v1909
        %v1973 = vpack.c.bf16 %v1919, %v1910
        %v1974 = vpack.c.bf16 %v1920, %v1911
        %v1975 = vpack.c.bf16 %v1921, %v1912
        %v1976 = vpack.c.bf16 %v1922, %v1913
        %v1977 = vpack.c.bf16 %v1923, %v1914
        %v1978 = vpack.c.bf16 %v1924, %v1915
        %v1979 = vpack.c.bf16 %v1925, %v1916
        %v1980 = vpack.c.bf16 %v1926, %v1917
        %v1981 = vpack.c.bf16 %v1936, %v1927
        %v1982 = vpack.c.bf16 %v1937, %v1928
        %v1983 = vpack.c.bf16 %v1938, %v1929
        %v1984 = vpack.c.bf16 %v1939, %v1930
        %v1985 = vpack.c.bf16 %v1940, %v1931
        %v1986 = vpack.c.bf16 %v1941, %v1932
        %v1987 = vpack.c.bf16 %v1942, %v1933
        %v1988 = vpack.c.bf16 %v1943, %v1934
        %v1989 = vpack.c.bf16 %v1944, %v1935
        %v1990 = vpack.c.bf16 %v1945, %v1945
        %v1991 = vpack.c.bf16 %v1946, %v1946
        %v1992 = vpack.c.bf16 %v1947, %v1947
        %v1993 = vpack.c.bf16 %v1948, %v1948
        %v1994 = vpack.c.bf16 %v1949, %v1949
        %v1995 = vpack.c.bf16 %v1950, %v1950
        %v1996 = vpack.c.bf16 %v1951, %v1951
        %v1997 = vpack.c.bf16 %v1952, %v1952
        %v1998 = vpack.c.bf16 %v1953, %v1953
        %v1999 = vld [vmem:[%s3] sm:$0xf]
        %v2000 = vld [vmem:[%s3 + $0x4] sm:$0xf]
        %v2001 = vld [vmem:[%s3 + $0x8] sm:$0xf]
        %v2002 = vld [vmem:[%s3 + $0xc] sm:$0xf]
        %v2003 = vld [vmem:[%s3 + $0x10] sm:$0xf]
        %v2004 = vld [vmem:[%s3 + $0x14] sm:$0xf]
        %v2005 = vld [vmem:[%s3 + $0x18] sm:$0xf]
        %v2006 = vld [vmem:[%s3 + $0x1c] sm:$0xf]
        %v2007 = vld [vmem:[%s3 + $0x20] sm:$0xf]
        %v2008 = vld [vmem:[%s3 + $0x24] sm:$0xf]
        %v2009 = vld [vmem:[%s3 + $0x28] sm:$0xf]
        %v2010 = vld [vmem:[%s3 + $0x2c] sm:$0xf]
        %v2011 = vld [vmem:[%s3 + $0x30] sm:$0xf]
        %v2012 = vld [vmem:[%s3 + $0x34] sm:$0xf]
        %v2013 = vld [vmem:[%s3 + $0x38] sm:$0xf]
        %v2014 = vld [vmem:[%s3 + $0x3c] sm:$0xf]
        %v2015 = vld [vmem:[%s3 + $0x40] sm:$0xf]
        %v2016 = vld [vmem:[%s3 + $0x44] sm:$0xf]
        %v2017 = vld [vmem:[%s3 + $0x48] sm:$0xf]
        %v2018 = vld [vmem:[%s3 + $0x4c] sm:$0xf]
        %v2019 = vld [vmem:[%s3 + $0x50] sm:$0xf]
        %v2020 = vld [vmem:[%s3 + $0x54] sm:$0xf]
        %v2021 = vld [vmem:[%s3 + $0x58] sm:$0xf]
        %v2022 = vld [vmem:[%s3 + $0x5c] sm:$0xf]
        %v2023 = vld [vmem:[%s3 + $0x60] sm:$0xf]
        %v2024 = vld [vmem:[%s3 + $0x64] sm:$0xf]
        %v2025 = vld [vmem:[%s3 + $0x68] sm:$0xf]
        %v2026 = vld [vmem:[%s3 + $0x6c] sm:$0xf]
        %v2027 = vld [vmem:[%s3 + $0x70] sm:$0xf]
        %v2028 = vld [vmem:[%s3 + $0x74] sm:$0xf]
        %v2029 = vld [vmem:[%s3 + $0x78] sm:$0xf]
        %v2030 = vld [vmem:[%s3 + $0x7c] sm:$0xf]
        %v2031 = vld [vmem:[%s3 + $0x80] sm:$0xf]
        %v2032 = vld [vmem:[%s3 + $0x84] sm:$0xf]
        %v2033 = vld [vmem:[%s3 + $0x88] sm:$0xf]
        %v2034 = vld [vmem:[%s3 + $0x8c] sm:$0xf]
        %v2035 = vld [vmem:[%s3 + $0x90] sm:$0xf]
        %v2036 = vld [vmem:[%s3 + $0x94] sm:$0xf]
        %v2037 = vld [vmem:[%s3 + $0x98] sm:$0xf]
        %v2038 = vld [vmem:[%s3 + $0x9c] sm:$0xf]
        %v2039 = vld [vmem:[%s3 + $0xa0] sm:$0xf]
        %v2040 = vld [vmem:[%s3 + $0xa4] sm:$0xf]
        %v2041 = vld [vmem:[%s3 + $0xa8] sm:$0xf]
        %v2042 = vld [vmem:[%s3 + $0xac] sm:$0xf]
        %v2043 = vld [vmem:[%s3 + $0xb0] sm:$0xf]
        %v2044 = vld [vmem:[%s3 + $0xb4] sm:$0xf]
        %v2045 = vld [vmem:[%s3 + $0xb8] sm:$0xf]
        %v2046 = vld [vmem:[%s3 + $0xbc] sm:$0xf]
        %v2047 = vld [vmem:[%s3 + $0xc0] sm:$0xf]
        %v2048 = vld [vmem:[%s3 + $0xc4] sm:$0xf]
        %v2049 = vld [vmem:[%s3 + $0xc8] sm:$0xf]
        %v2050 = vld [vmem:[%s3 + $0xcc] sm:$0xf]
        %v2051 = vld [vmem:[%s3 + $0xd0] sm:$0xf]
        %v2052 = vld [vmem:[%s3 + $0xd4] sm:$0xf]
        %v2053 = vld [vmem:[%s3 + $0xd8] sm:$0xf]
        %v2054 = vld [vmem:[%s3 + $0xdc] sm:$0xf]
        %v2055 = vld [vmem:[%s3 + $0xe0] sm:$0xf]
        %v2056 = vld [vmem:[%s3 + $0xe4] sm:$0xf]
        %v2057 = vld [vmem:[%s3 + $0xe8] sm:$0xf]
        %v2058 = vld [vmem:[%s3 + $0xec] sm:$0xf]
        %v2059 = vld [vmem:[%s3 + $0xf0] sm:$0xf]
        %v2060 = vld [vmem:[%s3 + $0xf4] sm:$0xf]
        %v2061 = vld [vmem:[%s3 + $0xf8] sm:$0xf]
        %v2062 = vld [vmem:[%s3 + $0xfc] sm:$0xf]
        %v2063 = vld [vmem:[%s3 + $0x100] sm:$0xf]
        %v2064 = vld [vmem:[%s3 + $0x104] sm:$0xf]
        %v2065 = vld [vmem:[%s3 + $0x108] sm:$0xf]
        %v2066 = vld [vmem:[%s3 + $0x10c] sm:$0xf]
        %v2067 = vld [vmem:[%s3 + $0x110] sm:$0xf]
        %v2068 = vld [vmem:[%s3 + $0x114] sm:$0xf]
        %v2069 = vld [vmem:[%s3 + $0x118] sm:$0xf]
        %v2070 = vld [vmem:[%s3 + $0x11c] sm:$0xf]
        %v2071 = vld [vmem:[%s3 + $0x120] sm:$0xf]
        %v2072 = vld [vmem:[%s3 + $0x124] sm:$0xf]
        %v2073 = vld [vmem:[%s3 + $0x128] sm:$0xf]
        %v2074 = vld [vmem:[%s3 + $0x12c] sm:$0xf]
        %v2075 = vld [vmem:[%s3 + $0x130] sm:$0xf]
        %v2076 = vld [vmem:[%s3 + $0x134] sm:$0xf]
        %v2077 = vld [vmem:[%s3 + $0x138] sm:$0xf]
        %v2078 = vld [vmem:[%s3 + $0x13c] sm:$0xf]
        %v2079 = vld [vmem:[%s3 + $0x140] sm:$0xf]
        %v2080 = vld [vmem:[%s3 + $0x144] sm:$0xf]
        %v2081 = vld [vmem:[%s3 + $0x148] sm:$0xf]
        %v2082 = vld [vmem:[%s3 + $0x14c] sm:$0xf]
        %v2083 = vld [vmem:[%s3 + $0x150] sm:$0xf]
        %v2084 = vld [vmem:[%s3 + $0x154] sm:$0xf]
        %v2085 = vld [vmem:[%s3 + $0x158] sm:$0xf]
        %v2086 = vld [vmem:[%s3 + $0x15c] sm:$0xf]
        %v2087 = vld [vmem:[%s3 + $0x160] sm:$0xf]
        %v2088 = vld [vmem:[%s3 + $0x164] sm:$0xf]
        %v2089 = vld [vmem:[%s3 + $0x168] sm:$0xf]
        %v2090 = vld [vmem:[%s3 + $0x16c] sm:$0xf]
        %v2091 = vld [vmem:[%s3 + $0x170] sm:$0xf]
        %v2092 = vld [vmem:[%s3 + $0x174] sm:$0xf]
        %v2093 = vld [vmem:[%s3 + $0x178] sm:$0xf]
        %v2094 = vld [vmem:[%s3 + $0x17c] sm:$0xf]
        %v2095 = vld [vmem:[%s3 + $0x180] sm:$0xf]
        %v2096 = vld [vmem:[%s3 + $0x184] sm:$0xf]
        %v2097 = vld [vmem:[%s3 + $0x188] sm:$0xf]
        %v2098 = vld [vmem:[%s3 + $0x18c] sm:$0xf]
        %v2099 = vld [vmem:[%s3 + $0x190] sm:$0xf]
        %v2100 = vld [vmem:[%s3 + $0x194] sm:$0xf]
        %v2101 = vld [vmem:[%s3 + $0x198] sm:$0xf]
        %v2102 = vld [vmem:[%s3 + $0x19c] sm:$0xf]
        %v2103 = vld [vmem:[%s3 + $0x1a0] sm:$0xf]
        %v2104 = vld [vmem:[%s3 + $0x1a4] sm:$0xf]
        %v2105 = vld [vmem:[%s3 + $0x1a8] sm:$0xf]
        %v2106 = vld [vmem:[%s3 + $0x1ac] sm:$0xf]
        %v2107 = vld [vmem:[%s3 + $0x1b0] sm:$0xf]
        %v2108 = vld [vmem:[%s3 + $0x1b4] sm:$0xf]
        %v2109 = vld [vmem:[%s3 + $0x1b8] sm:$0xf]
        %v2110 = vld [vmem:[%s3 + $0x1bc] sm:$0xf]
        %v2111 = vld [vmem:[%s3 + $0x1c0] sm:$0xf]
        %v2112 = vld [vmem:[%s3 + $0x1c4] sm:$0xf]
        %v2113 = vld [vmem:[%s3 + $0x1c8] sm:$0xf]
        %v2114 = vld [vmem:[%s3 + $0x1cc] sm:$0xf]
        %v2115 = vld [vmem:[%s3 + $0x1d0] sm:$0xf]
        %v2116 = vld [vmem:[%s3 + $0x1d4] sm:$0xf]
        %v2117 = vld [vmem:[%s3 + $0x1d8] sm:$0xf]
        %v2118 = vld [vmem:[%s3 + $0x1dc] sm:$0xf]
        %v2119 = vld [vmem:[%s3 + $0x1e0] sm:$0xf]
        %v2120 = vld [vmem:[%s3 + $0x1e4] sm:$0xf]
        %v2121 = vld [vmem:[%s3 + $0x1e8] sm:$0xf]
        %v2122 = vld [vmem:[%s3 + $0x1ec] sm:$0xf]
        %v2123 = vld [vmem:[%s3 + $0x1f0] sm:$0xf]
        %v2124 = vld [vmem:[%s3 + $0x1f4] sm:$0xf]
        %v2125 = vld [vmem:[%s3 + $0x1f8] sm:$0xf]
        %v2126 = vld [vmem:[%s3 + $0x1fc] sm:$0xf]
        %v2127 = vld [vmem:[%s3 + $0x200] sm:$0xf]
        %v2128 = vld [vmem:[%s3 + $0x204] sm:$0xf]
        %v2129 = vld [vmem:[%s3 + $0x208] sm:$0xf]
        %v2130 = vld [vmem:[%s3 + $0x20c] sm:$0xf]
        %v2131 = vld [vmem:[%s3 + $0x210] sm:$0xf]
        %v2132 = vld [vmem:[%s3 + $0x214] sm:$0xf]
        %v2133 = vld [vmem:[%s3 + $0x218] sm:$0xf]
        %v2134 = vld [vmem:[%s3 + $0x21c] sm:$0xf]
        %v2135 = vld [vmem:[%s3 + $0x220] sm:$0xf]
        %v2136 = vld [vmem:[%s3 + $0x224] sm:$0xf]
        %v2137 = vld [vmem:[%s3 + $0x228] sm:$0xf]
        %v2138 = vld [vmem:[%s3 + $0x22c] sm:$0xf]
        %v2139 = vld [vmem:[%s3 + $0x230] sm:$0xf]
        %v2140 = vld [vmem:[%s3 + $0x234] sm:$0xf]
        %v2141 = vld [vmem:[%s3 + $0x238] sm:$0xf]
        %v2142 = vld [vmem:[%s3 + $0x23c] sm:$0xf]
        %v2287 = vunpack.c.l.b16 %v1999
        %v2288 = vunpack.c.l.b16 %v2000
        %v2289 = vunpack.c.l.b16 %v2001
        %v2290 = vunpack.c.l.b16 %v2002
        %v2291 = vunpack.c.l.b16 %v2003
        %v2292 = vunpack.c.l.b16 %v2004
        %v2293 = vunpack.c.l.b16 %v2005
        %v2294 = vunpack.c.l.b16 %v2006
        %v2295 = vunpack.c.l.b16 %v2007
        %v2296 = vunpack.c.l.b16 %v2008
        %v2297 = vunpack.c.l.b16 %v2009
        %v2298 = vunpack.c.l.b16 %v2010
        %v2299 = vunpack.c.l.b16 %v2011
        %v2300 = vunpack.c.l.b16 %v2012
        %v2301 = vunpack.c.l.b16 %v2013
        %v2302 = vunpack.c.l.b16 %v2014
        %v2303 = vunpack.c.l.b16 %v2015
        %v2304 = vunpack.c.l.b16 %v2016
        %v2305 = vunpack.c.l.b16 %v2017
        %v2306 = vunpack.c.l.b16 %v2018
        %v2307 = vunpack.c.l.b16 %v2019
        %v2308 = vunpack.c.l.b16 %v2020
        %v2309 = vunpack.c.l.b16 %v2021
        %v2310 = vunpack.c.l.b16 %v2022
        %v2311 = vunpack.c.l.b16 %v2023
        %v2312 = vunpack.c.l.b16 %v2024
        %v2313 = vunpack.c.l.b16 %v2025
        %v2314 = vunpack.c.l.b16 %v2026
        %v2315 = vunpack.c.l.b16 %v2027
        %v2316 = vunpack.c.l.b16 %v2028
        %v2317 = vunpack.c.l.b16 %v2029
        %v2318 = vunpack.c.l.b16 %v2030
        %v2319 = vunpack.c.l.b16 %v2031
        %v2320 = vunpack.c.l.b16 %v2032
        %v2321 = vunpack.c.l.b16 %v2033
        %v2322 = vunpack.c.l.b16 %v2034
        %v2323 = vunpack.c.l.b16 %v2035
        %v2324 = vunpack.c.l.b16 %v2036
        %v2325 = vunpack.c.l.b16 %v2037
        %v2326 = vunpack.c.l.b16 %v2038
        %v2327 = vunpack.c.l.b16 %v2039
        %v2328 = vunpack.c.l.b16 %v2040
        %v2329 = vunpack.c.l.b16 %v2041
        %v2330 = vunpack.c.l.b16 %v2042
        %v2331 = vunpack.c.l.b16 %v2043
        %v2332 = vunpack.c.l.b16 %v2044
        %v2333 = vunpack.c.l.b16 %v2045
        %v2334 = vunpack.c.l.b16 %v2046
        %v2335 = vunpack.c.l.b16 %v2047
        %v2336 = vunpack.c.l.b16 %v2048
        %v2337 = vunpack.c.l.b16 %v2049
        %v2338 = vunpack.c.l.b16 %v2050
        %v2339 = vunpack.c.l.b16 %v2051
        %v2340 = vunpack.c.l.b16 %v2052
        %v2341 = vunpack.c.l.b16 %v2053
        %v2342 = vunpack.c.l.b16 %v2054
        %v2343 = vunpack.c.l.b16 %v2055
        %v2344 = vunpack.c.l.b16 %v2056
        %v2345 = vunpack.c.l.b16 %v2057
        %v2346 = vunpack.c.l.b16 %v2058
        %v2347 = vunpack.c.l.b16 %v2059
        %v2348 = vunpack.c.l.b16 %v2060
        %v2349 = vunpack.c.l.b16 %v2061
        %v2350 = vunpack.c.l.b16 %v2062
        %v2351 = vunpack.c.l.b16 %v2063
        %v2352 = vunpack.c.l.b16 %v2064
        %v2353 = vunpack.c.l.b16 %v2065
        %v2354 = vunpack.c.l.b16 %v2066
        %v2355 = vunpack.c.l.b16 %v2067
        %v2356 = vunpack.c.l.b16 %v2068
        %v2357 = vunpack.c.l.b16 %v2069
        %v2358 = vunpack.c.l.b16 %v2070
        %v2359 = vunpack.c.l.b16 %v2071
        %v2360 = vunpack.c.l.b16 %v2072
        %v2361 = vunpack.c.l.b16 %v2073
        %v2362 = vunpack.c.l.b16 %v2074
        %v2363 = vunpack.c.l.b16 %v2075
        %v2364 = vunpack.c.l.b16 %v2076
        %v2365 = vunpack.c.l.b16 %v2077
        %v2366 = vunpack.c.l.b16 %v2078
        %v2367 = vunpack.c.l.b16 %v2079
        %v2368 = vunpack.c.l.b16 %v2080
        %v2369 = vunpack.c.l.b16 %v2081
        %v2370 = vunpack.c.l.b16 %v2082
        %v2371 = vunpack.c.l.b16 %v2083
        %v2372 = vunpack.c.l.b16 %v2084
        %v2373 = vunpack.c.l.b16 %v2085
        %v2374 = vunpack.c.l.b16 %v2086
        %v2375 = vunpack.c.l.b16 %v2087
        %v2376 = vunpack.c.l.b16 %v2088
        %v2377 = vunpack.c.l.b16 %v2089
        %v2378 = vunpack.c.l.b16 %v2090
        %v2379 = vunpack.c.l.b16 %v2091
        %v2380 = vunpack.c.l.b16 %v2092
        %v2381 = vunpack.c.l.b16 %v2093
        %v2382 = vunpack.c.l.b16 %v2094
        %v2383 = vunpack.c.l.b16 %v2095
        %v2384 = vunpack.c.l.b16 %v2096
        %v2385 = vunpack.c.l.b16 %v2097
        %v2386 = vunpack.c.l.b16 %v2098
        %v2387 = vunpack.c.l.b16 %v2099
        %v2388 = vunpack.c.l.b16 %v2100
        %v2389 = vunpack.c.l.b16 %v2101
        %v2390 = vunpack.c.l.b16 %v2102
        %v2391 = vunpack.c.l.b16 %v2103
        %v2392 = vunpack.c.l.b16 %v2104
        %v2393 = vunpack.c.l.b16 %v2105
        %v2394 = vunpack.c.l.b16 %v2106
        %v2395 = vunpack.c.l.b16 %v2107
        %v2396 = vunpack.c.l.b16 %v2108
        %v2397 = vunpack.c.l.b16 %v2109
        %v2398 = vunpack.c.l.b16 %v2110
        %v2399 = vunpack.c.l.b16 %v2111
        %v2400 = vunpack.c.l.b16 %v2112
        %v2401 = vunpack.c.l.b16 %v2113
        %v2402 = vunpack.c.l.b16 %v2114
        %v2403 = vunpack.c.l.b16 %v2115
        %v2404 = vunpack.c.l.b16 %v2116
        %v2405 = vunpack.c.l.b16 %v2117
        %v2406 = vunpack.c.l.b16 %v2118
        %v2407 = vunpack.c.l.b16 %v2119
        %v2408 = vunpack.c.l.b16 %v2120
        %v2409 = vunpack.c.l.b16 %v2121
        %v2410 = vunpack.c.l.b16 %v2122
        %v2411 = vunpack.c.l.b16 %v2123
        %v2412 = vunpack.c.l.b16 %v2124
        %v2413 = vunpack.c.l.b16 %v2125
        %v2414 = vunpack.c.l.b16 %v2126
        %v2415 = vunpack.c.l.b16 %v2127
        %v2416 = vunpack.c.l.b16 %v2128
        %v2417 = vunpack.c.l.b16 %v2129
        %v2418 = vunpack.c.l.b16 %v2130
        %v2419 = vunpack.c.l.b16 %v2131
        %v2420 = vunpack.c.l.b16 %v2132
        %v2421 = vunpack.c.l.b16 %v2133
        %v2422 = vunpack.c.l.b16 %v2134
        %v2423 = vunpack.c.l.b16 %v2135
        %v2424 = vunpack.c.l.b16 %v2136
        %v2425 = vunpack.c.l.b16 %v2137
        %v2426 = vunpack.c.l.b16 %v2138
        %v2427 = vunpack.c.l.b16 %v2139
        %v2428 = vunpack.c.l.b16 %v2140
        %v2429 = vunpack.c.l.b16 %v2141
        %v2430 = vunpack.c.l.b16 %v2142
        %v2431 = vpack.c.b16 %v2288, %v2287
        %v2432 = vpack.c.b16 %v2290, %v2289
        %v2433 = vpack.c.b16 %v2292, %v2291
        %v2434 = vpack.c.b16 %v2294, %v2293
        %v2435 = vpack.c.b16 %v2296, %v2295
        %v2436 = vpack.c.b16 %v2298, %v2297
        %v2437 = vpack.c.b16 %v2300, %v2299
        %v2438 = vpack.c.b16 %v2302, %v2301
        %v2439 = vpack.c.b16 %v2304, %v2303
        %v2440 = vpack.c.b16 %v2306, %v2305
        %v2441 = vpack.c.b16 %v2308, %v2307
        %v2442 = vpack.c.b16 %v2310, %v2309
        %v2443 = vpack.c.b16 %v2312, %v2311
        %v2444 = vpack.c.b16 %v2314, %v2313
        %v2445 = vpack.c.b16 %v2316, %v2315
        %v2446 = vpack.c.b16 %v2318, %v2317
        %v2447 = vpack.c.b16 %v2320, %v2319
        %v2448 = vpack.c.b16 %v2322, %v2321
        %v2449 = vpack.c.b16 %v2324, %v2323
        %v2450 = vpack.c.b16 %v2326, %v2325
        %v2451 = vpack.c.b16 %v2328, %v2327
        %v2452 = vpack.c.b16 %v2330, %v2329
        %v2453 = vpack.c.b16 %v2332, %v2331
        %v2454 = vpack.c.b16 %v2334, %v2333
        %v2455 = vpack.c.b16 %v2336, %v2335
        %v2456 = vpack.c.b16 %v2338, %v2337
        %v2457 = vpack.c.b16 %v2340, %v2339
        %v2458 = vpack.c.b16 %v2342, %v2341
        %v2459 = vpack.c.b16 %v2344, %v2343
        %v2460 = vpack.c.b16 %v2346, %v2345
        %v2461 = vpack.c.b16 %v2348, %v2347
        %v2462 = vpack.c.b16 %v2350, %v2349
        %v2463 = vpack.c.b16 %v2352, %v2351
        %v2464 = vpack.c.b16 %v2354, %v2353
        %v2465 = vpack.c.b16 %v2356, %v2355
        %v2466 = vpack.c.b16 %v2358, %v2357
        %v2467 = vpack.c.b16 %v2360, %v2359
        %v2468 = vpack.c.b16 %v2362, %v2361
        %v2469 = vpack.c.b16 %v2364, %v2363
        %v2470 = vpack.c.b16 %v2366, %v2365
        %v2471 = vpack.c.b16 %v2368, %v2367
        %v2472 = vpack.c.b16 %v2370, %v2369
        %v2473 = vpack.c.b16 %v2372, %v2371
        %v2474 = vpack.c.b16 %v2374, %v2373
        %v2475 = vpack.c.b16 %v2376, %v2375
        %v2476 = vpack.c.b16 %v2378, %v2377
        %v2477 = vpack.c.b16 %v2380, %v2379
        %v2478 = vpack.c.b16 %v2382, %v2381
        %v2479 = vpack.c.b16 %v2384, %v2383
        %v2480 = vpack.c.b16 %v2386, %v2385
        %v2481 = vpack.c.b16 %v2388, %v2387
        %v2482 = vpack.c.b16 %v2390, %v2389
        %v2483 = vpack.c.b16 %v2392, %v2391
        %v2484 = vpack.c.b16 %v2394, %v2393
        %v2485 = vpack.c.b16 %v2396, %v2395
        %v2486 = vpack.c.b16 %v2398, %v2397
        %v2487 = vpack.c.b16 %v2400, %v2399
        %v2488 = vpack.c.b16 %v2402, %v2401
        %v2489 = vpack.c.b16 %v2404, %v2403
        %v2490 = vpack.c.b16 %v2406, %v2405
        %v2491 = vpack.c.b16 %v2408, %v2407
        %v2492 = vpack.c.b16 %v2410, %v2409
        %v2493 = vpack.c.b16 %v2412, %v2411
        %v2494 = vpack.c.b16 %v2414, %v2413
        %v2495 = vpack.c.b16 %v2416, %v2415
        %v2496 = vpack.c.b16 %v2418, %v2417
        %v2497 = vpack.c.b16 %v2420, %v2419
        %v2498 = vpack.c.b16 %v2422, %v2421
        %v2499 = vpack.c.b16 %v2424, %v2423
        %v2500 = vpack.c.b16 %v2426, %v2425
        %v2501 = vpack.c.b16 %v2428, %v2427
        %v2502 = vpack.c.b16 %v2430, %v2429
        %2575 = vmatprep.subr.bf16.mxu0 0
        %2576 = vmatpush1.bf16.msra.mxu0 %v2431
        %2577 = vmatprep.subr.bf16.mxu0 0
        %2578 = vmatpush1.bf16.msra.mxu0 %v2432
        %2579 = vmatprep.subr.bf16.mxu0 0
        %2580 = vmatpush1.bf16.msra.mxu0 %v2433
        %2581 = vmatprep.subr.bf16.mxu0 0
        %2582 = vmatpush1.bf16.msra.mxu0 %v2434
        %2583 = vmatprep.subr.bf16.mxu0 0
        %2584 = vmatpush1.bf16.msra.mxu0 %v2435
        %2585 = vmatprep.subr.bf16.mxu0 0
        %2586 = vmatpush1.bf16.msra.mxu0 %v2436
        %2587 = vmatprep.subr.bf16.mxu0 0
        %2588 = vmatpush1.bf16.msra.mxu0 %v2437
        %2589 = vmatprep.subr.bf16.mxu0 0
        %2590 = vmatpush1.bf16.msra.mxu0 %v2438
        %2591 = vmatprep.subr.bf16.mxu0 0
        %2592 = vmatpush1.bf16.msra.mxu0 %v2439
        %2593 = vmatprep.subr.bf16.mxu0 0
        %2594 = vmatpush1.bf16.msra.mxu0 %v2440
        %2595 = vmatprep.subr.bf16.mxu0 0
        %2596 = vmatpush1.bf16.msra.mxu0 %v2441
        %2597 = vmatprep.subr.bf16.mxu0 0
        %2598 = vmatpush1.bf16.msra.mxu0 %v2442
        %2599 = vmatprep.subr.bf16.mxu0 0
        %2600 = vmatpush1.bf16.msra.mxu0 %v2443
        %2601 = vmatprep.subr.bf16.mxu0 0
        %2602 = vmatpush1.bf16.msra.mxu0 %v2444
        %2603 = vmatprep.subr.bf16.mxu0 0
        %2604 = vmatpush1.bf16.msra.mxu0 %v2445
        %2605 = vmatprep.subr.bf16.mxu0 0
        %2606 = vmatpush1.bf16.msra.mxu0 %v2446
        %2607 = vmatprep.mubr.bf16.mxu0 %v1955
        %2608 = vmatmul.mubr.bf16.gmra.mrb[0].mxu0 %v1954
        %v2609 = vpop.f32.mrb[0].mxu0
        %v2610 = vadd.f32 0.0, %v2609
        %v2611 = vpop.f32.mrb[0].mxu0
        %v2612 = vpop.f32.mrb[0].mxu0
        %v2613 = vadd.f32 0.0, %v2612
        %v2614 = vpop.f32.mrb[0].mxu0
        %2615 = vmatprep.mubr.bf16.mxu0 %v1964
        %2616 = vmatmul.mubr.bf16.gmra.mrb[0].mxu0 %v1963
        %v2617 = vpop.f32.mrb[0].mxu0
        %v2618 = vadd.f32 0.0, %v2617
        %v2619 = vpop.f32.mrb[0].mxu0
        %v2620 = vpop.f32.mrb[0].mxu0
        %v2621 = vadd.f32 0.0, %v2620
        %v2622 = vpop.f32.mrb[0].mxu0
        %2623 = vmatprep.mubr.bf16.mxu0 %v1973
        %2624 = vmatmul.mubr.bf16.gmra.mrb[0].mxu0 %v1972
        %v2625 = vpop.f32.mrb[0].mxu0
        %v2626 = vadd.f32 0.0, %v2625
        %v2627 = vpop.f32.mrb[0].mxu0
        %v2628 = vpop.f32.mrb[0].mxu0
        %v2629 = vadd.f32 0.0, %v2628
        %v2630 = vpop.f32.mrb[0].mxu0
        %2631 = vmatprep.mubr.bf16.mxu0 %v1982
        %2632 = vmatmul.mubr.bf16.gmra.mrb[0].mxu0 %v1981
        %v2633 = vpop.f32.mrb[0].mxu0
        %v2634 = vadd.f32 0.0, %v2633
        %v2635 = vpop.f32.mrb[0].mxu0
        %v2636 = vpop.f32.mrb[0].mxu0
        %v2637 = vadd.f32 0.0, %v2636
        %v2638 = vpop.f32.mrb[0].mxu0
        %2639 = vmatprep.mubr.bf16.mxu0 %v1991
        %2640 = vmatmul.mubr.bf16.gmra.mrb[0].mxu0 %v1990
        %v2641 = vpop.f32.mrb[0].mxu0
        %v2642 = vadd.f32 0.0, %v2641
        %v2643 = vpop.f32.mrb[0].mxu0
        %v2644 = vpop.f32.mrb[0].mxu0
        %v2645 = vpop.f32.mrb[0].mxu0
        %2646 = vdwg.mxu0
        %2647 = vmatprep.subr.bf16.mxu0 0
        %2648 = vmatpush1.bf16.msra.mxu0 %v2447
        %2649 = vmatprep.subr.bf16.mxu0 0
        %2650 = vmatpush1.bf16.msra.mxu0 %v2448
        %2651 = vmatprep.subr.bf16.mxu0 0
        %2652 = vmatpush1.bf16.msra.mxu0 %v2449
        %2653 = vmatprep.subr.bf16.mxu0 0
        %2654 = vmatpush1.bf16.msra.mxu0 %v2450
        %2655 = vmatprep.subr.bf16.mxu0 0
        %2656 = vmatpush1.bf16.msra.mxu0 %v2451
        %2657 = vmatprep.subr.bf16.mxu0 0
        %2658 = vmatpush1.bf16.msra.mxu0 %v2452
        %2659 = vmatprep.subr.bf16.mxu0 0
        %2660 = vmatpush1.bf16.msra.mxu0 %v2453
        %2661 = vmatprep.subr.bf16.mxu0 0
        %2662 = vmatpush1.bf16.msra.mxu0 %v2454
        %2663 = vmatprep.subr.bf16.mxu0 0
        %2664 = vmatpush1.bf16.msra.mxu0 %v2455
        %2665 = vmatprep.subr.bf16.mxu0 0
        %2666 = vmatpush1.bf16.msra.mxu0 %v2456
        %2667 = vmatprep.subr.bf16.mxu0 0
        %2668 = vmatpush1.bf16.msra.mxu0 %v2457
        %2669 = vmatprep.subr.bf16.mxu0 0
        %2670 = vmatpush1.bf16.msra.mxu0 %v2458
        %2671 = vmatprep.subr.bf16.mxu0 0
        %2672 = vmatpush1.bf16.msra.mxu0 %v2459
        %2673 = vmatprep.subr.bf16.mxu0 0
        %2674 = vmatpush1.bf16.msra.mxu0 %v2460
        %2675 = vmatprep.subr.bf16.mxu0 0
        %2676 = vmatpush1.bf16.msra.mxu0 %v2461
        %2677 = vmatprep.subr.bf16.mxu0 0
        %2678 = vmatpush1.bf16.msra.mxu0 %v2462
        %2679 = vmatprep.mubr.bf16.mxu0 %v1957
        %2680 = vmatmul.mubr.bf16.gmra.mrb[0].mxu0 %v1956
        %v2681 = vpop.f32.mrb[0].mxu0
        %v2682 = vadd.f32 %v2610, %v2681
        %v2683 = vpop.f32.mrb[0].mxu0
        %v2684 = vpop.f32.mrb[0].mxu0
        %v2685 = vadd.f32 %v2613, %v2684
        %v2686 = vpop.f32.mrb[0].mxu0
        %2687 = vmatprep.mubr.bf16.mxu0 %v1966
        %2688 = vmatmul.mubr.bf16.gmra.mrb[0].mxu0 %v1965
        %v2689 = vpop.f32.mrb[0].mxu0
        %v2690 = vadd.f32 %v2618, %v2689
        %v2691 = vpop.f32.mrb[0].mxu0
        %v2692 = vpop.f32.mrb[0].mxu0
        %v2693 = vadd.f32 %v2621, %v2692
        %v2694 = vpop.f32.mrb[0].mxu0
        %2695 = vmatprep.mubr.bf16.mxu0 %v1975
        %2696 = vmatmul.mubr.bf16.gmra.mrb[0].mxu0 %v1974
        %v2697 = vpop.f32.mrb[0].mxu0
        %v2698 = vadd.f32 %v2626, %v2697
        %v2699 = vpop.f32.mrb[0].mxu0
        %v2700 = vpop.f32.mrb[0].mxu0
        %v2701 = vadd.f32 %v2629, %v2700
        %v2702 = vpop.f32.mrb[0].mxu0
        %2703 = vmatprep.mubr.bf16.mxu0 %v1984
        %2704 = vmatmul.mubr.bf16.gmra.mrb[0].mxu0 %v1983
        %v2705 = vpop.f32.mrb[0].mxu0
        %v2706 = vadd.f32 %v2634, %v2705
        %v2707 = vpop.f32.mrb[0].mxu0
        %v2708 = vpop.f32.mrb[0].mxu0
        %v2709 = vadd.f32 %v2637, %v2708
        %v2710 = vpop.f32.mrb[0].mxu0
        %2711 = vmatprep.mubr.bf16.mxu0 %v1993
        %2712 = vmatmul.mubr.bf16.gmra.mrb[0].mxu0 %v1992
        %v2713 = vpop.f32.mrb[0].mxu0
        %v2714 = vadd.f32 %v2642, %v2713
        %v2715 = vpop.f32.mrb[0].mxu0
        %v2716 = vpop.f32.mrb[0].mxu0
        %v2717 = vpop.f32.mrb[0].mxu0
        %2718 = vdwg.mxu0
        %2719 = vmatprep.subr.bf16.mxu0 0
        %2720 = vmatpush1.bf16.msra.mxu0 %v2463
        %2721 = vmatprep.subr.bf16.mxu0 0
        %2722 = vmatpush1.bf16.msra.mxu0 %v2464
        %2723 = vmatprep.subr.bf16.mxu0 0
        %2724 = vmatpush1.bf16.msra.mxu0 %v2465
        %2725 = vmatprep.subr.bf16.mxu0 0
        %2726 = vmatpush1.bf16.msra.mxu0 %v2466
        %2727 = vmatprep.subr.bf16.mxu0 0
        %2728 = vmatpush1.bf16.msra.mxu0 %v2467
        %2729 = vmatprep.subr.bf16.mxu0 0
        %2730 = vmatpush1.bf16.msra.mxu0 %v2468
        %2731 = vmatprep.subr.bf16.mxu0 0
        %2732 = vmatpush1.bf16.msra.mxu0 %v2469
        %2733 = vmatprep.subr.bf16.mxu0 0
        %2734 = vmatpush1.bf16.msra.mxu0 %v2470
        %2735 = vmatprep.subr.bf16.mxu0 0
        %2736 = vmatpush1.bf16.msra.mxu0 %v2471
        %2737 = vmatprep.subr.bf16.mxu0 0
        %2738 = vmatpush1.bf16.msra.mxu0 %v2472
        %2739 = vmatprep.subr.bf16.mxu0 0
        %2740 = vmatpush1.bf16.msra.mxu0 %v2473
        %2741 = vmatprep.subr.bf16.mxu0 0
        %2742 = vmatpush1.bf16.msra.mxu0 %v2474
        %2743 = vmatprep.subr.bf16.mxu0 0
        %2744 = vmatpush1.bf16.msra.mxu0 %v2475
        %2745 = vmatprep.subr.bf16.mxu0 0
        %2746 = vmatpush1.bf16.msra.mxu0 %v2476
        %2747 = vmatprep.subr.bf16.mxu0 0
        %2748 = vmatpush1.bf16.msra.mxu0 %v2477
        %2749 = vmatprep.subr.bf16.mxu0 0
        %2750 = vmatpush1.bf16.msra.mxu0 %v2478
        %2751 = vmatprep.mubr.bf16.mxu0 %v1959
        %2752 = vmatmul.mubr.bf16.gmra.mrb[0].mxu0 %v1958
        %v2753 = vpop.f32.mrb[0].mxu0
        %v2754 = vadd.f32 %v2682, %v2753
        %v2755 = vpop.f32.mrb[0].mxu0
        %v2756 = vpop.f32.mrb[0].mxu0
        %v2757 = vadd.f32 %v2685, %v2756
        %v2758 = vpop.f32.mrb[0].mxu0
        %2759 = vmatprep.mubr.bf16.mxu0 %v1968
        %2760 = vmatmul.mubr.bf16.gmra.mrb[0].mxu0 %v1967
        %v2761 = vpop.f32.mrb[0].mxu0
        %v2762 = vadd.f32 %v2690, %v2761
        %v2763 = vpop.f32.mrb[0].mxu0
        %v2764 = vpop.f32.mrb[0].mxu0
        %v2765 = vadd.f32 %v2693, %v2764
        %v2766 = vpop.f32.mrb[0].mxu0
        %2767 = vmatprep.mubr.bf16.mxu0 %v1977
        %2768 = vmatmul.mubr.bf16.gmra.mrb[0].mxu0 %v1976
        %v2769 = vpop.f32.mrb[0].mxu0
        %v2770 = vadd.f32 %v2698, %v2769
        %v2771 = vpop.f32.mrb[0].mxu0
        %v2772 = vpop.f32.mrb[0].mxu0
        %v2773 = vadd.f32 %v2701, %v2772
        %v2774 = vpop.f32.mrb[0].mxu0
        %2775 = vmatprep.mubr.bf16.mxu0 %v1986
        %2776 = vmatmul.mubr.bf16.gmra.mrb[0].mxu0 %v1985
        %v2777 = vpop.f32.mrb[0].mxu0
        %v2778 = vadd.f32 %v2706, %v2777
        %v2779 = vpop.f32.mrb[0].mxu0
        %v2780 = vpop.f32.mrb[0].mxu0
        %v2781 = vadd.f32 %v2709, %v2780
        %v2782 = vpop.f32.mrb[0].mxu0
        %2783 = vmatprep.mubr.bf16.mxu0 %v1995
        %2784 = vmatmul.mubr.bf16.gmra.mrb[0].mxu0 %v1994
        %v2785 = vpop.f32.mrb[0].mxu0
        %v2786 = vadd.f32 %v2714, %v2785
        %v2787 = vpop.f32.mrb[0].mxu0
        %v2788 = vpop.f32.mrb[0].mxu0
        %v2789 = vpop.f32.mrb[0].mxu0
        %2790 = vdwg.mxu0
        %2791 = vmatprep.subr.bf16.mxu0 0
        %2792 = vmatpush1.bf16.msra.mxu0 %v2479
        %2793 = vmatprep.subr.bf16.mxu0 0
        %2794 = vmatpush1.bf16.msra.mxu0 %v2480
        %2795 = vmatprep.subr.bf16.mxu0 0
        %2796 = vmatpush1.bf16.msra.mxu0 %v2481
        %2797 = vmatprep.subr.bf16.mxu0 0
        %2798 = vmatpush1.bf16.msra.mxu0 %v2482
        %2799 = vmatprep.subr.bf16.mxu0 0
        %2800 = vmatpush1.bf16.msra.mxu0 %v2483
        %2801 = vmatprep.subr.bf16.mxu0 0
        %2802 = vmatpush1.bf16.msra.mxu0 %v2484
        %2803 = vmatprep.subr.bf16.mxu0 0
        %2804 = vmatpush1.bf16.msra.mxu0 %v2485
        %2805 = vmatprep.subr.bf16.mxu0 0
        %2806 = vmatpush1.bf16.msra.mxu0 %v2486
        %2807 = vmatprep.subr.bf16.mxu0 0
        %2808 = vmatpush1.bf16.msra.mxu0 %v2487
        %2809 = vmatprep.subr.bf16.mxu0 0
        %2810 = vmatpush1.bf16.msra.mxu0 %v2488
        %2811 = vmatprep.subr.bf16.mxu0 0
        %2812 = vmatpush1.bf16.msra.mxu0 %v2489
        %2813 = vmatprep.subr.bf16.mxu0 0
        %2814 = vmatpush1.bf16.msra.mxu0 %v2490
        %2815 = vmatprep.subr.bf16.mxu0 0
        %2816 = vmatpush1.bf16.msra.mxu0 %v2491
        %2817 = vmatprep.subr.bf16.mxu0 0
        %2818 = vmatpush1.bf16.msra.mxu0 %v2492
        %2819 = vmatprep.subr.bf16.mxu0 0
        %2820 = vmatpush1.bf16.msra.mxu0 %v2493
        %2821 = vmatprep.subr.bf16.mxu0 0
        %2822 = vmatpush1.bf16.msra.mxu0 %v2494
        %2823 = vmatprep.mubr.bf16.mxu0 %v1961
        %2824 = vmatmul.mubr.bf16.gmra.mrb[0].mxu0 %v1960
        %v2825 = vpop.f32.mrb[0].mxu0
        %v2826 = vadd.f32 %v2754, %v2825
        %v2827 = vpop.f32.mrb[0].mxu0
        %v2828 = vpop.f32.mrb[0].mxu0
        %v2829 = vadd.f32 %v2757, %v2828
        %v2830 = vpop.f32.mrb[0].mxu0
        %2831 = vmatprep.mubr.bf16.mxu0 %v1970
        %2832 = vmatmul.mubr.bf16.gmra.mrb[0].mxu0 %v1969
        %v2833 = vpop.f32.mrb[0].mxu0
        %v2834 = vadd.f32 %v2762, %v2833
        %v2835 = vpop.f32.mrb[0].mxu0
        %v2836 = vpop.f32.mrb[0].mxu0
        %v2837 = vadd.f32 %v2765, %v2836
        %v2838 = vpop.f32.mrb[0].mxu0
        %2839 = vmatprep.mubr.bf16.mxu0 %v1979
        %2840 = vmatmul.mubr.bf16.gmra.mrb[0].mxu0 %v1978
        %v2841 = vpop.f32.mrb[0].mxu0
        %v2842 = vadd.f32 %v2770, %v2841
        %v2843 = vpop.f32.mrb[0].mxu0
        %v2844 = vpop.f32.mrb[0].mxu0
        %v2845 = vadd.f32 %v2773, %v2844
        %v2846 = vpop.f32.mrb[0].mxu0
        %2847 = vmatprep.mubr.bf16.mxu0 %v1988
        %2848 = vmatmul.mubr.bf16.gmra.mrb[0].mxu0 %v1987
        %v2849 = vpop.f32.mrb[0].mxu0
        %v2850 = vadd.f32 %v2778, %v2849
        %v2851 = vpop.f32.mrb[0].mxu0
        %v2852 = vpop.f32.mrb[0].mxu0
        %v2853 = vadd.f32 %v2781, %v2852
        %v2854 = vpop.f32.mrb[0].mxu0
        %2855 = vmatprep.mubr.bf16.mxu0 %v1997
        %2856 = vmatmul.mubr.bf16.gmra.mrb[0].mxu0 %v1996
        %v2857 = vpop.f32.mrb[0].mxu0
        %v2858 = vadd.f32 %v2786, %v2857
        %v2859 = vpop.f32.mrb[0].mxu0
        %v2860 = vpop.f32.mrb[0].mxu0
        %v2861 = vpop.f32.mrb[0].mxu0
        %2862 = vdwg.mxu0
        %2863 = vmatprep.subr.bf16.mxu0 0
        %2864 = vmatpush1.bf16.msra.mxu0 %v2495
        %2865 = vmatprep.subr.bf16.mxu0 0
        %2866 = vmatpush1.bf16.msra.mxu0 %v2496
        %2867 = vmatprep.subr.bf16.mxu0 0
        %2868 = vmatpush1.bf16.msra.mxu0 %v2497
        %2869 = vmatprep.subr.bf16.mxu0 0
        %2870 = vmatpush1.bf16.msra.mxu0 %v2498
        %2871 = vmatprep.subr.bf16.mxu0 0
        %2872 = vmatpush1.bf16.msra.mxu0 %v2499
        %2873 = vmatprep.subr.bf16.mxu0 0
        %2874 = vmatpush1.bf16.msra.mxu0 %v2500
        %2875 = vmatprep.subr.bf16.mxu0 0
        %2876 = vmatpush1.bf16.msra.mxu0 %v2501
        %2877 = vmatprep.subr.bf16.mxu0 0
        %2878 = vmatpush1.bf16.msra.mxu0 %v2502
        %2879 = vmatprep.subr.bf16.mxu0 0
        %2880 = vmatpush1.bf16.msra.mxu0 0
        %2881 = vmatprep.subr.bf16.mxu0 0
        %2882 = vmatpush1.bf16.msra.mxu0 0
        %2883 = vmatprep.subr.bf16.mxu0 0
        %2884 = vmatpush1.bf16.msra.mxu0 0
        %2885 = vmatprep.subr.bf16.mxu0 0
        %2886 = vmatpush1.bf16.msra.mxu0 0
        %2887 = vmatprep.subr.bf16.mxu0 0
        %2888 = vmatpush1.bf16.msra.mxu0 0
        %2889 = vmatprep.subr.bf16.mxu0 0
        %2890 = vmatpush1.bf16.msra.mxu0 0
        %2891 = vmatprep.subr.bf16.mxu0 0
        %2892 = vmatpush1.bf16.msra.mxu0 0
        %2893 = vmatprep.subr.bf16.mxu0 0
        %2894 = vmatpush1.bf16.msra.mxu0 0
        %2895 = vmatprep.mubr.bf16.mxu0 0
        %2896 = vmatmul.mubr.bf16.gmra.mrb[0].mxu0 %v1962
        %v2897 = vpop.f32.mrb[0].mxu0
        %v2898 = vadd.f32 %v2826, %v2897
        %v2899 = vpop.f32.mrb[0].mxu0
        %v2900 = vpop.f32.mrb[0].mxu0
        %v2901 = vadd.f32 %v2829, %v2900
        %v2902 = vpop.f32.mrb[0].mxu0
        %2903 = vmatprep.mubr.bf16.mxu0 0
        %2904 = vmatmul.mubr.bf16.gmra.mrb[0].mxu0 %v1971
        %v2905 = vpop.f32.mrb[0].mxu0
        %v2906 = vadd.f32 %v2834, %v2905
        %v2907 = vpop.f32.mrb[0].mxu0
        %v2908 = vpop.f32.mrb[0].mxu0
        %v2909 = vadd.f32 %v2837, %v2908
        %v2910 = vpop.f32.mrb[0].mxu0
        %2911 = vmatprep.mubr.bf16.mxu0 0
        %2912 = vmatmul.mubr.bf16.gmra.mrb[0].mxu0 %v1980
        %v2913 = vpop.f32.mrb[0].mxu0
        %v2914 = vadd.f32 %v2842, %v2913
        %v2915 = vpop.f32.mrb[0].mxu0
        %v2916 = vpop.f32.mrb[0].mxu0
        %v2917 = vadd.f32 %v2845, %v2916
        %v2918 = vpop.f32.mrb[0].mxu0
        %2919 = vmatprep.mubr.bf16.mxu0 0
        %2920 = vmatmul.mubr.bf16.gmra.mrb[0].mxu0 %v1989
        %v2921 = vpop.f32.mrb[0].mxu0
        %v2922 = vadd.f32 %v2850, %v2921
        %v2923 = vpop.f32.mrb[0].mxu0
        %v2924 = vpop.f32.mrb[0].mxu0
        %v2925 = vadd.f32 %v2853, %v2924
        %v2926 = vpop.f32.mrb[0].mxu0
        %2927 = vmatprep.mubr.bf16.mxu0 0
        %2928 = vmatmul.mubr.bf16.gmra.mrb[0].mxu0 %v1998
        %v2929 = vpop.f32.mrb[0].mxu0
        %v2930 = vadd.f32 %v2858, %v2929
        %v2931 = vpop.f32.mrb[0].mxu0
        %v2932 = vpop.f32.mrb[0].mxu0
        %v2933 = vpop.f32.mrb[0].mxu0
        %2934 = vdwg.mxu0
        %v2935 = vmax.f32 %v2898, 1e-10
        %v2936 = vmax.f32 %v2901, 1e-10
        %v2937 = vmax.f32 %v2906, 1e-10
        %v2938 = vmax.f32 %v2909, 1e-10
        %v2939 = vmax.f32 %v2914, 1e-10
        %v2940 = vmax.f32 %v2917, 1e-10
        %v2941 = vmax.f32 %v2922, 1e-10
        %v2942 = vmax.f32 %v2925, 1e-10
        %v2943 = vmax.f32 %v2930, 1e-10
        %v2944 = vlog2.pop %v2935
        %v2945 = vmul.f32 %v2944, 0.6931472
        %v2946 = vlog2.pop %v2936
        %v2947 = vmul.f32 %v2946, 0.6931472
        %v2948 = vlog2.pop %v2937
        %v2949 = vmul.f32 %v2948, 0.6931472
        %v2950 = vlog2.pop %v2938
        %v2951 = vmul.f32 %v2950, 0.6931472
        %v2952 = vlog2.pop %v2939
        %v2953 = vmul.f32 %v2952, 0.6931472
        %v2954 = vlog2.pop %v2940
        %v2955 = vmul.f32 %v2954, 0.6931472
        %v2956 = vlog2.pop %v2941
        %v2957 = vmul.f32 %v2956, 0.6931472
        %v2958 = vlog2.pop %v2942
        %v2959 = vmul.f32 %v2958, 0.6931472
        %v2960 = vlog2.pop %v2943
        %v2961 = vmul.f32 %v2960, 0.6931472
        %v2962 = vmul.f32 %v2945, 0.4342945
        %v2963 = vmul.f32 %v2947, 0.4342945
        %v2964 = vmul.f32 %v2949, 0.4342945
        %v2965 = vmul.f32 %v2951, 0.4342945
        %v2966 = vmul.f32 %v2953, 0.4342945
        %v2967 = vmul.f32 %v2955, 0.4342945
        %v2968 = vmul.f32 %v2957, 0.4342945
        %v2969 = vmul.f32 %v2959, 0.4342945
        %v2970 = vmul.f32 %v2961, 0.4342945
        %v2971 = vmul.f32 %v2962, 10.0
        %v2972 = vmul.f32 %v2963, 10.0
        %v2973 = vmul.f32 %v2964, 10.0
        %v2974 = vmul.f32 %v2965, 10.0
        %v2975 = vmul.f32 %v2966, 10.0
        %v2976 = vmul.f32 %v2967, 10.0
        %v2977 = vmul.f32 %v2968, 10.0
        %v2978 = vmul.f32 %v2969, 10.0
        %v2979 = vmul.f32 %v2970, 10.0
        %vm2980 = vcmask 326656
        %v2981 = vsel %vm2980, %v2971, -inf
        %2982 = vmax.xlane.f32.xlu0 %v2981
        %v2983 = vpop.xlane.xlu0 %2982
        %v2984 = vsel %vm2980, %v2972, -inf
        %2985 = vmax.xlane.f32.xlu0 %v2984
        %v2986 = vpop.xlane.xlu0 %2985
        %v2987 = vsel %vm2980, %v2973, -inf
        %2988 = vmax.xlane.f32.xlu0 %v2987
        %v2989 = vpop.xlane.xlu0 %2988
        %v2990 = vsel %vm2980, %v2974, -inf
        %2991 = vmax.xlane.f32.xlu0 %v2990
        %v2992 = vpop.xlane.xlu0 %2991
        %v2993 = vsel %vm2980, %v2975, -inf
        %2994 = vmax.xlane.f32.xlu0 %v2993
        %v2995 = vpop.xlane.xlu0 %2994
        %v2996 = vsel %vm2980, %v2976, -inf
        %2997 = vmax.xlane.f32.xlu0 %v2996
        %v2998 = vpop.xlane.xlu0 %2997
        %v2999 = vsel %vm2980, %v2977, -inf
        %3000 = vmax.xlane.f32.xlu0 %v2999
        %v3001 = vpop.xlane.xlu0 %3000
        %v3002 = vsel %vm2980, %v2978, -inf
        %3003 = vmax.xlane.f32.xlu0 %v3002
        %v3004 = vpop.xlane.xlu0 %3003
        %vm3005 = vcmask 319488
        %v3006 = vsel %vm3005, %v2979, -inf
        %3007 = vmax.xlane.f32.xlu0 %v3006
        %v3008 = vpop.xlane.xlu0 %3007
        %v3009 = vmax.f32 %v2983, %v2995
        %v3010 = vmax.f32 %v2986, %v2998
        %v3011 = vmax.f32 %v2989, %v3001
        %v3012 = vmax.f32 %v2992, %v3004
        %vm3013 = vcmask 1040384
        %v3014 = vsel %vm3013, %v3008, -inf
        %v3015 = vmax.f32 %v3009, %v3014
        %v3016 = vmax.f32 %v3015, %v3010
        %v3017 = vmax.f32 %v3011, %v3012
        %v3018 = vmax.f32 %v3016, %v3017
        %v3019 = vrot.slane %v3018, 4
        %v3020 = vmax.f32 %v3018, %v3019
        %v3021 = vrot.slane %v3020, 2
        %v3022 = vmax.f32 %v3020, %v3021
        %v3023 = vrot.slane %v3022, 1
        %v3024 = vmax.f32 %v3022, %v3023
        %v3025 = vsub.f32 %v3024, 80.0
        %v3026 = vmax.f32 %v2971, %v3025
        %v3027 = vmax.f32 %v2972, %v3025
        %v3028 = vmax.f32 %v2973, %v3025
        %v3029 = vmax.f32 %v2974, %v3025
        %v3030 = vmax.f32 %v2975, %v3025
        %v3031 = vmax.f32 %v2976, %v3025
        %v3032 = vmax.f32 %v2977, %v3025
        %v3033 = vmax.f32 %v2978, %v3025
        %v3034 = vmax.f32 %v2979, %v3025
        %v3035 = vpack.c.bf16 %v3027, %v3026
        %v3036 = vpack.c.bf16 %v3029, %v3028
        %v3037 = vpack.c.bf16 %v3031, %v3030
        %v3038 = vpack.c.bf16 %v3033, %v3032
        %v3039 = vpack.c.bf16 %v3034, %v3034
        %v3040 = vld [vmem:[%s5] sm:$0xf]
        %v3041 = vld [vmem:[%s5 + $0x4] sm:$0xf]
        %v3042 = vld [vmem:[%s5 + $0x8] sm:$0xf]
        %v3043 = vld [vmem:[%s5 + $0xc] sm:$0xf]
        %v3044 = vld [vmem:[%s5 + $0x10] sm:$0xf]
        %v3050 = vunpack.c.l.b16 %v3040
        %v3051 = vunpack.c.l.b16 %v3041
        %v3052 = vunpack.c.l.b16 %v3042
        %v3053 = vunpack.c.l.b16 %v3043
        %v3054 = vunpack.c.l.b16 %v3044
        %v3055 = vpack.c.b16 %v3051, %v3050
        %v3056 = vpack.c.b16 %v3053, %v3052
        %v3057 = vpack.c.b16 %v3054, %v3054
        %v3061 = vsel %vm2980, %v3035, 0
        %v3064 = vsel %vm2980, %v3036, 0
        %v3067 = vsel %vm2980, %v3037, 0
        %v3070 = vsel %vm2980, %v3038, 0
        %v3073 = vsel %vm2980, %v3039, 0
        %vm3075 = vcmask 1043456
        %v3077 = vsel %vm3075, %v3057, 0
        %3079 = vmatprep.subr.bf16.mxu0 0
        %3080 = vmatpush1.bf16.msra.mxu0 %v3055
        %3081 = vmatprep.subr.bf16.mxu0 0
        %3082 = vmatpush1.bf16.msra.mxu0 %v3056
        %3083 = vmatprep.subr.bf16.mxu0 0
        %3084 = vmatpush1.bf16.msra.mxu0 %v3077
        %3085 = vmatprep.subr.bf16.mxu0 0
        %3086 = vmatpush1.bf16.msra.mxu0 0
        %3087 = vmatprep.subr.bf16.mxu0 0
        %3088 = vmatpush1.bf16.msra.mxu0 0
        %3089 = vmatprep.subr.bf16.mxu0 0
        %3090 = vmatpush1.bf16.msra.mxu0 0
        %3091 = vmatprep.subr.bf16.mxu0 0
        %3092 = vmatpush1.bf16.msra.mxu0 0
        %3093 = vmatprep.subr.bf16.mxu0 0
        %3094 = vmatpush1.bf16.msra.mxu0 0
        %3095 = vmatprep.subr.bf16.mxu0 0
        %3096 = vmatpush1.bf16.msra.mxu0 0
        %3097 = vmatprep.subr.bf16.mxu0 0
        %3098 = vmatpush1.bf16.msra.mxu0 0
        %3099 = vmatprep.subr.bf16.mxu0 0
        %3100 = vmatpush1.bf16.msra.mxu0 0
        %3101 = vmatprep.subr.bf16.mxu0 0
        %3102 = vmatpush1.bf16.msra.mxu0 0
        %3103 = vmatprep.subr.bf16.mxu0 0
        %3104 = vmatpush1.bf16.msra.mxu0 0
        %3105 = vmatprep.subr.bf16.mxu0 0
        %3106 = vmatpush1.bf16.msra.mxu0 0
        %3107 = vmatprep.subr.bf16.mxu0 0
        %3108 = vmatpush1.bf16.msra.mxu0 0
        %3109 = vmatprep.subr.bf16.mxu0 0
        %3110 = vmatpush1.bf16.msra.mxu0 0
        %3111 = vmatprep.mubr.bf16.mxu0 0
        %3112 = vmatmul.mubr.bf16.gmra.mrb[0].mxu0 %v3061
        %v3113 = vpop.f32.mrb[0].mxu0
        %v3114 = vadd.f32 0.0, %v3113
        %v3115 = vpop.f32.mrb[0].mxu0
        %v3116 = vpop.f32.mrb[0].mxu0
        %v3117 = vadd.f32 0.0, %v3116
        %v3118 = vpop.f32.mrb[0].mxu0
        %3119 = vmatprep.mubr.bf16.mxu0 0
        %3120 = vmatmul.mubr.bf16.gmra.mrb[0].mxu0 %v3064
        %v3121 = vpop.f32.mrb[0].mxu0
        %v3122 = vadd.f32 0.0, %v3121
        %v3123 = vpop.f32.mrb[0].mxu0
        %v3124 = vpop.f32.mrb[0].mxu0
        %v3125 = vadd.f32 0.0, %v3124
        %v3126 = vpop.f32.mrb[0].mxu0
        %3127 = vmatprep.mubr.bf16.mxu0 0
        %3128 = vmatmul.mubr.bf16.gmra.mrb[0].mxu0 %v3067
        %v3129 = vpop.f32.mrb[0].mxu0
        %v3130 = vadd.f32 0.0, %v3129
        %v3131 = vpop.f32.mrb[0].mxu0
        %v3132 = vpop.f32.mrb[0].mxu0
        %v3133 = vadd.f32 0.0, %v3132
        %v3134 = vpop.f32.mrb[0].mxu0
        %3135 = vmatprep.mubr.bf16.mxu0 0
        %3136 = vmatmul.mubr.bf16.gmra.mrb[0].mxu0 %v3070
        %v3137 = vpop.f32.mrb[0].mxu0
        %v3138 = vadd.f32 0.0, %v3137
        %v3139 = vpop.f32.mrb[0].mxu0
        %v3140 = vpop.f32.mrb[0].mxu0
        %v3141 = vadd.f32 0.0, %v3140
        %v3142 = vpop.f32.mrb[0].mxu0
        %3143 = vmatprep.mubr.bf16.mxu0 0
        %3144 = vmatmul.mubr.bf16.gmra.mrb[0].mxu0 %v3073
        %v3145 = vpop.f32.mrb[0].mxu0
        %v3146 = vadd.f32 0.0, %v3145
        %v3147 = vpop.f32.mrb[0].mxu0
        %v3148 = vpop.f32.mrb[0].mxu0
        %v3149 = vpop.f32.mrb[0].mxu0
        %3150 = vdwg.mxu0
        %vm3159 = vcmask 1046528
        %v3160 = vrot.slane %v3114, 1
        %v3161 = vrot.slane %v3117, 1
        %v3162 = vsel %vm3159, %v3160, %v3161
        %v3163 = vrot.slane %v3122, 1
        %v3164 = vsel %vm3159, %v3161, %v3163
        %v3165 = vrot.slane %v3125, 1
        %v3166 = vsel %vm3159, %v3163, %v3165
        %v3167 = vrot.slane %v3130, 1
        %v3168 = vsel %vm3159, %v3165, %v3167
        %v3169 = vrot.slane %v3133, 1
        %v3170 = vsel %vm3159, %v3167, %v3169
        %v3171 = vrot.slane %v3138, 1
        %v3172 = vsel %vm3159, %v3169, %v3171
        %v3173 = vrot.slane %v3141, 1
        %v3174 = vsel %vm3159, %v3171, %v3173
        %3175 = vrot.lane.b32.xlu0 %v3162, 13
        %v3176 = vpop.permute.xlu0 %3175
        %3177 = vrot.lane.b32.xlu0 %v3164, 13
        %v3178 = vpop.permute.xlu0 %3177
        %3179 = vrot.lane.b32.xlu0 %v3166, 13
        %v3180 = vpop.permute.xlu0 %3179
        %3181 = vrot.lane.b32.xlu0 %v3168, 13
        %v3182 = vpop.permute.xlu0 %3181
        %3183 = vrot.lane.b32.xlu0 %v3170, 13
        %v3184 = vpop.permute.xlu0 %3183
        %3185 = vrot.lane.b32.xlu0 %v3172, 13
        %v3186 = vpop.permute.xlu0 %3185
        %3187 = vrot.lane.b32.xlu0 %v3174, 13
        %v3188 = vpop.permute.xlu0 %3187
        %3189 = vrot.lane.b32.xlu0 %v3173, 13
        %v3190 = vpop.permute.xlu0 %3189
        %vm3200 = vcmask 1045504
        %v3201 = vrot.slane %v3114, 2
        %v3202 = vrot.slane %v3117, 2
        %v3203 = vsel %vm3200, %v3201, %v3202
        %v3204 = vrot.slane %v3122, 2
        %v3205 = vsel %vm3200, %v3202, %v3204
        %v3206 = vrot.slane %v3125, 2
        %v3207 = vsel %vm3200, %v3204, %v3206
        %v3208 = vrot.slane %v3130, 2
        %v3209 = vsel %vm3200, %v3206, %v3208
        %v3210 = vrot.slane %v3133, 2
        %v3211 = vsel %vm3200, %v3208, %v3210
        %v3212 = vrot.slane %v3138, 2
        %v3213 = vsel %vm3200, %v3210, %v3212
        %v3214 = vrot.slane %v3141, 2
        %v3215 = vsel %vm3200, %v3212, %v3214
        %v3216 = vrot.slane %v3146, 2
        %v3217 = vsel %vm3200, %v3214, %v3216
        %3218 = vrot.lane.b32.xlu0 %v3203, 26
        %v3219 = vpop.permute.xlu0 %3218
        %3220 = vrot.lane.b32.xlu0 %v3205, 26
        %v3221 = vpop.permute.xlu0 %3220
        %3222 = vrot.lane.b32.xlu0 %v3207, 26
        %v3223 = vpop.permute.xlu0 %3222
        %3224 = vrot.lane.b32.xlu0 %v3209, 26
        %v3225 = vpop.permute.xlu0 %3224
        %3226 = vrot.lane.b32.xlu0 %v3211, 26
        %v3227 = vpop.permute.xlu0 %3226
        %3228 = vrot.lane.b32.xlu0 %v3213, 26
        %v3229 = vpop.permute.xlu0 %3228
        %3230 = vrot.lane.b32.xlu0 %v3215, 26
        %v3231 = vpop.permute.xlu0 %3230
        %3232 = vrot.lane.b32.xlu0 %v3217, 26
        %v3233 = vpop.permute.xlu0 %3232
        %vm3242 = vcmask 105472
        %v3243 = vsel %vm3242, %v3114, %v3176
        %v3244 = vsel %vm3242, %v3117, %v3178
        %v3245 = vsel %vm3242, %v3122, %v3180
        %v3246 = vsel %vm3242, %v3125, %v3182
        %v3247 = vsel %vm3242, %v3130, %v3184
        %v3248 = vsel %vm3242, %v3133, %v3186
        %v3249 = vsel %vm3242, %v3138, %v3188
        %v3250 = vsel %vm3242, %v3141, %v3190
        %vm3251 = vcmask 211968
        %v3252 = vsel %vm3251, %v3243, %v3219
        %v3253 = vsel %vm3251, %v3244, %v3221
        %v3254 = vsel %vm3251, %v3245, %v3223
        %v3255 = vsel %vm3251, %v3246, %v3225
        %v3256 = vsel %vm3251, %v3247, %v3227
        %v3257 = vsel %vm3251, %v3248, %v3229
        %v3258 = vsel %vm3251, %v3249, %v3231
        %v3259 = vsel %vm3251, %v3250, %v3233
        %v3260 = vpack.c.bf16 %v3253, %v3252
        %v3261 = vpack.c.bf16 %v3255, %v3254
        %v3262 = vpack.c.bf16 %v3257, %v3256
        %v3263 = vpack.c.bf16 %v3259, %v3258
        %v3264 = vld [vmem:[%s7] sm:$0xf]
        %v3265 = vld [vmem:[%s7 + $0x4] sm:$0xf]
        %v3266 = vld [vmem:[%s7 + $0x8] sm:$0xf]
        %v3267 = vld [vmem:[%s7 + $0xc] sm:$0xf]
        %v3268 = vld [vmem:[%s7 + $0x10] sm:$0xf]
        %v3269 = vld [vmem:[%s9] sm:$0x1]
        %v3271 = vlaneseq
        %v3272 = vshrl.u32 %v3271, 7
        %v3273 = vsub.s32 0, %v3272
        %v3274 = vrot.slane %v3269, %v3273
        %v3281 = vunpack.c.l.b16 %v3264
        %v3282 = vunpack.c.l.b16 %v3265
        %v3283 = vunpack.c.l.b16 %v3266
        %v3284 = vunpack.c.l.b16 %v3267
        %v3285 = vunpack.c.l.b16 %v3268
        %v3286 = vpack.c.b16 %v3282, %v3281
        %v3287 = vpack.c.b16 %v3284, %v3283
        %v3288 = vpack.c.b16 %v3285, %v3285
        %vm3291 = vcmask 318464
        %v3293 = vsel %vm3291, %v3260, 0
        %v3296 = vsel %vm3291, %v3261, 0
        %v3299 = vsel %vm3291, %v3262, 0
        %v3302 = vsel %vm3291, %v3263, 0
        %vm3304 = vcmask 1042432
        %v3305 = vsel %vm3304, 4294967295, 65535
        %v3306 = vsel %vm3075, %v3305, 0
        %v3308 = vand.u32 %v3288, %v3306
        %3310 = vmatprep.subr.bf16.mxu0 0
        %3311 = vmatpush1.bf16.msra.mxu0 %v3286
        %3312 = vmatprep.subr.bf16.mxu0 0
        %3313 = vmatpush1.bf16.msra.mxu0 %v3287
        %3314 = vmatprep.subr.bf16.mxu0 0
        %3315 = vmatpush1.bf16.msra.mxu0 %v3308
        %3316 = vmatprep.subr.bf16.mxu0 0
        %3317 = vmatpush1.bf16.msra.mxu0 0
        %3318 = vmatprep.subr.bf16.mxu0 0
        %3319 = vmatpush1.bf16.msra.mxu0 0
        %3320 = vmatprep.subr.bf16.mxu0 0
        %3321 = vmatpush1.bf16.msra.mxu0 0
        %3322 = vmatprep.subr.bf16.mxu0 0
        %3323 = vmatpush1.bf16.msra.mxu0 0
        %3324 = vmatprep.subr.bf16.mxu0 0
        %3325 = vmatpush1.bf16.msra.mxu0 0
        %3326 = vmatprep.subr.bf16.mxu0 0
        %3327 = vmatpush1.bf16.msra.mxu0 0
        %3328 = vmatprep.subr.bf16.mxu0 0
        %3329 = vmatpush1.bf16.msra.mxu0 0
        %3330 = vmatprep.subr.bf16.mxu0 0
        %3331 = vmatpush1.bf16.msra.mxu0 0
        %3332 = vmatprep.subr.bf16.mxu0 0
        %3333 = vmatpush1.bf16.msra.mxu0 0
        %3334 = vmatprep.subr.bf16.mxu0 0
        %3335 = vmatpush1.bf16.msra.mxu0 0
        %3336 = vmatprep.subr.bf16.mxu0 0
        %3337 = vmatpush1.bf16.msra.mxu0 0
        %3338 = vmatprep.subr.bf16.mxu0 0
        %3339 = vmatpush1.bf16.msra.mxu0 0
        %3340 = vmatprep.subr.bf16.mxu0 0
        %3341 = vmatpush1.bf16.msra.mxu0 0
        %3342 = vmatprep.mubr.bf16.mxu0 0
        %3343 = vmatmul.mubr.bf16.gmra.mrb[0].mxu0 %v3293
        %v3344 = vpop.f32.mrb[0].mxu0
        %v3345 = vadd.f32 %v3274, %v3344
        %v3346 = vpop.f32.mrb[0].mxu0
        %v3347 = vpop.f32.mrb[0].mxu0
        %v3348 = vadd.f32 %v3274, %v3347
        %v3349 = vpop.f32.mrb[0].mxu0
        %3350 = vmatprep.mubr.bf16.mxu0 0
        %3351 = vmatmul.mubr.bf16.gmra.mrb[0].mxu0 %v3296
        %v3352 = vpop.f32.mrb[0].mxu0
        %v3353 = vadd.f32 %v3274, %v3352
        %v3354 = vpop.f32.mrb[0].mxu0
        %v3355 = vpop.f32.mrb[0].mxu0
        %v3356 = vadd.f32 %v3274, %v3355
        %v3357 = vpop.f32.mrb[0].mxu0
        %3358 = vmatprep.mubr.bf16.mxu0 0
        %3359 = vmatmul.mubr.bf16.gmra.mrb[0].mxu0 %v3299
        %v3360 = vpop.f32.mrb[0].mxu0
        %v3361 = vadd.f32 %v3274, %v3360
        %v3362 = vpop.f32.mrb[0].mxu0
        %v3363 = vpop.f32.mrb[0].mxu0
        %v3364 = vadd.f32 %v3274, %v3363
        %v3365 = vpop.f32.mrb[0].mxu0
        %3366 = vmatprep.mubr.bf16.mxu0 0
        %3367 = vmatmul.mubr.bf16.gmra.mrb[0].mxu0 %v3302
        %v3368 = vpop.f32.mrb[0].mxu0
        %v3369 = vadd.f32 %v3274, %v3368
        %v3370 = vpop.f32.mrb[0].mxu0
        %v3371 = vpop.f32.mrb[0].mxu0
        %v3372 = vadd.f32 %v3274, %v3371
        %v3373 = vpop.f32.mrb[0].mxu0
        %3374 = vdwg.mxu0
        %v3375 = vmax.f32 %v3345, 0.0
        %v3376 = vmax.f32 %v3348, 0.0
        %v3377 = vmax.f32 %v3353, 0.0
        %v3378 = vmax.f32 %v3356, 0.0
        %v3379 = vmax.f32 %v3361, 0.0
        %v3380 = vmax.f32 %v3364, 0.0
        %v3381 = vmax.f32 %v3369, 0.0
        %v3382 = vmax.f32 %v3372, 0.0
        %v3383 = vlaneseq
        %v3384 = vshrl.u32 %v3383, 7
        %v3385 = vadd.s32 %v3384, 8
        %v3386 = vadd.s32 %v3384, 16
        %v3387 = vadd.s32 %v3384, 24
        %v3388 = vadd.s32 %v3384, 32
        %v3389 = vadd.s32 %v3384, 40
        %v3390 = vadd.s32 %v3384, 48
        %v3391 = vadd.s32 %v3384, 56
        %vm3392 = vcmp.eq.s32.totalorder %v3384, 0
        %vm3393 = vcmp.eq.s32.totalorder %v3385, 0
        %vm3394 = vcmp.eq.s32.totalorder %v3386, 0
        %vm3395 = vcmp.eq.s32.totalorder %v3387, 0
        %vm3396 = vcmp.eq.s32.totalorder %v3388, 0
        %vm3397 = vcmp.eq.s32.totalorder %v3389, 0
        %vm3398 = vcmp.eq.s32.totalorder %v3390, 0
        %vm3399 = vcmp.eq.s32.totalorder %v3391, 0
        %vm3400 = vcmp.eq.s32.totalorder %v3384, 62
        %vm3401 = vcmp.eq.s32.totalorder %v3385, 62
        %vm3402 = vcmp.eq.s32.totalorder %v3386, 62
        %vm3403 = vcmp.eq.s32.totalorder %v3387, 62
        %vm3404 = vcmp.eq.s32.totalorder %v3388, 62
        %vm3405 = vcmp.eq.s32.totalorder %v3389, 62
        %vm3406 = vcmp.eq.s32.totalorder %v3390, 62
        %vm3407 = vcmp.eq.s32.totalorder %v3391, 62
        %vm3408 = vcmask 1047559
        %v3409 = vrot.slane %v3375, 1
        %v3410 = vsel %vm3408, %v3409, %v3382
        %v3411 = vrot.slane %v3376, 1
        %v3412 = vrot.slane %v3377, 1
        %v3413 = vrot.slane %v3378, 1
        %v3414 = vrot.slane %v3379, 1
        %v3415 = vrot.slane %v3380, 1
        %v3416 = vrot.slane %v3381, 1
        %v3417 = vrot.slane %v3410, 1
        %v3418 = vsel %vm3408, %v3411, %v3409
        %v3419 = vsel %vm3408, %v3412, %v3411
        %v3420 = vsel %vm3408, %v3413, %v3412
        %v3421 = vsel %vm3408, %v3414, %v3413
        %v3422 = vsel %vm3408, %v3415, %v3414
        %v3423 = vsel %vm3408, %v3416, %v3415
        %v3424 = vsel %vm3408, %v3417, %v3416
        %vm3434 = vcmask 1041408
        %v3435 = vrot.slane %v3410, 6
        %v3436 = vrot.slane %v3418, 6
        %v3437 = vsel %vm3434, %v3435, %v3436
        %v3438 = vrot.slane %v3419, 6
        %v3439 = vsel %vm3434, %v3436, %v3438
        %v3440 = vrot.slane %v3420, 6
        %v3441 = vsel %vm3434, %v3438, %v3440
        %v3442 = vrot.slane %v3421, 6
        %v3443 = vsel %vm3434, %v3440, %v3442
        %v3444 = vrot.slane %v3422, 6
        %v3445 = vsel %vm3434, %v3442, %v3444
        %v3446 = vrot.slane %v3423, 6
        %v3447 = vsel %vm3434, %v3444, %v3446
        %v3448 = vrot.slane %v3424, 6
        %v3449 = vsel %vm3434, %v3446, %v3448
        %v3450 = vrot.slane %v3417, 6
        %v3451 = vsel %vm3434, %v3448, %v3450
        %v3460 = vsel %vm3392, 0.0, %v3437
        %v3461 = vsel %vm3393, 0.0, %v3439
        %v3462 = vsel %vm3394, 0.0, %v3441
        %v3463 = vsel %vm3395, 0.0, %v3443
        %v3464 = vsel %vm3396, 0.0, %v3445
        %v3465 = vsel %vm3397, 0.0, %v3447
        %v3466 = vsel %vm3398, 0.0, %v3449
        %v3467 = vsel %vm3399, 0.0, %v3451
        %v3475 = vrot.slane %v3375, 1
        %v3476 = vrot.slane %v3376, 1
        %v3477 = vsel %vm3159, %v3475, %v3476
        %v3478 = vrot.slane %v3377, 1
        %v3479 = vsel %vm3159, %v3476, %v3478
        %v3480 = vrot.slane %v3378, 1
        %v3481 = vsel %vm3159, %v3478, %v3480
        %v3482 = vrot.slane %v3379, 1
        %v3483 = vsel %vm3159, %v3480, %v3482
        %v3484 = vrot.slane %v3380, 1
        %v3485 = vsel %vm3159, %v3482, %v3484
        %v3486 = vrot.slane %v3381, 1
        %v3487 = vsel %vm3159, %v3484, %v3486
        %v3488 = vrot.slane %v3410, 1
        %v3489 = vsel %vm3159, %v3486, %v3488
        %v3498 = vsel %vm3400, 0.0, %v3477
        %v3499 = vsel %vm3401, 0.0, %v3479
        %v3500 = vsel %vm3402, 0.0, %v3481
        %v3501 = vsel %vm3403, 0.0, %v3483
        %v3502 = vsel %vm3404, 0.0, %v3485
        %v3503 = vsel %vm3405, 0.0, %v3487
        %v3504 = vsel %vm3406, 0.0, %v3489
        %v3505 = vsel %vm3407, 0.0, %v3488
        %v3506 = vmax.f32 %v3460, %v3375
        %v3507 = vmax.f32 %v3461, %v3376
        %v3508 = vmax.f32 %v3462, %v3377
        %v3509 = vmax.f32 %v3463, %v3378
        %v3510 = vmax.f32 %v3464, %v3379
        %v3511 = vmax.f32 %v3465, %v3380
        %v3512 = vmax.f32 %v3466, %v3381
        %v3513 = vmax.f32 %v3467, %v3382
        %v3514 = vmax.f32 %v3506, %v3498
        %v3515 = vmax.f32 %v3507, %v3499
        %v3516 = vmax.f32 %v3508, %v3500
        %v3517 = vmax.f32 %v3509, %v3501
        %v3518 = vmax.f32 %v3510, %v3502
        %v3519 = vmax.f32 %v3511, %v3503
        %v3520 = vmax.f32 %v3512, %v3504
        %v3521 = vmax.f32 %v3513, %v3505
        %v3522 = vpack.c.bf16 %v3515, %v3514
        %v3523 = vpack.c.bf16 %v3517, %v3516
        %v3524 = vpack.c.bf16 %v3519, %v3518
        %v3525 = vpack.c.bf16 %v3521, %v3520
        %v3526 = vlaneseq
        %v3527 = vand.u32 %v3526, 127
        %v3528 = vmul.u32 %v3384, 2
        %v3529 = vmul.u32 %v3385, 2
        %v3530 = vmul.u32 %v3386, 2
        %v3531 = vmul.u32 %v3387, 2
        %vm3532 = vcmp.eq.s32.totalorder %v3527, %v3528
        %vm3533 = vcmp.eq.s32.totalorder %v3527, %v3529
        %vm3534 = vcmp.eq.s32.totalorder %v3527, %v3530
        %vm3535 = vcmp.eq.s32.totalorder %v3527, %v3531
        %v3536 = vsel %vm3532, 1, 0
        %v3537 = vsel %vm3533, 1, 0
        %v3538 = vsel %vm3534, 1, 0
        %v3539 = vsel %vm3535, 1, 0
        %v3540 = vcvt.s32.f32 %v3536
        %v3541 = vcvt.s32.f32 %v3537
        %v3542 = vcvt.s32.f32 %v3538
        %v3543 = vcvt.s32.f32 %v3539
        %v3544 = vpack.c.bf16 %v3541, %v3540
        %v3545 = vpack.c.bf16 %v3543, %v3542
        %vm3546 = vcmask 515072
        %v3548 = vsel %vm3546, %v3544, 0
        %v3551 = vsel %vm3546, %v3545, 0
        %vm3553 = vcmask 1047552
        %v3554 = vsel %vm3159, 4294967295, 65535
        %v3555 = vsel %vm3553, %v3554, 0
        %v3557 = vand.u32 %v3525, %v3555
        %3559 = vmatprep.subr.bf16.mxu0 0
        %3560 = vmatpush1.bf16.msra.mxu0 %v3522
        %3561 = vmatprep.subr.bf16.mxu0 0
        %3562 = vmatpush1.bf16.msra.mxu0 %v3523
        %3563 = vmatprep.subr.bf16.mxu0 0
        %3564 = vmatpush1.bf16.msra.mxu0 %v3524
        %3565 = vmatprep.subr.bf16.mxu0 0
        %3566 = vmatpush1.bf16.msra.mxu0 %v3557
        %3567 = vmatprep.subr.bf16.mxu0 0
        %3568 = vmatpush1.bf16.msra.mxu0 0
        %3569 = vmatprep.subr.bf16.mxu0 0
        %3570 = vmatpush1.bf16.msra.mxu0 0
        %3571 = vmatprep.subr.bf16.mxu0 0
        %3572 = vmatpush1.bf16.msra.mxu0 0
        %3573 = vmatprep.subr.bf16.mxu0 0
        %3574 = vmatpush1.bf16.msra.mxu0 0
        %3575 = vmatprep.subr.bf16.mxu0 0
        %3576 = vmatpush1.bf16.msra.mxu0 0
        %3577 = vmatprep.subr.bf16.mxu0 0
        %3578 = vmatpush1.bf16.msra.mxu0 0
        %3579 = vmatprep.subr.bf16.mxu0 0
        %3580 = vmatpush1.bf16.msra.mxu0 0
        %3581 = vmatprep.subr.bf16.mxu0 0
        %3582 = vmatpush1.bf16.msra.mxu0 0
        %3583 = vmatprep.subr.bf16.mxu0 0
        %3584 = vmatpush1.bf16.msra.mxu0 0
        %3585 = vmatprep.subr.bf16.mxu0 0
        %3586 = vmatpush1.bf16.msra.mxu0 0
        %3587 = vmatprep.subr.bf16.mxu0 0
        %3588 = vmatpush1.bf16.msra.mxu0 0
        %3589 = vmatprep.subr.bf16.mxu0 0
        %3590 = vmatpush1.bf16.msra.mxu0 0
        %3591 = vmatprep.mubr.bf16.mxu0 0
        %3592 = vmatmul.mubr.bf16.gmra.mrb[0].mxu0 %v3548
        %v3593 = vpop.f32.mrb[0].mxu0
        %v3594 = vadd.f32 0.0, %v3593
        %v3595 = vpop.f32.mrb[0].mxu0
        %v3596 = vpop.f32.mrb[0].mxu0
        %v3597 = vadd.f32 0.0, %v3596
        %v3598 = vpop.f32.mrb[0].mxu0
        %3599 = vmatprep.mubr.bf16.mxu0 0
        %3600 = vmatmul.mubr.bf16.gmra.mrb[0].mxu0 %v3551
        %v3601 = vpop.f32.mrb[0].mxu0
        %v3602 = vadd.f32 0.0, %v3601
        %v3603 = vpop.f32.mrb[0].mxu0
        %v3604 = vpop.f32.mrb[0].mxu0
        %v3605 = vadd.f32 0.0, %v3604
        %v3606 = vpop.f32.mrb[0].mxu0
        %3607 = vdwg.mxu0
        %vm3608 = vcmp.eq.s32.totalorder %v3384, 31
        %vm3609 = vcmp.eq.s32.totalorder %v3385, 31
        %vm3610 = vcmp.eq.s32.totalorder %v3386, 31
        %vm3611 = vcmp.eq.s32.totalorder %v3387, 31
        %v3612 = vrot.slane %v3594, 7
        %v3613 = vrot.slane %v3597, 7
        %v3614 = vrot.slane %v3602, 7
        %v3615 = vrot.slane %v3605, 7
        %vm3616 = vcmp.lt.s32.totalorder %v3384, 1
        %v3617 = vsel %vm3616, %v3614, %v3615
        %v3618 = vsel %vm3616, %v3613, %v3614
        %v3619 = vsel %vm3616, %v3612, %v3613
        %v3620 = vsel %vm3616, %v3615, %v3612
        %v3621 = vsel %vm3392, 0.0, %v3620
        %v3622 = vsel %vm3393, 0.0, %v3619
        %v3623 = vsel %vm3394, 0.0, %v3618
        %v3624 = vsel %vm3395, 0.0, %v3617
        %v3625 = vrot.slane %v3594, 1
        %v3626 = vrot.slane %v3597, 1
        %v3627 = vrot.slane %v3602, 1
        %v3628 = vrot.slane %v3605, 1
        %vm3629 = vcmp.lt.s32.totalorder %v3384, 7
        %v3630 = vsel %vm3629, %v3627, %v3628
        %v3631 = vsel %vm3629, %v3626, %v3627
        %v3632 = vsel %vm3629, %v3625, %v3626
        %v3633 = vsel %vm3629, %v3628, %v3625
        %v3634 = vsel %vm3608, 0.0, %v3632
        %v3635 = vsel %vm3609, 0.0, %v3631
        %v3636 = vsel %vm3610, 0.0, %v3630
        %v3637 = vsel %vm3611, 0.0, %v3633
        %3642 = vrot.lane.b32.xlu0 %v3594, 13
        %v3643 = vpop.permute.xlu0 %3642
        %3644 = vrot.lane.b32.xlu0 %v3597, 13
        %v3645 = vpop.permute.xlu0 %3644
        %3646 = vrot.lane.b32.xlu0 %v3602, 13
        %v3647 = vpop.permute.xlu0 %3646
        %3648 = vrot.lane.b32.xlu0 %v3605, 13
        %v3649 = vpop.permute.xlu0 %3648
        %3658 = vrot.lane.b32.xlu0 %v3634, 26
        %v3659 = vpop.permute.xlu0 %3658
        %3660 = vrot.lane.b32.xlu0 %v3635, 26
        %v3661 = vpop.permute.xlu0 %3660
        %3662 = vrot.lane.b32.xlu0 %v3636, 26
        %v3663 = vpop.permute.xlu0 %3662
        %3664 = vrot.lane.b32.xlu0 %v3637, 26
        %v3665 = vpop.permute.xlu0 %3664
        %v3670 = vsel %vm3242, %v3621, %v3643
        %v3671 = vsel %vm3242, %v3622, %v3645
        %v3672 = vsel %vm3242, %v3623, %v3647
        %v3673 = vsel %vm3242, %v3624, %v3649
        %v3674 = vsel %vm3251, %v3670, %v3659
        %v3675 = vsel %vm3251, %v3671, %v3661
        %v3676 = vsel %vm3251, %v3672, %v3663
        %v3677 = vsel %vm3251, %v3673, %v3665
        %v3678 = vpack.c.bf16 %v3675, %v3674
        %v3679 = vpack.c.bf16 %v3677, %v3676
        %v3680 = vld [vmem:[%s11] sm:$0xf]
        %v3681 = vld [vmem:[%s11 + $0x4] sm:$0xf]
        %v3682 = vld [vmem:[%s11 + $0x8] sm:$0xf]
        %v3683 = vld [vmem:[%s11 + $0xc] sm:$0xf]
        %v3684 = vld [vmem:[%s11 + $0x10] sm:$0xf]
        %v3685 = vld [vmem:[%s13] sm:$0x1]
        %v3687 = vlaneseq
        %v3688 = vshrl.u32 %v3687, 7
        %v3689 = vsub.s32 0, %v3688
        %v3690 = vrot.slane %v3685, %v3689
        %v3697 = vunpack.c.l.b16 %v3680
        %v3698 = vunpack.c.l.b16 %v3681
        %v3699 = vunpack.c.l.b16 %v3682
        %v3700 = vunpack.c.l.b16 %v3683
        %v3701 = vunpack.c.l.b16 %v3684
        %v3702 = vpack.c.b16 %v3698, %v3697
        %v3703 = vpack.c.b16 %v3700, %v3699
        %v3704 = vpack.c.b16 %v3701, %v3701
        %v3708 = vsel %vm3291, %v3678, 0
        %v3711 = vsel %vm3291, %v3679, 0
        %v3714 = vand.u32 %v3704, %v3306
        %3716 = vmatprep.subr.bf16.mxu0 0
        %3717 = vmatpush1.bf16.msra.mxu0 %v3702
        %3718 = vmatprep.subr.bf16.mxu0 0
        %3719 = vmatpush1.bf16.msra.mxu0 %v3703
        %3720 = vmatprep.subr.bf16.mxu0 0
        %3721 = vmatpush1.bf16.msra.mxu0 %v3714
        %3722 = vmatprep.subr.bf16.mxu0 0
        %3723 = vmatpush1.bf16.msra.mxu0 0
        %3724 = vmatprep.subr.bf16.mxu0 0
        %3725 = vmatpush1.bf16.msra.mxu0 0
        %3726 = vmatprep.subr.bf16.mxu0 0
        %3727 = vmatpush1.bf16.msra.mxu0 0
        %3728 = vmatprep.subr.bf16.mxu0 0
        %3729 = vmatpush1.bf16.msra.mxu0 0
        %3730 = vmatprep.subr.bf16.mxu0 0
        %3731 = vmatpush1.bf16.msra.mxu0 0
        %3732 = vmatprep.subr.bf16.mxu0 0
        %3733 = vmatpush1.bf16.msra.mxu0 0
        %3734 = vmatprep.subr.bf16.mxu0 0
        %3735 = vmatpush1.bf16.msra.mxu0 0
        %3736 = vmatprep.subr.bf16.mxu0 0
        %3737 = vmatpush1.bf16.msra.mxu0 0
        %3738 = vmatprep.subr.bf16.mxu0 0
        %3739 = vmatpush1.bf16.msra.mxu0 0
        %3740 = vmatprep.subr.bf16.mxu0 0
        %3741 = vmatpush1.bf16.msra.mxu0 0
        %3742 = vmatprep.subr.bf16.mxu0 0
        %3743 = vmatpush1.bf16.msra.mxu0 0
        %3744 = vmatprep.subr.bf16.mxu0 0
        %3745 = vmatpush1.bf16.msra.mxu0 0
        %3746 = vmatprep.subr.bf16.mxu0 0
        %3747 = vmatpush1.bf16.msra.mxu0 0
        %3748 = vmatprep.mubr.bf16.mxu0 0
        %3749 = vmatmul.mubr.bf16.gmra.mrb[0].mxu0 %v3708
        %v3750 = vpop.f32.mrb[0].mxu0
        %v3751 = vadd.f32 %v3690, %v3750
        %v3752 = vpop.f32.mrb[0].mxu0
        %v3753 = vpop.f32.mrb[0].mxu0
        %v3754 = vadd.f32 %v3690, %v3753
        %v3755 = vpop.f32.mrb[0].mxu0
        %3756 = vmatprep.mubr.bf16.mxu0 0
        %3757 = vmatmul.mubr.bf16.gmra.mrb[0].mxu0 %v3711
        %v3758 = vpop.f32.mrb[0].mxu0
        %v3759 = vadd.f32 %v3690, %v3758
        %v3760 = vpop.f32.mrb[0].mxu0
        %v3761 = vpop.f32.mrb[0].mxu0
        %v3762 = vadd.f32 %v3690, %v3761
        %v3763 = vpop.f32.mrb[0].mxu0
        %3764 = vdwg.mxu0
        %v3765 = vmax.f32 %v3751, 0.0
        %v3766 = vmax.f32 %v3754, 0.0
        %v3767 = vmax.f32 %v3759, 0.0
        %v3768 = vmax.f32 %v3762, 0.0
        %v3769 = vrot.slane %v3765, 7
        %v3770 = vrot.slane %v3766, 7
        %v3771 = vrot.slane %v3767, 7
        %v3772 = vrot.slane %v3768, 7
        %v3773 = vsel %vm3616, %v3771, %v3772
        %v3774 = vsel %vm3616, %v3770, %v3771
        %v3775 = vsel %vm3616, %v3769, %v3770
        %v3776 = vsel %vm3616, %v3772, %v3769
        %v3777 = vsel %vm3392, 0.0, %v3776
        %v3778 = vsel %vm3393, 0.0, %v3775
        %v3779 = vsel %vm3394, 0.0, %v3774
        %v3780 = vsel %vm3395, 0.0, %v3773
        %v3781 = vrot.slane %v3765, 1
        %v3782 = vrot.slane %v3766, 1
        %v3783 = vrot.slane %v3767, 1
        %v3784 = vrot.slane %v3768, 1
        %v3785 = vsel %vm3629, %v3783, %v3784
        %v3786 = vsel %vm3629, %v3782, %v3783
        %v3787 = vsel %vm3629, %v3781, %v3782
        %v3788 = vsel %vm3629, %v3784, %v3781
        %v3789 = vsel %vm3608, 0.0, %v3787
        %v3790 = vsel %vm3609, 0.0, %v3786
        %v3791 = vsel %vm3610, 0.0, %v3785
        %v3792 = vsel %vm3611, 0.0, %v3788
        %3797 = vrot.lane.b32.xlu0 %v3765, 24
        %v3798 = vpop.permute.xlu0 %3797
        %3799 = vrot.lane.b32.xlu0 %v3766, 24
        %v3800 = vpop.permute.xlu0 %3799
        %3801 = vrot.lane.b32.xlu0 %v3767, 24
        %v3802 = vpop.permute.xlu0 %3801
        %3803 = vrot.lane.b32.xlu0 %v3768, 24
        %v3804 = vpop.permute.xlu0 %3803
        %3813 = vrot.lane.b32.xlu0 %v3789, 48
        %v3814 = vpop.permute.xlu0 %3813
        %3815 = vrot.lane.b32.xlu0 %v3790, 48
        %v3816 = vpop.permute.xlu0 %3815
        %3817 = vrot.lane.b32.xlu0 %v3791, 48
        %v3818 = vpop.permute.xlu0 %3817
        %3819 = vrot.lane.b32.xlu0 %v3792, 48
        %v3820 = vpop.permute.xlu0 %3819
        %vm3825 = vcmask 195584
        %v3826 = vsel %vm3825, %v3777, %v3798
        %v3827 = vsel %vm3825, %v3778, %v3800
        %v3828 = vsel %vm3825, %v3779, %v3802
        %v3829 = vsel %vm3825, %v3780, %v3804
        %vm3830 = vcmask 392192
        %v3831 = vsel %vm3830, %v3826, %v3814
        %v3832 = vsel %vm3830, %v3827, %v3816
        %v3833 = vsel %vm3830, %v3828, %v3818
        %v3834 = vsel %vm3830, %v3829, %v3820
        %v3835 = vpack.c.bf16 %v3832, %v3831
        %v3836 = vpack.c.bf16 %v3834, %v3833
        %v3837 = vld [vmem:[%s15] sm:$0xf]
        %v3838 = vld [vmem:[%s15 + $0x4] sm:$0xf]
        %v3839 = vld [vmem:[%s15 + $0x8] sm:$0xf]
        %v3840 = vld [vmem:[%s15 + $0xc] sm:$0xf]
        %v3841 = vld [vmem:[%s15 + $0x10] sm:$0xf]
        %v3842 = vld [vmem:[%s15 + $0x14] sm:$0xf]
        %v3843 = vld [vmem:[%s15 + $0x18] sm:$0xf]
        %v3844 = vld [vmem:[%s15 + $0x1c] sm:$0xf]
        %v3845 = vld [vmem:[%s15 + $0x20] sm:$0xf]
        %v3846 = vld [vmem:[%s17] sm:$0x1]
        %v3848 = vlaneseq
        %v3849 = vshrl.u32 %v3848, 7
        %v3850 = vsub.s32 0, %v3849
        %v3851 = vrot.slane %v3846, %v3850
        %v3862 = vunpack.c.l.b16 %v3837
        %v3863 = vunpack.c.l.b16 %v3838
        %v3864 = vunpack.c.l.b16 %v3839
        %v3865 = vunpack.c.l.b16 %v3840
        %v3866 = vunpack.c.l.b16 %v3841
        %v3867 = vunpack.c.l.b16 %v3842
        %v3868 = vunpack.c.l.b16 %v3843
        %v3869 = vunpack.c.l.b16 %v3844
        %v3870 = vunpack.c.l.b16 %v3845
        %v3871 = vpack.c.b16 %v3863, %v3862
        %v3872 = vpack.c.b16 %v3865, %v3864
        %v3873 = vpack.c.b16 %v3867, %v3866
        %v3874 = vpack.c.b16 %v3869, %v3868
        %v3875 = vpack.c.b16 %v3870, %v3870
        %vm3880 = vcmask 588800
        %v3882 = vsel %vm3880, %v3835, 0
        %v3885 = vsel %vm3880, %v3836, 0
        %v3888 = vsel %vm3075, %v3875, 0
        %3890 = vmatprep.subr.bf16.mxu0 0
        %3891 = vmatpush1.bf16.msra.mxu0 %v3871
        %3892 = vmatprep.subr.bf16.mxu0 0
        %3893 = vmatpush1.bf16.msra.mxu0 %v3872
        %3894 = vmatprep.subr.bf16.mxu0 0
        %3895 = vmatpush1.bf16.msra.mxu0 %v3873
        %3896 = vmatprep.subr.bf16.mxu0 0
        %3897 = vmatpush1.bf16.msra.mxu0 %v3874
        %3898 = vmatprep.subr.bf16.mxu0 0
        %3899 = vmatpush1.bf16.msra.mxu0 %v3888
        %3900 = vmatprep.subr.bf16.mxu0 0
        %3901 = vmatpush1.bf16.msra.mxu0 0
        %3902 = vmatprep.subr.bf16.mxu0 0
        %3903 = vmatpush1.bf16.msra.mxu0 0
        %3904 = vmatprep.subr.bf16.mxu0 0
        %3905 = vmatpush1.bf16.msra.mxu0 0
        %3906 = vmatprep.subr.bf16.mxu0 0
        %3907 = vmatpush1.bf16.msra.mxu0 0
        %3908 = vmatprep.subr.bf16.mxu0 0
        %3909 = vmatpush1.bf16.msra.mxu0 0
        %3910 = vmatprep.subr.bf16.mxu0 0
        %3911 = vmatpush1.bf16.msra.mxu0 0
        %3912 = vmatprep.subr.bf16.mxu0 0
        %3913 = vmatpush1.bf16.msra.mxu0 0
        %3914 = vmatprep.subr.bf16.mxu0 0
        %3915 = vmatpush1.bf16.msra.mxu0 0
        %3916 = vmatprep.subr.bf16.mxu0 0
        %3917 = vmatpush1.bf16.msra.mxu0 0
        %3918 = vmatprep.subr.bf16.mxu0 0
        %3919 = vmatpush1.bf16.msra.mxu0 0
        %3920 = vmatprep.subr.bf16.mxu0 0
        %3921 = vmatpush1.bf16.msra.mxu0 0
        %3922 = vmatprep.mubr.bf16.mxu0 0
        %3923 = vmatmul.mubr.bf16.gmra.mrb[0].mxu0 %v3882
        %v3924 = vpop.f32.mrb[0].mxu0
        %v3925 = vadd.f32 %v3851, %v3924
        %v3926 = vpop.f32.mrb[0].mxu0
        %v3927 = vpop.f32.mrb[0].mxu0
        %v3928 = vadd.f32 %v3851, %v3927
        %v3929 = vpop.f32.mrb[0].mxu0
        %3930 = vmatprep.mubr.bf16.mxu0 0
        %3931 = vmatmul.mubr.bf16.gmra.mrb[0].mxu0 %v3885
        %v3932 = vpop.f32.mrb[0].mxu0
        %v3933 = vadd.f32 %v3851, %v3932
        %v3934 = vpop.f32.mrb[0].mxu0
        %v3935 = vpop.f32.mrb[0].mxu0
        %v3936 = vadd.f32 %v3851, %v3935
        %v3937 = vpop.f32.mrb[0].mxu0
        %3938 = vdwg.mxu0
        %v3939 = vpack.c.bf16 %v3597, %v3594
        %v3940 = vpack.c.bf16 %v3605, %v3602
        %v3941 = vld [vmem:[%s19] sm:$0xf]
        %v3942 = vld [vmem:[%s19 + $0x4] sm:$0x7]
        %v3943 = vld [vmem:[%s21] sm:$0x1]
        %v3945 = vlaneseq
        %v3946 = vshrl.u32 %v3945, 7
        %v3947 = vsub.s32 0, %v3946
        %v3948 = vrot.slane %v3943, %v3947
        %v3952 = vunpack.c.l.b16 %v3941
        %v3953 = vunpack.c.l.b16 %v3942
        %v3954 = vpack.c.b16 %v3953, %v3952
        %v3956 = vsel %vm3242, %v3939, 0
        %v3959 = vsel %vm3242, %v3940, 0
        %v3961 = vsel %vm3200, 4294967295, 65535
        %v3962 = vsel %vm3159, %v3961, 0
        %v3964 = vand.u32 %v3954, %v3962
        %3966 = vmatprep.subr.bf16.mxu0 0
        %3967 = vmatpush1.bf16.msra.mxu0 %v3964
        %3968 = vmatprep.subr.bf16.mxu0 0
        %3969 = vmatpush1.bf16.msra.mxu0 0
        %3970 = vmatprep.subr.bf16.mxu0 0
        %3971 = vmatpush1.bf16.msra.mxu0 0
        %3972 = vmatprep.subr.bf16.mxu0 0
        %3973 = vmatpush1.bf16.msra.mxu0 0
        %3974 = vmatprep.subr.bf16.mxu0 0
        %3975 = vmatpush1.bf16.msra.mxu0 0
        %3976 = vmatprep.subr.bf16.mxu0 0
        %3977 = vmatpush1.bf16.msra.mxu0 0
        %3978 = vmatprep.subr.bf16.mxu0 0
        %3979 = vmatpush1.bf16.msra.mxu0 0
        %3980 = vmatprep.subr.bf16.mxu0 0
        %3981 = vmatpush1.bf16.msra.mxu0 0
        %3982 = vmatprep.subr.bf16.mxu0 0
        %3983 = vmatpush1.bf16.msra.mxu0 0
        %3984 = vmatprep.subr.bf16.mxu0 0
        %3985 = vmatpush1.bf16.msra.mxu0 0
        %3986 = vmatprep.subr.bf16.mxu0 0
        %3987 = vmatpush1.bf16.msra.mxu0 0
        %3988 = vmatprep.subr.bf16.mxu0 0
        %3989 = vmatpush1.bf16.msra.mxu0 0
        %3990 = vmatprep.subr.bf16.mxu0 0
        %3991 = vmatpush1.bf16.msra.mxu0 0
        %3992 = vmatprep.subr.bf16.mxu0 0
        %3993 = vmatpush1.bf16.msra.mxu0 0
        %3994 = vmatprep.subr.bf16.mxu0 0
        %3995 = vmatpush1.bf16.msra.mxu0 0
        %3996 = vmatprep.subr.bf16.mxu0 0
        %3997 = vmatpush1.bf16.msra.mxu0 0
        %3998 = vmatprep.mubr.bf16.mxu0 0
        %3999 = vmatmul.mubr.bf16.gmra.mrb[0].mxu0 %v3956
        %v4000 = vpop.f32.mrb[0].mxu0
        %v4001 = vadd.f32 %v3948, %v4000
        %v4002 = vpop.f32.mrb[0].mxu0
        %v4003 = vpop.f32.mrb[0].mxu0
        %v4004 = vadd.f32 %v3948, %v4003
        %v4005 = vpop.f32.mrb[0].mxu0
        %4006 = vmatprep.mubr.bf16.mxu0 0
        %4007 = vmatmul.mubr.bf16.gmra.mrb[0].mxu0 %v3959
        %v4008 = vpop.f32.mrb[0].mxu0
        %v4009 = vadd.f32 %v3948, %v4008
        %v4010 = vpop.f32.mrb[0].mxu0
        %v4011 = vpop.f32.mrb[0].mxu0
        %v4012 = vadd.f32 %v3948, %v4011
        %v4013 = vpop.f32.mrb[0].mxu0
        %4014 = vdwg.mxu0
        %v4015 = vadd.f32 %v3925, %v4001
        %v4016 = vadd.f32 %v3928, %v4004
        %v4017 = vadd.f32 %v3933, %v4009
        %v4018 = vadd.f32 %v3936, %v4012
        %v4019 = vmax.f32 %v4015, 0.0
        %v4020 = vmax.f32 %v4016, 0.0
        %v4021 = vmax.f32 %v4017, 0.0
        %v4022 = vmax.f32 %v4018, 0.0
        %v4023 = vrot.slane %v4019, 7
        %v4024 = vrot.slane %v4020, 7
        %v4025 = vrot.slane %v4021, 7
        %v4026 = vrot.slane %v4022, 7
        %v4027 = vsel %vm3616, %v4025, %v4026
        %v4028 = vsel %vm3616, %v4024, %v4025
        %v4029 = vsel %vm3616, %v4023, %v4024
        %v4030 = vsel %vm3616, %v4026, %v4023
        %v4031 = vsel %vm3392, 0.0, %v4030
        %v4032 = vsel %vm3393, 0.0, %v4029
        %v4033 = vsel %vm3394, 0.0, %v4028
        %v4034 = vsel %vm3395, 0.0, %v4027
        %v4035 = vrot.slane %v4019, 1
        %v4036 = vrot.slane %v4020, 1
        %v4037 = vrot.slane %v4021, 1
        %v4038 = vrot.slane %v4022, 1
        %v4039 = vsel %vm3629, %v4037, %v4038
        %v4040 = vsel %vm3629, %v4036, %v4037
        %v4041 = vsel %vm3629, %v4035, %v4036
        %v4042 = vsel %vm3629, %v4038, %v4035
        %v4043 = vsel %vm3608, 0.0, %v4041
        %v4044 = vsel %vm3609, 0.0, %v4040
        %v4045 = vsel %vm3610, 0.0, %v4039
        %v4046 = vsel %vm3611, 0.0, %v4042
        %4051 = vrot.lane.b32.xlu0 %v4019, 24
        %v4052 = vpop.permute.xlu0 %4051
        %4053 = vrot.lane.b32.xlu0 %v4020, 24
        %v4054 = vpop.permute.xlu0 %4053
        %4055 = vrot.lane.b32.xlu0 %v4021, 24
        %v4056 = vpop.permute.xlu0 %4055
        %4057 = vrot.lane.b32.xlu0 %v4022, 24
        %v4058 = vpop.permute.xlu0 %4057
        %4067 = vrot.lane.b32.xlu0 %v4043, 48
        %v4068 = vpop.permute.xlu0 %4067
        %4069 = vrot.lane.b32.xlu0 %v4044, 48
        %v4070 = vpop.permute.xlu0 %4069
        %4071 = vrot.lane.b32.xlu0 %v4045, 48
        %v4072 = vpop.permute.xlu0 %4071
        %4073 = vrot.lane.b32.xlu0 %v4046, 48
        %v4074 = vpop.permute.xlu0 %4073
        %v4079 = vsel %vm3825, %v4031, %v4052
        %v4080 = vsel %vm3825, %v4032, %v4054
        %v4081 = vsel %vm3825, %v4033, %v4056
        %v4082 = vsel %vm3825, %v4034, %v4058
        %v4083 = vsel %vm3830, %v4079, %v4068
        %v4084 = vsel %vm3830, %v4080, %v4070
        %v4085 = vsel %vm3830, %v4081, %v4072
        %v4086 = vsel %vm3830, %v4082, %v4074
        %v4087 = vpack.c.bf16 %v4084, %v4083
        %v4088 = vpack.c.bf16 %v4086, %v4085
        %v4089 = vld [vmem:[%s23] sm:$0xf]
        %v4090 = vld [vmem:[%s23 + $0x4] sm:$0xf]
        %v4091 = vld [vmem:[%s23 + $0x8] sm:$0xf]
        %v4092 = vld [vmem:[%s23 + $0xc] sm:$0xf]
        %v4093 = vld [vmem:[%s23 + $0x10] sm:$0xf]
        %v4094 = vld [vmem:[%s23 + $0x14] sm:$0xf]
        %v4095 = vld [vmem:[%s23 + $0x18] sm:$0xf]
        %v4096 = vld [vmem:[%s23 + $0x1c] sm:$0xf]
        %v4097 = vld [vmem:[%s23 + $0x20] sm:$0xf]
        %v4098 = vld [vmem:[%s25] sm:$0x1]
        %v4100 = vlaneseq
        %v4101 = vshrl.u32 %v4100, 7
        %v4102 = vsub.s32 0, %v4101
        %v4103 = vrot.slane %v4098, %v4102
        %v4114 = vunpack.c.l.b16 %v4089
        %v4115 = vunpack.c.l.b16 %v4090
        %v4116 = vunpack.c.l.b16 %v4091
        %v4117 = vunpack.c.l.b16 %v4092
        %v4118 = vunpack.c.l.b16 %v4093
        %v4119 = vunpack.c.l.b16 %v4094
        %v4120 = vunpack.c.l.b16 %v4095
        %v4121 = vunpack.c.l.b16 %v4096
        %v4122 = vunpack.c.l.b16 %v4097
        %v4123 = vpack.c.b16 %v4115, %v4114
        %v4124 = vpack.c.b16 %v4117, %v4116
        %v4125 = vpack.c.b16 %v4119, %v4118
        %v4126 = vpack.c.b16 %v4121, %v4120
        %v4127 = vpack.c.b16 %v4122, %v4122
        %v4133 = vsel %vm3880, %v4087, 0
        %v4136 = vsel %vm3880, %v4088, 0
        %v4139 = vsel %vm3075, %v4127, 0
        %4141 = vmatprep.subr.bf16.mxu0 0
        %4142 = vmatpush1.bf16.msra.mxu0 %v4123
        %4143 = vmatprep.subr.bf16.mxu0 0
        %4144 = vmatpush1.bf16.msra.mxu0 %v4124
        %4145 = vmatprep.subr.bf16.mxu0 0
        %4146 = vmatpush1.bf16.msra.mxu0 %v4125
        %4147 = vmatprep.subr.bf16.mxu0 0
        %4148 = vmatpush1.bf16.msra.mxu0 %v4126
        %4149 = vmatprep.subr.bf16.mxu0 0
        %4150 = vmatpush1.bf16.msra.mxu0 %v4139
        %4151 = vmatprep.subr.bf16.mxu0 0
        %4152 = vmatpush1.bf16.msra.mxu0 0
        %4153 = vmatprep.subr.bf16.mxu0 0
        %4154 = vmatpush1.bf16.msra.mxu0 0
        %4155 = vmatprep.subr.bf16.mxu0 0
        %4156 = vmatpush1.bf16.msra.mxu0 0
        %4157 = vmatprep.subr.bf16.mxu0 0
        %4158 = vmatpush1.bf16.msra.mxu0 0
        %4159 = vmatprep.subr.bf16.mxu0 0
        %4160 = vmatpush1.bf16.msra.mxu0 0
        %4161 = vmatprep.subr.bf16.mxu0 0
        %4162 = vmatpush1.bf16.msra.mxu0 0
        %4163 = vmatprep.subr.bf16.mxu0 0
        %4164 = vmatpush1.bf16.msra.mxu0 0
        %4165 = vmatprep.subr.bf16.mxu0 0
        %4166 = vmatpush1.bf16.msra.mxu0 0
        %4167 = vmatprep.subr.bf16.mxu0 0
        %4168 = vmatpush1.bf16.msra.mxu0 0
        %4169 = vmatprep.subr.bf16.mxu0 0
        %4170 = vmatpush1.bf16.msra.mxu0 0
        %4171 = vmatprep.subr.bf16.mxu0 0
        %4172 = vmatpush1.bf16.msra.mxu0 0
        %4173 = vmatprep.mubr.bf16.mxu0 0
        %4174 = vmatmul.mubr.bf16.gmra.mrb[0].mxu0 %v4133
        %v4175 = vpop.f32.mrb[0].mxu0
        %v4176 = vadd.f32 %v4103, %v4175
        %v4177 = vpop.f32.mrb[0].mxu0
        %v4178 = vpop.f32.mrb[0].mxu0
        %v4179 = vadd.f32 %v4103, %v4178
        %v4180 = vpop.f32.mrb[0].mxu0
        %4181 = vmatprep.mubr.bf16.mxu0 0
        %4182 = vmatmul.mubr.bf16.gmra.mrb[0].mxu0 %v4136
        %v4183 = vpop.f32.mrb[0].mxu0
        %v4184 = vadd.f32 %v4103, %v4183
        %v4185 = vpop.f32.mrb[0].mxu0
        %v4186 = vpop.f32.mrb[0].mxu0
        %v4187 = vadd.f32 %v4103, %v4186
        %v4188 = vpop.f32.mrb[0].mxu0
        %4189 = vdwg.mxu0
        %v4190 = vmax.f32 %v4176, 0.0
        %v4191 = vmax.f32 %v4179, 0.0
        %v4192 = vmax.f32 %v4184, 0.0
        %v4193 = vmax.f32 %v4187, 0.0
        %v4194 = vrot.slane %v4190, 7
        %v4195 = vrot.slane %v4191, 7
        %v4196 = vrot.slane %v4192, 7
        %v4197 = vrot.slane %v4193, 7
        %v4198 = vsel %vm3616, %v4196, %v4197
        %v4199 = vsel %vm3616, %v4195, %v4196
        %v4200 = vsel %vm3616, %v4194, %v4195
        %v4201 = vsel %vm3616, %v4197, %v4194
        %v4202 = vsel %vm3392, 0.0, %v4201
        %v4203 = vsel %vm3393, 0.0, %v4200
        %v4204 = vsel %vm3394, 0.0, %v4199
        %v4205 = vsel %vm3395, 0.0, %v4198
        %v4206 = vrot.slane %v4190, 1
        %v4207 = vrot.slane %v4191, 1
        %v4208 = vrot.slane %v4192, 1
        %v4209 = vrot.slane %v4193, 1
        %v4210 = vsel %vm3629, %v4208, %v4209
        %v4211 = vsel %vm3629, %v4207, %v4208
        %v4212 = vsel %vm3629, %v4206, %v4207
        %v4213 = vsel %vm3629, %v4209, %v4206
        %v4214 = vsel %vm3608, 0.0, %v4212
        %v4215 = vsel %vm3609, 0.0, %v4211
        %v4216 = vsel %vm3610, 0.0, %v4210
        %v4217 = vsel %vm3611, 0.0, %v4213
        %4222 = vrot.lane.b32.xlu0 %v4190, 24
        %v4223 = vpop.permute.xlu0 %4222
        %4224 = vrot.lane.b32.xlu0 %v4191, 24
        %v4225 = vpop.permute.xlu0 %4224
        %4226 = vrot.lane.b32.xlu0 %v4192, 24
        %v4227 = vpop.permute.xlu0 %4226
        %4228 = vrot.lane.b32.xlu0 %v4193, 24
        %v4229 = vpop.permute.xlu0 %4228
        %4238 = vrot.lane.b32.xlu0 %v4214, 48
        %v4239 = vpop.permute.xlu0 %4238
        %4240 = vrot.lane.b32.xlu0 %v4215, 48
        %v4241 = vpop.permute.xlu0 %4240
        %4242 = vrot.lane.b32.xlu0 %v4216, 48
        %v4243 = vpop.permute.xlu0 %4242
        %4244 = vrot.lane.b32.xlu0 %v4217, 48
        %v4245 = vpop.permute.xlu0 %4244
        %v4250 = vsel %vm3825, %v4202, %v4223
        %v4251 = vsel %vm3825, %v4203, %v4225
        %v4252 = vsel %vm3825, %v4204, %v4227
        %v4253 = vsel %vm3825, %v4205, %v4229
        %v4254 = vsel %vm3830, %v4250, %v4239
        %v4255 = vsel %vm3830, %v4251, %v4241
        %v4256 = vsel %vm3830, %v4252, %v4243
        %v4257 = vsel %vm3830, %v4253, %v4245
        %v4258 = vpack.c.bf16 %v4255, %v4254
        %v4259 = vpack.c.bf16 %v4257, %v4256
        %v4260 = vld [vmem:[%s27] sm:$0xf]
        %v4261 = vld [vmem:[%s27 + $0x4] sm:$0xf]
        %v4262 = vld [vmem:[%s27 + $0x8] sm:$0xf]
        %v4263 = vld [vmem:[%s27 + $0xc] sm:$0xf]
        %v4264 = vld [vmem:[%s27 + $0x10] sm:$0xf]
        %v4265 = vld [vmem:[%s27 + $0x14] sm:$0xf]
        %v4266 = vld [vmem:[%s27 + $0x18] sm:$0xf]
        %v4267 = vld [vmem:[%s27 + $0x1c] sm:$0xf]
        %v4268 = vld [vmem:[%s27 + $0x20] sm:$0xf]
        %v4269 = vld [vmem:[%s29] sm:$0x1]
        %v4271 = vlaneseq
        %v4272 = vshrl.u32 %v4271, 7
        %v4273 = vsub.s32 0, %v4272
        %v4274 = vrot.slane %v4269, %v4273
        %v4285 = vunpack.c.l.b16 %v4260
        %v4286 = vunpack.c.l.b16 %v4261
        %v4287 = vunpack.c.l.b16 %v4262
        %v4288 = vunpack.c.l.b16 %v4263
        %v4289 = vunpack.c.l.b16 %v4264
        %v4290 = vunpack.c.l.b16 %v4265
        %v4291 = vunpack.c.l.b16 %v4266
        %v4292 = vunpack.c.l.b16 %v4267
        %v4293 = vunpack.c.l.b16 %v4268
        %v4294 = vpack.c.b16 %v4286, %v4285
        %v4295 = vpack.c.b16 %v4288, %v4287
        %v4296 = vpack.c.b16 %v4290, %v4289
        %v4297 = vpack.c.b16 %v4292, %v4291
        %v4298 = vpack.c.b16 %v4293, %v4293
        %v4304 = vsel %vm3880, %v4258, 0
        %v4307 = vsel %vm3880, %v4259, 0
        %v4310 = vsel %vm3075, %v4298, 0
        %4312 = vmatprep.subr.bf16.mxu0 0
        %4313 = vmatpush1.bf16.msra.mxu0 %v4294
        %4314 = vmatprep.subr.bf16.mxu0 0
        %4315 = vmatpush1.bf16.msra.mxu0 %v4295
        %4316 = vmatprep.subr.bf16.mxu0 0
        %4317 = vmatpush1.bf16.msra.mxu0 %v4296
        %4318 = vmatprep.subr.bf16.mxu0 0
        %4319 = vmatpush1.bf16.msra.mxu0 %v4297
        %4320 = vmatprep.subr.bf16.mxu0 0
        %4321 = vmatpush1.bf16.msra.mxu0 %v4310
        %4322 = vmatprep.subr.bf16.mxu0 0
        %4323 = vmatpush1.bf16.msra.mxu0 0
        %4324 = vmatprep.subr.bf16.mxu0 0
        %4325 = vmatpush1.bf16.msra.mxu0 0
        %4326 = vmatprep.subr.bf16.mxu0 0
        %4327 = vmatpush1.bf16.msra.mxu0 0
        %4328 = vmatprep.subr.bf16.mxu0 0
        %4329 = vmatpush1.bf16.msra.mxu0 0
        %4330 = vmatprep.subr.bf16.mxu0 0
        %4331 = vmatpush1.bf16.msra.mxu0 0
        %4332 = vmatprep.subr.bf16.mxu0 0
        %4333 = vmatpush1.bf16.msra.mxu0 0
        %4334 = vmatprep.subr.bf16.mxu0 0
        %4335 = vmatpush1.bf16.msra.mxu0 0
        %4336 = vmatprep.subr.bf16.mxu0 0
        %4337 = vmatpush1.bf16.msra.mxu0 0
        %4338 = vmatprep.subr.bf16.mxu0 0
        %4339 = vmatpush1.bf16.msra.mxu0 0
        %4340 = vmatprep.subr.bf16.mxu0 0
        %4341 = vmatpush1.bf16.msra.mxu0 0
        %4342 = vmatprep.subr.bf16.mxu0 0
        %4343 = vmatpush1.bf16.msra.mxu0 0
        %4344 = vmatprep.mubr.bf16.mxu0 0
        %4345 = vmatmul.mubr.bf16.gmra.mrb[0].mxu0 %v4304
        %v4346 = vpop.f32.mrb[0].mxu0
        %v4347 = vadd.f32 %v4274, %v4346
        %v4348 = vpop.f32.mrb[0].mxu0
        %v4349 = vpop.f32.mrb[0].mxu0
        %v4350 = vadd.f32 %v4274, %v4349
        %v4351 = vpop.f32.mrb[0].mxu0
        %4352 = vmatprep.mubr.bf16.mxu0 0
        %4353 = vmatmul.mubr.bf16.gmra.mrb[0].mxu0 %v4307
        %v4354 = vpop.f32.mrb[0].mxu0
        %v4355 = vadd.f32 %v4274, %v4354
        %v4356 = vpop.f32.mrb[0].mxu0
        %v4357 = vpop.f32.mrb[0].mxu0
        %v4358 = vadd.f32 %v4274, %v4357
        %v4359 = vpop.f32.mrb[0].mxu0
        %4360 = vdwg.mxu0
        %v4361 = vadd.f32 %v4347, %v4019
        %v4362 = vadd.f32 %v4350, %v4020
        %v4363 = vadd.f32 %v4355, %v4021
        %v4364 = vadd.f32 %v4358, %v4022
        %v4365 = vmax.f32 %v4361, 0.0
        %v4366 = vmax.f32 %v4362, 0.0
        %v4367 = vmax.f32 %v4363, 0.0
        %v4368 = vmax.f32 %v4364, 0.0
        %v4369 = vrot.slane %v4365, 7
        %v4370 = vrot.slane %v4366, 7
        %v4371 = vrot.slane %v4367, 7
        %v4372 = vrot.slane %v4368, 7
        %v4373 = vsel %vm3616, %v4371, %v4372
        %v4374 = vsel %vm3616, %v4370, %v4371
        %v4375 = vsel %vm3616, %v4369, %v4370
        %v4376 = vsel %vm3616, %v4372, %v4369
        %v4377 = vsel %vm3392, 0.0, %v4376
        %v4378 = vsel %vm3393, 0.0, %v4375
        %v4379 = vsel %vm3394, 0.0, %v4374
        %v4380 = vsel %vm3395, 0.0, %v4373
        %v4381 = vrot.slane %v4365, 1
        %v4382 = vrot.slane %v4366, 1
        %v4383 = vrot.slane %v4367, 1
        %v4384 = vrot.slane %v4368, 1
        %v4385 = vsel %vm3629, %v4383, %v4384
        %v4386 = vsel %vm3629, %v4382, %v4383
        %v4387 = vsel %vm3629, %v4381, %v4382
        %v4388 = vsel %vm3629, %v4384, %v4381
        %v4389 = vsel %vm3608, 0.0, %v4387
        %v4390 = vsel %vm3609, 0.0, %v4386
        %v4391 = vsel %vm3610, 0.0, %v4385
        %v4392 = vsel %vm3611, 0.0, %v4388
        %4397 = vrot.lane.b32.xlu0 %v4365, 24
        %v4398 = vpop.permute.xlu0 %4397
        %4399 = vrot.lane.b32.xlu0 %v4366, 24
        %v4400 = vpop.permute.xlu0 %4399
        %4401 = vrot.lane.b32.xlu0 %v4367, 24
        %v4402 = vpop.permute.xlu0 %4401
        %4403 = vrot.lane.b32.xlu0 %v4368, 24
        %v4404 = vpop.permute.xlu0 %4403
        %4413 = vrot.lane.b32.xlu0 %v4389, 48
        %v4414 = vpop.permute.xlu0 %4413
        %4415 = vrot.lane.b32.xlu0 %v4390, 48
        %v4416 = vpop.permute.xlu0 %4415
        %4417 = vrot.lane.b32.xlu0 %v4391, 48
        %v4418 = vpop.permute.xlu0 %4417
        %4419 = vrot.lane.b32.xlu0 %v4392, 48
        %v4420 = vpop.permute.xlu0 %4419
        %v4425 = vsel %vm3825, %v4377, %v4398
        %v4426 = vsel %vm3825, %v4378, %v4400
        %v4427 = vsel %vm3825, %v4379, %v4402
        %v4428 = vsel %vm3825, %v4380, %v4404
        %v4429 = vsel %vm3830, %v4425, %v4414
        %v4430 = vsel %vm3830, %v4426, %v4416
        %v4431 = vsel %vm3830, %v4427, %v4418
        %v4432 = vsel %vm3830, %v4428, %v4420
        %v4433 = vpack.c.bf16 %v4430, %v4429
        %v4434 = vpack.c.bf16 %v4432, %v4431
        %v4435 = vld [vmem:[%s31] sm:$0xf]
        %v4436 = vld [vmem:[%s31 + $0x4] sm:$0xf]
        %v4437 = vld [vmem:[%s31 + $0x8] sm:$0xf]
        %v4438 = vld [vmem:[%s31 + $0xc] sm:$0xf]
        %v4439 = vld [vmem:[%s31 + $0x10] sm:$0xf]
        %v4440 = vld [vmem:[%s31 + $0x14] sm:$0xf]
        %v4441 = vld [vmem:[%s31 + $0x18] sm:$0xf]
        %v4442 = vld [vmem:[%s31 + $0x1c] sm:$0xf]
        %v4443 = vld [vmem:[%s31 + $0x20] sm:$0xf]
        %v4444 = vld [vmem:[%s33] sm:$0x1]
        %v4446 = vlaneseq
        %v4447 = vshrl.u32 %v4446, 7
        %v4448 = vsub.s32 0, %v4447
        %v4449 = vrot.slane %v4444, %v4448
        %v4460 = vunpack.c.l.b16 %v4435
        %v4461 = vunpack.c.l.b16 %v4436
        %v4462 = vunpack.c.l.b16 %v4437
        %v4463 = vunpack.c.l.b16 %v4438
        %v4464 = vunpack.c.l.b16 %v4439
        %v4465 = vunpack.c.l.b16 %v4440
        %v4466 = vunpack.c.l.b16 %v4441
        %v4467 = vunpack.c.l.b16 %v4442
        %v4468 = vunpack.c.l.b16 %v4443
        %v4469 = vpack.c.b16 %v4461, %v4460
        %v4470 = vpack.c.b16 %v4463, %v4462
        %v4471 = vpack.c.b16 %v4465, %v4464
        %v4472 = vpack.c.b16 %v4467, %v4466
        %v4473 = vpack.c.b16 %v4468, %v4468
        %v4479 = vsel %vm3880, %v4433, 0
        %v4482 = vsel %vm3880, %v4434, 0
        %v4485 = vsel %vm3075, %v4473, 0
        %4487 = vmatprep.subr.bf16.mxu0 0
        %4488 = vmatpush1.bf16.msra.mxu0 %v4469
        %4489 = vmatprep.subr.bf16.mxu0 0
        %4490 = vmatpush1.bf16.msra.mxu0 %v4470
        %4491 = vmatprep.subr.bf16.mxu0 0
        %4492 = vmatpush1.bf16.msra.mxu0 %v4471
        %4493 = vmatprep.subr.bf16.mxu0 0
        %4494 = vmatpush1.bf16.msra.mxu0 %v4472
        %4495 = vmatprep.subr.bf16.mxu0 0
        %4496 = vmatpush1.bf16.msra.mxu0 %v4485
        %4497 = vmatprep.subr.bf16.mxu0 0
        %4498 = vmatpush1.bf16.msra.mxu0 0
        %4499 = vmatprep.subr.bf16.mxu0 0
        %4500 = vmatpush1.bf16.msra.mxu0 0
        %4501 = vmatprep.subr.bf16.mxu0 0
        %4502 = vmatpush1.bf16.msra.mxu0 0
        %4503 = vmatprep.subr.bf16.mxu0 0
        %4504 = vmatpush1.bf16.msra.mxu0 0
        %4505 = vmatprep.subr.bf16.mxu0 0
        %4506 = vmatpush1.bf16.msra.mxu0 0
        %4507 = vmatprep.subr.bf16.mxu0 0
        %4508 = vmatpush1.bf16.msra.mxu0 0
        %4509 = vmatprep.subr.bf16.mxu0 0
        %4510 = vmatpush1.bf16.msra.mxu0 0
        %4511 = vmatprep.subr.bf16.mxu0 0
        %4512 = vmatpush1.bf16.msra.mxu0 0
        %4513 = vmatprep.subr.bf16.mxu0 0
        %4514 = vmatpush1.bf16.msra.mxu0 0
        %4515 = vmatprep.subr.bf16.mxu0 0
        %4516 = vmatpush1.bf16.msra.mxu0 0
        %4517 = vmatprep.subr.bf16.mxu0 0
        %4518 = vmatpush1.bf16.msra.mxu0 0
        %4519 = vmatprep.mubr.bf16.mxu0 0
        %4520 = vmatmul.mubr.bf16.gmra.mrb[0].mxu0 %v4479
        %v4521 = vpop.f32.mrb[0].mxu0
        %v4522 = vadd.f32 %v4449, %v4521
        %v4523 = vpop.f32.mrb[0].mxu0
        %v4524 = vpop.f32.mrb[0].mxu0
        %v4525 = vadd.f32 %v4449, %v4524
        %v4526 = vpop.f32.mrb[0].mxu0
        %4527 = vmatprep.mubr.bf16.mxu0 0
        %4528 = vmatmul.mubr.bf16.gmra.mrb[0].mxu0 %v4482
        %v4529 = vpop.f32.mrb[0].mxu0
        %v4530 = vadd.f32 %v4449, %v4529
        %v4531 = vpop.f32.mrb[0].mxu0
        %v4532 = vpop.f32.mrb[0].mxu0
        %v4533 = vadd.f32 %v4449, %v4532
        %v4534 = vpop.f32.mrb[0].mxu0
        %4535 = vdwg.mxu0
        %v4536 = vmax.f32 %v4522, 0.0
        %v4537 = vmax.f32 %v4525, 0.0
        %v4538 = vmax.f32 %v4530, 0.0
        %v4539 = vmax.f32 %v4533, 0.0
        %v4540 = vrot.slane %v4536, 7
        %v4541 = vrot.slane %v4537, 7
        %v4542 = vrot.slane %v4538, 7
        %v4543 = vrot.slane %v4539, 7
        %v4544 = vsel %vm3616, %v4542, %v4543
        %v4545 = vsel %vm3616, %v4541, %v4542
        %v4546 = vsel %vm3616, %v4540, %v4541
        %v4547 = vsel %vm3616, %v4543, %v4540
        %v4548 = vsel %vm3392, 0.0, %v4547
        %v4549 = vsel %vm3393, 0.0, %v4546
        %v4550 = vsel %vm3394, 0.0, %v4545
        %v4551 = vsel %vm3395, 0.0, %v4544
        %v4552 = vrot.slane %v4536, 1
        %v4553 = vrot.slane %v4537, 1
        %v4554 = vrot.slane %v4538, 1
        %v4555 = vrot.slane %v4539, 1
        %v4556 = vsel %vm3629, %v4554, %v4555
        %v4557 = vsel %vm3629, %v4553, %v4554
        %v4558 = vsel %vm3629, %v4552, %v4553
        %v4559 = vsel %vm3629, %v4555, %v4552
        %v4560 = vsel %vm3608, 0.0, %v4558
        %v4561 = vsel %vm3609, 0.0, %v4557
        %v4562 = vsel %vm3610, 0.0, %v4556
        %v4563 = vsel %vm3611, 0.0, %v4559
        %4568 = vrot.lane.b32.xlu0 %v4536, 24
        %v4569 = vpop.permute.xlu0 %4568
        %4570 = vrot.lane.b32.xlu0 %v4537, 24
        %v4571 = vpop.permute.xlu0 %4570
        %4572 = vrot.lane.b32.xlu0 %v4538, 24
        %v4573 = vpop.permute.xlu0 %4572
        %4574 = vrot.lane.b32.xlu0 %v4539, 24
        %v4575 = vpop.permute.xlu0 %4574
        %4584 = vrot.lane.b32.xlu0 %v4560, 48
        %v4585 = vpop.permute.xlu0 %4584
        %4586 = vrot.lane.b32.xlu0 %v4561, 48
        %v4587 = vpop.permute.xlu0 %4586
        %4588 = vrot.lane.b32.xlu0 %v4562, 48
        %v4589 = vpop.permute.xlu0 %4588
        %4590 = vrot.lane.b32.xlu0 %v4563, 48
        %v4591 = vpop.permute.xlu0 %4590
        %v4596 = vsel %vm3825, %v4548, %v4569
        %v4597 = vsel %vm3825, %v4549, %v4571
        %v4598 = vsel %vm3825, %v4550, %v4573
        %v4599 = vsel %vm3825, %v4551, %v4575
        %v4600 = vsel %vm3830, %v4596, %v4585
        %v4601 = vsel %vm3830, %v4597, %v4587
        %v4602 = vsel %vm3830, %v4598, %v4589
        %v4603 = vsel %vm3830, %v4599, %v4591
        %v4604 = vpack.c.bf16 %v4601, %v4600
        %v4605 = vpack.c.bf16 %v4603, %v4602
        %v4606 = vld [vmem:[%s35] sm:$0xf]
        %v4607 = vld [vmem:[%s35 + $0x4] sm:$0xf]
        %v4608 = vld [vmem:[%s35 + $0x8] sm:$0xf]
        %v4609 = vld [vmem:[%s35 + $0xc] sm:$0xf]
        %v4610 = vld [vmem:[%s35 + $0x10] sm:$0xf]
        %v4611 = vld [vmem:[%s35 + $0x14] sm:$0xf]
        %v4612 = vld [vmem:[%s35 + $0x18] sm:$0xf]
        %v4613 = vld [vmem:[%s35 + $0x1c] sm:$0xf]
        %v4614 = vld [vmem:[%s35 + $0x20] sm:$0xf]
        %v4615 = vld [vmem:[%s37] sm:$0x1]
        %v4617 = vlaneseq
        %v4618 = vshrl.u32 %v4617, 7
        %v4619 = vsub.s32 0, %v4618
        %v4620 = vrot.slane %v4615, %v4619
        %v4631 = vunpack.c.l.b16 %v4606
        %v4632 = vunpack.c.l.b16 %v4607
        %v4633 = vunpack.c.l.b16 %v4608
        %v4634 = vunpack.c.l.b16 %v4609
        %v4635 = vunpack.c.l.b16 %v4610
        %v4636 = vunpack.c.l.b16 %v4611
        %v4637 = vunpack.c.l.b16 %v4612
        %v4638 = vunpack.c.l.b16 %v4613
        %v4639 = vunpack.c.l.b16 %v4614
        %v4640 = vpack.c.b16 %v4632, %v4631
        %v4641 = vpack.c.b16 %v4634, %v4633
        %v4642 = vpack.c.b16 %v4636, %v4635
        %v4643 = vpack.c.b16 %v4638, %v4637
        %v4644 = vpack.c.b16 %v4639, %v4639
        %v4650 = vsel %vm3880, %v4604, 0
        %v4653 = vsel %vm3880, %v4605, 0
        %v4656 = vsel %vm3075, %v4644, 0
        %4658 = vmatprep.subr.bf16.mxu0 0
        %4659 = vmatpush1.bf16.msra.mxu0 %v4640
        %4660 = vmatprep.subr.bf16.mxu0 0
        %4661 = vmatpush1.bf16.msra.mxu0 %v4641
        %4662 = vmatprep.subr.bf16.mxu0 0
        %4663 = vmatpush1.bf16.msra.mxu0 %v4642
        %4664 = vmatprep.subr.bf16.mxu0 0
        %4665 = vmatpush1.bf16.msra.mxu0 %v4643
        %4666 = vmatprep.subr.bf16.mxu0 0
        %4667 = vmatpush1.bf16.msra.mxu0 %v4656
        %4668 = vmatprep.subr.bf16.mxu0 0
        %4669 = vmatpush1.bf16.msra.mxu0 0
        %4670 = vmatprep.subr.bf16.mxu0 0
        %4671 = vmatpush1.bf16.msra.mxu0 0
        %4672 = vmatprep.subr.bf16.mxu0 0
        %4673 = vmatpush1.bf16.msra.mxu0 0
        %4674 = vmatprep.subr.bf16.mxu0 0
        %4675 = vmatpush1.bf16.msra.mxu0 0
        %4676 = vmatprep.subr.bf16.mxu0 0
        %4677 = vmatpush1.bf16.msra.mxu0 0
        %4678 = vmatprep.subr.bf16.mxu0 0
        %4679 = vmatpush1.bf16.msra.mxu0 0
        %4680 = vmatprep.subr.bf16.mxu0 0
        %4681 = vmatpush1.bf16.msra.mxu0 0
        %4682 = vmatprep.subr.bf16.mxu0 0
        %4683 = vmatpush1.bf16.msra.mxu0 0
        %4684 = vmatprep.subr.bf16.mxu0 0
        %4685 = vmatpush1.bf16.msra.mxu0 0
        %4686 = vmatprep.subr.bf16.mxu0 0
        %4687 = vmatpush1.bf16.msra.mxu0 0
        %4688 = vmatprep.subr.bf16.mxu0 0
        %4689 = vmatpush1.bf16.msra.mxu0 0
        %4690 = vmatprep.mubr.bf16.mxu0 0
        %4691 = vmatmul.mubr.bf16.gmra.mrb[0].mxu0 %v4650
        %v4692 = vpop.f32.mrb[0].mxu0
        %v4693 = vadd.f32 %v4620, %v4692
        %v4694 = vpop.f32.mrb[0].mxu0
        %v4695 = vpop.f32.mrb[0].mxu0
        %v4696 = vadd.f32 %v4620, %v4695
        %v4697 = vpop.f32.mrb[0].mxu0
        %4698 = vmatprep.mubr.bf16.mxu0 0
        %4699 = vmatmul.mubr.bf16.gmra.mrb[0].mxu0 %v4653
        %v4700 = vpop.f32.mrb[0].mxu0
        %v4701 = vadd.f32 %v4620, %v4700
        %v4702 = vpop.f32.mrb[0].mxu0
        %v4703 = vpop.f32.mrb[0].mxu0
        %v4704 = vadd.f32 %v4620, %v4703
        %v4705 = vpop.f32.mrb[0].mxu0
        %4706 = vdwg.mxu0
        %v4707 = vadd.f32 %v4693, %v4365
        %v4708 = vadd.f32 %v4696, %v4366
        %v4709 = vadd.f32 %v4701, %v4367
        %v4710 = vadd.f32 %v4704, %v4368
        %v4711 = vmax.f32 %v4707, 0.0
        %v4712 = vmax.f32 %v4708, 0.0
        %v4713 = vmax.f32 %v4709, 0.0
        %v4714 = vmax.f32 %v4710, 0.0
        %v4715 = vrot.slane %v4711, 7
        %v4716 = vrot.slane %v4712, 7
        %v4717 = vrot.slane %v4713, 7
        %v4718 = vrot.slane %v4714, 7
        %v4719 = vsel %vm3616, %v4717, %v4718
        %v4720 = vsel %vm3616, %v4716, %v4717
        %v4721 = vsel %vm3616, %v4715, %v4716
        %v4722 = vsel %vm3616, %v4718, %v4715
        %v4723 = vsel %vm3392, 0.0, %v4722
        %v4724 = vsel %vm3393, 0.0, %v4721
        %v4725 = vsel %vm3394, 0.0, %v4720
        %v4726 = vsel %vm3395, 0.0, %v4719
        %v4727 = vrot.slane %v4711, 1
        %v4728 = vrot.slane %v4712, 1
        %v4729 = vrot.slane %v4713, 1
        %v4730 = vrot.slane %v4714, 1
        %v4731 = vsel %vm3629, %v4729, %v4730
        %v4732 = vsel %vm3629, %v4728, %v4729
        %v4733 = vsel %vm3629, %v4727, %v4728
        %v4734 = vsel %vm3629, %v4730, %v4727
        %v4735 = vsel %vm3608, 0.0, %v4733
        %v4736 = vsel %vm3609, 0.0, %v4732
        %v4737 = vsel %vm3610, 0.0, %v4731
        %v4738 = vsel %vm3611, 0.0, %v4734
        %4743 = vrot.lane.b32.xlu0 %v4711, 24
        %v4744 = vpop.permute.xlu0 %4743
        %4745 = vrot.lane.b32.xlu0 %v4712, 24
        %v4746 = vpop.permute.xlu0 %4745
        %4747 = vrot.lane.b32.xlu0 %v4713, 24
        %v4748 = vpop.permute.xlu0 %4747
        %4749 = vrot.lane.b32.xlu0 %v4714, 24
        %v4750 = vpop.permute.xlu0 %4749
        %4759 = vrot.lane.b32.xlu0 %v4735, 48
        %v4760 = vpop.permute.xlu0 %4759
        %4761 = vrot.lane.b32.xlu0 %v4736, 48
        %v4762 = vpop.permute.xlu0 %4761
        %4763 = vrot.lane.b32.xlu0 %v4737, 48
        %v4764 = vpop.permute.xlu0 %4763
        %4765 = vrot.lane.b32.xlu0 %v4738, 48
        %v4766 = vpop.permute.xlu0 %4765
        %v4771 = vsel %vm3825, %v4723, %v4744
        %v4772 = vsel %vm3825, %v4724, %v4746
        %v4773 = vsel %vm3825, %v4725, %v4748
        %v4774 = vsel %vm3825, %v4726, %v4750
        %v4775 = vsel %vm3830, %v4771, %v4760
        %v4776 = vsel %vm3830, %v4772, %v4762
        %v4777 = vsel %vm3830, %v4773, %v4764
        %v4778 = vsel %vm3830, %v4774, %v4766
        %v4779 = vpack.c.bf16 %v4776, %v4775
        %v4780 = vpack.c.bf16 %v4778, %v4777
        %vm4781 = vcmask 261120
        %v4782 = vsel %vm4781, %v3544, 0
        %4784 = vmatprep.subr.bf16.mxu0 0
        %4785 = vmatpush1.bf16.msra.mxu0 %v4779
        %4786 = vmatprep.subr.bf16.mxu0 0
        %4787 = vmatpush1.bf16.msra.mxu0 %v4780
        %4788 = vmatprep.subr.bf16.mxu0 0
        %4789 = vmatpush1.bf16.msra.mxu0 0
        %4790 = vmatprep.subr.bf16.mxu0 0
        %4791 = vmatpush1.bf16.msra.mxu0 0
        %4792 = vmatprep.subr.bf16.mxu0 0
        %4793 = vmatpush1.bf16.msra.mxu0 0
        %4794 = vmatprep.subr.bf16.mxu0 0
        %4795 = vmatpush1.bf16.msra.mxu0 0
        %4796 = vmatprep.subr.bf16.mxu0 0
        %4797 = vmatpush1.bf16.msra.mxu0 0
        %4798 = vmatprep.subr.bf16.mxu0 0
        %4799 = vmatpush1.bf16.msra.mxu0 0
        %4800 = vmatprep.subr.bf16.mxu0 0
        %4801 = vmatpush1.bf16.msra.mxu0 0
        %4802 = vmatprep.subr.bf16.mxu0 0
        %4803 = vmatpush1.bf16.msra.mxu0 0
        %4804 = vmatprep.subr.bf16.mxu0 0
        %4805 = vmatpush1.bf16.msra.mxu0 0
        %4806 = vmatprep.subr.bf16.mxu0 0
        %4807 = vmatpush1.bf16.msra.mxu0 0
        %4808 = vmatprep.subr.bf16.mxu0 0
        %4809 = vmatpush1.bf16.msra.mxu0 0
        %4810 = vmatprep.subr.bf16.mxu0 0
        %4811 = vmatpush1.bf16.msra.mxu0 0
        %4812 = vmatprep.subr.bf16.mxu0 0
        %4813 = vmatpush1.bf16.msra.mxu0 0
        %4814 = vmatprep.subr.bf16.mxu0 0
        %4815 = vmatpush1.bf16.msra.mxu0 0
        %4816 = vmatprep.mubr.bf16.mxu0 0
        %4817 = vmatmul.mubr.bf16.gmra.mrb[0].mxu0 %v4782
        %v4818 = vpop.f32.mrb[0].mxu0
        %v4819 = vadd.f32 0.0, %v4818
        %v4820 = vpop.f32.mrb[0].mxu0
        %v4821 = vpop.f32.mrb[0].mxu0
        %v4822 = vadd.f32 0.0, %v4821
        %v4823 = vpop.f32.mrb[0].mxu0
        %4824 = vdwg.mxu0
        %v4825 = vpack.c.bf16 %v4822, %v4819
        %v4826 = vld [vmem:[%s39] sm:$0xf]
        %v4827 = vld [vmem:[%s39 + $0x4] sm:$0xf]
        %v4828 = vld [vmem:[%s39 + $0x8] sm:$0xf]
        %v4829 = vld [vmem:[%s39 + $0xc] sm:$0xf]
        %v4830 = vld [vmem:[%s39 + $0x10] sm:$0xf]
        %v4831 = vld [vmem:[%s39 + $0x14] sm:$0xf]
        %v4832 = vld [vmem:[%s39 + $0x18] sm:$0xf]
        %v4833 = vld [vmem:[%s39 + $0x1c] sm:$0xf]
        %v4834 = vld [vmem:[%s39 + $0x20] sm:$0xf]
        %v4835 = vld [vmem:[%s41] sm:$0x1]
        %v4837 = vlaneseq
        %v4838 = vshrl.u32 %v4837, 7
        %v4839 = vsub.s32 0, %v4838
        %v4840 = vrot.slane %v4835, %v4839
        %v4851 = vunpack.c.l.b16 %v4826
        %v4852 = vunpack.c.l.b16 %v4827
        %v4853 = vunpack.c.l.b16 %v4828
        %v4854 = vunpack.c.l.b16 %v4829
        %v4855 = vunpack.c.l.b16 %v4830
        %v4856 = vunpack.c.l.b16 %v4831
        %v4857 = vunpack.c.l.b16 %v4832
        %v4858 = vunpack.c.l.b16 %v4833
        %v4859 = vunpack.c.l.b16 %v4834
        %v4860 = vpack.c.b16 %v4852, %v4851
        %v4861 = vpack.c.b16 %v4854, %v4853
        %v4862 = vpack.c.b16 %v4856, %v4855
        %v4863 = vpack.c.b16 %v4858, %v4857
        %v4864 = vpack.c.b16 %v4859, %v4859
        %v4870 = vsel %vm3880, %v4825, 0
        %v4873 = vsel %vm3075, %v4864, 0
        %4875 = vmatprep.subr.bf16.mxu0 0
        %4876 = vmatpush1.bf16.msra.mxu0 %v4860
        %4877 = vmatprep.subr.bf16.mxu0 0
        %4878 = vmatpush1.bf16.msra.mxu0 %v4861
        %4879 = vmatprep.subr.bf16.mxu0 0
        %4880 = vmatpush1.bf16.msra.mxu0 %v4862
        %4881 = vmatprep.subr.bf16.mxu0 0
        %4882 = vmatpush1.bf16.msra.mxu0 %v4863
        %4883 = vmatprep.subr.bf16.mxu0 0
        %4884 = vmatpush1.bf16.msra.mxu0 %v4873
        %4885 = vmatprep.subr.bf16.mxu0 0
        %4886 = vmatpush1.bf16.msra.mxu0 0
        %4887 = vmatprep.subr.bf16.mxu0 0
        %4888 = vmatpush1.bf16.msra.mxu0 0
        %4889 = vmatprep.subr.bf16.mxu0 0
        %4890 = vmatpush1.bf16.msra.mxu0 0
        %4891 = vmatprep.subr.bf16.mxu0 0
        %4892 = vmatpush1.bf16.msra.mxu0 0
        %4893 = vmatprep.subr.bf16.mxu0 0
        %4894 = vmatpush1.bf16.msra.mxu0 0
        %4895 = vmatprep.subr.bf16.mxu0 0
        %4896 = vmatpush1.bf16.msra.mxu0 0
        %4897 = vmatprep.subr.bf16.mxu0 0
        %4898 = vmatpush1.bf16.msra.mxu0 0
        %4899 = vmatprep.subr.bf16.mxu0 0
        %4900 = vmatpush1.bf16.msra.mxu0 0
        %4901 = vmatprep.subr.bf16.mxu0 0
        %4902 = vmatpush1.bf16.msra.mxu0 0
        %4903 = vmatprep.subr.bf16.mxu0 0
        %4904 = vmatpush1.bf16.msra.mxu0 0
        %4905 = vmatprep.subr.bf16.mxu0 0
        %4906 = vmatpush1.bf16.msra.mxu0 0
        %4907 = vmatprep.mubr.bf16.mxu0 0
        %4908 = vmatmul.mubr.bf16.gmra.mrb[0].mxu0 %v4870
        %v4909 = vpop.f32.mrb[0].mxu0
        %v4910 = vadd.f32 %v4840, %v4909
        %v4911 = vpop.f32.mrb[0].mxu0
        %v4912 = vpop.f32.mrb[0].mxu0
        %v4913 = vadd.f32 %v4840, %v4912
        %v4914 = vpop.f32.mrb[0].mxu0
        %4915 = vdwg.mxu0
        %v4916 = vmax.f32 %v4910, 0.0
        %v4917 = vmax.f32 %v4913, 0.0
        %vm4918 = vcmp.eq.s32.totalorder %v3384, 15
        %vm4919 = vcmp.eq.s32.totalorder %v3385, 15
        %v4920 = vrot.slane %v4916, 7
        %v4921 = vrot.slane %v4917, 7
        %v4922 = vsel %vm3616, %v4920, %v4921
        %v4923 = vsel %vm3616, %v4921, %v4920
        %v4924 = vsel %vm3392, 0.0, %v4923
        %v4925 = vsel %vm3393, 0.0, %v4922
        %v4926 = vrot.slane %v4916, 1
        %v4927 = vrot.slane %v4917, 1
        %v4928 = vsel %vm3629, %v4926, %v4927
        %v4929 = vsel %vm3629, %v4927, %v4926
        %v4930 = vsel %vm4918, 0.0, %v4928
        %v4931 = vsel %vm4919, 0.0, %v4929
        %4934 = vrot.lane.b32.xlu0 %v4916, 32
        %v4935 = vpop.permute.xlu0 %4934
        %4936 = vrot.lane.b32.xlu0 %v4917, 32
        %v4937 = vpop.permute.xlu0 %4936
        %4942 = vrot.lane.b32.xlu0 %v4930, 64
        %v4943 = vpop.permute.xlu0 %4942
        %4944 = vrot.lane.b32.xlu0 %v4931, 64
        %v4945 = vpop.permute.xlu0 %4944
        %v4948 = vsel %vm4781, %v4924, %v4935
        %v4949 = vsel %vm4781, %v4925, %v4937
        %vm4950 = vcmask 523264
        %v4951 = vsel %vm4950, %v4948, %v4943
        %v4952 = vsel %vm4950, %v4949, %v4945
        %v4953 = vpack.c.bf16 %v4952, %v4951
        %v4954 = vld [vmem:[%s43] sm:$0xf]
        %v4955 = vld [vmem:[%s43 + $0x4] sm:$0xf]
        %v4956 = vld [vmem:[%s43 + $0x8] sm:$0xf]
        %v4957 = vld [vmem:[%s43 + $0xc] sm:$0xf]
        %v4958 = vld [vmem:[%s43 + $0x10] sm:$0xf]
        %v4959 = vld [vmem:[%s43 + $0x14] sm:$0xf]
        %v4960 = vld [vmem:[%s43 + $0x18] sm:$0xf]
        %v4961 = vld [vmem:[%s43 + $0x1c] sm:$0xf]
        %v4962 = vld [vmem:[%s43 + $0x20] sm:$0xf]
        %v4963 = vld [vmem:[%s43 + $0x24] sm:$0xf]
        %v4964 = vld [vmem:[%s43 + $0x28] sm:$0xf]
        %v4965 = vld [vmem:[%s43 + $0x2c] sm:$0xf]
        %v4966 = vld [vmem:[%s45] sm:$0x1]
        %v4968 = vlaneseq
        %v4969 = vshrl.u32 %v4968, 7
        %v4970 = vsub.s32 0, %v4969
        %v4971 = vrot.slane %v4966, %v4970
        %v4985 = vunpack.c.l.b16 %v4954
        %v4986 = vunpack.c.l.b16 %v4955
        %v4987 = vunpack.c.l.b16 %v4956
        %v4988 = vunpack.c.l.b16 %v4957
        %v4989 = vunpack.c.l.b16 %v4958
        %v4990 = vunpack.c.l.b16 %v4959
        %v4991 = vunpack.c.l.b16 %v4960
        %v4992 = vunpack.c.l.b16 %v4961
        %v4993 = vunpack.c.l.b16 %v4962
        %v4994 = vunpack.c.l.b16 %v4963
        %v4995 = vunpack.c.l.b16 %v4964
        %v4996 = vunpack.c.l.b16 %v4965
        %v4997 = vpack.c.b16 %v4986, %v4985
        %v4998 = vpack.c.b16 %v4988, %v4987
        %v4999 = vpack.c.b16 %v4990, %v4989
        %v5000 = vpack.c.b16 %v4992, %v4991
        %v5001 = vpack.c.b16 %v4994, %v4993
        %v5002 = vpack.c.b16 %v4996, %v4995
        %vm5009 = vcmask 785408
        %v5011 = vsel %vm5009, %v4953, 0
        %5013 = vmatprep.subr.bf16.mxu0 0
        %5014 = vmatpush1.bf16.msra.mxu0 %v4997
        %5015 = vmatprep.subr.bf16.mxu0 0
        %5016 = vmatpush1.bf16.msra.mxu0 %v4998
        %5017 = vmatprep.subr.bf16.mxu0 0
        %5018 = vmatpush1.bf16.msra.mxu0 %v4999
        %5019 = vmatprep.subr.bf16.mxu0 0
        %5020 = vmatpush1.bf16.msra.mxu0 %v5000
        %5021 = vmatprep.subr.bf16.mxu0 0
        %5022 = vmatpush1.bf16.msra.mxu0 %v5001
        %5023 = vmatprep.subr.bf16.mxu0 0
        %5024 = vmatpush1.bf16.msra.mxu0 %v5002
        %5025 = vmatprep.subr.bf16.mxu0 0
        %5026 = vmatpush1.bf16.msra.mxu0 0
        %5027 = vmatprep.subr.bf16.mxu0 0
        %5028 = vmatpush1.bf16.msra.mxu0 0
        %5029 = vmatprep.subr.bf16.mxu0 0
        %5030 = vmatpush1.bf16.msra.mxu0 0
        %5031 = vmatprep.subr.bf16.mxu0 0
        %5032 = vmatpush1.bf16.msra.mxu0 0
        %5033 = vmatprep.subr.bf16.mxu0 0
        %5034 = vmatpush1.bf16.msra.mxu0 0
        %5035 = vmatprep.subr.bf16.mxu0 0
        %5036 = vmatpush1.bf16.msra.mxu0 0
        %5037 = vmatprep.subr.bf16.mxu0 0
        %5038 = vmatpush1.bf16.msra.mxu0 0
        %5039 = vmatprep.subr.bf16.mxu0 0
        %5040 = vmatpush1.bf16.msra.mxu0 0
        %5041 = vmatprep.subr.bf16.mxu0 0
        %5042 = vmatpush1.bf16.msra.mxu0 0
        %5043 = vmatprep.subr.bf16.mxu0 0
        %5044 = vmatpush1.bf16.msra.mxu0 0
        %5045 = vmatprep.mubr.bf16.mxu0 0
        %5046 = vmatmul.mubr.bf16.gmra.mrb[0].mxu0 %v5011
        %v5047 = vpop.f32.mrb[0].mxu0
        %v5048 = vadd.f32 %v4971, %v5047
        %v5049 = vpop.f32.mrb[0].mxu0
        %v5050 = vpop.f32.mrb[0].mxu0
        %v5051 = vadd.f32 %v4971, %v5050
        %v5052 = vpop.f32.mrb[0].mxu0
        %5053 = vdwg.mxu0
        %v5054 = vpack.c.bf16 %v4712, %v4711
        %v5055 = vpack.c.bf16 %v4714, %v4713
        %5056 = vmatprep.subr.bf16.mxu0 0
        %5057 = vmatpush1.bf16.msra.mxu0 %v5054
        %5058 = vmatprep.subr.bf16.mxu0 0
        %5059 = vmatpush1.bf16.msra.mxu0 %v5055
        %5060 = vmatprep.subr.bf16.mxu0 0
        %5061 = vmatpush1.bf16.msra.mxu0 0
        %5062 = vmatprep.subr.bf16.mxu0 0
        %5063 = vmatpush1.bf16.msra.mxu0 0
        %5064 = vmatprep.subr.bf16.mxu0 0
        %5065 = vmatpush1.bf16.msra.mxu0 0
        %5066 = vmatprep.subr.bf16.mxu0 0
        %5067 = vmatpush1.bf16.msra.mxu0 0
        %5068 = vmatprep.subr.bf16.mxu0 0
        %5069 = vmatpush1.bf16.msra.mxu0 0
        %5070 = vmatprep.subr.bf16.mxu0 0
        %5071 = vmatpush1.bf16.msra.mxu0 0
        %5072 = vmatprep.subr.bf16.mxu0 0
        %5073 = vmatpush1.bf16.msra.mxu0 0
        %5074 = vmatprep.subr.bf16.mxu0 0
        %5075 = vmatpush1.bf16.msra.mxu0 0
        %5076 = vmatprep.subr.bf16.mxu0 0
        %5077 = vmatpush1.bf16.msra.mxu0 0
        %5078 = vmatprep.subr.bf16.mxu0 0
        %5079 = vmatpush1.bf16.msra.mxu0 0
        %5080 = vmatprep.subr.bf16.mxu0 0
        %5081 = vmatpush1.bf16.msra.mxu0 0
        %5082 = vmatprep.subr.bf16.mxu0 0
        %5083 = vmatpush1.bf16.msra.mxu0 0
        %5084 = vmatprep.subr.bf16.mxu0 0
        %5085 = vmatpush1.bf16.msra.mxu0 0
        %5086 = vmatprep.subr.bf16.mxu0 0
        %5087 = vmatpush1.bf16.msra.mxu0 0
        %5088 = vmatprep.mubr.bf16.mxu0 0
        %5089 = vmatmul.mubr.bf16.gmra.mrb[0].mxu0 %v4782
        %v5090 = vpop.f32.mrb[0].mxu0
        %v5091 = vadd.f32 0.0, %v5090
        %v5092 = vpop.f32.mrb[0].mxu0
        %v5093 = vpop.f32.mrb[0].mxu0
        %v5094 = vadd.f32 0.0, %v5093
        %v5095 = vpop.f32.mrb[0].mxu0
        %5096 = vdwg.mxu0
        %v5097 = vpack.c.bf16 %v5094, %v5091
        %v5098 = vld [vmem:[%s47] sm:$0xf]
        %v5099 = vld [vmem:[%s47 + $0x4] sm:$0xf]
        %v5100 = vld [vmem:[%s47 + $0x8] sm:$0xf]
        %v5101 = vld [vmem:[%s49] sm:$0x1]
        %v5103 = vlaneseq
        %v5104 = vshrl.u32 %v5103, 7
        %v5105 = vsub.s32 0, %v5104
        %v5106 = vrot.slane %v5101, %v5105
        %v5111 = vunpack.c.l.b16 %v5098
        %v5112 = vunpack.c.l.b16 %v5099
        %v5113 = vunpack.c.l.b16 %v5100
        %v5114 = vpack.c.b16 %v5112, %v5111
        %v5115 = vpack.c.b16 %v5113, %v5113
        %v5118 = vsel %vm3825, %v5097, 0
        %v5121 = vsel %vm3075, %v5115, 0
        %5123 = vmatprep.subr.bf16.mxu0 0
        %5124 = vmatpush1.bf16.msra.mxu0 %v5114
        %5125 = vmatprep.subr.bf16.mxu0 0
        %5126 = vmatpush1.bf16.msra.mxu0 %v5121
        %5127 = vmatprep.subr.bf16.mxu0 0
        %5128 = vmatpush1.bf16.msra.mxu0 0
        %5129 = vmatprep.subr.bf16.mxu0 0
        %5130 = vmatpush1.bf16.msra.mxu0 0
        %5131 = vmatprep.subr.bf16.mxu0 0
        %5132 = vmatpush1.bf16.msra.mxu0 0
        %5133 = vmatprep.subr.bf16.mxu0 0
        %5134 = vmatpush1.bf16.msra.mxu0 0
        %5135 = vmatprep.subr.bf16.mxu0 0
        %5136 = vmatpush1.bf16.msra.mxu0 0
        %5137 = vmatprep.subr.bf16.mxu0 0
        %5138 = vmatpush1.bf16.msra.mxu0 0
        %5139 = vmatprep.subr.bf16.mxu0 0
        %5140 = vmatpush1.bf16.msra.mxu0 0
        %5141 = vmatprep.subr.bf16.mxu0 0
        %5142 = vmatpush1.bf16.msra.mxu0 0
        %5143 = vmatprep.subr.bf16.mxu0 0
        %5144 = vmatpush1.bf16.msra.mxu0 0
        %5145 = vmatprep.subr.bf16.mxu0 0
        %5146 = vmatpush1.bf16.msra.mxu0 0
        %5147 = vmatprep.subr.bf16.mxu0 0
        %5148 = vmatpush1.bf16.msra.mxu0 0
        %5149 = vmatprep.subr.bf16.mxu0 0
        %5150 = vmatpush1.bf16.msra.mxu0 0
        %5151 = vmatprep.subr.bf16.mxu0 0
        %5152 = vmatpush1.bf16.msra.mxu0 0
        %5153 = vmatprep.subr.bf16.mxu0 0
        %5154 = vmatpush1.bf16.msra.mxu0 0
        %5155 = vmatprep.mubr.bf16.mxu0 0
        %5156 = vmatmul.mubr.bf16.gmra.mrb[0].mxu0 %v5118
        %v5157 = vpop.f32.mrb[0].mxu0
        %v5158 = vadd.f32 %v5106, %v5157
        %v5159 = vpop.f32.mrb[0].mxu0
        %v5160 = vpop.f32.mrb[0].mxu0
        %v5161 = vadd.f32 %v5106, %v5160
        %v5162 = vpop.f32.mrb[0].mxu0
        %5163 = vdwg.mxu0
        %v5164 = vadd.f32 %v5048, %v5158
        %v5165 = vadd.f32 %v5051, %v5161
        %v5166 = vmax.f32 %v5164, 0.0
        %v5167 = vmax.f32 %v5165, 0.0
        %v5168 = vrot.slane %v5166, 7
        %v5169 = vrot.slane %v5167, 7
        %v5170 = vsel %vm3616, %v5168, %v5169
        %v5171 = vsel %vm3616, %v5169, %v5168
        %v5172 = vsel %vm3392, 0.0, %v5171
        %v5173 = vsel %vm3393, 0.0, %v5170
        %v5174 = vrot.slane %v5166, 1
        %v5175 = vrot.slane %v5167, 1
        %v5176 = vsel %vm3629, %v5174, %v5175
        %v5177 = vsel %vm3629, %v5175, %v5174
        %v5178 = vsel %vm4918, 0.0, %v5176
        %v5179 = vsel %vm4919, 0.0, %v5177
        %5182 = vrot.lane.b32.xlu0 %v5166, 32
        %v5183 = vpop.permute.xlu0 %5182
        %5184 = vrot.lane.b32.xlu0 %v5167, 32
        %v5185 = vpop.permute.xlu0 %5184
        %5190 = vrot.lane.b32.xlu0 %v5178, 64
        %v5191 = vpop.permute.xlu0 %5190
        %5192 = vrot.lane.b32.xlu0 %v5179, 64
        %v5193 = vpop.permute.xlu0 %5192
        %v5196 = vsel %vm4781, %v5172, %v5183
        %v5197 = vsel %vm4781, %v5173, %v5185
        %v5198 = vsel %vm4950, %v5196, %v5191
        %v5199 = vsel %vm4950, %v5197, %v5193
        %v5200 = vpack.c.bf16 %v5199, %v5198
        %v5201 = vld [vmem:[%s51] sm:$0xf]
        %v5202 = vld [vmem:[%s51 + $0x4] sm:$0xf]
        %v5203 = vld [vmem:[%s51 + $0x8] sm:$0xf]
        %v5204 = vld [vmem:[%s51 + $0xc] sm:$0xf]
        %v5205 = vld [vmem:[%s51 + $0x10] sm:$0xf]
        %v5206 = vld [vmem:[%s51 + $0x14] sm:$0xf]
        %v5207 = vld [vmem:[%s51 + $0x18] sm:$0xf]
        %v5208 = vld [vmem:[%s51 + $0x1c] sm:$0xf]
        %v5209 = vld [vmem:[%s51 + $0x20] sm:$0xf]
        %v5210 = vld [vmem:[%s51 + $0x24] sm:$0xf]
        %v5211 = vld [vmem:[%s51 + $0x28] sm:$0xf]
        %v5212 = vld [vmem:[%s51 + $0x2c] sm:$0xf]
        %v5213 = vld [vmem:[%s53] sm:$0x1]
        %v5215 = vlaneseq
        %v5216 = vshrl.u32 %v5215, 7
        %v5217 = vsub.s32 0, %v5216
        %v5218 = vrot.slane %v5213, %v5217
        %v5232 = vunpack.c.l.b16 %v5201
        %v5233 = vunpack.c.l.b16 %v5202
        %v5234 = vunpack.c.l.b16 %v5203
        %v5235 = vunpack.c.l.b16 %v5204
        %v5236 = vunpack.c.l.b16 %v5205
        %v5237 = vunpack.c.l.b16 %v5206
        %v5238 = vunpack.c.l.b16 %v5207
        %v5239 = vunpack.c.l.b16 %v5208
        %v5240 = vunpack.c.l.b16 %v5209
        %v5241 = vunpack.c.l.b16 %v5210
        %v5242 = vunpack.c.l.b16 %v5211
        %v5243 = vunpack.c.l.b16 %v5212
        %v5244 = vpack.c.b16 %v5233, %v5232
        %v5245 = vpack.c.b16 %v5235, %v5234
        %v5246 = vpack.c.b16 %v5237, %v5236
        %v5247 = vpack.c.b16 %v5239, %v5238
        %v5248 = vpack.c.b16 %v5241, %v5240
        %v5249 = vpack.c.b16 %v5243, %v5242
        %v5257 = vsel %vm5009, %v5200, 0
        %5259 = vmatprep.subr.bf16.mxu0 0
        %5260 = vmatpush1.bf16.msra.mxu0 %v5244
        %5261 = vmatprep.subr.bf16.mxu0 0
        %5262 = vmatpush1.bf16.msra.mxu0 %v5245
        %5263 = vmatprep.subr.bf16.mxu0 0
        %5264 = vmatpush1.bf16.msra.mxu0 %v5246
        %5265 = vmatprep.subr.bf16.mxu0 0
        %5266 = vmatpush1.bf16.msra.mxu0 %v5247
        %5267 = vmatprep.subr.bf16.mxu0 0
        %5268 = vmatpush1.bf16.msra.mxu0 %v5248
        %5269 = vmatprep.subr.bf16.mxu0 0
        %5270 = vmatpush1.bf16.msra.mxu0 %v5249
        %5271 = vmatprep.subr.bf16.mxu0 0
        %5272 = vmatpush1.bf16.msra.mxu0 0
        %5273 = vmatprep.subr.bf16.mxu0 0
        %5274 = vmatpush1.bf16.msra.mxu0 0
        %5275 = vmatprep.subr.bf16.mxu0 0
        %5276 = vmatpush1.bf16.msra.mxu0 0
        %5277 = vmatprep.subr.bf16.mxu0 0
        %5278 = vmatpush1.bf16.msra.mxu0 0
        %5279 = vmatprep.subr.bf16.mxu0 0
        %5280 = vmatpush1.bf16.msra.mxu0 0
        %5281 = vmatprep.subr.bf16.mxu0 0
        %5282 = vmatpush1.bf16.msra.mxu0 0
        %5283 = vmatprep.subr.bf16.mxu0 0
        %5284 = vmatpush1.bf16.msra.mxu0 0
        %5285 = vmatprep.subr.bf16.mxu0 0
        %5286 = vmatpush1.bf16.msra.mxu0 0
        %5287 = vmatprep.subr.bf16.mxu0 0
        %5288 = vmatpush1.bf16.msra.mxu0 0
        %5289 = vmatprep.subr.bf16.mxu0 0
        %5290 = vmatpush1.bf16.msra.mxu0 0
        %5291 = vmatprep.mubr.bf16.mxu0 0
        %5292 = vmatmul.mubr.bf16.gmra.mrb[0].mxu0 %v5257
        %v5293 = vpop.f32.mrb[0].mxu0
        %v5294 = vadd.f32 %v5218, %v5293
        %v5295 = vpop.f32.mrb[0].mxu0
        %v5296 = vpop.f32.mrb[0].mxu0
        %v5297 = vadd.f32 %v5218, %v5296
        %v5298 = vpop.f32.mrb[0].mxu0
        %5299 = vdwg.mxu0
        %v5300 = vmax.f32 %v5294, 0.0
        %v5301 = vmax.f32 %v5297, 0.0
        %v5302 = vrot.slane %v5300, 7
        %v5303 = vrot.slane %v5301, 7
        %v5304 = vsel %vm3616, %v5302, %v5303
        %v5305 = vsel %vm3616, %v5303, %v5302
        %v5306 = vsel %vm3392, 0.0, %v5305
        %v5307 = vsel %vm3393, 0.0, %v5304
        %v5308 = vrot.slane %v5300, 1
        %v5309 = vrot.slane %v5301, 1
        %v5310 = vsel %vm3629, %v5308, %v5309
        %v5311 = vsel %vm3629, %v5309, %v5308
        %v5312 = vsel %vm4918, 0.0, %v5310
        %v5313 = vsel %vm4919, 0.0, %v5311
        %5316 = vrot.lane.b32.xlu0 %v5300, 32
        %v5317 = vpop.permute.xlu0 %5316
        %5318 = vrot.lane.b32.xlu0 %v5301, 32
        %v5319 = vpop.permute.xlu0 %5318
        %5324 = vrot.lane.b32.xlu0 %v5312, 64
        %v5325 = vpop.permute.xlu0 %5324
        %5326 = vrot.lane.b32.xlu0 %v5313, 64
        %v5327 = vpop.permute.xlu0 %5326
        %v5330 = vsel %vm4781, %v5306, %v5317
        %v5331 = vsel %vm4781, %v5307, %v5319
        %v5332 = vsel %vm4950, %v5330, %v5325
        %v5333 = vsel %vm4950, %v5331, %v5327
        %v5334 = vpack.c.bf16 %v5333, %v5332
        %v5335 = vld [vmem:[%s55] sm:$0xf]
        %v5336 = vld [vmem:[%s55 + $0x4] sm:$0xf]
        %v5337 = vld [vmem:[%s55 + $0x8] sm:$0xf]
        %v5338 = vld [vmem:[%s55 + $0xc] sm:$0xf]
        %v5339 = vld [vmem:[%s55 + $0x10] sm:$0xf]
        %v5340 = vld [vmem:[%s55 + $0x14] sm:$0xf]
        %v5341 = vld [vmem:[%s55 + $0x18] sm:$0xf]
        %v5342 = vld [vmem:[%s55 + $0x1c] sm:$0xf]
        %v5343 = vld [vmem:[%s55 + $0x20] sm:$0xf]
        %v5344 = vld [vmem:[%s55 + $0x24] sm:$0xf]
        %v5345 = vld [vmem:[%s55 + $0x28] sm:$0xf]
        %v5346 = vld [vmem:[%s55 + $0x2c] sm:$0xf]
        %v5347 = vld [vmem:[#allocation2] sm:$0x1]
        %v5349 = vlaneseq
        %v5350 = vshrl.u32 %v5349, 7
        %v5351 = vsub.s32 0, %v5350
        %v5352 = vrot.slane %v5347, %v5351
        %v5366 = vunpack.c.l.b16 %v5335
        %v5367 = vunpack.c.l.b16 %v5336
        %v5368 = vunpack.c.l.b16 %v5337
        %v5369 = vunpack.c.l.b16 %v5338
        %v5370 = vunpack.c.l.b16 %v5339
        %v5371 = vunpack.c.l.b16 %v5340
        %v5372 = vunpack.c.l.b16 %v5341
        %v5373 = vunpack.c.l.b16 %v5342
        %v5374 = vunpack.c.l.b16 %v5343
        %v5375 = vunpack.c.l.b16 %v5344
        %v5376 = vunpack.c.l.b16 %v5345
        %v5377 = vunpack.c.l.b16 %v5346
        %v5378 = vpack.c.b16 %v5367, %v5366
        %v5379 = vpack.c.b16 %v5369, %v5368
        %v5380 = vpack.c.b16 %v5371, %v5370
        %v5381 = vpack.c.b16 %v5373, %v5372
        %v5382 = vpack.c.b16 %v5375, %v5374
        %v5383 = vpack.c.b16 %v5377, %v5376
        %v5391 = vsel %vm5009, %v5334, 0
        %5393 = vmatprep.subr.bf16.mxu0 0
        %5394 = vmatpush1.bf16.msra.mxu0 %v5378
        %5395 = vmatprep.subr.bf16.mxu0 0
        %5396 = vmatpush1.bf16.msra.mxu0 %v5379
        %5397 = vmatprep.subr.bf16.mxu0 0
        %5398 = vmatpush1.bf16.msra.mxu0 %v5380
        %5399 = vmatprep.subr.bf16.mxu0 0
        %5400 = vmatpush1.bf16.msra.mxu0 %v5381
        %5401 = vmatprep.subr.bf16.mxu0 0
        %5402 = vmatpush1.bf16.msra.mxu0 %v5382
        %5403 = vmatprep.subr.bf16.mxu0 0
        %5404 = vmatpush1.bf16.msra.mxu0 %v5383
        %5405 = vmatprep.subr.bf16.mxu0 0
        %5406 = vmatpush1.bf16.msra.mxu0 0
        %5407 = vmatprep.subr.bf16.mxu0 0
        %5408 = vmatpush1.bf16.msra.mxu0 0
        %5409 = vmatprep.subr.bf16.mxu0 0
        %5410 = vmatpush1.bf16.msra.mxu0 0
        %5411 = vmatprep.subr.bf16.mxu0 0
        %5412 = vmatpush1.bf16.msra.mxu0 0
        %5413 = vmatprep.subr.bf16.mxu0 0
        %5414 = vmatpush1.bf16.msra.mxu0 0
        %5415 = vmatprep.subr.bf16.mxu0 0
        %5416 = vmatpush1.bf16.msra.mxu0 0
        %5417 = vmatprep.subr.bf16.mxu0 0
        %5418 = vmatpush1.bf16.msra.mxu0 0
        %5419 = vmatprep.subr.bf16.mxu0 0
        %5420 = vmatpush1.bf16.msra.mxu0 0
        %5421 = vmatprep.subr.bf16.mxu0 0
        %5422 = vmatpush1.bf16.msra.mxu0 0
        %5423 = vmatprep.subr.bf16.mxu0 0
        %5424 = vmatpush1.bf16.msra.mxu0 0
        %5425 = vmatprep.mubr.bf16.mxu0 0
        %5426 = vmatmul.mubr.bf16.gmra.mrb[0].mxu0 %v5391
        %v5427 = vpop.f32.mrb[0].mxu0
        %v5428 = vadd.f32 %v5352, %v5427
        %v5429 = vpop.f32.mrb[0].mxu0
        %v5430 = vpop.f32.mrb[0].mxu0
        %v5431 = vadd.f32 %v5352, %v5430
        %v5432 = vpop.f32.mrb[0].mxu0
        %5433 = vdwg.mxu0
        %v5434 = vadd.f32 %v5428, %v5166
        %v5435 = vadd.f32 %v5431, %v5167
        %v5436 = vmax.f32 %v5434, 0.0
        %v5437 = vmax.f32 %v5435, 0.0
        %v5438 = vrot.slane %v5436, 7
        %v5439 = vrot.slane %v5437, 7
        %v5440 = vsel %vm3616, %v5438, %v5439
        %v5441 = vsel %vm3616, %v5439, %v5438
        %v5442 = vsel %vm3392, 0.0, %v5441
        %v5443 = vsel %vm3393, 0.0, %v5440
        %v5444 = vrot.slane %v5436, 1
        %v5445 = vrot.slane %v5437, 1
        %v5446 = vsel %vm3629, %v5444, %v5445
        %v5447 = vsel %vm3629, %v5445, %v5444
        %v5448 = vsel %vm4918, 0.0, %v5446
        %v5449 = vsel %vm4919, 0.0, %v5447
        %5452 = vrot.lane.b32.xlu0 %v5436, 32
        %v5453 = vpop.permute.xlu0 %5452
        %5454 = vrot.lane.b32.xlu0 %v5437, 32
        %v5455 = vpop.permute.xlu0 %5454
        %5460 = vrot.lane.b32.xlu0 %v5448, 64
        %v5461 = vpop.permute.xlu0 %5460
        %5462 = vrot.lane.b32.xlu0 %v5449, 64
        %v5463 = vpop.permute.xlu0 %5462
        %v5466 = vsel %vm4781, %v5442, %v5453
        %v5467 = vsel %vm4781, %v5443, %v5455
        %v5468 = vsel %vm4950, %v5466, %v5461
        %v5469 = vsel %vm4950, %v5467, %v5463
        %v5470 = vpack.c.bf16 %v5469, %v5468
        %v5471 = vld [vmem:[%s59] sm:$0xf]
        %v5472 = vld [vmem:[%s59 + $0x4] sm:$0xf]
        %v5473 = vld [vmem:[%s59 + $0x8] sm:$0xf]
        %v5474 = vld [vmem:[%s59 + $0xc] sm:$0xf]
        %v5475 = vld [vmem:[%s59 + $0x10] sm:$0xf]
        %v5476 = vld [vmem:[%s59 + $0x14] sm:$0xf]
        %v5477 = vld [vmem:[%s59 + $0x18] sm:$0xf]
        %v5478 = vld [vmem:[%s59 + $0x1c] sm:$0xf]
        %v5479 = vld [vmem:[%s59 + $0x20] sm:$0xf]
        %v5480 = vld [vmem:[%s59 + $0x24] sm:$0xf]
        %v5481 = vld [vmem:[%s59 + $0x28] sm:$0xf]
        %v5482 = vld [vmem:[%s59 + $0x2c] sm:$0xf]
        %v5483 = vld [vmem:[#allocation5] sm:$0x1]
        %v5485 = vlaneseq
        %v5486 = vshrl.u32 %v5485, 7
        %v5487 = vsub.s32 0, %v5486
        %v5488 = vrot.slane %v5483, %v5487
        %v5502 = vunpack.c.l.b16 %v5471
        %v5503 = vunpack.c.l.b16 %v5472
        %v5504 = vunpack.c.l.b16 %v5473
        %v5505 = vunpack.c.l.b16 %v5474
        %v5506 = vunpack.c.l.b16 %v5475
        %v5507 = vunpack.c.l.b16 %v5476
        %v5508 = vunpack.c.l.b16 %v5477
        %v5509 = vunpack.c.l.b16 %v5478
        %v5510 = vunpack.c.l.b16 %v5479
        %v5511 = vunpack.c.l.b16 %v5480
        %v5512 = vunpack.c.l.b16 %v5481
        %v5513 = vunpack.c.l.b16 %v5482
        %v5514 = vpack.c.b16 %v5503, %v5502
        %v5515 = vpack.c.b16 %v5505, %v5504
        %v5516 = vpack.c.b16 %v5507, %v5506
        %v5517 = vpack.c.b16 %v5509, %v5508
        %v5518 = vpack.c.b16 %v5511, %v5510
        %v5519 = vpack.c.b16 %v5513, %v5512
        %v5527 = vsel %vm5009, %v5470, 0
        %5529 = vmatprep.subr.bf16.mxu0 0
        %5530 = vmatpush1.bf16.msra.mxu0 %v5514
        %5531 = vmatprep.subr.bf16.mxu0 0
        %5532 = vmatpush1.bf16.msra.mxu0 %v5515
        %5533 = vmatprep.subr.bf16.mxu0 0
        %5534 = vmatpush1.bf16.msra.mxu0 %v5516
        %5535 = vmatprep.subr.bf16.mxu0 0
        %5536 = vmatpush1.bf16.msra.mxu0 %v5517
        %5537 = vmatprep.subr.bf16.mxu0 0
        %5538 = vmatpush1.bf16.msra.mxu0 %v5518
        %5539 = vmatprep.subr.bf16.mxu0 0
        %5540 = vmatpush1.bf16.msra.mxu0 %v5519
        %5541 = vmatprep.subr.bf16.mxu0 0
        %5542 = vmatpush1.bf16.msra.mxu0 0
        %5543 = vmatprep.subr.bf16.mxu0 0
        %5544 = vmatpush1.bf16.msra.mxu0 0
        %5545 = vmatprep.subr.bf16.mxu0 0
        %5546 = vmatpush1.bf16.msra.mxu0 0
        %5547 = vmatprep.subr.bf16.mxu0 0
        %5548 = vmatpush1.bf16.msra.mxu0 0
        %5549 = vmatprep.subr.bf16.mxu0 0
        %5550 = vmatpush1.bf16.msra.mxu0 0
        %5551 = vmatprep.subr.bf16.mxu0 0
        %5552 = vmatpush1.bf16.msra.mxu0 0
        %5553 = vmatprep.subr.bf16.mxu0 0
        %5554 = vmatpush1.bf16.msra.mxu0 0
        %5555 = vmatprep.subr.bf16.mxu0 0
        %5556 = vmatpush1.bf16.msra.mxu0 0
        %5557 = vmatprep.subr.bf16.mxu0 0
        %5558 = vmatpush1.bf16.msra.mxu0 0
        %5559 = vmatprep.subr.bf16.mxu0 0
        %5560 = vmatpush1.bf16.msra.mxu0 0
        %5561 = vmatprep.mubr.bf16.mxu0 0
        %5562 = vmatmul.mubr.bf16.gmra.mrb[0].mxu0 %v5527
        %v5563 = vpop.f32.mrb[0].mxu0
        %v5564 = vadd.f32 %v5488, %v5563
        %v5565 = vpop.f32.mrb[0].mxu0
        %v5566 = vpop.f32.mrb[0].mxu0
        %v5567 = vadd.f32 %v5488, %v5566
        %v5568 = vpop.f32.mrb[0].mxu0
        %5569 = vdwg.mxu0
        %v5570 = vmax.f32 %v5564, 0.0
        %v5571 = vmax.f32 %v5567, 0.0
        %v5572 = vrot.slane %v5570, 7
        %v5573 = vrot.slane %v5571, 7
        %v5574 = vsel %vm3616, %v5572, %v5573
        %v5575 = vsel %vm3616, %v5573, %v5572
        %v5576 = vsel %vm3392, 0.0, %v5575
        %v5577 = vsel %vm3393, 0.0, %v5574
        %v5578 = vrot.slane %v5570, 1
        %v5579 = vrot.slane %v5571, 1
        %v5580 = vsel %vm3629, %v5578, %v5579
        %v5581 = vsel %vm3629, %v5579, %v5578
        %v5582 = vsel %vm4918, 0.0, %v5580
        %v5583 = vsel %vm4919, 0.0, %v5581
        %5586 = vrot.lane.b32.xlu0 %v5570, 32
        %v5587 = vpop.permute.xlu0 %5586
        %5588 = vrot.lane.b32.xlu0 %v5571, 32
        %v5589 = vpop.permute.xlu0 %5588
        %5594 = vrot.lane.b32.xlu0 %v5582, 64
        %v5595 = vpop.permute.xlu0 %5594
        %5596 = vrot.lane.b32.xlu0 %v5583, 64
        %v5597 = vpop.permute.xlu0 %5596
        %v5600 = vsel %vm4781, %v5576, %v5587
        %v5601 = vsel %vm4781, %v5577, %v5589
        %v5602 = vsel %vm4950, %v5600, %v5595
        %v5603 = vsel %vm4950, %v5601, %v5597
        %v5604 = vpack.c.bf16 %v5603, %v5602
        %v5605 = vld [vmem:[%s63] sm:$0xf]
        %v5606 = vld [vmem:[%s63 + $0x4] sm:$0xf]
        %v5607 = vld [vmem:[%s63 + $0x8] sm:$0xf]
        %v5608 = vld [vmem:[%s63 + $0xc] sm:$0xf]
        %v5609 = vld [vmem:[%s63 + $0x10] sm:$0xf]
        %v5610 = vld [vmem:[%s63 + $0x14] sm:$0xf]
        %v5611 = vld [vmem:[%s63 + $0x18] sm:$0xf]
        %v5612 = vld [vmem:[%s63 + $0x1c] sm:$0xf]
        %v5613 = vld [vmem:[%s63 + $0x20] sm:$0xf]
        %v5614 = vld [vmem:[%s63 + $0x24] sm:$0xf]
        %v5615 = vld [vmem:[%s63 + $0x28] sm:$0xf]
        %v5616 = vld [vmem:[%s63 + $0x2c] sm:$0xf]
        %v5617 = vld [vmem:[#allocation7] sm:$0x1]
        %v5619 = vlaneseq
        %v5620 = vshrl.u32 %v5619, 7
        %v5621 = vsub.s32 0, %v5620
        %v5622 = vrot.slane %v5617, %v5621
        %v5636 = vunpack.c.l.b16 %v5605
        %v5637 = vunpack.c.l.b16 %v5606
        %v5638 = vunpack.c.l.b16 %v5607
        %v5639 = vunpack.c.l.b16 %v5608
        %v5640 = vunpack.c.l.b16 %v5609
        %v5641 = vunpack.c.l.b16 %v5610
        %v5642 = vunpack.c.l.b16 %v5611
        %v5643 = vunpack.c.l.b16 %v5612
        %v5644 = vunpack.c.l.b16 %v5613
        %v5645 = vunpack.c.l.b16 %v5614
        %v5646 = vunpack.c.l.b16 %v5615
        %v5647 = vunpack.c.l.b16 %v5616
        %v5648 = vpack.c.b16 %v5637, %v5636
        %v5649 = vpack.c.b16 %v5639, %v5638
        %v5650 = vpack.c.b16 %v5641, %v5640
        %v5651 = vpack.c.b16 %v5643, %v5642
        %v5652 = vpack.c.b16 %v5645, %v5644
        %v5653 = vpack.c.b16 %v5647, %v5646
        %v5661 = vsel %vm5009, %v5604, 0
        %5663 = vmatprep.subr.bf16.mxu0 0
        %5664 = vmatpush1.bf16.msra.mxu0 %v5648
        %5665 = vmatprep.subr.bf16.mxu0 0
        %5666 = vmatpush1.bf16.msra.mxu0 %v5649
        %5667 = vmatprep.subr.bf16.mxu0 0
        %5668 = vmatpush1.bf16.msra.mxu0 %v5650
        %5669 = vmatprep.subr.bf16.mxu0 0
        %5670 = vmatpush1.bf16.msra.mxu0 %v5651
        %5671 = vmatprep.subr.bf16.mxu0 0
        %5672 = vmatpush1.bf16.msra.mxu0 %v5652
        %5673 = vmatprep.subr.bf16.mxu0 0
        %5674 = vmatpush1.bf16.msra.mxu0 %v5653
        %5675 = vmatprep.subr.bf16.mxu0 0
        %5676 = vmatpush1.bf16.msra.mxu0 0
        %5677 = vmatprep.subr.bf16.mxu0 0
        %5678 = vmatpush1.bf16.msra.mxu0 0
        %5679 = vmatprep.subr.bf16.mxu0 0
        %5680 = vmatpush1.bf16.msra.mxu0 0
        %5681 = vmatprep.subr.bf16.mxu0 0
        %5682 = vmatpush1.bf16.msra.mxu0 0
        %5683 = vmatprep.subr.bf16.mxu0 0
        %5684 = vmatpush1.bf16.msra.mxu0 0
        %5685 = vmatprep.subr.bf16.mxu0 0
        %5686 = vmatpush1.bf16.msra.mxu0 0
        %5687 = vmatprep.subr.bf16.mxu0 0
        %5688 = vmatpush1.bf16.msra.mxu0 0
        %5689 = vmatprep.subr.bf16.mxu0 0
        %5690 = vmatpush1.bf16.msra.mxu0 0
        %5691 = vmatprep.subr.bf16.mxu0 0
        %5692 = vmatpush1.bf16.msra.mxu0 0
        %5693 = vmatprep.subr.bf16.mxu0 0
        %5694 = vmatpush1.bf16.msra.mxu0 0
        %5695 = vmatprep.mubr.bf16.mxu0 0
        %5696 = vmatmul.mubr.bf16.gmra.mrb[0].mxu0 %v5661
        %v5697 = vpop.f32.mrb[0].mxu0
        %v5698 = vadd.f32 %v5622, %v5697
        %v5699 = vpop.f32.mrb[0].mxu0
        %v5700 = vpop.f32.mrb[0].mxu0
        %v5701 = vadd.f32 %v5622, %v5700
        %v5702 = vpop.f32.mrb[0].mxu0
        %5703 = vdwg.mxu0
        %v5704 = vadd.f32 %v5698, %v5436
        %v5705 = vadd.f32 %v5701, %v5437
        %v5706 = vmax.f32 %v5704, 0.0
        %v5707 = vmax.f32 %v5705, 0.0
        %v5708 = vrot.slane %v5706, 7
        %v5709 = vrot.slane %v5707, 7
        %v5710 = vsel %vm3616, %v5708, %v5709
        %v5711 = vsel %vm3616, %v5709, %v5708
        %v5712 = vsel %vm3392, 0.0, %v5711
        %v5713 = vsel %vm3393, 0.0, %v5710
        %v5714 = vrot.slane %v5706, 1
        %v5715 = vrot.slane %v5707, 1
        %v5716 = vsel %vm3629, %v5714, %v5715
        %v5717 = vsel %vm3629, %v5715, %v5714
        %v5718 = vsel %vm4918, 0.0, %v5716
        %v5719 = vsel %vm4919, 0.0, %v5717
        %5722 = vrot.lane.b32.xlu0 %v5706, 32
        %v5723 = vpop.permute.xlu0 %5722
        %5724 = vrot.lane.b32.xlu0 %v5707, 32
        %v5725 = vpop.permute.xlu0 %5724
        %5730 = vrot.lane.b32.xlu0 %v5718, 64
        %v5731 = vpop.permute.xlu0 %5730
        %5732 = vrot.lane.b32.xlu0 %v5719, 64
        %v5733 = vpop.permute.xlu0 %5732
        %v5736 = vsel %vm4781, %v5712, %v5723
        %v5737 = vsel %vm4781, %v5713, %v5725
        %v5738 = vsel %vm4950, %v5736, %v5731
        %v5739 = vsel %vm4950, %v5737, %v5733
        %v5740 = vpack.c.bf16 %v5739, %v5738
        %v5741 = vpack.c.bf16 %v3540, %v3540
        %vm5742 = vcmask 130048
        %v5744 = vsel %vm5742, %v5741, 0
        %5746 = vmatprep.subr.bf16.mxu0 0
        %5747 = vmatpush1.bf16.msra.mxu0 %v5740
        %5748 = vmatprep.subr.bf16.mxu0 0
        %5749 = vmatpush1.bf16.msra.mxu0 0
        %5750 = vmatprep.subr.bf16.mxu0 0
        %5751 = vmatpush1.bf16.msra.mxu0 0
        %5752 = vmatprep.subr.bf16.mxu0 0
        %5753 = vmatpush1.bf16.msra.mxu0 0
        %5754 = vmatprep.subr.bf16.mxu0 0
        %5755 = vmatpush1.bf16.msra.mxu0 0
        %5756 = vmatprep.subr.bf16.mxu0 0
        %5757 = vmatpush1.bf16.msra.mxu0 0
        %5758 = vmatprep.subr.bf16.mxu0 0
        %5759 = vmatpush1.bf16.msra.mxu0 0
        %5760 = vmatprep.subr.bf16.mxu0 0
        %5761 = vmatpush1.bf16.msra.mxu0 0
        %5762 = vmatprep.subr.bf16.mxu0 0
        %5763 = vmatpush1.bf16.msra.mxu0 0
        %5764 = vmatprep.subr.bf16.mxu0 0
        %5765 = vmatpush1.bf16.msra.mxu0 0
        %5766 = vmatprep.subr.bf16.mxu0 0
        %5767 = vmatpush1.bf16.msra.mxu0 0
        %5768 = vmatprep.subr.bf16.mxu0 0
        %5769 = vmatpush1.bf16.msra.mxu0 0
        %5770 = vmatprep.subr.bf16.mxu0 0
        %5771 = vmatpush1.bf16.msra.mxu0 0
        %5772 = vmatprep.subr.bf16.mxu0 0
        %5773 = vmatpush1.bf16.msra.mxu0 0
        %5774 = vmatprep.subr.bf16.mxu0 0
        %5775 = vmatpush1.bf16.msra.mxu0 0
        %5776 = vmatprep.subr.bf16.mxu0 0
        %5777 = vmatpush1.bf16.msra.mxu0 0
        %5778 = vmatprep.mubr.bf16.mxu0 0
        %5779 = vmatmul.mubr.bf16.gmra.mrb[0].mxu0 %v5744
        %v5780 = vpop.f32.mrb[0].mxu0
        %v5781 = vadd.f32 0.0, %v5780
        %v5782 = vpop.f32.mrb[0].mxu0
        %v5783 = vpop.f32.mrb[0].mxu0
        %v5784 = vpop.f32.mrb[0].mxu0
        %5785 = vdwg.mxu0
        %v5786 = vpack.c.bf16 %v5781, %v5781
        %v5787 = vld [vmem:[%s67] sm:$0xf]
        %v5788 = vld [vmem:[%s67 + $0x4] sm:$0xf]
        %v5789 = vld [vmem:[%s67 + $0x8] sm:$0xf]
        %v5790 = vld [vmem:[%s67 + $0xc] sm:$0xf]
        %v5791 = vld [vmem:[%s67 + $0x10] sm:$0xf]
        %v5792 = vld [vmem:[%s67 + $0x14] sm:$0xf]
        %v5793 = vld [vmem:[%s67 + $0x18] sm:$0xf]
        %v5794 = vld [vmem:[%s67 + $0x1c] sm:$0xf]
        %v5795 = vld [vmem:[%s67 + $0x20] sm:$0xf]
        %v5796 = vld [vmem:[%s67 + $0x24] sm:$0xf]
        %v5797 = vld [vmem:[%s67 + $0x28] sm:$0xf]
        %v5798 = vld [vmem:[%s67 + $0x2c] sm:$0xf]
        %v5799 = vld [vmem:[#allocation8] sm:$0x1]
        %v5801 = vlaneseq
        %v5802 = vshrl.u32 %v5801, 7
        %v5803 = vsub.s32 0, %v5802
        %v5804 = vrot.slane %v5799, %v5803
        %v5818 = vunpack.c.l.b16 %v5787
        %v5819 = vunpack.c.l.b16 %v5788
        %v5820 = vunpack.c.l.b16 %v5789
        %v5821 = vunpack.c.l.b16 %v5790
        %v5822 = vunpack.c.l.b16 %v5791
        %v5823 = vunpack.c.l.b16 %v5792
        %v5824 = vunpack.c.l.b16 %v5793
        %v5825 = vunpack.c.l.b16 %v5794
        %v5826 = vunpack.c.l.b16 %v5795
        %v5827 = vunpack.c.l.b16 %v5796
        %v5828 = vunpack.c.l.b16 %v5797
        %v5829 = vunpack.c.l.b16 %v5798
        %v5830 = vpack.c.b16 %v5819, %v5818
        %v5831 = vpack.c.b16 %v5821, %v5820
        %v5832 = vpack.c.b16 %v5823, %v5822
        %v5833 = vpack.c.b16 %v5825, %v5824
        %v5834 = vpack.c.b16 %v5827, %v5826
        %v5835 = vpack.c.b16 %v5829, %v5828
        %v5843 = vsel %vm5009, %v5786, 0
        %5845 = vmatprep.subr.bf16.mxu0 0
        %5846 = vmatpush1.bf16.msra.mxu0 %v5830
        %5847 = vmatprep.subr.bf16.mxu0 0
        %5848 = vmatpush1.bf16.msra.mxu0 %v5831
        %5849 = vmatprep.subr.bf16.mxu0 0
        %5850 = vmatpush1.bf16.msra.mxu0 %v5832
        %5851 = vmatprep.subr.bf16.mxu0 0
        %5852 = vmatpush1.bf16.msra.mxu0 %v5833
        %5853 = vmatprep.subr.bf16.mxu0 0
        %5854 = vmatpush1.bf16.msra.mxu0 %v5834
        %5855 = vmatprep.subr.bf16.mxu0 0
        %5856 = vmatpush1.bf16.msra.mxu0 %v5835
        %5857 = vmatprep.subr.bf16.mxu0 0
        %5858 = vmatpush1.bf16.msra.mxu0 0
        %5859 = vmatprep.subr.bf16.mxu0 0
        %5860 = vmatpush1.bf16.msra.mxu0 0
        %5861 = vmatprep.subr.bf16.mxu0 0
        %5862 = vmatpush1.bf16.msra.mxu0 0
        %5863 = vmatprep.subr.bf16.mxu0 0
        %5864 = vmatpush1.bf16.msra.mxu0 0
        %5865 = vmatprep.subr.bf16.mxu0 0
        %5866 = vmatpush1.bf16.msra.mxu0 0
        %5867 = vmatprep.subr.bf16.mxu0 0
        %5868 = vmatpush1.bf16.msra.mxu0 0
        %5869 = vmatprep.subr.bf16.mxu0 0
        %5870 = vmatpush1.bf16.msra.mxu0 0
        %5871 = vmatprep.subr.bf16.mxu0 0
        %5872 = vmatpush1.bf16.msra.mxu0 0
        %5873 = vmatprep.subr.bf16.mxu0 0
        %5874 = vmatpush1.bf16.msra.mxu0 0
        %5875 = vmatprep.subr.bf16.mxu0 0
        %5876 = vmatpush1.bf16.msra.mxu0 0
        %5877 = vmatprep.mubr.bf16.mxu0 0
        %5878 = vmatmul.mubr.bf16.gmra.mrb[0].mxu0 %v5843
        %v5879 = vpop.f32.mrb[0].mxu0
        %v5880 = vadd.f32 %v5804, %v5879
        %v5881 = vpop.f32.mrb[0].mxu0
        %v5882 = vpop.f32.mrb[0].mxu0
        %v5883 = vpop.f32.mrb[0].mxu0
        %5884 = vdwg.mxu0
        %v5885 = vmax.f32 %v5880, 0.0
        %vm5886 = vcmp.eq.s32.totalorder %v3384, 7
        %v5887 = vrot.slane %v5885, 7
        %v5888 = vsel %vm3392, 0.0, %v5887
        %v5889 = vrot.slane %v5885, 1
        %v5890 = vsel %vm5886, 0.0, %v5889
        %5892 = vrot.lane.b32.xlu0 %v5885, 48
        %v5893 = vpop.permute.xlu0 %5892
        %5896 = vrot.lane.b32.xlu0 %v5890, 96
        %v5897 = vpop.permute.xlu0 %5896
        %v5899 = vsel %vm3830, %v5888, %v5893
        %v5900 = vsel %vm5009, %v5899, %v5897
        %v5901 = vpack.c.bf16 %v5900, %v5900
        %v5902 = vpack.c.bf16 %v5897, %v5897
        %v5903 = vld [vmem:[%s71] sm:$0xf]
        %v5904 = vld [vmem:[%s71 + $0x4] sm:$0xf]
        %v5905 = vld [vmem:[%s71 + $0x8] sm:$0xf]
        %v5906 = vld [vmem:[%s71 + $0xc] sm:$0xf]
        %v5907 = vld [vmem:[%s71 + $0x10] sm:$0xf]
        %v5908 = vld [vmem:[%s71 + $0x14] sm:$0xf]
        %v5909 = vld [vmem:[%s71 + $0x18] sm:$0xf]
        %v5910 = vld [vmem:[%s71 + $0x1c] sm:$0xf]
        %v5911 = vld [vmem:[%s71 + $0x20] sm:$0xf]
        %v5912 = vld [vmem:[%s71 + $0x24] sm:$0xf]
        %v5913 = vld [vmem:[%s71 + $0x28] sm:$0xf]
        %v5914 = vld [vmem:[%s71 + $0x2c] sm:$0xf]
        %v5915 = vld [vmem:[%s71 + $0x30] sm:$0xf]
        %v5916 = vld [vmem:[%s71 + $0x34] sm:$0xf]
        %v5917 = vld [vmem:[%s71 + $0x38] sm:$0xf]
        %v5918 = vld [vmem:[%s71 + $0x3c] sm:$0xf]
        %v5919 = vld [vmem:[%s71 + $0x40] sm:$0xf]
        %v5920 = vld [vmem:[%s71 + $0x44] sm:$0xf]
        %v5921 = vld [vmem:[#allocation10] sm:$0x1]
        %v5923 = vlaneseq
        %v5924 = vshrl.u32 %v5923, 7
        %v5925 = vsub.s32 0, %v5924
        %v5926 = vrot.slane %v5921, %v5925
        %v5946 = vunpack.c.l.b16 %v5903
        %v5947 = vunpack.c.l.b16 %v5904
        %v5948 = vunpack.c.l.b16 %v5905
        %v5949 = vunpack.c.l.b16 %v5906
        %v5950 = vunpack.c.l.b16 %v5907
        %v5951 = vunpack.c.l.b16 %v5908
        %v5952 = vunpack.c.l.b16 %v5909
        %v5953 = vunpack.c.l.b16 %v5910
        %v5954 = vunpack.c.l.b16 %v5911
        %v5955 = vunpack.c.l.b16 %v5912
        %v5956 = vunpack.c.l.b16 %v5913
        %v5957 = vunpack.c.l.b16 %v5914
        %v5958 = vunpack.c.l.b16 %v5915
        %v5959 = vunpack.c.l.b16 %v5916
        %v5960 = vunpack.c.l.b16 %v5917
        %v5961 = vunpack.c.l.b16 %v5918
        %v5962 = vunpack.c.l.b16 %v5919
        %v5963 = vunpack.c.l.b16 %v5920
        %v5964 = vpack.c.b16 %v5947, %v5946
        %v5965 = vpack.c.b16 %v5949, %v5948
        %v5966 = vpack.c.b16 %v5951, %v5950
        %v5967 = vpack.c.b16 %v5953, %v5952
        %v5968 = vpack.c.b16 %v5955, %v5954
        %v5969 = vpack.c.b16 %v5957, %v5956
        %v5970 = vpack.c.b16 %v5959, %v5958
        %v5971 = vpack.c.b16 %v5961, %v5960
        %v5972 = vpack.c.b16 %v5963, %v5962
        %v5983 = vsel %vm5742, %v5902, 0
        %5985 = vmatprep.subr.bf16.mxu0 0
        %5986 = vmatpush1.bf16.msra.mxu0 %v5964
        %5987 = vmatprep.subr.bf16.mxu0 0
        %5988 = vmatpush1.bf16.msra.mxu0 %v5965
        %5989 = vmatprep.subr.bf16.mxu0 0
        %5990 = vmatpush1.bf16.msra.mxu0 %v5966
        %5991 = vmatprep.subr.bf16.mxu0 0
        %5992 = vmatpush1.bf16.msra.mxu0 %v5967
        %5993 = vmatprep.subr.bf16.mxu0 0
        %5994 = vmatpush1.bf16.msra.mxu0 %v5968
        %5995 = vmatprep.subr.bf16.mxu0 0
        %5996 = vmatpush1.bf16.msra.mxu0 %v5969
        %5997 = vmatprep.subr.bf16.mxu0 0
        %5998 = vmatpush1.bf16.msra.mxu0 %v5970
        %5999 = vmatprep.subr.bf16.mxu0 0
        %6000 = vmatpush1.bf16.msra.mxu0 %v5971
        %6001 = vmatprep.subr.bf16.mxu0 0
        %6002 = vmatpush1.bf16.msra.mxu0 %v5972
        %6003 = vmatprep.subr.bf16.mxu0 0
        %6004 = vmatpush1.bf16.msra.mxu0 0
        %6005 = vmatprep.subr.bf16.mxu0 0
        %6006 = vmatpush1.bf16.msra.mxu0 0
        %6007 = vmatprep.subr.bf16.mxu0 0
        %6008 = vmatpush1.bf16.msra.mxu0 0
        %6009 = vmatprep.subr.bf16.mxu0 0
        %6010 = vmatpush1.bf16.msra.mxu0 0
        %6011 = vmatprep.subr.bf16.mxu0 0
        %6012 = vmatpush1.bf16.msra.mxu0 0
        %6013 = vmatprep.subr.bf16.mxu0 0
        %6014 = vmatpush1.bf16.msra.mxu0 0
        %6015 = vmatprep.subr.bf16.mxu0 0
        %6016 = vmatpush1.bf16.msra.mxu0 0
        %6017 = vmatprep.mubr.bf16.mxu0 %v5983
        %6018 = vmatmul.mubr.bf16.gmra.mrb[0].mxu0 %v5901
        %v6019 = vpop.f32.mrb[0].mxu0
        %v6020 = vadd.f32 %v5926, %v6019
        %v6021 = vpop.f32.mrb[0].mxu0
        %v6022 = vpop.f32.mrb[0].mxu0
        %v6023 = vpop.f32.mrb[0].mxu0
        %6024 = vdwg.mxu0
        %v6025 = vpack.c.bf16 %v5707, %v5706
        %6026 = vmatprep.subr.bf16.mxu0 0
        %6027 = vmatpush1.bf16.msra.mxu0 %v6025
        %6028 = vmatprep.subr.bf16.mxu0 0
        %6029 = vmatpush1.bf16.msra.mxu0 0
        %6030 = vmatprep.subr.bf16.mxu0 0
        %6031 = vmatpush1.bf16.msra.mxu0 0
        %6032 = vmatprep.subr.bf16.mxu0 0
        %6033 = vmatpush1.bf16.msra.mxu0 0
        %6034 = vmatprep.subr.bf16.mxu0 0
        %6035 = vmatpush1.bf16.msra.mxu0 0
        %6036 = vmatprep.subr.bf16.mxu0 0
        %6037 = vmatpush1.bf16.msra.mxu0 0
        %6038 = vmatprep.subr.bf16.mxu0 0
        %6039 = vmatpush1.bf16.msra.mxu0 0
        %6040 = vmatprep.subr.bf16.mxu0 0
        %6041 = vmatpush1.bf16.msra.mxu0 0
        %6042 = vmatprep.subr.bf16.mxu0 0
        %6043 = vmatpush1.bf16.msra.mxu0 0
        %6044 = vmatprep.subr.bf16.mxu0 0
        %6045 = vmatpush1.bf16.msra.mxu0 0
        %6046 = vmatprep.subr.bf16.mxu0 0
        %6047 = vmatpush1.bf16.msra.mxu0 0
        %6048 = vmatprep.subr.bf16.mxu0 0
        %6049 = vmatpush1.bf16.msra.mxu0 0
        %6050 = vmatprep.subr.bf16.mxu0 0
        %6051 = vmatpush1.bf16.msra.mxu0 0
        %6052 = vmatprep.subr.bf16.mxu0 0
        %6053 = vmatpush1.bf16.msra.mxu0 0
        %6054 = vmatprep.subr.bf16.mxu0 0
        %6055 = vmatpush1.bf16.msra.mxu0 0
        %6056 = vmatprep.subr.bf16.mxu0 0
        %6057 = vmatpush1.bf16.msra.mxu0 0
        %6058 = vmatprep.mubr.bf16.mxu0 0
        %6059 = vmatmul.mubr.bf16.gmra.mrb[0].mxu0 %v5744
        %v6060 = vpop.f32.mrb[0].mxu0
        %v6061 = vadd.f32 0.0, %v6060
        %v6062 = vpop.f32.mrb[0].mxu0
        %v6063 = vpop.f32.mrb[0].mxu0
        %v6064 = vpop.f32.mrb[0].mxu0
        %6065 = vdwg.mxu0
        %v6066 = vpack.c.bf16 %v6061, %v6061
        %v6067 = vld [vmem:[%s75] sm:$0xf]
        %v6068 = vld [vmem:[%s75 + $0x4] sm:$0xf]
        %v6069 = vld [vmem:[%s75 + $0x8] sm:$0xf]
        %v6070 = vld [vmem:[%s75 + $0xc] sm:$0xf]
        %v6071 = vld [vmem:[#allocation11] sm:$0x1]
        %v6073 = vlaneseq
        %v6074 = vshrl.u32 %v6073, 7
        %v6075 = vsub.s32 0, %v6074
        %v6076 = vrot.slane %v6071, %v6075
        %v6082 = vunpack.c.l.b16 %v6067
        %v6083 = vunpack.c.l.b16 %v6068
        %v6084 = vunpack.c.l.b16 %v6069
        %v6085 = vunpack.c.l.b16 %v6070
        %v6086 = vpack.c.b16 %v6083, %v6082
        %v6087 = vpack.c.b16 %v6085, %v6084
        %v6091 = vsel %vm4781, %v6066, 0
        %6093 = vmatprep.subr.bf16.mxu0 0
        %6094 = vmatpush1.bf16.msra.mxu0 %v6086
        %6095 = vmatprep.subr.bf16.mxu0 0
        %6096 = vmatpush1.bf16.msra.mxu0 %v6087
        %6097 = vmatprep.subr.bf16.mxu0 0
        %6098 = vmatpush1.bf16.msra.mxu0 0
        %6099 = vmatprep.subr.bf16.mxu0 0
        %6100 = vmatpush1.bf16.msra.mxu0 0
        %6101 = vmatprep.subr.bf16.mxu0 0
        %6102 = vmatpush1.bf16.msra.mxu0 0
        %6103 = vmatprep.subr.bf16.mxu0 0
        %6104 = vmatpush1.bf16.msra.mxu0 0
        %6105 = vmatprep.subr.bf16.mxu0 0
        %6106 = vmatpush1.bf16.msra.mxu0 0
        %6107 = vmatprep.subr.bf16.mxu0 0
        %6108 = vmatpush1.bf16.msra.mxu0 0
        %6109 = vmatprep.subr.bf16.mxu0 0
        %6110 = vmatpush1.bf16.msra.mxu0 0
        %6111 = vmatprep.subr.bf16.mxu0 0
        %6112 = vmatpush1.bf16.msra.mxu0 0
        %6113 = vmatprep.subr.bf16.mxu0 0
        %6114 = vmatpush1.bf16.msra.mxu0 0
        %6115 = vmatprep.subr.bf16.mxu0 0
        %6116 = vmatpush1.bf16.msra.mxu0 0
        %6117 = vmatprep.subr.bf16.mxu0 0
        %6118 = vmatpush1.bf16.msra.mxu0 0
        %6119 = vmatprep.subr.bf16.mxu0 0
        %6120 = vmatpush1.bf16.msra.mxu0 0
        %6121 = vmatprep.subr.bf16.mxu0 0
        %6122 = vmatpush1.bf16.msra.mxu0 0
        %6123 = vmatprep.subr.bf16.mxu0 0
        %6124 = vmatpush1.bf16.msra.mxu0 0
        %6125 = vmatprep.mubr.bf16.mxu0 0
        %6126 = vmatmul.mubr.bf16.gmra.mrb[0].mxu0 %v6091
        %v6127 = vpop.f32.mrb[0].mxu0
        %v6128 = vadd.f32 %v6076, %v6127
        %v6129 = vpop.f32.mrb[0].mxu0
        %v6130 = vpop.f32.mrb[0].mxu0
        %v6131 = vpop.f32.mrb[0].mxu0
        %6132 = vdwg.mxu0
        %v6133 = vadd.f32 %v6020, %v6128
        %v6134 = vmax.f32 %v6133, 0.0
        %v6135 = vrot.slane %v6134, 7
        %v6136 = vsel %vm3392, 0.0, %v6135
        %v6137 = vrot.slane %v6134, 1
        %v6138 = vsel %vm5886, 0.0, %v6137
        %6140 = vrot.lane.b32.xlu0 %v6134, 48
        %v6141 = vpop.permute.xlu0 %6140
        %6144 = vrot.lane.b32.xlu0 %v6138, 96
        %v6145 = vpop.permute.xlu0 %6144
        %v6147 = vsel %vm3830, %v6136, %v6141
        %v6148 = vsel %vm5009, %v6147, %v6145
        %v6149 = vpack.c.bf16 %v6148, %v6148
        %v6150 = vpack.c.bf16 %v6145, %v6145
        %v6151 = vld [vmem:[%s79] sm:$0xf]
        %v6152 = vld [vmem:[%s79 + $0x4] sm:$0xf]
        %v6153 = vld [vmem:[%s79 + $0x8] sm:$0xf]
        %v6154 = vld [vmem:[%s79 + $0xc] sm:$0xf]
        %v6155 = vld [vmem:[%s79 + $0x10] sm:$0xf]
        %v6156 = vld [vmem:[%s79 + $0x14] sm:$0xf]
        %v6157 = vld [vmem:[%s79 + $0x18] sm:$0xf]
        %v6158 = vld [vmem:[%s79 + $0x1c] sm:$0xf]
        %v6159 = vld [vmem:[%s79 + $0x20] sm:$0xf]
        %v6160 = vld [vmem:[%s79 + $0x24] sm:$0xf]
        %v6161 = vld [vmem:[%s79 + $0x28] sm:$0xf]
        %v6162 = vld [vmem:[%s79 + $0x2c] sm:$0xf]
        %v6163 = vld [vmem:[%s79 + $0x30] sm:$0xf]
        %v6164 = vld [vmem:[%s79 + $0x34] sm:$0xf]
        %v6165 = vld [vmem:[%s79 + $0x38] sm:$0xf]
        %v6166 = vld [vmem:[%s79 + $0x3c] sm:$0xf]
        %v6167 = vld [vmem:[%s79 + $0x40] sm:$0xf]
        %v6168 = vld [vmem:[%s79 + $0x44] sm:$0xf]
        %v6169 = vld [vmem:[#allocation13] sm:$0x1]
        %v6171 = vlaneseq
        %v6172 = vshrl.u32 %v6171, 7
        %v6173 = vsub.s32 0, %v6172
        %v6174 = vrot.slane %v6169, %v6173
        %v6194 = vunpack.c.l.b16 %v6151
        %v6195 = vunpack.c.l.b16 %v6152
        %v6196 = vunpack.c.l.b16 %v6153
        %v6197 = vunpack.c.l.b16 %v6154
        %v6198 = vunpack.c.l.b16 %v6155
        %v6199 = vunpack.c.l.b16 %v6156
        %v6200 = vunpack.c.l.b16 %v6157
        %v6201 = vunpack.c.l.b16 %v6158
        %v6202 = vunpack.c.l.b16 %v6159
        %v6203 = vunpack.c.l.b16 %v6160
        %v6204 = vunpack.c.l.b16 %v6161
        %v6205 = vunpack.c.l.b16 %v6162
        %v6206 = vunpack.c.l.b16 %v6163
        %v6207 = vunpack.c.l.b16 %v6164
        %v6208 = vunpack.c.l.b16 %v6165
        %v6209 = vunpack.c.l.b16 %v6166
        %v6210 = vunpack.c.l.b16 %v6167
        %v6211 = vunpack.c.l.b16 %v6168
        %v6212 = vpack.c.b16 %v6195, %v6194
        %v6213 = vpack.c.b16 %v6197, %v6196
        %v6214 = vpack.c.b16 %v6199, %v6198
        %v6215 = vpack.c.b16 %v6201, %v6200
        %v6216 = vpack.c.b16 %v6203, %v6202
        %v6217 = vpack.c.b16 %v6205, %v6204
        %v6218 = vpack.c.b16 %v6207, %v6206
        %v6219 = vpack.c.b16 %v6209, %v6208
        %v6220 = vpack.c.b16 %v6211, %v6210
        %v6231 = vsel %vm5742, %v6150, 0
        %6233 = vmatprep.subr.bf16.mxu0 0
        %6234 = vmatpush1.bf16.msra.mxu0 %v6212
        %6235 = vmatprep.subr.bf16.mxu0 0
        %6236 = vmatpush1.bf16.msra.mxu0 %v6213
        %6237 = vmatprep.subr.bf16.mxu0 0
        %6238 = vmatpush1.bf16.msra.mxu0 %v6214
        %6239 = vmatprep.subr.bf16.mxu0 0
        %6240 = vmatpush1.bf16.msra.mxu0 %v6215
        %6241 = vmatprep.subr.bf16.mxu0 0
        %6242 = vmatpush1.bf16.msra.mxu0 %v6216
        %6243 = vmatprep.subr.bf16.mxu0 0
        %6244 = vmatpush1.bf16.msra.mxu0 %v6217
        %6245 = vmatprep.subr.bf16.mxu0 0
        %6246 = vmatpush1.bf16.msra.mxu0 %v6218
        %6247 = vmatprep.subr.bf16.mxu0 0
        %6248 = vmatpush1.bf16.msra.mxu0 %v6219
        %6249 = vmatprep.subr.bf16.mxu0 0
        %6250 = vmatpush1.bf16.msra.mxu0 %v6220
        %6251 = vmatprep.subr.bf16.mxu0 0
        %6252 = vmatpush1.bf16.msra.mxu0 0
        %6253 = vmatprep.subr.bf16.mxu0 0
        %6254 = vmatpush1.bf16.msra.mxu0 0
        %6255 = vmatprep.subr.bf16.mxu0 0
        %6256 = vmatpush1.bf16.msra.mxu0 0
        %6257 = vmatprep.subr.bf16.mxu0 0
        %6258 = vmatpush1.bf16.msra.mxu0 0
        %6259 = vmatprep.subr.bf16.mxu0 0
        %6260 = vmatpush1.bf16.msra.mxu0 0
        %6261 = vmatprep.subr.bf16.mxu0 0
        %6262 = vmatpush1.bf16.msra.mxu0 0
        %6263 = vmatprep.subr.bf16.mxu0 0
        %6264 = vmatpush1.bf16.msra.mxu0 0
        %6265 = vmatprep.mubr.bf16.mxu0 %v6231
        %6266 = vmatmul.mubr.bf16.gmra.mrb[0].mxu0 %v6149
        %v6267 = vpop.f32.mrb[0].mxu0
        %v6268 = vadd.f32 %v6174, %v6267
        %v6269 = vpop.f32.mrb[0].mxu0
        %v6270 = vpop.f32.mrb[0].mxu0
        %v6271 = vpop.f32.mrb[0].mxu0
        %6272 = vdwg.mxu0
        %v6273 = vmax.f32 %v6268, 0.0
        %v6274 = vrot.slane %v6273, 7
        %v6275 = vsel %vm3392, 0.0, %v6274
        %v6276 = vrot.slane %v6273, 1
        %v6277 = vsel %vm5886, 0.0, %v6276
        %6279 = vrot.lane.b32.xlu0 %v6273, 48
        %v6280 = vpop.permute.xlu0 %6279
        %6283 = vrot.lane.b32.xlu0 %v6277, 96
        %v6284 = vpop.permute.xlu0 %6283
        %v6286 = vsel %vm3830, %v6275, %v6280
        %v6287 = vsel %vm5009, %v6286, %v6284
        %v6288 = vpack.c.bf16 %v6287, %v6287
        %v6289 = vpack.c.bf16 %v6284, %v6284
        %v6290 = vld [vmem:[%s83] sm:$0xf]
        %v6291 = vld [vmem:[%s83 + $0x4] sm:$0xf]
        %v6292 = vld [vmem:[%s83 + $0x8] sm:$0xf]
        %v6293 = vld [vmem:[%s83 + $0xc] sm:$0xf]
        %v6294 = vld [vmem:[%s83 + $0x10] sm:$0xf]
        %v6295 = vld [vmem:[%s83 + $0x14] sm:$0xf]
        %v6296 = vld [vmem:[%s83 + $0x18] sm:$0xf]
        %v6297 = vld [vmem:[%s83 + $0x1c] sm:$0xf]
        %v6298 = vld [vmem:[%s83 + $0x20] sm:$0xf]
        %v6299 = vld [vmem:[%s83 + $0x24] sm:$0xf]
        %v6300 = vld [vmem:[%s83 + $0x28] sm:$0xf]
        %v6301 = vld [vmem:[%s83 + $0x2c] sm:$0xf]
        %v6302 = vld [vmem:[%s83 + $0x30] sm:$0xf]
        %v6303 = vld [vmem:[%s83 + $0x34] sm:$0xf]
        %v6304 = vld [vmem:[%s83 + $0x38] sm:$0xf]
        %v6305 = vld [vmem:[%s83 + $0x3c] sm:$0xf]
        %v6306 = vld [vmem:[%s83 + $0x40] sm:$0xf]
        %v6307 = vld [vmem:[%s83 + $0x44] sm:$0xf]
        %v6308 = vld [vmem:[#allocation14] sm:$0x1]
        %v6310 = vlaneseq
        %v6311 = vshrl.u32 %v6310, 7
        %v6312 = vsub.s32 0, %v6311
        %v6313 = vrot.slane %v6308, %v6312
        %v6333 = vunpack.c.l.b16 %v6290
        %v6334 = vunpack.c.l.b16 %v6291
        %v6335 = vunpack.c.l.b16 %v6292
        %v6336 = vunpack.c.l.b16 %v6293
        %v6337 = vunpack.c.l.b16 %v6294
        %v6338 = vunpack.c.l.b16 %v6295
        %v6339 = vunpack.c.l.b16 %v6296
        %v6340 = vunpack.c.l.b16 %v6297
        %v6341 = vunpack.c.l.b16 %v6298
        %v6342 = vunpack.c.l.b16 %v6299
        %v6343 = vunpack.c.l.b16 %v6300
        %v6344 = vunpack.c.l.b16 %v6301
        %v6345 = vunpack.c.l.b16 %v6302
        %v6346 = vunpack.c.l.b16 %v6303
        %v6347 = vunpack.c.l.b16 %v6304
        %v6348 = vunpack.c.l.b16 %v6305
        %v6349 = vunpack.c.l.b16 %v6306
        %v6350 = vunpack.c.l.b16 %v6307
        %v6351 = vpack.c.b16 %v6334, %v6333
        %v6352 = vpack.c.b16 %v6336, %v6335
        %v6353 = vpack.c.b16 %v6338, %v6337
        %v6354 = vpack.c.b16 %v6340, %v6339
        %v6355 = vpack.c.b16 %v6342, %v6341
        %v6356 = vpack.c.b16 %v6344, %v6343
        %v6357 = vpack.c.b16 %v6346, %v6345
        %v6358 = vpack.c.b16 %v6348, %v6347
        %v6359 = vpack.c.b16 %v6350, %v6349
        %v6370 = vsel %vm5742, %v6289, 0
        %6372 = vmatprep.subr.bf16.mxu0 0
        %6373 = vmatpush1.bf16.msra.mxu0 %v6351
        %6374 = vmatprep.subr.bf16.mxu0 0
        %6375 = vmatpush1.bf16.msra.mxu0 %v6352
        %6376 = vmatprep.subr.bf16.mxu0 0
        %6377 = vmatpush1.bf16.msra.mxu0 %v6353
        %6378 = vmatprep.subr.bf16.mxu0 0
        %6379 = vmatpush1.bf16.msra.mxu0 %v6354
        %6380 = vmatprep.subr.bf16.mxu0 0
        %6381 = vmatpush1.bf16.msra.mxu0 %v6355
        %6382 = vmatprep.subr.bf16.mxu0 0
        %6383 = vmatpush1.bf16.msra.mxu0 %v6356
        %6384 = vmatprep.subr.bf16.mxu0 0
        %6385 = vmatpush1.bf16.msra.mxu0 %v6357
        %6386 = vmatprep.subr.bf16.mxu0 0
        %6387 = vmatpush1.bf16.msra.mxu0 %v6358
        %6388 = vmatprep.subr.bf16.mxu0 0
        %6389 = vmatpush1.bf16.msra.mxu0 %v6359
        %6390 = vmatprep.subr.bf16.mxu0 0
        %6391 = vmatpush1.bf16.msra.mxu0 0
        %6392 = vmatprep.subr.bf16.mxu0 0
        %6393 = vmatpush1.bf16.msra.mxu0 0
        %6394 = vmatprep.subr.bf16.mxu0 0
        %6395 = vmatpush1.bf16.msra.mxu0 0
        %6396 = vmatprep.subr.bf16.mxu0 0
        %6397 = vmatpush1.bf16.msra.mxu0 0
        %6398 = vmatprep.subr.bf16.mxu0 0
        %6399 = vmatpush1.bf16.msra.mxu0 0
        %6400 = vmatprep.subr.bf16.mxu0 0
        %6401 = vmatpush1.bf16.msra.mxu0 0
        %6402 = vmatprep.subr.bf16.mxu0 0
        %6403 = vmatpush1.bf16.msra.mxu0 0
        %6404 = vmatprep.mubr.bf16.mxu0 %v6370
        %6405 = vmatmul.mubr.bf16.gmra.mrb[0].mxu0 %v6288
        %v6406 = vpop.f32.mrb[0].mxu0
        %v6407 = vadd.f32 %v6313, %v6406
        %v6408 = vpop.f32.mrb[0].mxu0
        %v6409 = vpop.f32.mrb[0].mxu0
        %v6410 = vpop.f32.mrb[0].mxu0
        %6411 = vdwg.mxu0
        %v6412 = vadd.f32 %v6407, %v6134
        %v6413 = vmax.f32 %v6412, 0.0
        %v6414 = vrot.slane %v6413, 7
        %v6415 = vsel %vm3392, 0.0, %v6414
        %v6416 = vrot.slane %v6413, 1
        %v6417 = vsel %vm5886, 0.0, %v6416
        %6419 = vrot.lane.b32.xlu0 %v6413, 48
        %v6420 = vpop.permute.xlu0 %6419
        %6423 = vrot.lane.b32.xlu0 %v6417, 96
        %v6424 = vpop.permute.xlu0 %6423
        %v6426 = vsel %vm3830, %v6415, %v6420
        %v6427 = vsel %vm5009, %v6426, %v6424
        %v6428 = vpack.c.bf16 %v6427, %v6427
        %v6429 = vpack.c.bf16 %v6424, %v6424
        %vm6430 = vcmask 64512
        %v6431 = vsel %vm6430, %v5741, 0
        %v6434 = vsel %vm3075, %v6428, 0
        %v6437 = vsel %vm3075, %v6429, 0
        %6439 = vmatprep.subr.bf16.mxu0 %v6437
        %6440 = vmatpush1.bf16.msra.mxu0 %v6434
        %6441 = vmatprep.subr.bf16.mxu0 0
        %6442 = vmatpush1.bf16.msra.mxu0 0
        %6443 = vmatprep.subr.bf16.mxu0 0
        %6444 = vmatpush1.bf16.msra.mxu0 0
        %6445 = vmatprep.subr.bf16.mxu0 0
        %6446 = vmatpush1.bf16.msra.mxu0 0
        %6447 = vmatprep.subr.bf16.mxu0 0
        %6448 = vmatpush1.bf16.msra.mxu0 0
        %6449 = vmatprep.subr.bf16.mxu0 0
        %6450 = vmatpush1.bf16.msra.mxu0 0
        %6451 = vmatprep.subr.bf16.mxu0 0
        %6452 = vmatpush1.bf16.msra.mxu0 0
        %6453 = vmatprep.subr.bf16.mxu0 0
        %6454 = vmatpush1.bf16.msra.mxu0 0
        %6455 = vmatprep.subr.bf16.mxu0 0
        %6456 = vmatpush1.bf16.msra.mxu0 0
        %6457 = vmatprep.subr.bf16.mxu0 0
        %6458 = vmatpush1.bf16.msra.mxu0 0
        %6459 = vmatprep.subr.bf16.mxu0 0
        %6460 = vmatpush1.bf16.msra.mxu0 0
        %6461 = vmatprep.subr.bf16.mxu0 0
        %6462 = vmatpush1.bf16.msra.mxu0 0
        %6463 = vmatprep.subr.bf16.mxu0 0
        %6464 = vmatpush1.bf16.msra.mxu0 0
        %6465 = vmatprep.subr.bf16.mxu0 0
        %6466 = vmatpush1.bf16.msra.mxu0 0
        %6467 = vmatprep.subr.bf16.mxu0 0
        %6468 = vmatpush1.bf16.msra.mxu0 0
        %6469 = vmatprep.subr.bf16.mxu0 0
        %6470 = vmatpush1.bf16.msra.mxu0 0
        %6471 = vmatprep.mubr.bf16.mxu0 0
        %6472 = vmatmul.mubr.bf16.gmra.mrb[0].mxu0 %v6431
        %v6473 = vpop.f32.mrb[0].mxu0
        %v6474 = vadd.f32 0.0, %v6473
        %v6475 = vpop.f32.mrb[0].mxu0
        %v6476 = vadd.f32 0.0, %v6475
        %v6477 = vpop.f32.mrb[0].mxu0
        %v6478 = vpop.f32.mrb[0].mxu0
        %6479 = vdwg.mxu0
        %v6480 = vpack.c.bf16 %v6474, %v6474
        %v6481 = vpack.c.bf16 %v6476, %v6476
        %v6482 = vld [vmem:[%s87] sm:$0xf]
        %v6483 = vld [vmem:[%s87 + $0x4] sm:$0xf]
        %v6484 = vld [vmem:[%s87 + $0x8] sm:$0xf]
        %v6485 = vld [vmem:[%s87 + $0xc] sm:$0xf]
        %v6486 = vld [vmem:[%s87 + $0x10] sm:$0xf]
        %v6487 = vld [vmem:[%s87 + $0x14] sm:$0xf]
        %v6488 = vld [vmem:[%s87 + $0x18] sm:$0xf]
        %v6489 = vld [vmem:[%s87 + $0x1c] sm:$0xf]
        %v6490 = vld [vmem:[%s87 + $0x20] sm:$0xf]
        %v6491 = vld [vmem:[%s87 + $0x24] sm:$0xf]
        %v6492 = vld [vmem:[%s87 + $0x28] sm:$0xf]
        %v6493 = vld [vmem:[%s87 + $0x2c] sm:$0xf]
        %v6494 = vld [vmem:[%s87 + $0x30] sm:$0xf]
        %v6495 = vld [vmem:[%s87 + $0x34] sm:$0xf]
        %v6496 = vld [vmem:[%s87 + $0x38] sm:$0xf]
        %v6497 = vld [vmem:[%s87 + $0x3c] sm:$0xf]
        %v6498 = vld [vmem:[%s87 + $0x40] sm:$0xf]
        %v6499 = vld [vmem:[%s87 + $0x44] sm:$0xf]
        %v6500 = vld [vmem:[#allocation16] sm:$0x1]
        %v6502 = vlaneseq
        %v6503 = vshrl.u32 %v6502, 7
        %v6504 = vsub.s32 0, %v6503
        %v6505 = vrot.slane %v6500, %v6504
        %v6525 = vunpack.c.l.b16 %v6482
        %v6526 = vunpack.c.l.b16 %v6483
        %v6527 = vunpack.c.l.b16 %v6484
        %v6528 = vunpack.c.l.b16 %v6485
        %v6529 = vunpack.c.l.b16 %v6486
        %v6530 = vunpack.c.l.b16 %v6487
        %v6531 = vunpack.c.l.b16 %v6488
        %v6532 = vunpack.c.l.b16 %v6489
        %v6533 = vunpack.c.l.b16 %v6490
        %v6534 = vunpack.c.l.b16 %v6491
        %v6535 = vunpack.c.l.b16 %v6492
        %v6536 = vunpack.c.l.b16 %v6493
        %v6537 = vunpack.c.l.b16 %v6494
        %v6538 = vunpack.c.l.b16 %v6495
        %v6539 = vunpack.c.l.b16 %v6496
        %v6540 = vunpack.c.l.b16 %v6497
        %v6541 = vunpack.c.l.b16 %v6498
        %v6542 = vunpack.c.l.b16 %v6499
        %v6543 = vpack.c.b16 %v6526, %v6525
        %v6544 = vpack.c.b16 %v6528, %v6527
        %v6545 = vpack.c.b16 %v6530, %v6529
        %v6546 = vpack.c.b16 %v6532, %v6531
        %v6547 = vpack.c.b16 %v6534, %v6533
        %v6548 = vpack.c.b16 %v6536, %v6535
        %v6549 = vpack.c.b16 %v6538, %v6537
        %v6550 = vpack.c.b16 %v6540, %v6539
        %v6551 = vpack.c.b16 %v6542, %v6541
        %v6562 = vsel %vm5742, %v6481, 0
        %6564 = vmatprep.subr.bf16.mxu0 0
        %6565 = vmatpush1.bf16.msra.mxu0 %v6543
        %6566 = vmatprep.subr.bf16.mxu0 0
        %6567 = vmatpush1.bf16.msra.mxu0 %v6544
        %6568 = vmatprep.subr.bf16.mxu0 0
        %6569 = vmatpush1.bf16.msra.mxu0 %v6545
        %6570 = vmatprep.subr.bf16.mxu0 0
        %6571 = vmatpush1.bf16.msra.mxu0 %v6546
        %6572 = vmatprep.subr.bf16.mxu0 0
        %6573 = vmatpush1.bf16.msra.mxu0 %v6547
        %6574 = vmatprep.subr.bf16.mxu0 0
        %6575 = vmatpush1.bf16.msra.mxu0 %v6548
        %6576 = vmatprep.subr.bf16.mxu0 0
        %6577 = vmatpush1.bf16.msra.mxu0 %v6549
        %6578 = vmatprep.subr.bf16.mxu0 0
        %6579 = vmatpush1.bf16.msra.mxu0 %v6550
        %6580 = vmatprep.subr.bf16.mxu0 0
        %6581 = vmatpush1.bf16.msra.mxu0 %v6551
        %6582 = vmatprep.subr.bf16.mxu0 0
        %6583 = vmatpush1.bf16.msra.mxu0 0
        %6584 = vmatprep.subr.bf16.mxu0 0
        %6585 = vmatpush1.bf16.msra.mxu0 0
        %6586 = vmatprep.subr.bf16.mxu0 0
        %6587 = vmatpush1.bf16.msra.mxu0 0
        %6588 = vmatprep.subr.bf16.mxu0 0
        %6589 = vmatpush1.bf16.msra.mxu0 0
        %6590 = vmatprep.subr.bf16.mxu0 0
        %6591 = vmatpush1.bf16.msra.mxu0 0
        %6592 = vmatprep.subr.bf16.mxu0 0
        %6593 = vmatpush1.bf16.msra.mxu0 0
        %6594 = vmatprep.subr.bf16.mxu0 0
        %6595 = vmatpush1.bf16.msra.mxu0 0
        %6596 = vmatprep.mubr.bf16.mxu0 %v6562
        %6597 = vmatmul.mubr.bf16.gmra.mrb[0].mxu0 %v6480
        %v6598 = vpop.f32.mrb[0].mxu0
        %v6599 = vadd.f32 %v6505, %v6598
        %v6600 = vpop.f32.mrb[0].mxu0
        %v6601 = vpop.f32.mrb[0].mxu0
        %v6602 = vpop.f32.mrb[0].mxu0
        %6603 = vdwg.mxu0
        %v6604 = vmax.f32 %v6599, 0.0
        %vm6605 = vcmp.eq.s32.totalorder %v3384, 3
        %vm6606 = vcmask 1047556
        %v6607 = vrot.slane %v6604, 4
        %v6608 = vsel %vm6606, %v6607, %v6604
        %v6609 = vrot.slane %v6608, 4
        %v6610 = vsel %vm6606, %v6609, %v6604
        %v6612 = vrot.slane %v6610, 3
        %v6614 = vsel %vm3392, 0.0, %v6612
        %v6615 = vrot.slane %v6610, 1
        %v6617 = vsel %vm6605, 0.0, %v6615
        %6619 = vrot.lane.b32.xlu0 %v6604, 60
        %v6620 = vpop.permute.xlu0 %6619
        %6623 = vrot.lane.b32.xlu0 %v6617, 120
        %v6624 = vpop.permute.xlu0 %6623
        %vm6626 = vcmask 490496
        %v6627 = vsel %vm6626, %v6614, %v6620
        %vm6628 = vcmask 982016
        %v6629 = vsel %vm6628, %v6627, %v6624
        %v6630 = vpack.c.bf16 %v6629, %v6629
        %v6631 = vpack.c.bf16 %v6624, %v6624
        %v6632 = vld [vmem:[%s91] sm:$0xf]
        %v6633 = vld [vmem:[%s91 + $0x4] sm:$0xf]
        %v6634 = vld [vmem:[%s91 + $0x8] sm:$0xf]
        %v6635 = vld [vmem:[%s91 + $0xc] sm:$0xf]
        %v6636 = vld [vmem:[%s91 + $0x10] sm:$0xf]
        %v6637 = vld [vmem:[%s91 + $0x14] sm:$0xf]
        %v6638 = vld [vmem:[%s91 + $0x18] sm:$0xf]
        %v6639 = vld [vmem:[%s91 + $0x1c] sm:$0xf]
        %v6640 = vld [vmem:[%s91 + $0x20] sm:$0xf]
        %v6641 = vld [vmem:[%s91 + $0x24] sm:$0xf]
        %v6642 = vld [vmem:[%s91 + $0x28] sm:$0xf]
        %v6643 = vld [vmem:[%s91 + $0x2c] sm:$0xf]
        %v6644 = vld [vmem:[%s91 + $0x30] sm:$0xf]
        %v6645 = vld [vmem:[%s91 + $0x34] sm:$0xf]
        %v6646 = vld [vmem:[%s91 + $0x38] sm:$0xf]
        %v6647 = vld [vmem:[%s91 + $0x3c] sm:$0xf]
        %v6648 = vld [vmem:[%s91 + $0x40] sm:$0xf]
        %v6649 = vld [vmem:[%s91 + $0x44] sm:$0xf]
        %v6650 = vld [vmem:[%s91 + $0x48] sm:$0xf]
        %v6651 = vld [vmem:[%s91 + $0x4c] sm:$0xf]
        %v6652 = vld [vmem:[%s91 + $0x50] sm:$0xf]
        %v6653 = vld [vmem:[%s91 + $0x54] sm:$0xf]
        %v6654 = vld [vmem:[%s91 + $0x58] sm:$0x3]
        %v6655 = vld [vmem:[#allocation17] sm:$0x1]
        %v6657 = vlaneseq
        %v6658 = vshrl.u32 %v6657, 7
        %v6659 = vsub.s32 0, %v6658
        %v6660 = vrot.slane %v6655, %v6659
        %v6685 = vunpack.c.l.b16 %v6632
        %v6686 = vunpack.c.l.b16 %v6633
        %v6687 = vunpack.c.l.b16 %v6634
        %v6688 = vunpack.c.l.b16 %v6635
        %v6689 = vunpack.c.l.b16 %v6636
        %v6690 = vunpack.c.l.b16 %v6637
        %v6691 = vunpack.c.l.b16 %v6638
        %v6692 = vunpack.c.l.b16 %v6639
        %v6693 = vunpack.c.l.b16 %v6640
        %v6694 = vunpack.c.l.b16 %v6641
        %v6695 = vunpack.c.l.b16 %v6642
        %v6696 = vunpack.c.l.b16 %v6643
        %v6697 = vunpack.c.l.b16 %v6644
        %v6698 = vunpack.c.l.b16 %v6645
        %v6699 = vunpack.c.l.b16 %v6646
        %v6700 = vunpack.c.l.b16 %v6647
        %v6701 = vunpack.c.l.b16 %v6648
        %v6702 = vunpack.c.l.b16 %v6649
        %v6703 = vunpack.c.l.b16 %v6650
        %v6704 = vunpack.c.l.b16 %v6651
        %v6705 = vunpack.c.l.b16 %v6652
        %v6706 = vunpack.c.l.b16 %v6653
        %v6707 = vunpack.c.l.b16 %v6654
        %v6708 = vpack.c.b16 %v6686, %v6685
        %v6709 = vpack.c.b16 %v6688, %v6687
        %v6710 = vpack.c.b16 %v6690, %v6689
        %v6711 = vpack.c.b16 %v6692, %v6691
        %v6712 = vpack.c.b16 %v6694, %v6693
        %v6713 = vpack.c.b16 %v6696, %v6695
        %v6714 = vpack.c.b16 %v6698, %v6697
        %v6715 = vpack.c.b16 %v6700, %v6699
        %v6716 = vpack.c.b16 %v6702, %v6701
        %v6717 = vpack.c.b16 %v6704, %v6703
        %v6718 = vpack.c.b16 %v6706, %v6705
        %v6719 = vpack.c.b16 %v6707, %v6707
        %vm6731 = vcmask 424960
        %v6733 = vsel %vm6731, %v6631, 0
        %v6736 = vsel %vm3434, %v6719, 0
        %6738 = vmatprep.subr.bf16.mxu0 0
        %6739 = vmatpush1.bf16.msra.mxu0 %v6708
        %6740 = vmatprep.subr.bf16.mxu0 0
        %6741 = vmatpush1.bf16.msra.mxu0 %v6709
        %6742 = vmatprep.subr.bf16.mxu0 0
        %6743 = vmatpush1.bf16.msra.mxu0 %v6710
        %6744 = vmatprep.subr.bf16.mxu0 0
        %6745 = vmatpush1.bf16.msra.mxu0 %v6711
        %6746 = vmatprep.subr.bf16.mxu0 0
        %6747 = vmatpush1.bf16.msra.mxu0 %v6712
        %6748 = vmatprep.subr.bf16.mxu0 0
        %6749 = vmatpush1.bf16.msra.mxu0 %v6713
        %6750 = vmatprep.subr.bf16.mxu0 0
        %6751 = vmatpush1.bf16.msra.mxu0 %v6714
        %6752 = vmatprep.subr.bf16.mxu0 0
        %6753 = vmatpush1.bf16.msra.mxu0 %v6715
        %6754 = vmatprep.subr.bf16.mxu0 0
        %6755 = vmatpush1.bf16.msra.mxu0 %v6716
        %6756 = vmatprep.subr.bf16.mxu0 0
        %6757 = vmatpush1.bf16.msra.mxu0 %v6717
        %6758 = vmatprep.subr.bf16.mxu0 0
        %6759 = vmatpush1.bf16.msra.mxu0 %v6718
        %6760 = vmatprep.subr.bf16.mxu0 0
        %6761 = vmatpush1.bf16.msra.mxu0 %v6736
        %6762 = vmatprep.subr.bf16.mxu0 0
        %6763 = vmatpush1.bf16.msra.mxu0 0
        %6764 = vmatprep.subr.bf16.mxu0 0
        %6765 = vmatpush1.bf16.msra.mxu0 0
        %6766 = vmatprep.subr.bf16.mxu0 0
        %6767 = vmatpush1.bf16.msra.mxu0 0
        %6768 = vmatprep.subr.bf16.mxu0 0
        %6769 = vmatpush1.bf16.msra.mxu0 0
        %6770 = vmatprep.mubr.bf16.mxu0 %v6733
        %6771 = vmatmul.mubr.bf16.gmra.mrb[0].mxu0 %v6630
        %v6772 = vpop.f32.mrb[0].mxu0
        %v6773 = vadd.f32 %v6660, %v6772
        %v6774 = vpop.f32.mrb[0].mxu0
        %v6775 = vpop.f32.mrb[0].mxu0
        %v6776 = vpop.f32.mrb[0].mxu0
        %6777 = vdwg.mxu0
        %v6778 = vpack.c.bf16 %v6413, %v6413
        %v6780 = vsel %vm3075, %v6778, 0
        %6782 = vmatprep.subr.bf16.mxu0 0
        %6783 = vmatpush1.bf16.msra.mxu0 %v6780
        %6784 = vmatprep.subr.bf16.mxu0 0
        %6785 = vmatpush1.bf16.msra.mxu0 0
        %6786 = vmatprep.subr.bf16.mxu0 0
        %6787 = vmatpush1.bf16.msra.mxu0 0
        %6788 = vmatprep.subr.bf16.mxu0 0
        %6789 = vmatpush1.bf16.msra.mxu0 0
        %6790 = vmatprep.subr.bf16.mxu0 0
        %6791 = vmatpush1.bf16.msra.mxu0 0
        %6792 = vmatprep.subr.bf16.mxu0 0
        %6793 = vmatpush1.bf16.msra.mxu0 0
        %6794 = vmatprep.subr.bf16.mxu0 0
        %6795 = vmatpush1.bf16.msra.mxu0 0
        %6796 = vmatprep.subr.bf16.mxu0 0
        %6797 = vmatpush1.bf16.msra.mxu0 0
        %6798 = vmatprep.subr.bf16.mxu0 0
        %6799 = vmatpush1.bf16.msra.mxu0 0
        %6800 = vmatprep.subr.bf16.mxu0 0
        %6801 = vmatpush1.bf16.msra.mxu0 0
        %6802 = vmatprep.subr.bf16.mxu0 0
        %6803 = vmatpush1.bf16.msra.mxu0 0
        %6804 = vmatprep.subr.bf16.mxu0 0
        %6805 = vmatpush1.bf16.msra.mxu0 0
        %6806 = vmatprep.subr.bf16.mxu0 0
        %6807 = vmatpush1.bf16.msra.mxu0 0
        %6808 = vmatprep.subr.bf16.mxu0 0
        %6809 = vmatpush1.bf16.msra.mxu0 0
        %6810 = vmatprep.subr.bf16.mxu0 0
        %6811 = vmatpush1.bf16.msra.mxu0 0
        %6812 = vmatprep.subr.bf16.mxu0 0
        %6813 = vmatpush1.bf16.msra.mxu0 0
        %6814 = vmatprep.mubr.bf16.mxu0 0
        %6815 = vmatmul.mubr.bf16.gmra.mrb[0].mxu0 %v6431
        %v6816 = vpop.f32.mrb[0].mxu0
        %v6817 = vadd.f32 0.0, %v6816
        %v6818 = vpop.f32.mrb[0].mxu0
        %v6819 = vpop.f32.mrb[0].mxu0
        %v6820 = vpop.f32.mrb[0].mxu0
        %6821 = vdwg.mxu0
        %v6822 = vpack.c.bf16 %v6817, %v6817
        %v6823 = vld [vmem:[%s95] sm:$0xf]
        %v6824 = vld [vmem:[%s95 + $0x4] sm:$0xf]
        %v6825 = vld [vmem:[%s95 + $0x8] sm:$0xf]
        %v6826 = vld [vmem:[%s95 + $0xc] sm:$0xf]
        %v6827 = vld [vmem:[%s95 + $0x10] sm:$0xf]
        %v6828 = vld [vmem:[%s95 + $0x14] sm:$0xf]
        %v6829 = vld [vmem:[#allocation19] sm:$0x1]
        %v6831 = vlaneseq
        %v6832 = vshrl.u32 %v6831, 7
        %v6833 = vsub.s32 0, %v6832
        %v6834 = vrot.slane %v6829, %v6833
        %v6842 = vunpack.c.l.b16 %v6823
        %v6843 = vunpack.c.l.b16 %v6824
        %v6844 = vunpack.c.l.b16 %v6825
        %v6845 = vunpack.c.l.b16 %v6826
        %v6846 = vunpack.c.l.b16 %v6827
        %v6847 = vunpack.c.l.b16 %v6828
        %v6848 = vpack.c.b16 %v6843, %v6842
        %v6849 = vpack.c.b16 %v6845, %v6844
        %v6850 = vpack.c.b16 %v6847, %v6846
        %v6855 = vsel %vm3830, %v6822, 0
        %6857 = vmatprep.subr.bf16.mxu0 0
        %6858 = vmatpush1.bf16.msra.mxu0 %v6848
        %6859 = vmatprep.subr.bf16.mxu0 0
        %6860 = vmatpush1.bf16.msra.mxu0 %v6849
        %6861 = vmatprep.subr.bf16.mxu0 0
        %6862 = vmatpush1.bf16.msra.mxu0 %v6850
        %6863 = vmatprep.subr.bf16.mxu0 0
        %6864 = vmatpush1.bf16.msra.mxu0 0
        %6865 = vmatprep.subr.bf16.mxu0 0
        %6866 = vmatpush1.bf16.msra.mxu0 0
        %6867 = vmatprep.subr.bf16.mxu0 0
        %6868 = vmatpush1.bf16.msra.mxu0 0
        %6869 = vmatprep.subr.bf16.mxu0 0
        %6870 = vmatpush1.bf16.msra.mxu0 0
        %6871 = vmatprep.subr.bf16.mxu0 0
        %6872 = vmatpush1.bf16.msra.mxu0 0
        %6873 = vmatprep.subr.bf16.mxu0 0
        %6874 = vmatpush1.bf16.msra.mxu0 0
        %6875 = vmatprep.subr.bf16.mxu0 0
        %6876 = vmatpush1.bf16.msra.mxu0 0
        %6877 = vmatprep.subr.bf16.mxu0 0
        %6878 = vmatpush1.bf16.msra.mxu0 0
        %6879 = vmatprep.subr.bf16.mxu0 0
        %6880 = vmatpush1.bf16.msra.mxu0 0
        %6881 = vmatprep.subr.bf16.mxu0 0
        %6882 = vmatpush1.bf16.msra.mxu0 0
        %6883 = vmatprep.subr.bf16.mxu0 0
        %6884 = vmatpush1.bf16.msra.mxu0 0
        %6885 = vmatprep.subr.bf16.mxu0 0
        %6886 = vmatpush1.bf16.msra.mxu0 0
        %6887 = vmatprep.subr.bf16.mxu0 0
        %6888 = vmatpush1.bf16.msra.mxu0 0
        %6889 = vmatprep.mubr.bf16.mxu0 0
        %6890 = vmatmul.mubr.bf16.gmra.mrb[0].mxu0 %v6855
        %v6891 = vpop.f32.mrb[0].mxu0
        %v6892 = vadd.f32 %v6834, %v6891
        %v6893 = vpop.f32.mrb[0].mxu0
        %v6894 = vpop.f32.mrb[0].mxu0
        %v6895 = vpop.f32.mrb[0].mxu0
        %6896 = vdwg.mxu0
        %v6897 = vadd.f32 %v6773, %v6892
        %v6898 = vmax.f32 %v6897, 0.0
        %v6899 = vrot.slane %v6898, 4
        %v6900 = vsel %vm6606, %v6899, %v6898
        %v6901 = vrot.slane %v6900, 4
        %v6902 = vsel %vm6606, %v6901, %v6898
        %v6904 = vrot.slane %v6902, 3
        %v6906 = vsel %vm3392, 0.0, %v6904
        %v6907 = vrot.slane %v6902, 1
        %v6909 = vsel %vm6605, 0.0, %v6907
        %6911 = vrot.lane.b32.xlu0 %v6898, 60
        %v6912 = vpop.permute.xlu0 %6911
        %6915 = vrot.lane.b32.xlu0 %v6909, 120
        %v6916 = vpop.permute.xlu0 %6915
        %v6918 = vsel %vm6626, %v6906, %v6912
        %v6919 = vsel %vm6628, %v6918, %v6916
        %v6920 = vpack.c.bf16 %v6919, %v6919
        %v6921 = vpack.c.bf16 %v6916, %v6916
        %v6922 = vld [vmem:[%s99] sm:$0xf]
        %v6923 = vld [vmem:[%s99 + $0x4] sm:$0xf]
        %v6924 = vld [vmem:[%s99 + $0x8] sm:$0xf]
        %v6925 = vld [vmem:[%s99 + $0xc] sm:$0xf]
        %v6926 = vld [vmem:[%s99 + $0x10] sm:$0xf]
        %v6927 = vld [vmem:[%s99 + $0x14] sm:$0xf]
        %v6928 = vld [vmem:[%s99 + $0x18] sm:$0xf]
        %v6929 = vld [vmem:[%s99 + $0x1c] sm:$0xf]
        %v6930 = vld [vmem:[%s99 + $0x20] sm:$0xf]
        %v6931 = vld [vmem:[%s99 + $0x24] sm:$0xf]
        %v6932 = vld [vmem:[%s99 + $0x28] sm:$0xf]
        %v6933 = vld [vmem:[%s99 + $0x2c] sm:$0xf]
        %v6934 = vld [vmem:[%s99 + $0x30] sm:$0xf]
        %v6935 = vld [vmem:[%s99 + $0x34] sm:$0xf]
        %v6936 = vld [vmem:[%s99 + $0x38] sm:$0xf]
        %v6937 = vld [vmem:[%s99 + $0x3c] sm:$0xf]
        %v6938 = vld [vmem:[%s99 + $0x40] sm:$0xf]
        %v6939 = vld [vmem:[%s99 + $0x44] sm:$0xf]
        %v6940 = vld [vmem:[%s99 + $0x48] sm:$0xf]
        %v6941 = vld [vmem:[%s99 + $0x4c] sm:$0xf]
        %v6942 = vld [vmem:[%s99 + $0x50] sm:$0xf]
        %v6943 = vld [vmem:[%s99 + $0x54] sm:$0xf]
        %v6944 = vld [vmem:[%s99 + $0x58] sm:$0x3]
        %v6945 = vld [vmem:[#allocation20] sm:$0x1]
        %v6947 = vlaneseq
        %v6948 = vshrl.u32 %v6947, 7
        %v6949 = vsub.s32 0, %v6948
        %v6950 = vrot.slane %v6945, %v6949
        %v6975 = vunpack.c.l.b16 %v6922
        %v6976 = vunpack.c.l.b16 %v6923
        %v6977 = vunpack.c.l.b16 %v6924
        %v6978 = vunpack.c.l.b16 %v6925
        %v6979 = vunpack.c.l.b16 %v6926
        %v6980 = vunpack.c.l.b16 %v6927
        %v6981 = vunpack.c.l.b16 %v6928
        %v6982 = vunpack.c.l.b16 %v6929
        %v6983 = vunpack.c.l.b16 %v6930
        %v6984 = vunpack.c.l.b16 %v6931
        %v6985 = vunpack.c.l.b16 %v6932
        %v6986 = vunpack.c.l.b16 %v6933
        %v6987 = vunpack.c.l.b16 %v6934
        %v6988 = vunpack.c.l.b16 %v6935
        %v6989 = vunpack.c.l.b16 %v6936
        %v6990 = vunpack.c.l.b16 %v6937
        %v6991 = vunpack.c.l.b16 %v6938
        %v6992 = vunpack.c.l.b16 %v6939
        %v6993 = vunpack.c.l.b16 %v6940
        %v6994 = vunpack.c.l.b16 %v6941
        %v6995 = vunpack.c.l.b16 %v6942
        %v6996 = vunpack.c.l.b16 %v6943
        %v6997 = vunpack.c.l.b16 %v6944
        %v6998 = vpack.c.b16 %v6976, %v6975
        %v6999 = vpack.c.b16 %v6978, %v6977
        %v7000 = vpack.c.b16 %v6980, %v6979
        %v7001 = vpack.c.b16 %v6982, %v6981
        %v7002 = vpack.c.b16 %v6984, %v6983
        %v7003 = vpack.c.b16 %v6986, %v6985
        %v7004 = vpack.c.b16 %v6988, %v6987
        %v7005 = vpack.c.b16 %v6990, %v6989
        %v7006 = vpack.c.b16 %v6992, %v6991
        %v7007 = vpack.c.b16 %v6994, %v6993
        %v7008 = vpack.c.b16 %v6996, %v6995
        %v7009 = vpack.c.b16 %v6997, %v6997
        %v7022 = vsel %vm6731, %v6921, 0
        %v7025 = vsel %vm3434, %v7009, 0
        %7027 = vmatprep.subr.bf16.mxu0 0
        %7028 = vmatpush1.bf16.msra.mxu0 %v6998
        %7029 = vmatprep.subr.bf16.mxu0 0
        %7030 = vmatpush1.bf16.msra.mxu0 %v6999
        %7031 = vmatprep.subr.bf16.mxu0 0
        %7032 = vmatpush1.bf16.msra.mxu0 %v7000
        %7033 = vmatprep.subr.bf16.mxu0 0
        %7034 = vmatpush1.bf16.msra.mxu0 %v7001
        %7035 = vmatprep.subr.bf16.mxu0 0
        %7036 = vmatpush1.bf16.msra.mxu0 %v7002
        %7037 = vmatprep.subr.bf16.mxu0 0
        %7038 = vmatpush1.bf16.msra.mxu0 %v7003
        %7039 = vmatprep.subr.bf16.mxu0 0
        %7040 = vmatpush1.bf16.msra.mxu0 %v7004
        %7041 = vmatprep.subr.bf16.mxu0 0
        %7042 = vmatpush1.bf16.msra.mxu0 %v7005
        %7043 = vmatprep.subr.bf16.mxu0 0
        %7044 = vmatpush1.bf16.msra.mxu0 %v7006
        %7045 = vmatprep.subr.bf16.mxu0 0
        %7046 = vmatpush1.bf16.msra.mxu0 %v7007
        %7047 = vmatprep.subr.bf16.mxu0 0
        %7048 = vmatpush1.bf16.msra.mxu0 %v7008
        %7049 = vmatprep.subr.bf16.mxu0 0
        %7050 = vmatpush1.bf16.msra.mxu0 %v7025
        %7051 = vmatprep.subr.bf16.mxu0 0
        %7052 = vmatpush1.bf16.msra.mxu0 0
        %7053 = vmatprep.subr.bf16.mxu0 0
        %7054 = vmatpush1.bf16.msra.mxu0 0
        %7055 = vmatprep.subr.bf16.mxu0 0
        %7056 = vmatpush1.bf16.msra.mxu0 0
        %7057 = vmatprep.subr.bf16.mxu0 0
        %7058 = vmatpush1.bf16.msra.mxu0 0
        %7059 = vmatprep.mubr.bf16.mxu0 %v7022
        %7060 = vmatmul.mubr.bf16.gmra.mrb[0].mxu0 %v6920
        %v7061 = vpop.f32.mrb[0].mxu0
        %v7062 = vadd.f32 %v6950, %v7061
        %v7063 = vpop.f32.mrb[0].mxu0
        %v7064 = vpop.f32.mrb[0].mxu0
        %v7065 = vpop.f32.mrb[0].mxu0
        %7066 = vdwg.mxu0
        %v7067 = vmax.f32 %v7062, 0.0
        %v7068 = vrot.slane %v7067, 4
        %v7069 = vsel %vm6606, %v7068, %v7067
        %v7070 = vrot.slane %v7069, 4
        %v7071 = vsel %vm6606, %v7070, %v7067
        %v7073 = vrot.slane %v7071, 3
        %v7075 = vsel %vm3392, 0.0, %v7073
        %v7076 = vrot.slane %v7071, 1
        %v7078 = vsel %vm6605, 0.0, %v7076
        %7080 = vrot.lane.b32.xlu0 %v7067, 60
        %v7081 = vpop.permute.xlu0 %7080
        %7084 = vrot.lane.b32.xlu0 %v7078, 120
        %v7085 = vpop.permute.xlu0 %7084
        %v7087 = vsel %vm6626, %v7075, %v7081
        %v7088 = vsel %vm6628, %v7087, %v7085
        %v7089 = vpack.c.bf16 %v7088, %v7088
        %v7090 = vpack.c.bf16 %v7085, %v7085
        %v7091 = vld [vmem:[%s103] sm:$0xf]
        %v7092 = vld [vmem:[%s103 + $0x4] sm:$0xf]
        %v7093 = vld [vmem:[%s103 + $0x8] sm:$0xf]
        %v7094 = vld [vmem:[%s103 + $0xc] sm:$0xf]
        %v7095 = vld [vmem:[%s103 + $0x10] sm:$0xf]
        %v7096 = vld [vmem:[%s103 + $0x14] sm:$0xf]
        %v7097 = vld [vmem:[%s103 + $0x18] sm:$0xf]
        %v7098 = vld [vmem:[%s103 + $0x1c] sm:$0xf]
        %v7099 = vld [vmem:[%s103 + $0x20] sm:$0xf]
        %v7100 = vld [vmem:[%s103 + $0x24] sm:$0xf]
        %v7101 = vld [vmem:[%s103 + $0x28] sm:$0xf]
        %v7102 = vld [vmem:[%s103 + $0x2c] sm:$0xf]
        %v7103 = vld [vmem:[%s103 + $0x30] sm:$0xf]
        %v7104 = vld [vmem:[%s103 + $0x34] sm:$0xf]
        %v7105 = vld [vmem:[%s103 + $0x38] sm:$0xf]
        %v7106 = vld [vmem:[%s103 + $0x3c] sm:$0xf]
        %v7107 = vld [vmem:[%s103 + $0x40] sm:$0xf]
        %v7108 = vld [vmem:[%s103 + $0x44] sm:$0xf]
        %v7109 = vld [vmem:[%s103 + $0x48] sm:$0xf]
        %v7110 = vld [vmem:[%s103 + $0x4c] sm:$0xf]
        %v7111 = vld [vmem:[%s103 + $0x50] sm:$0xf]
        %v7112 = vld [vmem:[%s103 + $0x54] sm:$0xf]
        %v7113 = vld [vmem:[%s103 + $0x58] sm:$0x3]
        %v7114 = vld [vmem:[#allocation22] sm:$0x1]
        %v7116 = vlaneseq
        %v7117 = vshrl.u32 %v7116, 7
        %v7118 = vsub.s32 0, %v7117
        %v7119 = vrot.slane %v7114, %v7118
        %v7144 = vunpack.c.l.b16 %v7091
        %v7145 = vunpack.c.l.b16 %v7092
        %v7146 = vunpack.c.l.b16 %v7093
        %v7147 = vunpack.c.l.b16 %v7094
        %v7148 = vunpack.c.l.b16 %v7095
        %v7149 = vunpack.c.l.b16 %v7096
        %v7150 = vunpack.c.l.b16 %v7097
        %v7151 = vunpack.c.l.b16 %v7098
        %v7152 = vunpack.c.l.b16 %v7099
        %v7153 = vunpack.c.l.b16 %v7100
        %v7154 = vunpack.c.l.b16 %v7101
        %v7155 = vunpack.c.l.b16 %v7102
        %v7156 = vunpack.c.l.b16 %v7103
        %v7157 = vunpack.c.l.b16 %v7104
        %v7158 = vunpack.c.l.b16 %v7105
        %v7159 = vunpack.c.l.b16 %v7106
        %v7160 = vunpack.c.l.b16 %v7107
        %v7161 = vunpack.c.l.b16 %v7108
        %v7162 = vunpack.c.l.b16 %v7109
        %v7163 = vunpack.c.l.b16 %v7110
        %v7164 = vunpack.c.l.b16 %v7111
        %v7165 = vunpack.c.l.b16 %v7112
        %v7166 = vunpack.c.l.b16 %v7113
        %v7167 = vpack.c.b16 %v7145, %v7144
        %v7168 = vpack.c.b16 %v7147, %v7146
        %v7169 = vpack.c.b16 %v7149, %v7148
        %v7170 = vpack.c.b16 %v7151, %v7150
        %v7171 = vpack.c.b16 %v7153, %v7152
        %v7172 = vpack.c.b16 %v7155, %v7154
        %v7173 = vpack.c.b16 %v7157, %v7156
        %v7174 = vpack.c.b16 %v7159, %v7158
        %v7175 = vpack.c.b16 %v7161, %v7160
        %v7176 = vpack.c.b16 %v7163, %v7162
        %v7177 = vpack.c.b16 %v7165, %v7164
        %v7178 = vpack.c.b16 %v7166, %v7166
        %v7191 = vsel %vm6731, %v7090, 0
        %v7194 = vsel %vm3434, %v7178, 0
        %7196 = vmatprep.subr.bf16.mxu0 0
        %7197 = vmatpush1.bf16.msra.mxu0 %v7167
        %7198 = vmatprep.subr.bf16.mxu0 0
        %7199 = vmatpush1.bf16.msra.mxu0 %v7168
        %7200 = vmatprep.subr.bf16.mxu0 0
        %7201 = vmatpush1.bf16.msra.mxu0 %v7169
        %7202 = vmatprep.subr.bf16.mxu0 0
        %7203 = vmatpush1.bf16.msra.mxu0 %v7170
        %7204 = vmatprep.subr.bf16.mxu0 0
        %7205 = vmatpush1.bf16.msra.mxu0 %v7171
        %7206 = vmatprep.subr.bf16.mxu0 0
        %7207 = vmatpush1.bf16.msra.mxu0 %v7172
        %7208 = vmatprep.subr.bf16.mxu0 0
        %7209 = vmatpush1.bf16.msra.mxu0 %v7173
        %7210 = vmatprep.subr.bf16.mxu0 0
        %7211 = vmatpush1.bf16.msra.mxu0 %v7174
        %7212 = vmatprep.subr.bf16.mxu0 0
        %7213 = vmatpush1.bf16.msra.mxu0 %v7175
        %7214 = vmatprep.subr.bf16.mxu0 0
        %7215 = vmatpush1.bf16.msra.mxu0 %v7176
        %7216 = vmatprep.subr.bf16.mxu0 0
        %7217 = vmatpush1.bf16.msra.mxu0 %v7177
        %7218 = vmatprep.subr.bf16.mxu0 0
        %7219 = vmatpush1.bf16.msra.mxu0 %v7194
        %7220 = vmatprep.subr.bf16.mxu0 0
        %7221 = vmatpush1.bf16.msra.mxu0 0
        %7222 = vmatprep.subr.bf16.mxu0 0
        %7223 = vmatpush1.bf16.msra.mxu0 0
        %7224 = vmatprep.subr.bf16.mxu0 0
        %7225 = vmatpush1.bf16.msra.mxu0 0
        %7226 = vmatprep.subr.bf16.mxu0 0
        %7227 = vmatpush1.bf16.msra.mxu0 0
        %7228 = vmatprep.mubr.bf16.mxu0 %v7191
        %7229 = vmatmul.mubr.bf16.gmra.mrb[0].mxu0 %v7089
        %v7230 = vpop.f32.mrb[0].mxu0
        %v7231 = vadd.f32 %v7119, %v7230
        %v7232 = vpop.f32.mrb[0].mxu0
        %v7233 = vpop.f32.mrb[0].mxu0
        %v7234 = vpop.f32.mrb[0].mxu0
        %7235 = vdwg.mxu0
        %v7236 = vadd.f32 %v7231, %v6898
        %v7237 = vmax.f32 %v7236, 0.0
        %vm7238 = vcmask 486400
        %v7239 = vsel %vm7238, %v7237, 0.0
        %v7240 = vrot.slane %v7239, 4
        %v7241 = vadd.f32 %v7239, %v7240
        %v7242 = vrot.slane %v7241, 2
        %v7243 = vadd.f32 %v7241, %v7242
        %v7244 = vrot.slane %v7243, 1
        %v7245 = vadd.f32 %v7243, %v7244
        %v7246 = vrcp.pop 4.0
        %v7247 = vmul.f32 %v7245, %v7246
        %v7248 = vpack.c.bf16 %v7247, %v7247
        %v7249 = vld [vmem:[%s107] sm:$0xf]
        %v7250 = vld [vmem:[%s107 + $0x4] sm:$0xf]
        %v7251 = vld [vmem:[%s107 + $0x8] sm:$0xf]
        %v7252 = vld [vmem:[%s107 + $0xc] sm:$0xf]
        %v7253 = vld [vmem:[%s107 + $0x10] sm:$0xf]
        %v7254 = vld [vmem:[%s107 + $0x14] sm:$0xf]
        %v7255 = vld [vmem:[%s107 + $0x18] sm:$0xf]
        %v7256 = vld [vmem:[%s107 + $0x1c] sm:$0x3]
        %v7257 = vld [vmem:[#allocation23] sm:$0x1]
        %v7266 = vunpack.c.l.b16 %v7249
        %v7267 = vunpack.c.l.b16 %v7250
        %v7268 = vunpack.c.l.b16 %v7251
        %v7269 = vunpack.c.l.b16 %v7252
        %v7270 = vunpack.c.l.b16 %v7253
        %v7271 = vunpack.c.l.b16 %v7254
        %v7272 = vunpack.c.l.b16 %v7255
        %v7273 = vunpack.c.l.b16 %v7256
        %v7274 = vpack.c.b16 %v7267, %v7266
        %v7275 = vpack.c.b16 %v7269, %v7268
        %v7276 = vpack.c.b16 %v7271, %v7270
        %v7277 = vpack.c.b16 %v7273, %v7272
        %v7282 = vsel %vm6626, %v7248, 0
        %v7285 = vsel %vm3200, %v7277, 0
        %7287 = vmatprep.subr.bf16.mxu0 0
        %7288 = vmatpush1.bf16.msra.mxu0 %v7274
        %7289 = vmatprep.subr.bf16.mxu0 0
        %7290 = vmatpush1.bf16.msra.mxu0 %v7275
        %7291 = vmatprep.subr.bf16.mxu0 0
        %7292 = vmatpush1.bf16.msra.mxu0 %v7276
        %7293 = vmatprep.subr.bf16.mxu0 0
        %7294 = vmatpush1.bf16.msra.mxu0 %v7285
        %7295 = vmatprep.subr.bf16.mxu0 0
        %7296 = vmatpush1.bf16.msra.mxu0 0
        %7297 = vmatprep.subr.bf16.mxu0 0
        %7298 = vmatpush1.bf16.msra.mxu0 0
        %7299 = vmatprep.subr.bf16.mxu0 0
        %7300 = vmatpush1.bf16.msra.mxu0 0
        %7301 = vmatprep.subr.bf16.mxu0 0
        %7302 = vmatpush1.bf16.msra.mxu0 0
        %7303 = vmatprep.subr.bf16.mxu0 0
        %7304 = vmatpush1.bf16.msra.mxu0 0
        %7305 = vmatprep.subr.bf16.mxu0 0
        %7306 = vmatpush1.bf16.msra.mxu0 0
        %7307 = vmatprep.subr.bf16.mxu0 0
        %7308 = vmatpush1.bf16.msra.mxu0 0
        %7309 = vmatprep.subr.bf16.mxu0 0
        %7310 = vmatpush1.bf16.msra.mxu0 0
        %7311 = vmatprep.subr.bf16.mxu0 0
        %7312 = vmatpush1.bf16.msra.mxu0 0
        %7313 = vmatprep.subr.bf16.mxu0 0
        %7314 = vmatpush1.bf16.msra.mxu0 0
        %7315 = vmatprep.subr.bf16.mxu0 0
        %7316 = vmatpush1.bf16.msra.mxu0 0
        %7317 = vmatprep.subr.bf16.mxu0 0
        %7318 = vmatpush1.bf16.msra.mxu0 0
        %7319 = vmatprep.mubr.bf16.mxu0 0
        %7320 = vmatmul.mubr.bf16.gmra.mrb[0].mxu0 %v7282
        %v7321 = vpop.f32.mrb[0].mxu0
        %v7322 = vadd.f32 %v7257, %v7321
        %v7323 = vpop.f32.mrb[0].mxu0
        %v7324 = vpop.f32.mrb[0].mxu0
        %v7325 = vpop.f32.mrb[0].mxu0
        %7326 = vdwg.mxu0
        %v7327 = vmax.f32 %v7322, 0.0
        %v7328 = vpack.c.bf16 %v7327, %v7327
        %v7329 = vld [vmem:[%s111] sm:$0xf]
        %v7330 = vld [vmem:[%s111 + $0x4] sm:$0xf]
        %v7331 = vld [vmem:[%s111 + $0x8] sm:$0xf]
        %v7332 = vld [vmem:[%s111 + $0xc] sm:$0xf]
        %v7333 = vld [vmem:[%s111 + $0x10] sm:$0xf]
        %v7334 = vld [vmem:[%s111 + $0x14] sm:$0xf]
        %v7335 = vld [vmem:[%s111 + $0x18] sm:$0xf]
        %v7336 = vld [vmem:[%s111 + $0x1c] sm:$0x3]
        %v7337 = vld [vmem:[#allocation25] sm:$0x1]
        %v7346 = vunpack.c.l.b16 %v7329
        %v7347 = vunpack.c.l.b16 %v7330
        %v7348 = vunpack.c.l.b16 %v7331
        %v7349 = vunpack.c.l.b16 %v7332
        %v7350 = vunpack.c.l.b16 %v7333
        %v7351 = vunpack.c.l.b16 %v7334
        %v7352 = vunpack.c.l.b16 %v7335
        %v7353 = vunpack.c.l.b16 %v7336
        %v7354 = vpack.c.b16 %v7347, %v7346
        %v7355 = vpack.c.b16 %v7349, %v7348
        %v7356 = vpack.c.b16 %v7351, %v7350
        %v7357 = vpack.c.b16 %v7353, %v7352
        %v7362 = vsel %vm6626, %v7328, 0
        %v7365 = vsel %vm3200, %v7357, 0
        %7367 = vmatprep.subr.bf16.mxu0 0
        %7368 = vmatpush1.bf16.msra.mxu0 %v7354
        %7369 = vmatprep.subr.bf16.mxu0 0
        %7370 = vmatpush1.bf16.msra.mxu0 %v7355
        %7371 = vmatprep.subr.bf16.mxu0 0
        %7372 = vmatpush1.bf16.msra.mxu0 %v7356
        %7373 = vmatprep.subr.bf16.mxu0 0
        %7374 = vmatpush1.bf16.msra.mxu0 %v7365
        %7375 = vmatprep.subr.bf16.mxu0 0
        %7376 = vmatpush1.bf16.msra.mxu0 0
        %7377 = vmatprep.subr.bf16.mxu0 0
        %7378 = vmatpush1.bf16.msra.mxu0 0
        %7379 = vmatprep.subr.bf16.mxu0 0
        %7380 = vmatpush1.bf16.msra.mxu0 0
        %7381 = vmatprep.subr.bf16.mxu0 0
        %7382 = vmatpush1.bf16.msra.mxu0 0
        %7383 = vmatprep.subr.bf16.mxu0 0
        %7384 = vmatpush1.bf16.msra.mxu0 0
        %7385 = vmatprep.subr.bf16.mxu0 0
        %7386 = vmatpush1.bf16.msra.mxu0 0
        %7387 = vmatprep.subr.bf16.mxu0 0
        %7388 = vmatpush1.bf16.msra.mxu0 0
        %7389 = vmatprep.subr.bf16.mxu0 0
        %7390 = vmatpush1.bf16.msra.mxu0 0
        %7391 = vmatprep.subr.bf16.mxu0 0
        %7392 = vmatpush1.bf16.msra.mxu0 0
        %7393 = vmatprep.subr.bf16.mxu0 0
        %7394 = vmatpush1.bf16.msra.mxu0 0
        %7395 = vmatprep.subr.bf16.mxu0 0
        %7396 = vmatpush1.bf16.msra.mxu0 0
        %7397 = vmatprep.subr.bf16.mxu0 0
        %7398 = vmatpush1.bf16.msra.mxu0 0
        %7399 = vmatprep.mubr.bf16.mxu0 0
        %7400 = vmatmul.mubr.bf16.gmra.mrb[0].mxu0 %v7362
        %v7401 = vpop.f32.mrb[0].mxu0
        %v7402 = vadd.f32 %v7337, %v7401
        %v7403 = vpop.f32.mrb[0].mxu0
        %v7404 = vpop.f32.mrb[0].mxu0
        %v7405 = vpop.f32.mrb[0].mxu0
        %7406 = vdwg.mxu0
        %vm7407 = vcmask 8192
        %v7408 = vsel %vm7407, %v7402, -inf
        %7409 = vmax.xlane.f32.xlu0 %v7408
        %v7410 = vpop.xlane.xlu0 %7409
        %v7411 = vsub.f32 %v7402, %v7410
        %v7412 = vmul.f32 %v7411, 1.442695
        %v7413 = vpow.pop %v7412
        %v7414 = vsel %vm7407, %v7413, 0.0
        %7415 = vadd.xlane.f32.xlu0 %v7414
        %v7416 = vpop.xlane.xlu0 %7415
        %v7417 = vrcp.pop %v7416
        %v7418 = vmul.f32 %v7413, %v7417
        %7419 = vst.msk [vmem:[%s1866] sm:$0x1] %vm7407, %v7418
        %s7420 = sand.u32 %s1347, 1
        %s7421 = scalar_lea.sflag [#allocation4], %s7420
        %s7422 = sand.u32 %s1347, 1
        %s7423 = scalar_lea.vmem [#allocation26], %s7422
        // Predicated region
        $region309: #{resnet3_mfcc_forward.1} parent=247 // pred_check
          %p7424 = pneg %p1357
        $region310: #{resnet3_mfcc_forward.1} parent=247 // pred_check_branch
          %7426 = sbr.rel (%p7424) target = $region312
        $region311: #{resnet3_mfcc_forward.1} parent=247 // pred_region
          %s7428 = ssub.s32 16, 16
          %7429 = vsyncadd %s7421, %s7428
          %s7430 = smul.addr %s137, 16
          %s7431 = scalar_lea.hbm %s115, %s7430
          %s7433 = sshll.u32 %s7423, 4
          %s7434 = int_to_ptr.vmem [resolvable:$true] %s7433
          %7436 = dma.vmem_to_hbm [thread:$0]  %s7434, 16, %s7431, %s7421
        $region312: #{resnet3_mfcc_forward.1} parent=247 // pred_fallthru
          _
      $region248: #{resnet3_mfcc_forward.1} parent=5 // pred_fallthru
        _
      %p7437 = scmp.le.s32.totalorder 2, %s132
      // Predicated region
      $region313: #{resnet3_mfcc_forward.1} parent=5 // pred_check
        %p7438 = pneg %p7437
      $region314: #{resnet3_mfcc_forward.1} parent=5 // pred_check_branch
        %7440 = sbr.rel (%p7438) target = $region316
      $region315: #{resnet3_mfcc_forward.1} parent=5 // pred_region
        %s7441 = ssub.s32 %s132, 2
        // Predicated region
        $region317: #{resnet3_mfcc_forward.1} parent=315 // pred_check
          %p7442 = pneg %p1363
        $region318: #{resnet3_mfcc_forward.1} parent=315 // pred_check_branch
          %7444 = sbr.rel (%p7442) target = $region320
        $region319: #{resnet3_mfcc_forward.1} parent=315 // pred_region
          %s7445 = sand.u32 %s1348, 1
          %s7446 = scalar_lea.sflag [#allocation4], %s7445
          %s7447 = sand.u32 %s1348, 1
          %s7448 = scalar_lea.vmem [#allocation26], %s7447
          %7449 = dma.done %s7446, 16
        $region320: #{resnet3_mfcc_forward.1} parent=315 // pred_fallthru
          _
      $region316: #{resnet3_mfcc_forward.1} parent=5 // pred_fallthru
        _
    $region6: #{resnet3_mfcc_forward.1} parent=1 // loop_footer
      %s136 = sadd.s32 1, %s132
    $region7: #{resnet3_mfcc_forward.1} parent=1 // loop_footer_branch
      %131 = sbr.rel target = $region3
    $region8: #{resnet3_mfcc_forward.1} parent=1 // loop_exit
      _
    %7450 = vsyncpa [#allocation3], 1
    %s7451 = scalar_lea.sflag [#allocation3], 1
    %7452 = vsyncpa %s7451, 1
    %7453 = vsyncpa [#allocation6], 1
    %7454 = vsyncpa [#allocation9], 1
    %7455 = vsyncpa [#allocation12], 1
    %7456 = vsyncpa [#allocation15], 1
    %7457 = vsyncpa [#allocation18], 1
    %7458 = vsyncpa [#allocation21], 1
    %7459 = vsyncpa [#allocation24], 1
    %7460 = vsyncpa [#allocation4], 1
    %s7461 = scalar_lea.sflag [#allocation4], 1
    %7462 = vsyncpa %s7461, 1

</llo_original>
